<compile_context>
chip_gen: v6e
topology: v6e:2x2x1
jax: 0.10.0
libtpu: 0.0.40
codegen_flags: <defaults>
</compile_context>

<pallas_src>
import math
import functools

import jax
import jax.numpy as jnp
from jax.experimental import pallas as pl
from jax.experimental.pallas import tpu as pltpu

NEG_INF = -1e9


def _pick_vmem_limit():
    """Generation-dependent VMEM budget: ~3/4 of physical, capped at 100 MiB."""
    cap = None
    try:
        cap = getattr(pltpu.get_tpu_info(), "vmem_capacity_bytes", None)
    except Exception:
        cap = None
    if cap is None:
        try:
            kind = jax.devices()[0].device_kind.lower()
            cap = 64 * 1024 * 1024 if "v7" in kind else 128 * 1024 * 1024
        except Exception:
            cap = 64 * 1024 * 1024
    return min(int(cap * 3 // 4), 100 * 1024 * 1024)


VMEM_LIMIT_BYTES = _pick_vmem_limit()


def _round_up(x, m):
    return ((x + m - 1) // m) * m


def _pick_tile(dim, target, base):
    """Largest tile <= target that is a multiple of `base` and divides `dim`
    (falls back to the full dim, which is always legal)."""
    if dim <= target:
        return dim
    t = (target // base) * base
    while t >= base:
        if dim % t == 0:
            return t
        t -= base
    return dim


def _pad_rows(x2d, multiple):
    M = x2d.shape[0]
    Mp = _round_up(M, multiple)
    if Mp != M:
        x2d = jnp.pad(x2d, ((0, Mp - M), (0, 0)))
    return x2d, Mp


def _apply_act(y, act):
    if act == "tanh":
        return jnp.tanh(y)
    if act == "gelu":
        # TODO(synk): tanh-approx GELU; HF BERT default is the erf-based GELU.
        return 0.5 * y * (1.0 + jnp.tanh(0.7978845608028654 * (y + 0.044715 * y * y * y)))
    return y


# --------------------------- tiled linear kernels ---------------------------

def _mm_bias_act_kernel(x_ref, w_ref, b_ref, o_ref, acc_ref, *, act):
    k = pl.program_id(2)

    @pl.when(k == 0)
    def _():
        acc_ref[...] = jnp.zeros_like(acc_ref)

    acc_ref[...] += jnp.dot(x_ref[...], w_ref[...], preferred_element_type=jnp.float32)

    @pl.when(k == pl.num_programs(2) - 1)
    def _():
        y = acc_ref[...] + b_ref[...]          # bias only once, in the epilogue
        y = _apply_act(y, act)
        o_ref[...] = y.astype(o_ref.dtype)


def pallas_linear(x2d, w, b, act=None, out_dtype=jnp.bfloat16):
    """x2d: (M,K), w: (K,N), b: (N,) -> (M,N). Tiled M/N/K with K as the
    trailing 'arbitrary' (reduction) axis and a resident f32 accumulator.
    M is padded to a 256 (or 16) multiple so tiles stay large and MXU-shaped."""
    M0 = x2d.shape[0]
    x2d, M = _pad_rows(x2d, 256 if M0 > 256 else 16)
    K = x2d.shape[1]
    N = w.shape[1]
    tm = _pick_tile(M, 512, 16)
    tn = _pick_tile(N, 1024, 128)
    tk = _pick_tile(K, 512, 128)
    grid = (M // tm, N // tn, K // tk)
    out = pl.pallas_call(
        functools.partial(_mm_bias_act_kernel, act=act),
        grid=grid,
        in_specs=[
            pl.BlockSpec((tm, tk), lambda i, j, k: (i, k)),
            pl.BlockSpec((tk, tn), lambda i, j, k: (k, j)),
            pl.BlockSpec((1, tn), lambda i, j, k: (0, j)),
        ],
        out_specs=pl.BlockSpec((tm, tn), lambda i, j, k: (i, j)),
        out_shape=jax.ShapeDtypeStruct((M, N), out_dtype),
        scratch_shapes=[pltpu.VMEM((tm, tn), jnp.float32)],
        compiler_params=pltpu.CompilerParams(
            dimension_semantics=("parallel", "parallel", "arbitrary"),
            vmem_limit_bytes=VMEM_LIMIT_BYTES),
    )(x2d.astype(jnp.bfloat16), w.astype(jnp.bfloat16),
      b.astype(jnp.float32).reshape(1, N))
    return out[:M0] if M != M0 else out


def _mm_res_ln_kernel(x_ref, w_ref, b_ref, res_ref, g_ref, beta_ref, o_ref, acc_ref, *, eps):
    k = pl.program_id(1)

    @pl.when(k == 0)
    def _():
        acc_ref[...] = jnp.zeros_like(acc_ref)

    acc_ref[...] += jnp.dot(x_ref[...], w_ref[...], preferred_element_type=jnp.float32)

    @pl.when(k == pl.num_programs(1) - 1)
    def _():
        y = acc_ref[...] + b_ref[...] + res_ref[...].astype(jnp.float32)
        mu = jnp.mean(y, axis=-1, keepdims=True)
        d = y - mu
        var = jnp.mean(d * d, axis=-1, keepdims=True)
        y = d * jax.lax.rsqrt(var + eps) * g_ref[...] + beta_ref[...]
        o_ref[...] = y.astype(o_ref.dtype)


def pallas_linear_res_ln(x2d, w, b, res2d, g, beta, eps=1e-12, out_dtype=jnp.bfloat16):
    """Fused y = LayerNorm(res + x @ W + b). N kept whole (LN needs the full row)."""
    M0, K = x2d.shape
    N = w.shape[1]
    pad = 256 if M0 > 256 else 16
    x2d, M = _pad_rows(x2d, pad)
    res2d, _ = _pad_rows(res2d, pad)
    tm = _pick_tile(M, 512, 16)
    tk = _pick_tile(K, 512, 128)
    grid = (M // tm, K // tk)
    out = pl.pallas_call(
        functools.partial(_mm_res_ln_kernel, eps=eps),
        grid=grid,
        in_specs=[
            pl.BlockSpec((tm, tk), lambda i, k: (i, k)),
            pl.BlockSpec((tk, N), lambda i, k: (k, 0)),
            pl.BlockSpec((1, N), lambda i, k: (0, 0)),
            pl.BlockSpec((tm, N), lambda i, k: (i, 0)),
            pl.BlockSpec((1, N), lambda i, k: (0, 0)),
            pl.BlockSpec((1, N), lambda i, k: (0, 0)),
        ],
        out_specs=pl.BlockSpec((tm, N), lambda i, k: (i, 0)),
        out_shape=jax.ShapeDtypeStruct((M, N), out_dtype),
        scratch_shapes=[pltpu.VMEM((tm, N), jnp.float32)],
        compiler_params=pltpu.CompilerParams(
            dimension_semantics=("parallel", "arbitrary"),
            vmem_limit_bytes=VMEM_LIMIT_BYTES),
    )(x2d.astype(jnp.bfloat16), w.astype(jnp.bfloat16),
      b.astype(jnp.float32).reshape(1, N), res2d,
      g.astype(jnp.float32).reshape(1, N), beta.astype(jnp.float32).reshape(1, N))
    return out[:M0] if M != M0 else out


def linear3d(x, w, b, act=None):
    B, L, K = x.shape
    return pallas_linear(x.reshape(B * L, K), w, b, act=act).reshape(B, L, w.shape[1])


def linear3d_res_ln(x, w, b, res, g, beta):
    B, L, K = x.shape
    N = w.shape[1]
    return pallas_linear_res_ln(x.reshape(B * L, K), w, b,
                                res.reshape(B * L, N), g, beta).reshape(B, L, N)


# ------------------------------ attention kernel ----------------------------

def _mha_flash_kernel(lens_ref, q_ref, k_ref, v_ref, o_ref,
                      m_sc, l_sc, acc_sc, *, scale, causal):
    b = pl.program_id(0)
    qi = pl.program_id(1)
    ki = pl.program_id(2)

    @pl.when(ki == 0)
    def _():
        m_sc[...] = jnp.full_like(m_sc, -jnp.inf)
        l_sc[...] = jnp.zeros_like(l_sc)
        acc_sc[...] = jnp.zeros_like(acc_sc)

    q = q_ref[0]                      # (nh, tq, hd) bf16
    k = k_ref[0]                      # (nh, tk, hd) bf16
    v = v_ref[0]                      # (nh, tk, hd) bf16
    nh, tq, hd = q.shape
    tk = k.shape[1]

    # Batched QK^T over all heads in one dot_general.
    s = jax.lax.dot_general(q, k, (((2,), (2,)), ((0,), (0,))),
                            preferred_element_type=jnp.float32) * scale   # (nh,tq,tk)

    # Mask rebuilt in-kernel from the per-example key length (no HBM mask DMA);
    # built once as (1, tq, tk) and broadcast across heads.
    kv_len = lens_ref[b]
    kv_pos = jax.lax.broadcasted_iota(jnp.int32, (1, tq, tk), 2) + ki * tk
    valid = kv_pos < kv_len
    if causal:
        q_pos = jax.lax.broadcasted_iota(jnp.int32, (1, tq, tk), 1) + qi * tq
        valid = jnp.logical_and(valid, kv_pos <= q_pos)
    s = jnp.where(valid, s, NEG_INF)

    # Online softmax across kv tiles.
    m_prev = m_sc[...]
    m_new = jnp.maximum(m_prev, jnp.max(s, axis=-1, keepdims=True))
    alpha = jnp.exp(m_prev - m_new)
    p = jnp.exp(s - m_new)
    l_sc[...] = alpha * l_sc[...] + jnp.sum(p, axis=-1, keepdims=True)
    acc_sc[...] = alpha * acc_sc[...] + jax.lax.dot_general(
        p.astype(v.dtype), v, (((2,), (1,)), ((0,), (0,))),
        preferred_element_type=jnp.float32)                               # (nh,tq,hd)
    m_sc[...] = m_new

    @pl.when(ki == pl.num_programs(2) - 1)
    def _():
        ctx = acc_sc[...] * pl.reciprocal(l_sc[...], approx=False)        # (nh,tq,hd)
        # Merge heads in-register into a single lane-dense (tq, H) store.
        o_ref[0] = jnp.concatenate([ctx[h] for h in range(nh)],
                                   axis=-1).astype(o_ref.dtype)


def pallas_mha(q, k, v, kv_lens, num_heads, causal):
    """q: (B,Lq,H), k/v: (B,Lk,H), kv_lens: (B,) valid key lengths.
    Flash-style grid (B, q-tiles, kv-tiles) with online-softmax scratch."""
    B, Lq, H = q.shape
    Lk = k.shape[1]
    hd = H // num_heads
    # TODO(synk): head-split transpose still done in the XLA wrapper; consuming
    #             the fused QKV projection buffer directly would drop this extra
    #             HBM round-trip of Q/K/V.
    qh = q.reshape(B, Lq, num_heads, hd).transpose(0, 2, 1, 3)
    kh = k.reshape(B, Lk, num_heads, hd).transpose(0, 2, 1, 3)
    vh = v.reshape(B, Lk, num_heads, hd).transpose(0, 2, 1, 3)

    tq = _pick_tile(Lq, 256, 8)
    tk = _pick_tile(Lk, 256, 8)
    grid = (B, Lq // tq, Lk // tk)
    return pl.pallas_call(
        functools.partial(_mha_flash_kernel, scale=1.0 / math.sqrt(hd), causal=causal),
        grid_spec=pltpu.PrefetchScalarGridSpec(
            num_scalar_prefetch=1,
            grid=grid,
            in_specs=[
                pl.BlockSpec((1, num_heads, tq, hd), lambda b, qi, ki, lens: (b, 0, qi, 0)),
                pl.BlockSpec((1, num_heads, tk, hd), lambda b, qi, ki, lens: (b, 0, ki, 0)),
                pl.BlockSpec((1, num_heads, tk, hd), lambda b, qi, ki, lens: (b, 0, ki, 0)),
            ],
            out_specs=pl.BlockSpec((1, tq, H), lambda b, qi, ki, lens: (b, qi, 0)),
            scratch_shapes=[
                pltpu.VMEM((num_heads, tq, 1), jnp.float32),
                pltpu.VMEM((num_heads, tq, 1), jnp.float32),
                pltpu.VMEM((num_heads, tq, hd), jnp.float32),
            ],
        ),
        out_shape=jax.ShapeDtypeStruct((B, Lq, H), jnp.bfloat16),
        compiler_params=pltpu.CompilerParams(
            dimension_semantics=("parallel", "parallel", "arbitrary"),
            vmem_limit_bytes=VMEM_LIMIT_BYTES),
    )(kv_lens.astype(jnp.int32), qh, kh, vh)


# ------------------- tied generator + cross-entropy kernel ------------------

def _gen_ce_kernel(x_ref, e_ref, b_ref, t_ref, loss_ref, m_sc, s_sc, tl_sc):
    j = pl.program_id(1)

    @pl.when(j == 0)
    def _():
        m_sc[...] = jnp.full_like(m_sc, -jnp.inf)
        s_sc[...] = jnp.zeros_like(s_sc)
        tl_sc[...] = jnp.zeros_like(tl_sc)

    # logits tile = x @ word_emb^T (contraction on the embedding's lane axis is
    # fed straight to the MXU; no materialized (H,V) copy of the table).
    logits = jax.lax.dot_general(x_ref[...], e_ref[...], (((1,), (1,)), ((), ())),
                                 preferred_element_type=jnp.float32) + b_ref[...]
    tv = logits.shape[1]

    # Online logsumexp across vocab tiles.
    m_prev = m_sc[...]
    m_new = jnp.maximum(m_prev, jnp.max(logits, axis=-1, keepdims=True))
    s_sc[...] = s_sc[...] * jnp.exp(m_prev - m_new) + \
        jnp.sum(jnp.exp(logits - m_new), axis=-1, keepdims=True)
    m_sc[...] = m_new

    # Target logit (target falls in exactly one vocab tile) - single where/sum pass.
    col = jax.lax.broadcasted_iota(jnp.int32, logits.shape, 1) + j * tv
    tl_sc[...] = tl_sc[...] + jnp.sum(
        jnp.where(col == t_ref[...], logits, 0.0), axis=-1, keepdims=True)

    @pl.when(j == pl.num_programs(1) - 1)
    def _():
        loss_ref[...] = m_sc[...] + jnp.log(s_sc[...]) - tl_sc[...]


def pallas_generator_ce(x2d, word_emb, b, targets):
    """x2d: (M,H), word_emb: (V,H) tied weights, b: (V,), targets: (M,) -> (M,) loss."""
    M0, H = x2d.shape
    V = word_emb.shape[0]
    pad = 256 if M0 > 256 else 16
    Mp = _round_up(M0, pad)
    if Mp != M0:
        x2d = jnp.pad(x2d, ((0, Mp - M0), (0, 0)))
        targets = jnp.pad(targets, ((0, Mp - M0),))
    tm = _pick_tile(Mp, 512, 16)
    # Bigger vocab tiles where the VMEM budget allows (v5e/v6e), 2048 on v7x.
    tv_target = 4096 if VMEM_LIMIT_BYTES >= 80 * 1024 * 1024 else 2048
    tv = _pick_tile(V, tv_target, 128)    # TODO(synk): pad real vocabs to a multiple of 128
    grid = (Mp // tm, V // tv)
    loss = pl.pallas_call(
        _gen_ce_kernel,
        grid=grid,
        in_specs=[
            pl.BlockSpec((tm, H), lambda i, j: (i, 0)),
            pl.BlockSpec((tv, H), lambda i, j: (j, 0)),
            pl.BlockSpec((1, tv), lambda i, j: (0, j)),
            pl.BlockSpec((tm, 1), lambda i, j: (i, 0)),
        ],
        out_specs=pl.BlockSpec((tm, 1), lambda i, j: (i, 0)),
        out_shape=jax.ShapeDtypeStruct((Mp, 1), jnp.float32),
        scratch_shapes=[pltpu.VMEM((tm, 1), jnp.float32),
                        pltpu.VMEM((tm, 1), jnp.float32),
                        pltpu.VMEM((tm, 1), jnp.float32)],
        compiler_params=pltpu.CompilerParams(
            dimension_semantics=("parallel", "arbitrary"),
            vmem_limit_bytes=VMEM_LIMIT_BYTES),
    )(x2d.astype(jnp.bfloat16), word_emb.astype(jnp.bfloat16),
      b.astype(jnp.float32).reshape(1, V), targets.reshape(Mp, 1).astype(jnp.int32))
    return loss.reshape(Mp)[:M0]


# ------------------------------- glue (JAX) --------------------------------

def layer_norm(x, g, b, eps=1e-12):
    x = x.astype(jnp.float32)
    mu = jnp.mean(x, axis=-1, keepdims=True)
    var = jnp.mean((x - mu) ** 2, axis=-1, keepdims=True)
    return ((x - mu) * jax.lax.rsqrt(var + eps) * g + b).astype(jnp.bfloat16)


def embed(params, ids):
    # TODO(synk): embedding gather + embedding LayerNorm kept in XLA.
    L = ids.shape[1]
    x = params["word_emb"][ids] + params["pos_emb"][:L][None, :, :]
    return layer_norm(x, params["emb_ln_g"], params["emb_ln_b"])


def encoder_layer(p, x, src_lens, num_heads):
    qkv = linear3d(x, p["w_qkv"], p["b_qkv"])                 # fused Q/K/V projection
    q, k, v = jnp.split(qkv, 3, axis=-1)
    a = pallas_mha(q, k, v, src_lens, num_heads, causal=False)
    x = linear3d_res_ln(a, p["wo"], p["bo"], x, p["ln1_g"], p["ln1_b"])
    h = linear3d(x, p["wf1"], p["bf1"], act="gelu")
    return linear3d_res_ln(h, p["wf2"], p["bf2"], x, p["ln2_g"], p["ln2_b"])


def decoder_layer(p, y, mem, tgt_lens, src_lens, num_heads):
    qkv = linear3d(y, p["sa_wqkv"], p["sa_bqkv"])
    q, k, v = jnp.split(qkv, 3, axis=-1)
    a = pallas_mha(q, k, v, tgt_lens, num_heads, causal=True)
    y = linear3d_res_ln(a, p["sa_wo"], p["sa_bo"], y, p["ln1_g"], p["ln1_b"])

    q = linear3d(y, p["ca_wq"], p["ca_bq"])
    kv = linear3d(mem, p["ca_wkv"], p["ca_bkv"])              # fused K/V projection
    k, v = jnp.split(kv, 2, axis=-1)
    a = pallas_mha(q, k, v, src_lens, num_heads, causal=False)
    y = linear3d_res_ln(a, p["ca_wo"], p["ca_bo"], y, p["ln2_g"], p["ln2_b"])

    h = linear3d(y, p["wf1"], p["bf1"], act="gelu")
    return linear3d_res_ln(h, p["wf2"], p["bf2"], y, p["ln3_g"], p["ln3_b"])


def transformer_bert_forward(params, code_ids, code_lens, summary_ids, summary_lens,
                             target_seq, code_mask, summary_mask, example_weights,
                             pad_token_id, num_heads):
    B, S = code_ids.shape
    T = summary_ids.shape[1]

    # Attention masks are contiguous length masks -> pass lengths; the masks
    # themselves are rebuilt in-kernel via broadcasted_iota (no (B,L,L) DMA).
    src_key_lens = code_mask.sum(axis=-1).astype(jnp.int32)
    tgt_key_lens = summary_mask.sum(axis=-1).astype(jnp.int32)

    # ---------------- encoder (stands in for code_bert) ----------------
    x = embed(params, code_ids)
    memory_bank = encoder_layer(params["enc"], x, src_key_lens, num_heads)

    # summary_emb = encoder.embeddings(summary_ids)
    summary_emb = embed(params, summary_ids)

    # ---------------- decoder ----------------
    dec_out = decoder_layer(params["dec"], summary_emb, memory_bank,
                            tgt_key_lens, src_key_lens, num_heads)

    # decoder_outputs = tanh(self.dense(decoder_outputs)) -- fused linear+tanh
    dec_out = linear3d(dec_out, params["dense_w"], params["dense_b"], act="tanh")

    # scores = generator(dec_out)[:, :-1]; CrossEntropyLoss(reduction='none')
    # (tied generator weight == word_emb, no transposed copy materialized).
    target = target_seq[:, 1:]                                  # (B, T-1)
    H = dec_out.shape[-1]
    dec_trim = dec_out[:, :-1, :].reshape(B * (T - 1), H)
    ml_loss = pallas_generator_ce(dec_trim, params["word_emb"], params["gen_b"],
                                  target.reshape(-1)).reshape(B, T - 1)
    ml_loss = ml_loss * (target != pad_token_id).astype(jnp.float32)
    ml_loss = ml_loss.sum(axis=1) * example_weights
    denom = jnp.maximum(summary_lens - 1, 1).astype(jnp.float32)   # guard len-1 summaries
    return {
        "ml_loss": ml_loss.mean(),
        "loss_per_token": (ml_loss / denom).mean(),
    }


# --------------------------- parameter creation -----------------------------

def init_params(key, vocab_size, hidden, ffn, max_pos):
    keys = iter(jax.random.split(key, 64))

    def nrm(shape):
        return (0.02 * jax.random.normal(next(keys), shape, jnp.float32)).astype(jnp.bfloat16)

    def lin(k_in, n_out):
        return nrm((k_in, n_out)), jnp.zeros((n_out,), jnp.float32)

    def ln(d, name):
        d[name + "_g"] = jnp.ones((hidden,), jnp.float32)
        d[name + "_b"] = jnp.zeros((hidden,), jnp.float32)

    p = {
        "word_emb": nrm((vocab_size, hidden)),
        "pos_emb": nrm((max_pos, hidden)),
        "emb_ln_g": jnp.ones((hidden,), jnp.float32),
        "emb_ln_b": jnp.zeros((hidden,), jnp.float32),
    }

    enc = {}
    enc["w_qkv"], enc["b_qkv"] = lin(hidden, 3 * hidden)
    enc["wo"], enc["bo"] = lin(hidden, hidden)
    enc["wf1"], enc["bf1"] = lin(hidden, ffn)
    enc["wf2"], enc["bf2"] = lin(ffn, hidden)
    ln(enc, "ln1"); ln(enc, "ln2")
    p["enc"] = enc

    dec = {}
    dec["sa_wqkv"], dec["sa_bqkv"] = lin(hidden, 3 * hidden)
    dec["sa_wo"], dec["sa_bo"] = lin(hidden, hidden)
    dec["ca_wq"], dec["ca_bq"] = lin(hidden, hidden)
    dec["ca_wkv"], dec["ca_bkv"] = lin(hidden, 2 * hidden)
    dec["ca_wo"], dec["ca_bo"] = lin(hidden, hidden)
    dec["wf1"], dec["bf1"] = lin(hidden, ffn)
    dec["wf2"], dec["bf2"] = lin(ffn, hidden)
    ln(dec, "ln1"); ln(dec, "ln2"); ln(dec, "ln3")
    p["dec"] = dec

    p["dense_w"], p["dense_b"] = lin(hidden, hidden)
    # share_decoder_embeddings -> generator weight IS word_emb (used untransposed).
    p["gen_b"] = jnp.zeros((vocab_size,), jnp.float32)
    return p


# ----------------------------------- main -----------------------------------

if __name__ == "__main__":
    B, S, T = 2, 16, 8
    H, FFN, V, NH = 32, 64, 64, 4
    PAD = 0

    key = jax.random.PRNGKey(0)
    k_param, k_code, k_sum = jax.random.split(key, 3)
    params = init_params(k_param, V, H, FFN, max_pos=64)

    code_lens = jnp.array([16, 12], jnp.int32)
    summary_lens = jnp.array([8, 6], jnp.int32)
    code_mask = (jnp.arange(S)[None, :] < code_lens[:, None]).astype(jnp.int32)
    summary_mask = (jnp.arange(T)[None, :] < summary_lens[:, None]).astype(jnp.int32)
    code_ids = jax.random.randint(k_code, (B, S), 1, V) * code_mask
    summary_ids = jax.random.randint(k_sum, (B, T), 1, V) * summary_mask
    target_seq = summary_ids
    example_weights = jnp.ones((B,), jnp.float32)

    fwd = jax.jit(functools.partial(transformer_bert_forward,
                                    pad_token_id=PAD, num_heads=NH))
    loss = fwd(params, code_ids, code_lens, summary_ids, summary_lens,
               target_seq, code_mask, summary_mask, example_weights)
    jax.block_until_ready(loss)
    assert jnp.isfinite(loss["ml_loss"]) and jnp.isfinite(loss["loss_per_token"])
    print("KERNEL_OK")
</pallas_src>

<mosaic_0001>
module attributes {stable_mosaic.version = 11 : i64} {
  func.func @_mm_bias_act_kernel(%arg0: i32, %arg1: i32, %arg2: i32, %arg3: memref<32x32xbf16, #tpu.memory_space<vmem>>, %arg4: memref<32x96xbf16, #tpu.memory_space<vmem>>, %arg5: memref<1x96xf32, #tpu.memory_space<vmem>>, %arg6: memref<32x96xbf16, #tpu.memory_space<vmem>>, %arg7: memref<32x96xf32, #tpu.memory_space<vmem>>) attributes {dimension_semantics = [#tpu.dimension_semantics<parallel>, #tpu.dimension_semantics<parallel>, #tpu.dimension_semantics<arbitrary>], iteration_bounds = array<i64: 1, 1, 1>, scalar_prefetch = 0 : i64, scratch_operands = 1 : i64, tpu.core_type = #tpu.core_type<tc>, window_params = [{transform_indices = @transform_0, window_bounds = array<i64: 32, 32>}, {transform_indices = @transform_1, window_bounds = array<i64: 32, 96>}, {transform_indices = @transform_2, window_bounds = array<i64: 1, 96>}, {transform_indices = @transform_3, window_bounds = array<i64: 32, 96>}]} {
    %c0_i32 = arith.constant 0 : i32
    %0 = arith.cmpi eq, %arg2, %c0_i32 : i32
    %1 = arith.extui %0 : i1 to i32
    %c0_i32_0 = arith.constant 0 : i32
    %2 = arith.cmpi ne, %1, %c0_i32_0 : i32
    scf.if %2 {
      %cst_10 = arith.constant 0.000000e+00 : f32
      %12 = vector.broadcast %cst_10 : f32 to vector<32x96xf32>
      %c0_11 = arith.constant 0 : index
      %c0_12 = arith.constant 0 : index
      %13 = vector.load %arg7[%c0_11, %c0_12] : memref<32x96xf32, #tpu.memory_space<vmem>>, vector<32x96xf32>
      tpu.vector_store %arg7[%c0_11, %c0_12], %12 {strides = array<i32>} : memref<32x96xf32, #tpu.memory_space<vmem>>, vector<32x96xf32>,
    } else {
    }
    %c0 = arith.constant 0 : index
    %c0_1 = arith.constant 0 : index
    %3 = vector.load %arg7[%c0, %c0_1] : memref<32x96xf32, #tpu.memory_space<vmem>>, vector<32x96xf32>
    %c0_2 = arith.constant 0 : index
    %c0_3 = arith.constant 0 : index
    %4 = vector.load %arg3[%c0_2, %c0_3] : memref<32x32xbf16, #tpu.memory_space<vmem>>, vector<32x32xbf16>
    %c0_4 = arith.constant 0 : index
    %c0_5 = arith.constant 0 : index
    %5 = vector.load %arg4[%c0_4, %c0_5] : memref<32x96xbf16, #tpu.memory_space<vmem>>, vector<32x96xbf16>
    %cst = arith.constant dense<0.000000e+00> : vector<32x96xf32>
    %6 = tpu.matmul %4, %5, %cst {dimension_numbers = #tpu.dot_dimension_numbers<[1], [0], [0], [1], [0, 0, 1, 1], [], []>} : vector<32x32xbf16>, vector<32x96xbf16>, vector<32x96xf32> -> vector<32x96xf32>
    %7 = arith.addf %3, %6 : vector<32x96xf32>
    %c0_6 = arith.constant 0 : index
    %c0_7 = arith.constant 0 : index
    %8 = vector.load %arg7[%c0_6, %c0_7] : memref<32x96xf32, #tpu.memory_space<vmem>>, vector<32x96xf32>
    tpu.vector_store %arg7[%c0_6, %c0_7], %7 {strides = array<i32>} : memref<32x96xf32, #tpu.memory_space<vmem>>, vector<32x96xf32>,
    %c0_i32_8 = arith.constant 0 : i32
    %9 = arith.cmpi eq, %arg2, %c0_i32_8 : i32
    %10 = arith.extui %9 : i1 to i32
    %c0_i32_9 = arith.constant 0 : i32
    %11 = arith.cmpi ne, %10, %c0_i32_9 : i32
    scf.if %11 {
      %c0_10 = arith.constant 0 : index
      %c0_11 = arith.constant 0 : index
      %12 = vector.load %arg7[%c0_10, %c0_11] : memref<32x96xf32, #tpu.memory_space<vmem>>, vector<32x96xf32>
      %c0_12 = arith.constant 0 : index
      %c0_13 = arith.constant 0 : index
      %13 = vector.load %arg5[%c0_12, %c0_13] : memref<1x96xf32, #tpu.memory_space<vmem>>, vector<1x96xf32>
      %14 = vector.broadcast %13 : vector<1x96xf32> to vector<32x96xf32>
      %15 = arith.addf %12, %14 : vector<32x96xf32>
      %16 = arith.truncf %15 : vector<32x96xf32> to vector<32x96xbf16>
      %c0_14 = arith.constant 0 : index
      %c0_15 = arith.constant 0 : index
      %17 = vector.load %arg6[%c0_14, %c0_15] : memref<32x96xbf16, #tpu.memory_space<vmem>>, vector<32x96xbf16>
      tpu.vector_store %arg6[%c0_14, %c0_15], %16 {strides = array<i32>} : memref<32x96xbf16, #tpu.memory_space<vmem>>, vector<32x96xbf16>,
    } else {
    }
    return
  }
  func.func @transform_0(%arg0: i32, %arg1: i32, %arg2: i32) -> (i32, i32) {
    %c0_i32 = arith.constant 0 : i32
    return %arg0, %arg2 : i32, i32
  }
  func.func @transform_1(%arg0: i32, %arg1: i32, %arg2: i32) -> (i32, i32) {
    %c0_i32 = arith.constant 0 : i32
    return %arg2, %arg1 : i32, i32
  }
  func.func @transform_2(%arg0: i32, %arg1: i32, %arg2: i32) -> (i32, i32) {
    %c0_i32 = arith.constant 0 : i32
    %c0_i32_0 = arith.constant 0 : i32
    return %c0_i32, %arg1 : i32, i32
  }
  func.func @transform_3(%arg0: i32, %arg1: i32, %arg2: i32) -> (i32, i32) {
    %c0_i32 = arith.constant 0 : i32
    return %arg0, %arg1 : i32, i32
  }
}

module attributes {stable_mosaic.version = 11 : i64} {
  func.func @_mm_bias_act_kernel(%arg0: i32, %arg1: i32, %arg2: i32, %arg3: memref<32x32xbf16, #tpu.memory_space<vmem>>, %arg4: memref<32x64xbf16, #tpu.memory_space<vmem>>, %arg5: memref<1x64xf32, #tpu.memory_space<vmem>>, %arg6: memref<32x64xbf16, #tpu.memory_space<vmem>>, %arg7: memref<32x64xf32, #tpu.memory_space<vmem>>) attributes {dimension_semantics = [#tpu.dimension_semantics<parallel>, #tpu.dimension_semantics<parallel>, #tpu.dimension_semantics<arbitrary>], iteration_bounds = array<i64: 1, 1, 1>, scalar_prefetch = 0 : i64, scratch_operands = 1 : i64, tpu.core_type = #tpu.core_type<tc>, window_params = [{transform_indices = @transform_0, window_bounds = array<i64: 32, 32>}, {transform_indices = @transform_1, window_bounds = array<i64: 32, 64>}, {transform_indices = @transform_2, window_bounds = array<i64: 1, 64>}, {transform_indices = @transform_3, window_bounds = array<i64: 32, 64>}]} {
    %c0_i32 = arith.constant 0 : i32
    %0 = arith.cmpi eq, %arg2, %c0_i32 : i32
    %1 = arith.extui %0 : i1 to i32
    %c0_i32_0 = arith.constant 0 : i32
    %2 = arith.cmpi ne, %1, %c0_i32_0 : i32
    scf.if %2 {
      %cst_10 = arith.constant 0.000000e+00 : f32
      %12 = vector.broadcast %cst_10 : f32 to vector<32x64xf32>
      %c0_11 = arith.constant 0 : index
      %c0_12 = arith.constant 0 : index
      %13 = vector.load %arg7[%c0_11, %c0_12] : memref<32x64xf32, #tpu.memory_space<vmem>>, vector<32x64xf32>
      tpu.vector_store %arg7[%c0_11, %c0_12], %12 {strides = array<i32>} : memref<32x64xf32, #tpu.memory_space<vmem>>, vector<32x64xf32>,
    } else {
    }
    %c0 = arith.constant 0 : index
    %c0_1 = arith.constant 0 : index
    %3 = vector.load %arg7[%c0, %c0_1] : memref<32x64xf32, #tpu.memory_space<vmem>>, vector<32x64xf32>
    %c0_2 = arith.constant 0 : index
    %c0_3 = arith.constant 0 : index
    %4 = vector.load %arg3[%c0_2, %c0_3] : memref<32x32xbf16, #tpu.memory_space<vmem>>, vector<32x32xbf16>
    %c0_4 = arith.constant 0 : index
    %c0_5 = arith.constant 0 : index
    %5 = vector.load %arg4[%c0_4, %c0_5] : memref<32x64xbf16, #tpu.memory_space<vmem>>, vector<32x64xbf16>
    %cst = arith.constant dense<0.000000e+00> : vector<32x64xf32>
    %6 = tpu.matmul %4, %5, %cst {dimension_numbers = #tpu.dot_dimension_numbers<[1], [0], [0], [1], [0, 0, 1, 1], [], []>} : vector<32x32xbf16>, vector<32x64xbf16>, vector<32x64xf32> -> vector<32x64xf32>
    %7 = arith.addf %3, %6 : vector<32x64xf32>
    %c0_6 = arith.constant 0 : index
    %c0_7 = arith.constant 0 : index
    %8 = vector.load %arg7[%c0_6, %c0_7] : memref<32x64xf32, #tpu.memory_space<vmem>>, vector<32x64xf32>
    tpu.vector_store %arg7[%c0_6, %c0_7], %7 {strides = array<i32>} : memref<32x64xf32, #tpu.memory_space<vmem>>, vector<32x64xf32>,
    %c0_i32_8 = arith.constant 0 : i32
    %9 = arith.cmpi eq, %arg2, %c0_i32_8 : i32
    %10 = arith.extui %9 : i1 to i32
    %c0_i32_9 = arith.constant 0 : i32
    %11 = arith.cmpi ne, %10, %c0_i32_9 : i32
    scf.if %11 {
      %c0_10 = arith.constant 0 : index
      %c0_11 = arith.constant 0 : index
      %12 = vector.load %arg7[%c0_10, %c0_11] : memref<32x64xf32, #tpu.memory_space<vmem>>, vector<32x64xf32>
      %c0_12 = arith.constant 0 : index
      %c0_13 = arith.constant 0 : index
      %13 = vector.load %arg5[%c0_12, %c0_13] : memref<1x64xf32, #tpu.memory_space<vmem>>, vector<1x64xf32>
      %14 = vector.broadcast %13 : vector<1x64xf32> to vector<32x64xf32>
      %15 = arith.addf %12, %14 : vector<32x64xf32>
      %cst_14 = arith.constant 5.000000e-01 : f32
      %16 = vector.broadcast %cst_14 : f32 to vector<32x64xf32>
      %17 = arith.mulf %16, %15 : vector<32x64xf32>
      %cst_15 = arith.constant 4.471500e-02 : f32
      %18 = vector.broadcast %cst_15 : f32 to vector<32x64xf32>
      %19 = arith.mulf %18, %15 : vector<32x64xf32>
      %20 = arith.mulf %19, %15 : vector<32x64xf32>
      %21 = arith.mulf %20, %15 : vector<32x64xf32>
      %22 = arith.addf %15, %21 : vector<32x64xf32>
      %cst_16 = arith.constant 0.797884583 : f32
      %23 = vector.broadcast %cst_16 : f32 to vector<32x64xf32>
      %24 = arith.mulf %23, %22 : vector<32x64xf32>
      %25 = math.tanh %24 : vector<32x64xf32>
      %cst_17 = arith.constant 1.000000e+00 : f32
      %26 = vector.broadcast %cst_17 : f32 to vector<32x64xf32>
      %27 = arith.addf %26, %25 : vector<32x64xf32>
      %28 = arith.mulf %17, %27 : vector<32x64xf32>
      %29 = arith.truncf %28 : vector<32x64xf32> to vector<32x64xbf16>
      %c0_18 = arith.constant 0 : index
      %c0_19 = arith.constant 0 : index
      %30 = vector.load %arg6[%c0_18, %c0_19] : memref<32x64xbf16, #tpu.memory_space<vmem>>, vector<32x64xbf16>
      tpu.vector_store %arg6[%c0_18, %c0_19], %29 {strides = array<i32>} : memref<32x64xbf16, #tpu.memory_space<vmem>>, vector<32x64xbf16>,
    } else {
    }
    return
  }
  func.func @transform_0(%arg0: i32, %arg1: i32, %arg2: i32) -> (i32, i32) {
    %c0_i32 = arith.constant 0 : i32
    return %arg0, %arg2 : i32, i32
  }
  func.func @transform_1(%arg0: i32, %arg1: i32, %arg2: i32) -> (i32, i32) {
    %c0_i32 = arith.constant 0 : i32
    return %arg2, %arg1 : i32, i32
  }
  func.func @transform_2(%arg0: i32, %arg1: i32, %arg2: i32) -> (i32, i32) {
    %c0_i32 = arith.constant 0 : i32
    %c0_i32_0 = arith.constant 0 : i32
    return %c0_i32, %arg1 : i32, i32
  }
  func.func @transform_3(%arg0: i32, %arg1: i32, %arg2: i32) -> (i32, i32) {
    %c0_i32 = arith.constant 0 : i32
    return %arg0, %arg1 : i32, i32
  }
}

module attributes {stable_mosaic.version = 11 : i64} {
  func.func @_mm_res_ln_kernel(%arg0: i32, %arg1: i32, %arg2: memref<32x32xbf16, #tpu.memory_space<vmem>>, %arg3: memref<32x32xbf16, #tpu.memory_space<vmem>>, %arg4: memref<1x32xf32, #tpu.memory_space<vmem>>, %arg5: memref<32x32xbf16, #tpu.memory_space<vmem>>, %arg6: memref<1x32xf32, #tpu.memory_space<vmem>>, %arg7: memref<1x32xf32, #tpu.memory_space<vmem>>, %arg8: memref<32x32xbf16, #tpu.memory_space<vmem>>, %arg9: memref<32x32xf32, #tpu.memory_space<vmem>>) attributes {dimension_semantics = [#tpu.dimension_semantics<parallel>, #tpu.dimension_semantics<arbitrary>], iteration_bounds = array<i64: 1, 1>, scalar_prefetch = 0 : i64, scratch_operands = 1 : i64, tpu.core_type = #tpu.core_type<tc>, window_params = [{transform_indices = @transform_0, window_bounds = array<i64: 32, 32>}, {transform_indices = @transform_1, window_bounds = array<i64: 32, 32>}, {pipeline_mode = #tpu.pipeline_mode<synchronous>, transform_indices = @transform_2, window_bounds = array<i64: 1, 32>}, {transform_indices = @transform_3, window_bounds = array<i64: 32, 32>}, {pipeline_mode = #tpu.pipeline_mode<synchronous>, transform_indices = @transform_4, window_bounds = array<i64: 1, 32>}, {pipeline_mode = #tpu.pipeline_mode<synchronous>, transform_indices = @transform_5, window_bounds = array<i64: 1, 32>}, {transform_indices = @transform_6, window_bounds = array<i64: 32, 32>}]} {
    %c0_i32 = arith.constant 0 : i32
    %0 = arith.cmpi eq, %arg1, %c0_i32 : i32
    %1 = arith.extui %0 : i1 to i32
    %c0_i32_0 = arith.constant 0 : i32
    %2 = arith.cmpi ne, %1, %c0_i32_0 : i32
    scf.if %2 {
      %cst_10 = arith.constant 0.000000e+00 : f32
      %12 = vector.broadcast %cst_10 : f32 to vector<32x32xf32>
      %c0_11 = arith.constant 0 : index
      %c0_12 = arith.constant 0 : index
      %13 = vector.load %arg9[%c0_11, %c0_12] : memref<32x32xf32, #tpu.memory_space<vmem>>, vector<32x32xf32>
      tpu.vector_store %arg9[%c0_11, %c0_12], %12 {strides = array<i32>} : memref<32x32xf32, #tpu.memory_space<vmem>>, vector<32x32xf32>,
    } else {
    }
    %c0 = arith.constant 0 : index
    %c0_1 = arith.constant 0 : index
    %3 = vector.load %arg9[%c0, %c0_1] : memref<32x32xf32, #tpu.memory_space<vmem>>, vector<32x32xf32>
    %c0_2 = arith.constant 0 : index
    %c0_3 = arith.constant 0 : index
    %4 = vector.load %arg2[%c0_2, %c0_3] : memref<32x32xbf16, #tpu.memory_space<vmem>>, vector<32x32xbf16>
    %c0_4 = arith.constant 0 : index
    %c0_5 = arith.constant 0 : index
    %5 = vector.load %arg3[%c0_4, %c0_5] : memref<32x32xbf16, #tpu.memory_space<vmem>>, vector<32x32xbf16>
    %cst = arith.constant dense<0.000000e+00> : vector<32x32xf32>
    %6 = tpu.matmul %4, %5, %cst {dimension_numbers = #tpu.dot_dimension_numbers<[1], [0], [0], [1], [0, 0, 1, 1], [], []>} : vector<32x32xbf16>, vector<32x32xbf16>, vector<32x32xf32> -> vector<32x32xf32>
    %7 = arith.addf %3, %6 : vector<32x32xf32>
    %c0_6 = arith.constant 0 : index
    %c0_7 = arith.constant 0 : index
    %8 = vector.load %arg9[%c0_6, %c0_7] : memref<32x32xf32, #tpu.memory_space<vmem>>, vector<32x32xf32>
    tpu.vector_store %arg9[%c0_6, %c0_7], %7 {strides = array<i32>} : memref<32x32xf32, #tpu.memory_space<vmem>>, vector<32x32xf32>,
    %c0_i32_8 = arith.constant 0 : i32
    %9 = arith.cmpi eq, %arg1, %c0_i32_8 : i32
    %10 = arith.extui %9 : i1 to i32
    %c0_i32_9 = arith.constant 0 : i32
    %11 = arith.cmpi ne, %10, %c0_i32_9 : i32
    scf.if %11 {
      %c0_10 = arith.constant 0 : index
      %c0_11 = arith.constant 0 : index
      %12 = vector.load %arg9[%c0_10, %c0_11] : memref<32x32xf32, #tpu.memory_space<vmem>>, vector<32x32xf32>
      %c0_12 = arith.constant 0 : index
      %c0_13 = arith.constant 0 : index
      %13 = vector.load %arg4[%c0_12, %c0_13] : memref<1x32xf32, #tpu.memory_space<vmem>>, vector<1x32xf32>
      %14 = vector.broadcast %13 : vector<1x32xf32> to vector<32x32xf32>
      %15 = arith.addf %12, %14 : vector<32x32xf32>
      %c0_14 = arith.constant 0 : index
      %c0_15 = arith.constant 0 : index
      %16 = vector.load %arg5[%c0_14, %c0_15] : memref<32x32xbf16, #tpu.memory_space<vmem>>, vector<32x32xbf16>
      %17 = arith.extf %16 : vector<32x32xbf16> to vector<32x32xf32>
      %18 = arith.addf %15, %17 : vector<32x32xf32>
      %cst_16 = arith.constant dense<0.000000e+00> : vector<32xf32>
      %19 = vector.multi_reduction <add>, %18, %cst_16 [1] : vector<32x32xf32> to vector<32xf32>
      %20 = vector.shape_cast %19 : vector<32xf32> to vector<32x1xf32>
      %cst_17 = arith.constant 3.200000e+01 : f32
      %21 = vector.broadcast %cst_17 : f32 to vector<32x1xf32>
      %22 = arith.divf %20, %21 : vector<32x1xf32>
      %23 = vector.broadcast %22 : vector<32x1xf32> to vector<32x32xf32>
      %24 = arith.subf %18, %23 : vector<32x32xf32>
      %25 = arith.mulf %24, %24 : vector<32x32xf32>
      %cst_18 = arith.constant dense<0.000000e+00> : vector<32xf32>
      %26 = vector.multi_reduction <add>, %25, %cst_18 [1] : vector<32x32xf32> to vector<32xf32>
      %27 = vector.shape_cast %26 : vector<32xf32> to vector<32x1xf32>
      %cst_19 = arith.constant 3.200000e+01 : f32
      %28 = vector.broadcast %cst_19 : f32 to vector<32x1xf32>
      %29 = arith.divf %27, %28 : vector<32x1xf32>
      %cst_20 = arith.constant 9.99999996E-13 : f32
      %30 = vector.broadcast %cst_20 : f32 to vector<32x1xf32>
      %31 = arith.addf %29, %30 : vector<32x1xf32>
      %32 = math.rsqrt %31 : vector<32x1xf32>
      %33 = vector.broadcast %32 : vector<32x1xf32> to vector<32x32xf32>
      %34 = arith.mulf %24, %33 : vector<32x32xf32>
      %c0_21 = arith.constant 0 : index
      %c0_22 = arith.constant 0 : index
      %35 = vector.load %arg6[%c0_21, %c0_22] : memref<1x32xf32, #tpu.memory_space<vmem>>, vector<1x32xf32>
      %36 = vector.broadcast %35 : vector<1x32xf32> to vector<32x32xf32>
      %37 = arith.mulf %34, %36 : vector<32x32xf32>
      %c0_23 = arith.constant 0 : index
      %c0_24 = arith.constant 0 : index
      %38 = vector.load %arg7[%c0_23, %c0_24] : memref<1x32xf32, #tpu.memory_space<vmem>>, vector<1x32xf32>
      %39 = vector.broadcast %38 : vector<1x32xf32> to vector<32x32xf32>
      %40 = arith.addf %37, %39 : vector<32x32xf32>
      %41 = arith.truncf %40 : vector<32x32xf32> to vector<32x32xbf16>
      %c0_25 = arith.constant 0 : index
      %c0_26 = arith.constant 0 : index
      %42 = vector.load %arg8[%c0_25, %c0_26] : memref<32x32xbf16, #tpu.memory_space<vmem>>, vector<32x32xbf16>
      tpu.vector_store %arg8[%c0_25, %c0_26], %41 {strides = array<i32>} : memref<32x32xbf16, #tpu.memory_space<vmem>>, vector<32x32xbf16>,
    } else {
    }
    return
  }
  func.func @transform_0(%arg0: i32, %arg1: i32) -> (i32, i32) {
    %c0_i32 = arith.constant 0 : i32
    return %arg0, %arg1 : i32, i32
  }
  func.func @transform_1(%arg0: i32, %arg1: i32) -> (i32, i32) {
    %c0_i32 = arith.constant 0 : i32
    %c0_i32_0 = arith.constant 0 : i32
    return %arg1, %c0_i32 : i32, i32
  }
  func.func @transform_2(%arg0: i32, %arg1: i32) -> (i32, i32) {
    %c0_i32 = arith.constant 0 : i32
    %c0_i32_0 = arith.constant 0 : i32
    %c0_i32_1 = arith.constant 0 : i32
    return %c0_i32, %c0_i32_0 : i32, i32
  }
  func.func @transform_3(%arg0: i32, %arg1: i32) -> (i32, i32) {
    %c0_i32 = arith.constant 0 : i32
    %c0_i32_0 = arith.constant 0 : i32
    return %arg0, %c0_i32 : i32, i32
  }
  func.func @transform_4(%arg0: i32, %arg1: i32) -> (i32, i32) {
    %c0_i32 = arith.constant 0 : i32
    %c0_i32_0 = arith.constant 0 : i32
    %c0_i32_1 = arith.constant 0 : i32
    return %c0_i32, %c0_i32_0 : i32, i32
  }
  func.func @transform_5(%arg0: i32, %arg1: i32) -> (i32, i32) {
    %c0_i32 = arith.constant 0 : i32
    %c0_i32_0 = arith.constant 0 : i32
    %c0_i32_1 = arith.constant 0 : i32
    return %c0_i32, %c0_i32_0 : i32, i32
  }
  func.func @transform_6(%arg0: i32, %arg1: i32) -> (i32, i32) {
    %c0_i32 = arith.constant 0 : i32
    %c0_i32_0 = arith.constant 0 : i32
    return %arg0, %c0_i32 : i32, i32
  }
}

module attributes {stable_mosaic.version = 11 : i64} {
  func.func @_mha_flash_kernel(%arg0: i32, %arg1: i32, %arg2: i32, %arg3: memref<2xi32, #tpu.memory_space<smem>>, %arg4: memref<1x4x16x8xbf16, #tpu.memory_space<vmem>>, %arg5: memref<1x4x16x8xbf16, #tpu.memory_space<vmem>>, %arg6: memref<1x4x16x8xbf16, #tpu.memory_space<vmem>>, %arg7: memref<1x16x32xbf16, #tpu.memory_space<vmem>>, %arg8: memref<4x16x1xf32, #tpu.memory_space<vmem>>, %arg9: memref<4x16x1xf32, #tpu.memory_space<vmem>>, %arg10: memref<4x16x8xf32, #tpu.memory_space<vmem>>) attributes {dimension_semantics = [#tpu.dimension_semantics<parallel>, #tpu.dimension_semantics<parallel>, #tpu.dimension_semantics<arbitrary>], iteration_bounds = array<i64: 2, 1, 1>, scalar_prefetch = 1 : i64, scratch_operands = 3 : i64, tpu.core_type = #tpu.core_type<tc>, window_params = [{transform_indices = @transform_0, window_bounds = array<i64: 1, 4, 16, 8>}, {transform_indices = @transform_1, window_bounds = array<i64: 1, 4, 16, 8>}, {transform_indices = @transform_2, window_bounds = array<i64: 1, 4, 16, 8>}, {transform_indices = @transform_3, window_bounds = array<i64: 1, 16, 32>}]} {
    %c0_i32 = arith.constant 0 : i32
    %0 = arith.cmpi eq, %arg2, %c0_i32 : i32
    %1 = arith.extui %0 : i1 to i32
    %c0_i32_0 = arith.constant 0 : i32
    %2 = arith.cmpi ne, %1, %c0_i32_0 : i32
    scf.if %2 {
      %cst_37 = arith.constant 0xFF800000 : f32
      %50 = vector.broadcast %cst_37 : f32 to vector<4x16x1xf32>
      %c0_38 = arith.constant 0 : index
      %c0_39 = arith.constant 0 : index
      %c0_40 = arith.constant 0 : index
      %51 = vector.load %arg8[%c0_38, %c0_39, %c0_40] : memref<4x16x1xf32, #tpu.memory_space<vmem>>, vector<4x16x1xf32>
      tpu.vector_store %arg8[%c0_38, %c0_39, %c0_40], %50 {strides = array<i32>} : memref<4x16x1xf32, #tpu.memory_space<vmem>>, vector<4x16x1xf32>,
      %cst_41 = arith.constant 0.000000e+00 : f32
      %52 = vector.broadcast %cst_41 : f32 to vector<4x16x1xf32>
      %c0_42 = arith.constant 0 : index
      %c0_43 = arith.constant 0 : index
      %c0_44 = arith.constant 0 : index
      %53 = vector.load %arg9[%c0_42, %c0_43, %c0_44] : memref<4x16x1xf32, #tpu.memory_space<vmem>>, vector<4x16x1xf32>
      tpu.vector_store %arg9[%c0_42, %c0_43, %c0_44], %52 {strides = array<i32>} : memref<4x16x1xf32, #tpu.memory_space<vmem>>, vector<4x16x1xf32>,
      %cst_45 = arith.constant 0.000000e+00 : f32
      %54 = vector.broadcast %cst_45 : f32 to vector<4x16x8xf32>
      %c0_46 = arith.constant 0 : index
      %c0_47 = arith.constant 0 : index
      %c0_48 = arith.constant 0 : index
      %55 = vector.load %arg10[%c0_46, %c0_47, %c0_48] : memref<4x16x8xf32, #tpu.memory_space<vmem>>, vector<4x16x8xf32>
      tpu.vector_store %arg10[%c0_46, %c0_47, %c0_48], %54 {strides = array<i32>} : memref<4x16x8xf32, #tpu.memory_space<vmem>>, vector<4x16x8xf32>,
    } else {
    }
    %c0 = arith.constant 0 : index
    %c0_1 = arith.constant 0 : index
    %c0_2 = arith.constant 0 : index
    %c0_3 = arith.constant 0 : index
    %3 = vector.load %arg4[%c0, %c0_1, %c0_2, %c0_3] : memref<1x4x16x8xbf16, #tpu.memory_space<vmem>>, vector<1x4x16x8xbf16>
    %4 = vector.shape_cast %3 : vector<1x4x16x8xbf16> to vector<4x16x8xbf16>
    %c0_4 = arith.constant 0 : index
    %c0_5 = arith.constant 0 : index
    %c0_6 = arith.constant 0 : index
    %c0_7 = arith.constant 0 : index
    %5 = vector.load %arg5[%c0_4, %c0_5, %c0_6, %c0_7] : memref<1x4x16x8xbf16, #tpu.memory_space<vmem>>, vector<1x4x16x8xbf16>
    %6 = vector.shape_cast %5 : vector<1x4x16x8xbf16> to vector<4x16x8xbf16>
    %c0_8 = arith.constant 0 : index
    %c0_9 = arith.constant 0 : index
    %c0_10 = arith.constant 0 : index
    %c0_11 = arith.constant 0 : index
    %7 = vector.load %arg6[%c0_8, %c0_9, %c0_10, %c0_11] : memref<1x4x16x8xbf16, #tpu.memory_space<vmem>>, vector<1x4x16x8xbf16>
    %8 = vector.shape_cast %7 : vector<1x4x16x8xbf16> to vector<4x16x8xbf16>
    %cst = arith.constant dense<0.000000e+00> : vector<4x16x16xf32>
    %9 = tpu.matmul %4, %6, %cst {dimension_numbers = #tpu.dot_dimension_numbers<[2], [2], [1], [1], [0, 0, 0, 1, 1, 1], [0], [0]>} : vector<4x16x8xbf16>, vector<4x16x8xbf16>, vector<4x16x16xf32> -> vector<4x16x16xf32>
    %cst_12 = arith.constant 0.353553385 : f32
    %10 = vector.broadcast %cst_12 : f32 to vector<4x16x16xf32>
    %11 = arith.mulf %9, %10 : vector<4x16x16xf32>
    %12 = arith.index_cast %arg0 : i32 to index
    %13 = memref.load %arg3[%12] : memref<2xi32, #tpu.memory_space<smem>>
    %14 = tpu.iota {dimensions = array<i32: 2>} : vector<1x16x16xi32>
    %c16_i32 = arith.constant 16 : i32
    %15 = arith.muli %arg2, %c16_i32 : i32
    %16 = vector.broadcast %15 : i32 to vector<1x16x16xi32>
    %17 = arith.addi %14, %16 : vector<1x16x16xi32>
    %18 = vector.broadcast %13 : i32 to vector<1x16x16xi32>
    %19 = arith.cmpi slt, %17, %18 : vector<1x16x16xi32>
    %cst_13 = arith.constant -1.000000e+09 : f32
    %20 = vector.shape_cast %19 : vector<1x16x16xi1> to vector<1x16x16xi1>
    %21 = vector.broadcast %20 : vector<1x16x16xi1> to vector<4x16x16xi1>
    %22 = vector.broadcast %cst_13 : f32 to vector<4x16x16xf32>
    %23 = arith.select %21, %11, %22 : vector<4x16x16xi1>, vector<4x16x16xf32>
    %c0_14 = arith.constant 0 : index
    %c0_15 = arith.constant 0 : index
    %c0_16 = arith.constant 0 : index
    %24 = vector.load %arg8[%c0_14, %c0_15, %c0_16] : memref<4x16x1xf32, #tpu.memory_space<vmem>>, vector<4x16x1xf32>
    %cst_17 = arith.constant dense<0xFF800000> : vector<4x16xf32>
    %25 = vector.multi_reduction <maximumf>, %23, %cst_17 [2] : vector<4x16x16xf32> to vector<4x16xf32>
    %26 = vector.shape_cast %25 : vector<4x16xf32> to vector<4x16x1xf32>
    %27 = arith.maximumf %24, %26 : vector<4x16x1xf32>
    %28 = arith.subf %24, %27 : vector<4x16x1xf32>
    %29 = math.exp %28 : vector<4x16x1xf32>
    %30 = vector.broadcast %27 : vector<4x16x1xf32> to vector<4x16x16xf32>
    %31 = arith.subf %23, %30 : vector<4x16x16xf32>
    %32 = math.exp %31 : vector<4x16x16xf32>
    %c0_18 = arith.constant 0 : index
    %c0_19 = arith.constant 0 : index
    %c0_20 = arith.constant 0 : index
    %33 = vector.load %arg9[%c0_18, %c0_19, %c0_20] : memref<4x16x1xf32, #tpu.memory_space<vmem>>, vector<4x16x1xf32>
    %34 = arith.mulf %29, %33 : vector<4x16x1xf32>
    %cst_21 = arith.constant dense<0.000000e+00> : vector<4x16xf32>
    %35 = vector.multi_reduction <add>, %32, %cst_21 [2] : vector<4x16x16xf32> to vector<4x16xf32>
    %36 = vector.shape_cast %35 : vector<4x16xf32> to vector<4x16x1xf32>
    %37 = arith.addf %34, %36 : vector<4x16x1xf32>
    %c0_22 = arith.constant 0 : index
    %c0_23 = arith.constant 0 : index
    %c0_24 = arith.constant 0 : index
    %38 = vector.load %arg9[%c0_22, %c0_23, %c0_24] : memref<4x16x1xf32, #tpu.memory_space<vmem>>, vector<4x16x1xf32>
    tpu.vector_store %arg9[%c0_22, %c0_23, %c0_24], %37 {strides = array<i32>} : memref<4x16x1xf32, #tpu.memory_space<vmem>>, vector<4x16x1xf32>,
    %c0_25 = arith.constant 0 : index
    %c0_26 = arith.constant 0 : index
    %c0_27 = arith.constant 0 : index
    %39 = vector.load %arg10[%c0_25, %c0_26, %c0_27] : memref<4x16x8xf32, #tpu.memory_space<vmem>>, vector<4x16x8xf32>
    %40 = vector.broadcast %29 : vector<4x16x1xf32> to vector<4x16x8xf32>
    %41 = arith.mulf %40, %39 : vector<4x16x8xf32>
    %42 = arith.truncf %32 : vector<4x16x16xf32> to vector<4x16x16xbf16>
    %cst_28 = arith.constant dense<0.000000e+00> : vector<4x16x8xf32>
    %43 = tpu.matmul %42, %8, %cst_28 {dimension_numbers = #tpu.dot_dimension_numbers<[2], [1], [1], [2], [0, 0, 0, 1, 1, 2], [0], [0]>} : vector<4x16x16xbf16>, vector<4x16x8xbf16>, vector<4x16x8xf32> -> vector<4x16x8xf32>
    %44 = arith.addf %41, %43 : vector<4x16x8xf32>
    %c0_29 = arith.constant 0 : index
    %c0_30 = arith.constant 0 : index
    %c0_31 = arith.constant 0 : index
    %45 = vector.load %arg10[%c0_29, %c0_30, %c0_31] : memref<4x16x8xf32, #tpu.memory_space<vmem>>, vector<4x16x8xf32>
    tpu.vector_store %arg10[%c0_29, %c0_30, %c0_31], %44 {strides = array<i32>} : memref<4x16x8xf32, #tpu.memory_space<vmem>>, vector<4x16x8xf32>,
    %c0_32 = arith.constant 0 : index
    %c0_33 = arith.constant 0 : index
    %c0_34 = arith.constant 0 : index
    %46 = vector.load %arg8[%c0_32, %c0_33, %c0_34] : memref<4x16x1xf32, #tpu.memory_space<vmem>>, vector<4x16x1xf32>
    tpu.vector_store %arg8[%c0_32, %c0_33, %c0_34], %27 {strides = array<i32>} : memref<4x16x1xf32, #tpu.memory_space<vmem>>, vector<4x16x1xf32>,
    %c0_i32_35 = arith.constant 0 : i32
    %47 = arith.cmpi eq, %arg2, %c0_i32_35 : i32
    %48 = arith.extui %47 : i1 to i32
    %c0_i32_36 = arith.constant 0 : i32
    %49 = arith.cmpi ne, %48, %c0_i32_36 : i32
    scf.if %49 {
      %c0_37 = arith.constant 0 : index
      %c0_38 = arith.constant 0 : index
      %c0_39 = arith.constant 0 : index
      %50 = vector.load %arg10[%c0_37, %c0_38, %c0_39] : memref<4x16x8xf32, #tpu.memory_space<vmem>>, vector<4x16x8xf32>
      %c0_40 = arith.constant 0 : index
      %c0_41 = arith.constant 0 : index
      %c0_42 = arith.constant 0 : index
      %51 = vector.load %arg9[%c0_40, %c0_41, %c0_42] : memref<4x16x1xf32, #tpu.memory_space<vmem>>, vector<4x16x1xf32>
      %52 = tpu.reciprocal %51 : vector<4x16x1xf32> -> vector<4x16x1xf32>
      %53 = vector.broadcast %52 : vector<4x16x1xf32> to vector<4x16x8xf32>
      %54 = arith.mulf %50, %53 : vector<4x16x8xf32>
      %55 = vector.extract_strided_slice %54 {offsets = [0, 0, 0], sizes = [1, 16, 8], strides = [1, 1, 1]} : vector<4x16x8xf32> to vector<1x16x8xf32>
      %56 = vector.shape_cast %55 : vector<1x16x8xf32> to vector<16x8xf32>
      %57 = vector.extract_strided_slice %54 {offsets = [1, 0, 0], sizes = [1, 16, 8], strides = [1, 1, 1]} : vector<4x16x8xf32> to vector<1x16x8xf32>
      %58 = vector.shape_cast %57 : vector<1x16x8xf32> to vector<16x8xf32>
      %59 = vector.extract_strided_slice %54 {offsets = [2, 0, 0], sizes = [1, 16, 8], strides = [1, 1, 1]} : vector<4x16x8xf32> to vector<1x16x8xf32>
      %60 = vector.shape_cast %59 : vector<1x16x8xf32> to vector<16x8xf32>
      %61 = vector.extract_strided_slice %54 {offsets = [3, 0, 0], sizes = [1, 16, 8], strides = [1, 1, 1]} : vector<4x16x8xf32> to vector<1x16x8xf32>
      %62 = vector.shape_cast %61 : vector<1x16x8xf32> to vector<16x8xf32>
      %63 = tpu.concatenate %56, %58, %60, %62 in 1 : vector<16x8xf32>, vector<16x8xf32>, vector<16x8xf32>, vector<16x8xf32> -> vector<16x32xf32>
      %64 = arith.truncf %63 : vector<16x32xf32> to vector<16x32xbf16>
      %c0_43 = arith.constant 0 : index
      %c0_44 = arith.constant 0 : index
      %c0_45 = arith.constant 0 : index
      %65 = vector.load %arg7[%c0_43, %c0_44, %c0_45] : memref<1x16x32xbf16, #tpu.memory_space<vmem>>, vector<1x16x32xbf16>
      %66 = vector.shape_cast %65 : vector<1x16x32xbf16> to vector<16x32xbf16>
      %67 = vector.shape_cast %64 : vector<16x32xbf16> to vector<1x16x32xbf16>
      tpu.vector_store %arg7[%c0_43, %c0_44, %c0_45], %67 {strides = array<i32>} : memref<1x16x32xbf16, #tpu.memory_space<vmem>>, vector<1x16x32xbf16>,
    } else {
    }
    return
  }
  func.func @transform_0(%arg0: i32, %arg1: i32, %arg2: i32, %arg3: memref<2xi32, #tpu.memory_space<smem>>) -> (i32, i32, i32, i32) {
    %c0_i32 = arith.constant 0 : i32
    %c0_i32_0 = arith.constant 0 : i32
    %c0_i32_1 = arith.constant 0 : i32
    return %arg0, %c0_i32, %arg1, %c0_i32_0 : i32, i32, i32, i32
  }
  func.func @transform_1(%arg0: i32, %arg1: i32, %arg2: i32, %arg3: memref<2xi32, #tpu.memory_space<smem>>) -> (i32, i32, i32, i32) {
    %c0_i32 = arith.constant 0 : i32
    %c0_i32_0 = arith.constant 0 : i32
    %c0_i32_1 = arith.constant 0 : i32
    return %arg0, %c0_i32, %arg2, %c0_i32_0 : i32, i32, i32, i32
  }
  func.func @transform_2(%arg0: i32, %arg1: i32, %arg2: i32, %arg3: memref<2xi32, #tpu.memory_space<smem>>) -> (i32, i32, i32, i32) {
    %c0_i32 = arith.constant 0 : i32
    %c0_i32_0 = arith.constant 0 : i32
    %c0_i32_1 = arith.constant 0 : i32
    return %arg0, %c0_i32, %arg2, %c0_i32_0 : i32, i32, i32, i32
  }
  func.func @transform_3(%arg0: i32, %arg1: i32, %arg2: i32, %arg3: memref<2xi32, #tpu.memory_space<smem>>) -> (i32, i32, i32) {
    %c0_i32 = arith.constant 0 : i32
    %c0_i32_0 = arith.constant 0 : i32
    return %arg0, %arg1, %c0_i32 : i32, i32, i32
  }
}

module attributes {stable_mosaic.version = 11 : i64} {
  func.func @_mm_bias_act_kernel(%arg0: i32, %arg1: i32, %arg2: i32, %arg3: memref<32x32xbf16, #tpu.memory_space<vmem>>, %arg4: memref<32x64xbf16, #tpu.memory_space<vmem>>, %arg5: memref<1x64xf32, #tpu.memory_space<vmem>>, %arg6: memref<32x64xbf16, #tpu.memory_space<vmem>>, %arg7: memref<32x64xf32, #tpu.memory_space<vmem>>) attributes {dimension_semantics = [#tpu.dimension_semantics<parallel>, #tpu.dimension_semantics<parallel>, #tpu.dimension_semantics<arbitrary>], iteration_bounds = array<i64: 1, 1, 1>, scalar_prefetch = 0 : i64, scratch_operands = 1 : i64, tpu.core_type = #tpu.core_type<tc>, window_params = [{transform_indices = @transform_0, window_bounds = array<i64: 32, 32>}, {transform_indices = @transform_1, window_bounds = array<i64: 32, 64>}, {transform_indices = @transform_2, window_bounds = array<i64: 1, 64>}, {transform_indices = @transform_3, window_bounds = array<i64: 32, 64>}]} {
    %c0_i32 = arith.constant 0 : i32
    %0 = arith.cmpi eq, %arg2, %c0_i32 : i32
    %1 = arith.extui %0 : i1 to i32
    %c0_i32_0 = arith.constant 0 : i32
    %2 = arith.cmpi ne, %1, %c0_i32_0 : i32
    scf.if %2 {
      %cst_10 = arith.constant 0.000000e+00 : f32
      %12 = vector.broadcast %cst_10 : f32 to vector<32x64xf32>
      %c0_11 = arith.constant 0 : index
      %c0_12 = arith.constant 0 : index
      %13 = vector.load %arg7[%c0_11, %c0_12] : memref<32x64xf32, #tpu.memory_space<vmem>>, vector<32x64xf32>
      tpu.vector_store %arg7[%c0_11, %c0_12], %12 {strides = array<i32>} : memref<32x64xf32, #tpu.memory_space<vmem>>, vector<32x64xf32>,
    } else {
    }
    %c0 = arith.constant 0 : index
    %c0_1 = arith.constant 0 : index
    %3 = vector.load %arg7[%c0, %c0_1] : memref<32x64xf32, #tpu.memory_space<vmem>>, vector<32x64xf32>
    %c0_2 = arith.constant 0 : index
    %c0_3 = arith.constant 0 : index
    %4 = vector.load %arg3[%c0_2, %c0_3] : memref<32x32xbf16, #tpu.memory_space<vmem>>, vector<32x32xbf16>
    %c0_4 = arith.constant 0 : index
    %c0_5 = arith.constant 0 : index
    %5 = vector.load %arg4[%c0_4, %c0_5] : memref<32x64xbf16, #tpu.memory_space<vmem>>, vector<32x64xbf16>
    %cst = arith.constant dense<0.000000e+00> : vector<32x64xf32>
    %6 = tpu.matmul %4, %5, %cst {dimension_numbers = #tpu.dot_dimension_numbers<[1], [0], [0], [1], [0, 0, 1, 1], [], []>} : vector<32x32xbf16>, vector<32x64xbf16>, vector<32x64xf32> -> vector<32x64xf32>
    %7 = arith.addf %3, %6 : vector<32x64xf32>
    %c0_6 = arith.constant 0 : index
    %c0_7 = arith.constant 0 : index
    %8 = vector.load %arg7[%c0_6, %c0_7] : memref<32x64xf32, #tpu.memory_space<vmem>>, vector<32x64xf32>
    tpu.vector_store %arg7[%c0_6, %c0_7], %7 {strides = array<i32>} : memref<32x64xf32, #tpu.memory_space<vmem>>, vector<32x64xf32>,
    %c0_i32_8 = arith.constant 0 : i32
    %9 = arith.cmpi eq, %arg2, %c0_i32_8 : i32
    %10 = arith.extui %9 : i1 to i32
    %c0_i32_9 = arith.constant 0 : i32
    %11 = arith.cmpi ne, %10, %c0_i32_9 : i32
    scf.if %11 {
      %c0_10 = arith.constant 0 : index
      %c0_11 = arith.constant 0 : index
      %12 = vector.load %arg7[%c0_10, %c0_11] : memref<32x64xf32, #tpu.memory_space<vmem>>, vector<32x64xf32>
      %c0_12 = arith.constant 0 : index
      %c0_13 = arith.constant 0 : index
      %13 = vector.load %arg5[%c0_12, %c0_13] : memref<1x64xf32, #tpu.memory_space<vmem>>, vector<1x64xf32>
      %14 = vector.broadcast %13 : vector<1x64xf32> to vector<32x64xf32>
      %15 = arith.addf %12, %14 : vector<32x64xf32>
      %16 = arith.truncf %15 : vector<32x64xf32> to vector<32x64xbf16>
      %c0_14 = arith.constant 0 : index
      %c0_15 = arith.constant 0 : index
      %17 = vector.load %arg6[%c0_14, %c0_15] : memref<32x64xbf16, #tpu.memory_space<vmem>>, vector<32x64xbf16>
      tpu.vector_store %arg6[%c0_14, %c0_15], %16 {strides = array<i32>} : memref<32x64xbf16, #tpu.memory_space<vmem>>, vector<32x64xbf16>,
    } else {
    }
    return
  }
  func.func @transform_0(%arg0: i32, %arg1: i32, %arg2: i32) -> (i32, i32) {
    %c0_i32 = arith.constant 0 : i32
    return %arg0, %arg2 : i32, i32
  }
  func.func @transform_1(%arg0: i32, %arg1: i32, %arg2: i32) -> (i32, i32) {
    %c0_i32 = arith.constant 0 : i32
    return %arg2, %arg1 : i32, i32
  }
  func.func @transform_2(%arg0: i32, %arg1: i32, %arg2: i32) -> (i32, i32) {
    %c0_i32 = arith.constant 0 : i32
    %c0_i32_0 = arith.constant 0 : i32
    return %c0_i32, %arg1 : i32, i32
  }
  func.func @transform_3(%arg0: i32, %arg1: i32, %arg2: i32) -> (i32, i32) {
    %c0_i32 = arith.constant 0 : i32
    return %arg0, %arg1 : i32, i32
  }
}

module attributes {stable_mosaic.version = 11 : i64} {
  func.func @_mm_res_ln_kernel(%arg0: i32, %arg1: i32, %arg2: memref<32x64xbf16, #tpu.memory_space<vmem>>, %arg3: memref<64x32xbf16, #tpu.memory_space<vmem>>, %arg4: memref<1x32xf32, #tpu.memory_space<vmem>>, %arg5: memref<32x32xbf16, #tpu.memory_space<vmem>>, %arg6: memref<1x32xf32, #tpu.memory_space<vmem>>, %arg7: memref<1x32xf32, #tpu.memory_space<vmem>>, %arg8: memref<32x32xbf16, #tpu.memory_space<vmem>>, %arg9: memref<32x32xf32, #tpu.memory_space<vmem>>) attributes {dimension_semantics = [#tpu.dimension_semantics<parallel>, #tpu.dimension_semantics<arbitrary>], iteration_bounds = array<i64: 1, 1>, scalar_prefetch = 0 : i64, scratch_operands = 1 : i64, tpu.core_type = #tpu.core_type<tc>, window_params = [{transform_indices = @transform_0, window_bounds = array<i64: 32, 64>}, {transform_indices = @transform_1, window_bounds = array<i64: 64, 32>}, {pipeline_mode = #tpu.pipeline_mode<synchronous>, transform_indices = @transform_2, window_bounds = array<i64: 1, 32>}, {transform_indices = @transform_3, window_bounds = array<i64: 32, 32>}, {pipeline_mode = #tpu.pipeline_mode<synchronous>, transform_indices = @transform_4, window_bounds = array<i64: 1, 32>}, {pipeline_mode = #tpu.pipeline_mode<synchronous>, transform_indices = @transform_5, window_bounds = array<i64: 1, 32>}, {transform_indices = @transform_6, window_bounds = array<i64: 32, 32>}]} {
    %c0_i32 = arith.constant 0 : i32
    %0 = arith.cmpi eq, %arg1, %c0_i32 : i32
    %1 = arith.extui %0 : i1 to i32
    %c0_i32_0 = arith.constant 0 : i32
    %2 = arith.cmpi ne, %1, %c0_i32_0 : i32
    scf.if %2 {
      %cst_10 = arith.constant 0.000000e+00 : f32
      %12 = vector.broadcast %cst_10 : f32 to vector<32x32xf32>
      %c0_11 = arith.constant 0 : index
      %c0_12 = arith.constant 0 : index
      %13 = vector.load %arg9[%c0_11, %c0_12] : memref<32x32xf32, #tpu.memory_space<vmem>>, vector<32x32xf32>
      tpu.vector_store %arg9[%c0_11, %c0_12], %12 {strides = array<i32>} : memref<32x32xf32, #tpu.memory_space<vmem>>, vector<32x32xf32>,
    } else {
    }
    %c0 = arith.constant 0 : index
    %c0_1 = arith.constant 0 : index
    %3 = vector.load %arg9[%c0, %c0_1] : memref<32x32xf32, #tpu.memory_space<vmem>>, vector<32x32xf32>
    %c0_2 = arith.constant 0 : index
    %c0_3 = arith.constant 0 : index
    %4 = vector.load %arg2[%c0_2, %c0_3] : memref<32x64xbf16, #tpu.memory_space<vmem>>, vector<32x64xbf16>
    %c0_4 = arith.constant 0 : index
    %c0_5 = arith.constant 0 : index
    %5 = vector.load %arg3[%c0_4, %c0_5] : memref<64x32xbf16, #tpu.memory_space<vmem>>, vector<64x32xbf16>
    %cst = arith.constant dense<0.000000e+00> : vector<32x32xf32>
    %6 = tpu.matmul %4, %5, %cst {dimension_numbers = #tpu.dot_dimension_numbers<[1], [0], [0], [1], [0, 0, 1, 1], [], []>} : vector<32x64xbf16>, vector<64x32xbf16>, vector<32x32xf32> -> vector<32x32xf32>
    %7 = arith.addf %3, %6 : vector<32x32xf32>
    %c0_6 = arith.constant 0 : index
    %c0_7 = arith.constant 0 : index
    %8 = vector.load %arg9[%c0_6, %c0_7] : memref<32x32xf32, #tpu.memory_space<vmem>>, vector<32x32xf32>
    tpu.vector_store %arg9[%c0_6, %c0_7], %7 {strides = array<i32>} : memref<32x32xf32, #tpu.memory_space<vmem>>, vector<32x32xf32>,
    %c0_i32_8 = arith.constant 0 : i32
    %9 = arith.cmpi eq, %arg1, %c0_i32_8 : i32
    %10 = arith.extui %9 : i1 to i32
    %c0_i32_9 = arith.constant 0 : i32
    %11 = arith.cmpi ne, %10, %c0_i32_9 : i32
    scf.if %11 {
      %c0_10 = arith.constant 0 : index
      %c0_11 = arith.constant 0 : index
      %12 = vector.load %arg9[%c0_10, %c0_11] : memref<32x32xf32, #tpu.memory_space<vmem>>, vector<32x32xf32>
      %c0_12 = arith.constant 0 : index
      %c0_13 = arith.constant 0 : index
      %13 = vector.load %arg4[%c0_12, %c0_13] : memref<1x32xf32, #tpu.memory_space<vmem>>, vector<1x32xf32>
      %14 = vector.broadcast %13 : vector<1x32xf32> to vector<32x32xf32>
      %15 = arith.addf %12, %14 : vector<32x32xf32>
      %c0_14 = arith.constant 0 : index
      %c0_15 = arith.constant 0 : index
      %16 = vector.load %arg5[%c0_14, %c0_15] : memref<32x32xbf16, #tpu.memory_space<vmem>>, vector<32x32xbf16>
      %17 = arith.extf %16 : vector<32x32xbf16> to vector<32x32xf32>
      %18 = arith.addf %15, %17 : vector<32x32xf32>
      %cst_16 = arith.constant dense<0.000000e+00> : vector<32xf32>
      %19 = vector.multi_reduction <add>, %18, %cst_16 [1] : vector<32x32xf32> to vector<32xf32>
      %20 = vector.shape_cast %19 : vector<32xf32> to vector<32x1xf32>
      %cst_17 = arith.constant 3.200000e+01 : f32
      %21 = vector.broadcast %cst_17 : f32 to vector<32x1xf32>
      %22 = arith.divf %20, %21 : vector<32x1xf32>
      %23 = vector.broadcast %22 : vector<32x1xf32> to vector<32x32xf32>
      %24 = arith.subf %18, %23 : vector<32x32xf32>
      %25 = arith.mulf %24, %24 : vector<32x32xf32>
      %cst_18 = arith.constant dense<0.000000e+00> : vector<32xf32>
      %26 = vector.multi_reduction <add>, %25, %cst_18 [1] : vector<32x32xf32> to vector<32xf32>
      %27 = vector.shape_cast %26 : vector<32xf32> to vector<32x1xf32>
      %cst_19 = arith.constant 3.200000e+01 : f32
      %28 = vector.broadcast %cst_19 : f32 to vector<32x1xf32>
      %29 = arith.divf %27, %28 : vector<32x1xf32>
      %cst_20 = arith.constant 9.99999996E-13 : f32
      %30 = vector.broadcast %cst_20 : f32 to vector<32x1xf32>
      %31 = arith.addf %29, %30 : vector<32x1xf32>
      %32 = math.rsqrt %31 : vector<32x1xf32>
      %33 = vector.broadcast %32 : vector<32x1xf32> to vector<32x32xf32>
      %34 = arith.mulf %24, %33 : vector<32x32xf32>
      %c0_21 = arith.constant 0 : index
      %c0_22 = arith.constant 0 : index
      %35 = vector.load %arg6[%c0_21, %c0_22] : memref<1x32xf32, #tpu.memory_space<vmem>>, vector<1x32xf32>
      %36 = vector.broadcast %35 : vector<1x32xf32> to vector<32x32xf32>
      %37 = arith.mulf %34, %36 : vector<32x32xf32>
      %c0_23 = arith.constant 0 : index
      %c0_24 = arith.constant 0 : index
      %38 = vector.load %arg7[%c0_23, %c0_24] : memref<1x32xf32, #tpu.memory_space<vmem>>, vector<1x32xf32>
      %39 = vector.broadcast %38 : vector<1x32xf32> to vector<32x32xf32>
      %40 = arith.addf %37, %39 : vector<32x32xf32>
      %41 = arith.truncf %40 : vector<32x32xf32> to vector<32x32xbf16>
      %c0_25 = arith.constant 0 : index
      %c0_26 = arith.constant 0 : index
      %42 = vector.load %arg8[%c0_25, %c0_26] : memref<32x32xbf16, #tpu.memory_space<vmem>>, vector<32x32xbf16>
      tpu.vector_store %arg8[%c0_25, %c0_26], %41 {strides = array<i32>} : memref<32x32xbf16, #tpu.memory_space<vmem>>, vector<32x32xbf16>,
    } else {
    }
    return
  }
  func.func @transform_0(%arg0: i32, %arg1: i32) -> (i32, i32) {
    %c0_i32 = arith.constant 0 : i32
    return %arg0, %arg1 : i32, i32
  }
  func.func @transform_1(%arg0: i32, %arg1: i32) -> (i32, i32) {
    %c0_i32 = arith.constant 0 : i32
    %c0_i32_0 = arith.constant 0 : i32
    return %arg1, %c0_i32 : i32, i32
  }
  func.func @transform_2(%arg0: i32, %arg1: i32) -> (i32, i32) {
    %c0_i32 = arith.constant 0 : i32
    %c0_i32_0 = arith.constant 0 : i32
    %c0_i32_1 = arith.constant 0 : i32
    return %c0_i32, %c0_i32_0 : i32, i32
  }
  func.func @transform_3(%arg0: i32, %arg1: i32) -> (i32, i32) {
    %c0_i32 = arith.constant 0 : i32
    %c0_i32_0 = arith.constant 0 : i32
    return %arg0, %c0_i32 : i32, i32
  }
  func.func @transform_4(%arg0: i32, %arg1: i32) -> (i32, i32) {
    %c0_i32 = arith.constant 0 : i32
    %c0_i32_0 = arith.constant 0 : i32
    %c0_i32_1 = arith.constant 0 : i32
    return %c0_i32, %c0_i32_0 : i32, i32
  }
  func.func @transform_5(%arg0: i32, %arg1: i32) -> (i32, i32) {
    %c0_i32 = arith.constant 0 : i32
    %c0_i32_0 = arith.constant 0 : i32
    %c0_i32_1 = arith.constant 0 : i32
    return %c0_i32, %c0_i32_0 : i32, i32
  }
  func.func @transform_6(%arg0: i32, %arg1: i32) -> (i32, i32) {
    %c0_i32 = arith.constant 0 : i32
    %c0_i32_0 = arith.constant 0 : i32
    return %arg0, %c0_i32 : i32, i32
  }
}

module attributes {stable_mosaic.version = 11 : i64} {
  func.func @_mm_bias_act_kernel(%arg0: i32, %arg1: i32, %arg2: i32, %arg3: memref<16x32xbf16, #tpu.memory_space<vmem>>, %arg4: memref<32x96xbf16, #tpu.memory_space<vmem>>, %arg5: memref<1x96xf32, #tpu.memory_space<vmem>>, %arg6: memref<16x96xbf16, #tpu.memory_space<vmem>>, %arg7: memref<16x96xf32, #tpu.memory_space<vmem>>) attributes {dimension_semantics = [#tpu.dimension_semantics<parallel>, #tpu.dimension_semantics<parallel>, #tpu.dimension_semantics<arbitrary>], iteration_bounds = array<i64: 1, 1, 1>, scalar_prefetch = 0 : i64, scratch_operands = 1 : i64, tpu.core_type = #tpu.core_type<tc>, window_params = [{transform_indices = @transform_0, window_bounds = array<i64: 16, 32>}, {transform_indices = @transform_1, window_bounds = array<i64: 32, 96>}, {transform_indices = @transform_2, window_bounds = array<i64: 1, 96>}, {transform_indices = @transform_3, window_bounds = array<i64: 16, 96>}]} {
    %c0_i32 = arith.constant 0 : i32
    %0 = arith.cmpi eq, %arg2, %c0_i32 : i32
    %1 = arith.extui %0 : i1 to i32
    %c0_i32_0 = arith.constant 0 : i32
    %2 = arith.cmpi ne, %1, %c0_i32_0 : i32
    scf.if %2 {
      %cst_10 = arith.constant 0.000000e+00 : f32
      %12 = vector.broadcast %cst_10 : f32 to vector<16x96xf32>
      %c0_11 = arith.constant 0 : index
      %c0_12 = arith.constant 0 : index
      %13 = vector.load %arg7[%c0_11, %c0_12] : memref<16x96xf32, #tpu.memory_space<vmem>>, vector<16x96xf32>
      tpu.vector_store %arg7[%c0_11, %c0_12], %12 {strides = array<i32>} : memref<16x96xf32, #tpu.memory_space<vmem>>, vector<16x96xf32>,
    } else {
    }
    %c0 = arith.constant 0 : index
    %c0_1 = arith.constant 0 : index
    %3 = vector.load %arg7[%c0, %c0_1] : memref<16x96xf32, #tpu.memory_space<vmem>>, vector<16x96xf32>
    %c0_2 = arith.constant 0 : index
    %c0_3 = arith.constant 0 : index
    %4 = vector.load %arg3[%c0_2, %c0_3] : memref<16x32xbf16, #tpu.memory_space<vmem>>, vector<16x32xbf16>
    %c0_4 = arith.constant 0 : index
    %c0_5 = arith.constant 0 : index
    %5 = vector.load %arg4[%c0_4, %c0_5] : memref<32x96xbf16, #tpu.memory_space<vmem>>, vector<32x96xbf16>
    %cst = arith.constant dense<0.000000e+00> : vector<16x96xf32>
    %6 = tpu.matmul %4, %5, %cst {dimension_numbers = #tpu.dot_dimension_numbers<[1], [0], [0], [1], [0, 0, 1, 1], [], []>} : vector<16x32xbf16>, vector<32x96xbf16>, vector<16x96xf32> -> vector<16x96xf32>
    %7 = arith.addf %3, %6 : vector<16x96xf32>
    %c0_6 = arith.constant 0 : index
    %c0_7 = arith.constant 0 : index
    %8 = vector.load %arg7[%c0_6, %c0_7] : memref<16x96xf32, #tpu.memory_space<vmem>>, vector<16x96xf32>
    tpu.vector_store %arg7[%c0_6, %c0_7], %7 {strides = array<i32>} : memref<16x96xf32, #tpu.memory_space<vmem>>, vector<16x96xf32>,
    %c0_i32_8 = arith.constant 0 : i32
    %9 = arith.cmpi eq, %arg2, %c0_i32_8 : i32
    %10 = arith.extui %9 : i1 to i32
    %c0_i32_9 = arith.constant 0 : i32
    %11 = arith.cmpi ne, %10, %c0_i32_9 : i32
    scf.if %11 {
      %c0_10 = arith.constant 0 : index
      %c0_11 = arith.constant 0 : index
      %12 = vector.load %arg7[%c0_10, %c0_11] : memref<16x96xf32, #tpu.memory_space<vmem>>, vector<16x96xf32>
      %c0_12 = arith.constant 0 : index
      %c0_13 = arith.constant 0 : index
      %13 = vector.load %arg5[%c0_12, %c0_13] : memref<1x96xf32, #tpu.memory_space<vmem>>, vector<1x96xf32>
      %14 = vector.broadcast %13 : vector<1x96xf32> to vector<16x96xf32>
      %15 = arith.addf %12, %14 : vector<16x96xf32>
      %16 = arith.truncf %15 : vector<16x96xf32> to vector<16x96xbf16>
      %c0_14 = arith.constant 0 : index
      %c0_15 = arith.constant 0 : index
      %17 = vector.load %arg6[%c0_14, %c0_15] : memref<16x96xbf16, #tpu.memory_space<vmem>>, vector<16x96xbf16>
      tpu.vector_store %arg6[%c0_14, %c0_15], %16 {strides = array<i32>} : memref<16x96xbf16, #tpu.memory_space<vmem>>, vector<16x96xbf16>,
    } else {
    }
    return
  }
  func.func @transform_0(%arg0: i32, %arg1: i32, %arg2: i32) -> (i32, i32) {
    %c0_i32 = arith.constant 0 : i32
    return %arg0, %arg2 : i32, i32
  }
  func.func @transform_1(%arg0: i32, %arg1: i32, %arg2: i32) -> (i32, i32) {
    %c0_i32 = arith.constant 0 : i32
    return %arg2, %arg1 : i32, i32
  }
  func.func @transform_2(%arg0: i32, %arg1: i32, %arg2: i32) -> (i32, i32) {
    %c0_i32 = arith.constant 0 : i32
    %c0_i32_0 = arith.constant 0 : i32
    return %c0_i32, %arg1 : i32, i32
  }
  func.func @transform_3(%arg0: i32, %arg1: i32, %arg2: i32) -> (i32, i32) {
    %c0_i32 = arith.constant 0 : i32
    return %arg0, %arg1 : i32, i32
  }
}

module attributes {stable_mosaic.version = 11 : i64} {
  func.func @_mha_flash_kernel(%arg0: i32, %arg1: i32, %arg2: i32, %arg3: memref<2xi32, #tpu.memory_space<smem>>, %arg4: memref<1x4x8x8xbf16, #tpu.memory_space<vmem>>, %arg5: memref<1x4x8x8xbf16, #tpu.memory_space<vmem>>, %arg6: memref<1x4x8x8xbf16, #tpu.memory_space<vmem>>, %arg7: memref<1x8x32xbf16, #tpu.memory_space<vmem>>, %arg8: memref<4x8x1xf32, #tpu.memory_space<vmem>>, %arg9: memref<4x8x1xf32, #tpu.memory_space<vmem>>, %arg10: memref<4x8x8xf32, #tpu.memory_space<vmem>>) attributes {dimension_semantics = [#tpu.dimension_semantics<parallel>, #tpu.dimension_semantics<parallel>, #tpu.dimension_semantics<arbitrary>], iteration_bounds = array<i64: 2, 1, 1>, scalar_prefetch = 1 : i64, scratch_operands = 3 : i64, tpu.core_type = #tpu.core_type<tc>, window_params = [{transform_indices = @transform_0, window_bounds = array<i64: 1, 4, 8, 8>}, {transform_indices = @transform_1, window_bounds = array<i64: 1, 4, 8, 8>}, {transform_indices = @transform_2, window_bounds = array<i64: 1, 4, 8, 8>}, {transform_indices = @transform_3, window_bounds = array<i64: 1, 8, 32>}]} {
    %c0_i32 = arith.constant 0 : i32
    %0 = arith.cmpi eq, %arg2, %c0_i32 : i32
    %1 = arith.extui %0 : i1 to i32
    %c0_i32_0 = arith.constant 0 : i32
    %2 = arith.cmpi ne, %1, %c0_i32_0 : i32
    scf.if %2 {
      %cst_38 = arith.constant 0xFF800000 : f32
      %56 = vector.broadcast %cst_38 : f32 to vector<4x8x1xf32>
      %c0_39 = arith.constant 0 : index
      %c0_40 = arith.constant 0 : index
      %c0_41 = arith.constant 0 : index
      %57 = vector.load %arg8[%c0_39, %c0_40, %c0_41] : memref<4x8x1xf32, #tpu.memory_space<vmem>>, vector<4x8x1xf32>
      tpu.vector_store %arg8[%c0_39, %c0_40, %c0_41], %56 {strides = array<i32>} : memref<4x8x1xf32, #tpu.memory_space<vmem>>, vector<4x8x1xf32>,
      %cst_42 = arith.constant 0.000000e+00 : f32
      %58 = vector.broadcast %cst_42 : f32 to vector<4x8x1xf32>
      %c0_43 = arith.constant 0 : index
      %c0_44 = arith.constant 0 : index
      %c0_45 = arith.constant 0 : index
      %59 = vector.load %arg9[%c0_43, %c0_44, %c0_45] : memref<4x8x1xf32, #tpu.memory_space<vmem>>, vector<4x8x1xf32>
      tpu.vector_store %arg9[%c0_43, %c0_44, %c0_45], %58 {strides = array<i32>} : memref<4x8x1xf32, #tpu.memory_space<vmem>>, vector<4x8x1xf32>,
      %cst_46 = arith.constant 0.000000e+00 : f32
      %60 = vector.broadcast %cst_46 : f32 to vector<4x8x8xf32>
      %c0_47 = arith.constant 0 : index
      %c0_48 = arith.constant 0 : index
      %c0_49 = arith.constant 0 : index
      %61 = vector.load %arg10[%c0_47, %c0_48, %c0_49] : memref<4x8x8xf32, #tpu.memory_space<vmem>>, vector<4x8x8xf32>
      tpu.vector_store %arg10[%c0_47, %c0_48, %c0_49], %60 {strides = array<i32>} : memref<4x8x8xf32, #tpu.memory_space<vmem>>, vector<4x8x8xf32>,
    } else {
    }
    %c0 = arith.constant 0 : index
    %c0_1 = arith.constant 0 : index
    %c0_2 = arith.constant 0 : index
    %c0_3 = arith.constant 0 : index
    %3 = vector.load %arg4[%c0, %c0_1, %c0_2, %c0_3] : memref<1x4x8x8xbf16, #tpu.memory_space<vmem>>, vector<1x4x8x8xbf16>
    %4 = vector.shape_cast %3 : vector<1x4x8x8xbf16> to vector<4x8x8xbf16>
    %c0_4 = arith.constant 0 : index
    %c0_5 = arith.constant 0 : index
    %c0_6 = arith.constant 0 : index
    %c0_7 = arith.constant 0 : index
    %5 = vector.load %arg5[%c0_4, %c0_5, %c0_6, %c0_7] : memref<1x4x8x8xbf16, #tpu.memory_space<vmem>>, vector<1x4x8x8xbf16>
    %6 = vector.shape_cast %5 : vector<1x4x8x8xbf16> to vector<4x8x8xbf16>
    %c0_8 = arith.constant 0 : index
    %c0_9 = arith.constant 0 : index
    %c0_10 = arith.constant 0 : index
    %c0_11 = arith.constant 0 : index
    %7 = vector.load %arg6[%c0_8, %c0_9, %c0_10, %c0_11] : memref<1x4x8x8xbf16, #tpu.memory_space<vmem>>, vector<1x4x8x8xbf16>
    %8 = vector.shape_cast %7 : vector<1x4x8x8xbf16> to vector<4x8x8xbf16>
    %cst = arith.constant dense<0.000000e+00> : vector<4x8x8xf32>
    %9 = tpu.matmul %4, %6, %cst {dimension_numbers = #tpu.dot_dimension_numbers<[2], [2], [1], [1], [0, 0, 0, 1, 1, 1], [0], [0]>} : vector<4x8x8xbf16>, vector<4x8x8xbf16>, vector<4x8x8xf32> -> vector<4x8x8xf32>
    %cst_12 = arith.constant 0.353553385 : f32
    %10 = vector.broadcast %cst_12 : f32 to vector<4x8x8xf32>
    %11 = arith.mulf %9, %10 : vector<4x8x8xf32>
    %12 = arith.index_cast %arg0 : i32 to index
    %13 = memref.load %arg3[%12] : memref<2xi32, #tpu.memory_space<smem>>
    %14 = tpu.iota {dimensions = array<i32: 2>} : vector<1x8x8xi32>
    %c8_i32 = arith.constant 8 : i32
    %15 = arith.muli %arg2, %c8_i32 : i32
    %16 = vector.broadcast %15 : i32 to vector<1x8x8xi32>
    %17 = arith.addi %14, %16 : vector<1x8x8xi32>
    %18 = vector.broadcast %13 : i32 to vector<1x8x8xi32>
    %19 = arith.cmpi slt, %17, %18 : vector<1x8x8xi32>
    %20 = tpu.iota {dimensions = array<i32: 1>} : vector<1x8x8xi32>
    %c8_i32_13 = arith.constant 8 : i32
    %21 = arith.muli %arg1, %c8_i32_13 : i32
    %22 = vector.broadcast %21 : i32 to vector<1x8x8xi32>
    %23 = arith.addi %20, %22 : vector<1x8x8xi32>
    %24 = arith.cmpi sle, %17, %23 : vector<1x8x8xi32>
    %25 = arith.andi %19, %24 : vector<1x8x8xi1>
    %cst_14 = arith.constant -1.000000e+09 : f32
    %26 = vector.shape_cast %25 : vector<1x8x8xi1> to vector<1x8x8xi1>
    %27 = vector.broadcast %26 : vector<1x8x8xi1> to vector<4x8x8xi1>
    %28 = vector.broadcast %cst_14 : f32 to vector<4x8x8xf32>
    %29 = arith.select %27, %11, %28 : vector<4x8x8xi1>, vector<4x8x8xf32>
    %c0_15 = arith.constant 0 : index
    %c0_16 = arith.constant 0 : index
    %c0_17 = arith.constant 0 : index
    %30 = vector.load %arg8[%c0_15, %c0_16, %c0_17] : memref<4x8x1xf32, #tpu.memory_space<vmem>>, vector<4x8x1xf32>
    %cst_18 = arith.constant dense<0xFF800000> : vector<4x8xf32>
    %31 = vector.multi_reduction <maximumf>, %29, %cst_18 [2] : vector<4x8x8xf32> to vector<4x8xf32>
    %32 = vector.shape_cast %31 : vector<4x8xf32> to vector<4x8x1xf32>
    %33 = arith.maximumf %30, %32 : vector<4x8x1xf32>
    %34 = arith.subf %30, %33 : vector<4x8x1xf32>
    %35 = math.exp %34 : vector<4x8x1xf32>
    %36 = vector.broadcast %33 : vector<4x8x1xf32> to vector<4x8x8xf32>
    %37 = arith.subf %29, %36 : vector<4x8x8xf32>
    %38 = math.exp %37 : vector<4x8x8xf32>
    %c0_19 = arith.constant 0 : index
    %c0_20 = arith.constant 0 : index
    %c0_21 = arith.constant 0 : index
    %39 = vector.load %arg9[%c0_19, %c0_20, %c0_21] : memref<4x8x1xf32, #tpu.memory_space<vmem>>, vector<4x8x1xf32>
    %40 = arith.mulf %35, %39 : vector<4x8x1xf32>
    %cst_22 = arith.constant dense<0.000000e+00> : vector<4x8xf32>
    %41 = vector.multi_reduction <add>, %38, %cst_22 [2] : vector<4x8x8xf32> to vector<4x8xf32>
    %42 = vector.shape_cast %41 : vector<4x8xf32> to vector<4x8x1xf32>
    %43 = arith.addf %40, %42 : vector<4x8x1xf32>
    %c0_23 = arith.constant 0 : index
    %c0_24 = arith.constant 0 : index
    %c0_25 = arith.constant 0 : index
    %44 = vector.load %arg9[%c0_23, %c0_24, %c0_25] : memref<4x8x1xf32, #tpu.memory_space<vmem>>, vector<4x8x1xf32>
    tpu.vector_store %arg9[%c0_23, %c0_24, %c0_25], %43 {strides = array<i32>} : memref<4x8x1xf32, #tpu.memory_space<vmem>>, vector<4x8x1xf32>,
    %c0_26 = arith.constant 0 : index
    %c0_27 = arith.constant 0 : index
    %c0_28 = arith.constant 0 : index
    %45 = vector.load %arg10[%c0_26, %c0_27, %c0_28] : memref<4x8x8xf32, #tpu.memory_space<vmem>>, vector<4x8x8xf32>
    %46 = vector.broadcast %35 : vector<4x8x1xf32> to vector<4x8x8xf32>
    %47 = arith.mulf %46, %45 : vector<4x8x8xf32>
    %48 = arith.truncf %38 : vector<4x8x8xf32> to vector<4x8x8xbf16>
    %cst_29 = arith.constant dense<0.000000e+00> : vector<4x8x8xf32>
    %49 = tpu.matmul %48, %8, %cst_29 {dimension_numbers = #tpu.dot_dimension_numbers<[2], [1], [1], [2], [0, 0, 0, 1, 1, 2], [0], [0]>} : vector<4x8x8xbf16>, vector<4x8x8xbf16>, vector<4x8x8xf32> -> vector<4x8x8xf32>
    %50 = arith.addf %47, %49 : vector<4x8x8xf32>
    %c0_30 = arith.constant 0 : index
    %c0_31 = arith.constant 0 : index
    %c0_32 = arith.constant 0 : index
    %51 = vector.load %arg10[%c0_30, %c0_31, %c0_32] : memref<4x8x8xf32, #tpu.memory_space<vmem>>, vector<4x8x8xf32>
    tpu.vector_store %arg10[%c0_30, %c0_31, %c0_32], %50 {strides = array<i32>} : memref<4x8x8xf32, #tpu.memory_space<vmem>>, vector<4x8x8xf32>,
    %c0_33 = arith.constant 0 : index
    %c0_34 = arith.constant 0 : index
    %c0_35 = arith.constant 0 : index
    %52 = vector.load %arg8[%c0_33, %c0_34, %c0_35] : memref<4x8x1xf32, #tpu.memory_space<vmem>>, vector<4x8x1xf32>
    tpu.vector_store %arg8[%c0_33, %c0_34, %c0_35], %33 {strides = array<i32>} : memref<4x8x1xf32, #tpu.memory_space<vmem>>, vector<4x8x1xf32>,
    %c0_i32_36 = arith.constant 0 : i32
    %53 = arith.cmpi eq, %arg2, %c0_i32_36 : i32
    %54 = arith.extui %53 : i1 to i32
    %c0_i32_37 = arith.constant 0 : i32
    %55 = arith.cmpi ne, %54, %c0_i32_37 : i32
    scf.if %55 {
      %c0_38 = arith.constant 0 : index
      %c0_39 = arith.constant 0 : index
      %c0_40 = arith.constant 0 : index
      %56 = vector.load %arg10[%c0_38, %c0_39, %c0_40] : memref<4x8x8xf32, #tpu.memory_space<vmem>>, vector<4x8x8xf32>
      %c0_41 = arith.constant 0 : index
      %c0_42 = arith.constant 0 : index
      %c0_43 = arith.constant 0 : index
      %57 = vector.load %arg9[%c0_41, %c0_42, %c0_43] : memref<4x8x1xf32, #tpu.memory_space<vmem>>, vector<4x8x1xf32>
      %58 = tpu.reciprocal %57 : vector<4x8x1xf32> -> vector<4x8x1xf32>
      %59 = vector.broadcast %58 : vector<4x8x1xf32> to vector<4x8x8xf32>
      %60 = arith.mulf %56, %59 : vector<4x8x8xf32>
      %61 = vector.extract_strided_slice %60 {offsets = [0, 0, 0], sizes = [1, 8, 8], strides = [1, 1, 1]} : vector<4x8x8xf32> to vector<1x8x8xf32>
      %62 = vector.shape_cast %61 : vector<1x8x8xf32> to vector<8x8xf32>
      %63 = vector.extract_strided_slice %60 {offsets = [1, 0, 0], sizes = [1, 8, 8], strides = [1, 1, 1]} : vector<4x8x8xf32> to vector<1x8x8xf32>
      %64 = vector.shape_cast %63 : vector<1x8x8xf32> to vector<8x8xf32>
      %65 = vector.extract_strided_slice %60 {offsets = [2, 0, 0], sizes = [1, 8, 8], strides = [1, 1, 1]} : vector<4x8x8xf32> to vector<1x8x8xf32>
      %66 = vector.shape_cast %65 : vector<1x8x8xf32> to vector<8x8xf32>
      %67 = vector.extract_strided_slice %60 {offsets = [3, 0, 0], sizes = [1, 8, 8], strides = [1, 1, 1]} : vector<4x8x8xf32> to vector<1x8x8xf32>
      %68 = vector.shape_cast %67 : vector<1x8x8xf32> to vector<8x8xf32>
      %69 = tpu.concatenate %62, %64, %66, %68 in 1 : vector<8x8xf32>, vector<8x8xf32>, vector<8x8xf32>, vector<8x8xf32> -> vector<8x32xf32>
      %70 = arith.truncf %69 : vector<8x32xf32> to vector<8x32xbf16>
      %c0_44 = arith.constant 0 : index
      %c0_45 = arith.constant 0 : index
      %c0_46 = arith.constant 0 : index
      %71 = vector.load %arg7[%c0_44, %c0_45, %c0_46] : memref<1x8x32xbf16, #tpu.memory_space<vmem>>, vector<1x8x32xbf16>
      %72 = vector.shape_cast %71 : vector<1x8x32xbf16> to vector<8x32xbf16>
      %73 = vector.shape_cast %70 : vector<8x32xbf16> to vector<1x8x32xbf16>
      tpu.vector_store %arg7[%c0_44, %c0_45, %c0_46], %73 {strides = array<i32>} : memref<1x8x32xbf16, #tpu.memory_space<vmem>>, vector<1x8x32xbf16>,
    } else {
    }
    return
  }
  func.func @transform_0(%arg0: i32, %arg1: i32, %arg2: i32, %arg3: memref<2xi32, #tpu.memory_space<smem>>) -> (i32, i32, i32, i32) {
    %c0_i32 = arith.constant 0 : i32
    %c0_i32_0 = arith.constant 0 : i32
    %c0_i32_1 = arith.constant 0 : i32
    return %arg0, %c0_i32, %arg1, %c0_i32_0 : i32, i32, i32, i32
  }
  func.func @transform_1(%arg0: i32, %arg1: i32, %arg2: i32, %arg3: memref<2xi32, #tpu.memory_space<smem>>) -> (i32, i32, i32, i32) {
    %c0_i32 = arith.constant 0 : i32
    %c0_i32_0 = arith.constant 0 : i32
    %c0_i32_1 = arith.constant 0 : i32
    return %arg0, %c0_i32, %arg2, %c0_i32_0 : i32, i32, i32, i32
  }
  func.func @transform_2(%arg0: i32, %arg1: i32, %arg2: i32, %arg3: memref<2xi32, #tpu.memory_space<smem>>) -> (i32, i32, i32, i32) {
    %c0_i32 = arith.constant 0 : i32
    %c0_i32_0 = arith.constant 0 : i32
    %c0_i32_1 = arith.constant 0 : i32
    return %arg0, %c0_i32, %arg2, %c0_i32_0 : i32, i32, i32, i32
  }
  func.func @transform_3(%arg0: i32, %arg1: i32, %arg2: i32, %arg3: memref<2xi32, #tpu.memory_space<smem>>) -> (i32, i32, i32) {
    %c0_i32 = arith.constant 0 : i32
    %c0_i32_0 = arith.constant 0 : i32
    return %arg0, %arg1, %c0_i32 : i32, i32, i32
  }
}

module attributes {stable_mosaic.version = 11 : i64} {
  func.func @_mm_res_ln_kernel(%arg0: i32, %arg1: i32, %arg2: memref<16x32xbf16, #tpu.memory_space<vmem>>, %arg3: memref<32x32xbf16, #tpu.memory_space<vmem>>, %arg4: memref<1x32xf32, #tpu.memory_space<vmem>>, %arg5: memref<16x32xbf16, #tpu.memory_space<vmem>>, %arg6: memref<1x32xf32, #tpu.memory_space<vmem>>, %arg7: memref<1x32xf32, #tpu.memory_space<vmem>>, %arg8: memref<16x32xbf16, #tpu.memory_space<vmem>>, %arg9: memref<16x32xf32, #tpu.memory_space<vmem>>) attributes {dimension_semantics = [#tpu.dimension_semantics<parallel>, #tpu.dimension_semantics<arbitrary>], iteration_bounds = array<i64: 1, 1>, scalar_prefetch = 0 : i64, scratch_operands = 1 : i64, tpu.core_type = #tpu.core_type<tc>, window_params = [{transform_indices = @transform_0, window_bounds = array<i64: 16, 32>}, {transform_indices = @transform_1, window_bounds = array<i64: 32, 32>}, {pipeline_mode = #tpu.pipeline_mode<synchronous>, transform_indices = @transform_2, window_bounds = array<i64: 1, 32>}, {transform_indices = @transform_3, window_bounds = array<i64: 16, 32>}, {pipeline_mode = #tpu.pipeline_mode<synchronous>, transform_indices = @transform_4, window_bounds = array<i64: 1, 32>}, {pipeline_mode = #tpu.pipeline_mode<synchronous>, transform_indices = @transform_5, window_bounds = array<i64: 1, 32>}, {transform_indices = @transform_6, window_bounds = array<i64: 16, 32>}]} {
    %c0_i32 = arith.constant 0 : i32
    %0 = arith.cmpi eq, %arg1, %c0_i32 : i32
    %1 = arith.extui %0 : i1 to i32
    %c0_i32_0 = arith.constant 0 : i32
    %2 = arith.cmpi ne, %1, %c0_i32_0 : i32
    scf.if %2 {
      %cst_10 = arith.constant 0.000000e+00 : f32
      %12 = vector.broadcast %cst_10 : f32 to vector<16x32xf32>
      %c0_11 = arith.constant 0 : index
      %c0_12 = arith.constant 0 : index
      %13 = vector.load %arg9[%c0_11, %c0_12] : memref<16x32xf32, #tpu.memory_space<vmem>>, vector<16x32xf32>
      tpu.vector_store %arg9[%c0_11, %c0_12], %12 {strides = array<i32>} : memref<16x32xf32, #tpu.memory_space<vmem>>, vector<16x32xf32>,
    } else {
    }
    %c0 = arith.constant 0 : index
    %c0_1 = arith.constant 0 : index
    %3 = vector.load %arg9[%c0, %c0_1] : memref<16x32xf32, #tpu.memory_space<vmem>>, vector<16x32xf32>
    %c0_2 = arith.constant 0 : index
    %c0_3 = arith.constant 0 : index
    %4 = vector.load %arg2[%c0_2, %c0_3] : memref<16x32xbf16, #tpu.memory_space<vmem>>, vector<16x32xbf16>
    %c0_4 = arith.constant 0 : index
    %c0_5 = arith.constant 0 : index
    %5 = vector.load %arg3[%c0_4, %c0_5] : memref<32x32xbf16, #tpu.memory_space<vmem>>, vector<32x32xbf16>
    %cst = arith.constant dense<0.000000e+00> : vector<16x32xf32>
    %6 = tpu.matmul %4, %5, %cst {dimension_numbers = #tpu.dot_dimension_numbers<[1], [0], [0], [1], [0, 0, 1, 1], [], []>} : vector<16x32xbf16>, vector<32x32xbf16>, vector<16x32xf32> -> vector<16x32xf32>
    %7 = arith.addf %3, %6 : vector<16x32xf32>
    %c0_6 = arith.constant 0 : index
    %c0_7 = arith.constant 0 : index
    %8 = vector.load %arg9[%c0_6, %c0_7] : memref<16x32xf32, #tpu.memory_space<vmem>>, vector<16x32xf32>
    tpu.vector_store %arg9[%c0_6, %c0_7], %7 {strides = array<i32>} : memref<16x32xf32, #tpu.memory_space<vmem>>, vector<16x32xf32>,
    %c0_i32_8 = arith.constant 0 : i32
    %9 = arith.cmpi eq, %arg1, %c0_i32_8 : i32
    %10 = arith.extui %9 : i1 to i32
    %c0_i32_9 = arith.constant 0 : i32
    %11 = arith.cmpi ne, %10, %c0_i32_9 : i32
    scf.if %11 {
      %c0_10 = arith.constant 0 : index
      %c0_11 = arith.constant 0 : index
      %12 = vector.load %arg9[%c0_10, %c0_11] : memref<16x32xf32, #tpu.memory_space<vmem>>, vector<16x32xf32>
      %c0_12 = arith.constant 0 : index
      %c0_13 = arith.constant 0 : index
      %13 = vector.load %arg4[%c0_12, %c0_13] : memref<1x32xf32, #tpu.memory_space<vmem>>, vector<1x32xf32>
      %14 = vector.broadcast %13 : vector<1x32xf32> to vector<16x32xf32>
      %15 = arith.addf %12, %14 : vector<16x32xf32>
      %c0_14 = arith.constant 0 : index
      %c0_15 = arith.constant 0 : index
      %16 = vector.load %arg5[%c0_14, %c0_15] : memref<16x32xbf16, #tpu.memory_space<vmem>>, vector<16x32xbf16>
      %17 = arith.extf %16 : vector<16x32xbf16> to vector<16x32xf32>
      %18 = arith.addf %15, %17 : vector<16x32xf32>
      %cst_16 = arith.constant dense<0.000000e+00> : vector<16xf32>
      %19 = vector.multi_reduction <add>, %18, %cst_16 [1] : vector<16x32xf32> to vector<16xf32>
      %20 = vector.shape_cast %19 : vector<16xf32> to vector<16x1xf32>
      %cst_17 = arith.constant 3.200000e+01 : f32
      %21 = vector.broadcast %cst_17 : f32 to vector<16x1xf32>
      %22 = arith.divf %20, %21 : vector<16x1xf32>
      %23 = vector.broadcast %22 : vector<16x1xf32> to vector<16x32xf32>
      %24 = arith.subf %18, %23 : vector<16x32xf32>
      %25 = arith.mulf %24, %24 : vector<16x32xf32>
      %cst_18 = arith.constant dense<0.000000e+00> : vector<16xf32>
      %26 = vector.multi_reduction <add>, %25, %cst_18 [1] : vector<16x32xf32> to vector<16xf32>
      %27 = vector.shape_cast %26 : vector<16xf32> to vector<16x1xf32>
      %cst_19 = arith.constant 3.200000e+01 : f32
      %28 = vector.broadcast %cst_19 : f32 to vector<16x1xf32>
      %29 = arith.divf %27, %28 : vector<16x1xf32>
      %cst_20 = arith.constant 9.99999996E-13 : f32
      %30 = vector.broadcast %cst_20 : f32 to vector<16x1xf32>
      %31 = arith.addf %29, %30 : vector<16x1xf32>
      %32 = math.rsqrt %31 : vector<16x1xf32>
      %33 = vector.broadcast %32 : vector<16x1xf32> to vector<16x32xf32>
      %34 = arith.mulf %24, %33 : vector<16x32xf32>
      %c0_21 = arith.constant 0 : index
      %c0_22 = arith.constant 0 : index
      %35 = vector.load %arg6[%c0_21, %c0_22] : memref<1x32xf32, #tpu.memory_space<vmem>>, vector<1x32xf32>
      %36 = vector.broadcast %35 : vector<1x32xf32> to vector<16x32xf32>
      %37 = arith.mulf %34, %36 : vector<16x32xf32>
      %c0_23 = arith.constant 0 : index
      %c0_24 = arith.constant 0 : index
      %38 = vector.load %arg7[%c0_23, %c0_24] : memref<1x32xf32, #tpu.memory_space<vmem>>, vector<1x32xf32>
      %39 = vector.broadcast %38 : vector<1x32xf32> to vector<16x32xf32>
      %40 = arith.addf %37, %39 : vector<16x32xf32>
      %41 = arith.truncf %40 : vector<16x32xf32> to vector<16x32xbf16>
      %c0_25 = arith.constant 0 : index
      %c0_26 = arith.constant 0 : index
      %42 = vector.load %arg8[%c0_25, %c0_26] : memref<16x32xbf16, #tpu.memory_space<vmem>>, vector<16x32xbf16>
      tpu.vector_store %arg8[%c0_25, %c0_26], %41 {strides = array<i32>} : memref<16x32xbf16, #tpu.memory_space<vmem>>, vector<16x32xbf16>,
    } else {
    }
    return
  }
  func.func @transform_0(%arg0: i32, %arg1: i32) -> (i32, i32) {
    %c0_i32 = arith.constant 0 : i32
    return %arg0, %arg1 : i32, i32
  }
  func.func @transform_1(%arg0: i32, %arg1: i32) -> (i32, i32) {
    %c0_i32 = arith.constant 0 : i32
    %c0_i32_0 = arith.constant 0 : i32
    return %arg1, %c0_i32 : i32, i32
  }
  func.func @transform_2(%arg0: i32, %arg1: i32) -> (i32, i32) {
    %c0_i32 = arith.constant 0 : i32
    %c0_i32_0 = arith.constant 0 : i32
    %c0_i32_1 = arith.constant 0 : i32
    return %c0_i32, %c0_i32_0 : i32, i32
  }
  func.func @transform_3(%arg0: i32, %arg1: i32) -> (i32, i32) {
    %c0_i32 = arith.constant 0 : i32
    %c0_i32_0 = arith.constant 0 : i32
    return %arg0, %c0_i32 : i32, i32
  }
  func.func @transform_4(%arg0: i32, %arg1: i32) -> (i32, i32) {
    %c0_i32 = arith.constant 0 : i32
    %c0_i32_0 = arith.constant 0 : i32
    %c0_i32_1 = arith.constant 0 : i32
    return %c0_i32, %c0_i32_0 : i32, i32
  }
  func.func @transform_5(%arg0: i32, %arg1: i32) -> (i32, i32) {
    %c0_i32 = arith.constant 0 : i32
    %c0_i32_0 = arith.constant 0 : i32
    %c0_i32_1 = arith.constant 0 : i32
    return %c0_i32, %c0_i32_0 : i32, i32
  }
  func.func @transform_6(%arg0: i32, %arg1: i32) -> (i32, i32) {
    %c0_i32 = arith.constant 0 : i32
    %c0_i32_0 = arith.constant 0 : i32
    return %arg0, %c0_i32 : i32, i32
  }
}

module attributes {stable_mosaic.version = 11 : i64} {
  func.func @_mm_bias_act_kernel(%arg0: i32, %arg1: i32, %arg2: i32, %arg3: memref<16x32xbf16, #tpu.memory_space<vmem>>, %arg4: memref<32x32xbf16, #tpu.memory_space<vmem>>, %arg5: memref<1x32xf32, #tpu.memory_space<vmem>>, %arg6: memref<16x32xbf16, #tpu.memory_space<vmem>>, %arg7: memref<16x32xf32, #tpu.memory_space<vmem>>) attributes {dimension_semantics = [#tpu.dimension_semantics<parallel>, #tpu.dimension_semantics<parallel>, #tpu.dimension_semantics<arbitrary>], iteration_bounds = array<i64: 1, 1, 1>, scalar_prefetch = 0 : i64, scratch_operands = 1 : i64, tpu.core_type = #tpu.core_type<tc>, window_params = [{transform_indices = @transform_0, window_bounds = array<i64: 16, 32>}, {transform_indices = @transform_1, window_bounds = array<i64: 32, 32>}, {transform_indices = @transform_2, window_bounds = array<i64: 1, 32>}, {transform_indices = @transform_3, window_bounds = array<i64: 16, 32>}]} {
    %c0_i32 = arith.constant 0 : i32
    %0 = arith.cmpi eq, %arg2, %c0_i32 : i32
    %1 = arith.extui %0 : i1 to i32
    %c0_i32_0 = arith.constant 0 : i32
    %2 = arith.cmpi ne, %1, %c0_i32_0 : i32
    scf.if %2 {
      %cst_10 = arith.constant 0.000000e+00 : f32
      %12 = vector.broadcast %cst_10 : f32 to vector<16x32xf32>
      %c0_11 = arith.constant 0 : index
      %c0_12 = arith.constant 0 : index
      %13 = vector.load %arg7[%c0_11, %c0_12] : memref<16x32xf32, #tpu.memory_space<vmem>>, vector<16x32xf32>
      tpu.vector_store %arg7[%c0_11, %c0_12], %12 {strides = array<i32>} : memref<16x32xf32, #tpu.memory_space<vmem>>, vector<16x32xf32>,
    } else {
    }
    %c0 = arith.constant 0 : index
    %c0_1 = arith.constant 0 : index
    %3 = vector.load %arg7[%c0, %c0_1] : memref<16x32xf32, #tpu.memory_space<vmem>>, vector<16x32xf32>
    %c0_2 = arith.constant 0 : index
    %c0_3 = arith.constant 0 : index
    %4 = vector.load %arg3[%c0_2, %c0_3] : memref<16x32xbf16, #tpu.memory_space<vmem>>, vector<16x32xbf16>
    %c0_4 = arith.constant 0 : index
    %c0_5 = arith.constant 0 : index
    %5 = vector.load %arg4[%c0_4, %c0_5] : memref<32x32xbf16, #tpu.memory_space<vmem>>, vector<32x32xbf16>
    %cst = arith.constant dense<0.000000e+00> : vector<16x32xf32>
    %6 = tpu.matmul %4, %5, %cst {dimension_numbers = #tpu.dot_dimension_numbers<[1], [0], [0], [1], [0, 0, 1, 1], [], []>} : vector<16x32xbf16>, vector<32x32xbf16>, vector<16x32xf32> -> vector<16x32xf32>
    %7 = arith.addf %3, %6 : vector<16x32xf32>
    %c0_6 = arith.constant 0 : index
    %c0_7 = arith.constant 0 : index
    %8 = vector.load %arg7[%c0_6, %c0_7] : memref<16x32xf32, #tpu.memory_space<vmem>>, vector<16x32xf32>
    tpu.vector_store %arg7[%c0_6, %c0_7], %7 {strides = array<i32>} : memref<16x32xf32, #tpu.memory_space<vmem>>, vector<16x32xf32>,
    %c0_i32_8 = arith.constant 0 : i32
    %9 = arith.cmpi eq, %arg2, %c0_i32_8 : i32
    %10 = arith.extui %9 : i1 to i32
    %c0_i32_9 = arith.constant 0 : i32
    %11 = arith.cmpi ne, %10, %c0_i32_9 : i32
    scf.if %11 {
      %c0_10 = arith.constant 0 : index
      %c0_11 = arith.constant 0 : index
      %12 = vector.load %arg7[%c0_10, %c0_11] : memref<16x32xf32, #tpu.memory_space<vmem>>, vector<16x32xf32>
      %c0_12 = arith.constant 0 : index
      %c0_13 = arith.constant 0 : index
      %13 = vector.load %arg5[%c0_12, %c0_13] : memref<1x32xf32, #tpu.memory_space<vmem>>, vector<1x32xf32>
      %14 = vector.broadcast %13 : vector<1x32xf32> to vector<16x32xf32>
      %15 = arith.addf %12, %14 : vector<16x32xf32>
      %16 = arith.truncf %15 : vector<16x32xf32> to vector<16x32xbf16>
      %c0_14 = arith.constant 0 : index
      %c0_15 = arith.constant 0 : index
      %17 = vector.load %arg6[%c0_14, %c0_15] : memref<16x32xbf16, #tpu.memory_space<vmem>>, vector<16x32xbf16>
      tpu.vector_store %arg6[%c0_14, %c0_15], %16 {strides = array<i32>} : memref<16x32xbf16, #tpu.memory_space<vmem>>, vector<16x32xbf16>,
    } else {
    }
    return
  }
  func.func @transform_0(%arg0: i32, %arg1: i32, %arg2: i32) -> (i32, i32) {
    %c0_i32 = arith.constant 0 : i32
    return %arg0, %arg2 : i32, i32
  }
  func.func @transform_1(%arg0: i32, %arg1: i32, %arg2: i32) -> (i32, i32) {
    %c0_i32 = arith.constant 0 : i32
    return %arg2, %arg1 : i32, i32
  }
  func.func @transform_2(%arg0: i32, %arg1: i32, %arg2: i32) -> (i32, i32) {
    %c0_i32 = arith.constant 0 : i32
    %c0_i32_0 = arith.constant 0 : i32
    return %c0_i32, %arg1 : i32, i32
  }
  func.func @transform_3(%arg0: i32, %arg1: i32, %arg2: i32) -> (i32, i32) {
    %c0_i32 = arith.constant 0 : i32
    return %arg0, %arg1 : i32, i32
  }
}

module attributes {stable_mosaic.version = 11 : i64} {
  func.func @_mha_flash_kernel(%arg0: i32, %arg1: i32, %arg2: i32, %arg3: memref<2xi32, #tpu.memory_space<smem>>, %arg4: memref<1x4x8x8xbf16, #tpu.memory_space<vmem>>, %arg5: memref<1x4x16x8xbf16, #tpu.memory_space<vmem>>, %arg6: memref<1x4x16x8xbf16, #tpu.memory_space<vmem>>, %arg7: memref<1x8x32xbf16, #tpu.memory_space<vmem>>, %arg8: memref<4x8x1xf32, #tpu.memory_space<vmem>>, %arg9: memref<4x8x1xf32, #tpu.memory_space<vmem>>, %arg10: memref<4x8x8xf32, #tpu.memory_space<vmem>>) attributes {dimension_semantics = [#tpu.dimension_semantics<parallel>, #tpu.dimension_semantics<parallel>, #tpu.dimension_semantics<arbitrary>], iteration_bounds = array<i64: 2, 1, 1>, scalar_prefetch = 1 : i64, scratch_operands = 3 : i64, tpu.core_type = #tpu.core_type<tc>, window_params = [{transform_indices = @transform_0, window_bounds = array<i64: 1, 4, 8, 8>}, {transform_indices = @transform_1, window_bounds = array<i64: 1, 4, 16, 8>}, {transform_indices = @transform_2, window_bounds = array<i64: 1, 4, 16, 8>}, {transform_indices = @transform_3, window_bounds = array<i64: 1, 8, 32>}]} {
    %c0_i32 = arith.constant 0 : i32
    %0 = arith.cmpi eq, %arg2, %c0_i32 : i32
    %1 = arith.extui %0 : i1 to i32
    %c0_i32_0 = arith.constant 0 : i32
    %2 = arith.cmpi ne, %1, %c0_i32_0 : i32
    scf.if %2 {
      %cst_37 = arith.constant 0xFF800000 : f32
      %50 = vector.broadcast %cst_37 : f32 to vector<4x8x1xf32>
      %c0_38 = arith.constant 0 : index
      %c0_39 = arith.constant 0 : index
      %c0_40 = arith.constant 0 : index
      %51 = vector.load %arg8[%c0_38, %c0_39, %c0_40] : memref<4x8x1xf32, #tpu.memory_space<vmem>>, vector<4x8x1xf32>
      tpu.vector_store %arg8[%c0_38, %c0_39, %c0_40], %50 {strides = array<i32>} : memref<4x8x1xf32, #tpu.memory_space<vmem>>, vector<4x8x1xf32>,
      %cst_41 = arith.constant 0.000000e+00 : f32
      %52 = vector.broadcast %cst_41 : f32 to vector<4x8x1xf32>
      %c0_42 = arith.constant 0 : index
      %c0_43 = arith.constant 0 : index
      %c0_44 = arith.constant 0 : index
      %53 = vector.load %arg9[%c0_42, %c0_43, %c0_44] : memref<4x8x1xf32, #tpu.memory_space<vmem>>, vector<4x8x1xf32>
      tpu.vector_store %arg9[%c0_42, %c0_43, %c0_44], %52 {strides = array<i32>} : memref<4x8x1xf32, #tpu.memory_space<vmem>>, vector<4x8x1xf32>,
      %cst_45 = arith.constant 0.000000e+00 : f32
      %54 = vector.broadcast %cst_45 : f32 to vector<4x8x8xf32>
      %c0_46 = arith.constant 0 : index
      %c0_47 = arith.constant 0 : index
      %c0_48 = arith.constant 0 : index
      %55 = vector.load %arg10[%c0_46, %c0_47, %c0_48] : memref<4x8x8xf32, #tpu.memory_space<vmem>>, vector<4x8x8xf32>
      tpu.vector_store %arg10[%c0_46, %c0_47, %c0_48], %54 {strides = array<i32>} : memref<4x8x8xf32, #tpu.memory_space<vmem>>, vector<4x8x8xf32>,
    } else {
    }
    %c0 = arith.constant 0 : index
    %c0_1 = arith.constant 0 : index
    %c0_2 = arith.constant 0 : index
    %c0_3 = arith.constant 0 : index
    %3 = vector.load %arg4[%c0, %c0_1, %c0_2, %c0_3] : memref<1x4x8x8xbf16, #tpu.memory_space<vmem>>, vector<1x4x8x8xbf16>
    %4 = vector.shape_cast %3 : vector<1x4x8x8xbf16> to vector<4x8x8xbf16>
    %c0_4 = arith.constant 0 : index
    %c0_5 = arith.constant 0 : index
    %c0_6 = arith.constant 0 : index
    %c0_7 = arith.constant 0 : index
    %5 = vector.load %arg5[%c0_4, %c0_5, %c0_6, %c0_7] : memref<1x4x16x8xbf16, #tpu.memory_space<vmem>>, vector<1x4x16x8xbf16>
    %6 = vector.shape_cast %5 : vector<1x4x16x8xbf16> to vector<4x16x8xbf16>
    %c0_8 = arith.constant 0 : index
    %c0_9 = arith.constant 0 : index
    %c0_10 = arith.constant 0 : index
    %c0_11 = arith.constant 0 : index
    %7 = vector.load %arg6[%c0_8, %c0_9, %c0_10, %c0_11] : memref<1x4x16x8xbf16, #tpu.memory_space<vmem>>, vector<1x4x16x8xbf16>
    %8 = vector.shape_cast %7 : vector<1x4x16x8xbf16> to vector<4x16x8xbf16>
    %cst = arith.constant dense<0.000000e+00> : vector<4x8x16xf32>
    %9 = tpu.matmul %4, %6, %cst {dimension_numbers = #tpu.dot_dimension_numbers<[2], [2], [1], [1], [0, 0, 0, 1, 1, 1], [0], [0]>} : vector<4x8x8xbf16>, vector<4x16x8xbf16>, vector<4x8x16xf32> -> vector<4x8x16xf32>
    %cst_12 = arith.constant 0.353553385 : f32
    %10 = vector.broadcast %cst_12 : f32 to vector<4x8x16xf32>
    %11 = arith.mulf %9, %10 : vector<4x8x16xf32>
    %12 = arith.index_cast %arg0 : i32 to index
    %13 = memref.load %arg3[%12] : memref<2xi32, #tpu.memory_space<smem>>
    %14 = tpu.iota {dimensions = array<i32: 2>} : vector<1x8x16xi32>
    %c16_i32 = arith.constant 16 : i32
    %15 = arith.muli %arg2, %c16_i32 : i32
    %16 = vector.broadcast %15 : i32 to vector<1x8x16xi32>
    %17 = arith.addi %14, %16 : vector<1x8x16xi32>
    %18 = vector.broadcast %13 : i32 to vector<1x8x16xi32>
    %19 = arith.cmpi slt, %17, %18 : vector<1x8x16xi32>
    %cst_13 = arith.constant -1.000000e+09 : f32
    %20 = vector.shape_cast %19 : vector<1x8x16xi1> to vector<1x8x16xi1>
    %21 = vector.broadcast %20 : vector<1x8x16xi1> to vector<4x8x16xi1>
    %22 = vector.broadcast %cst_13 : f32 to vector<4x8x16xf32>
    %23 = arith.select %21, %11, %22 : vector<4x8x16xi1>, vector<4x8x16xf32>
    %c0_14 = arith.constant 0 : index
    %c0_15 = arith.constant 0 : index
    %c0_16 = arith.constant 0 : index
    %24 = vector.load %arg8[%c0_14, %c0_15, %c0_16] : memref<4x8x1xf32, #tpu.memory_space<vmem>>, vector<4x8x1xf32>
    %cst_17 = arith.constant dense<0xFF800000> : vector<4x8xf32>
    %25 = vector.multi_reduction <maximumf>, %23, %cst_17 [2] : vector<4x8x16xf32> to vector<4x8xf32>
    %26 = vector.shape_cast %25 : vector<4x8xf32> to vector<4x8x1xf32>
    %27 = arith.maximumf %24, %26 : vector<4x8x1xf32>
    %28 = arith.subf %24, %27 : vector<4x8x1xf32>
    %29 = math.exp %28 : vector<4x8x1xf32>
    %30 = vector.broadcast %27 : vector<4x8x1xf32> to vector<4x8x16xf32>
    %31 = arith.subf %23, %30 : vector<4x8x16xf32>
    %32 = math.exp %31 : vector<4x8x16xf32>
    %c0_18 = arith.constant 0 : index
    %c0_19 = arith.constant 0 : index
    %c0_20 = arith.constant 0 : index
    %33 = vector.load %arg9[%c0_18, %c0_19, %c0_20] : memref<4x8x1xf32, #tpu.memory_space<vmem>>, vector<4x8x1xf32>
    %34 = arith.mulf %29, %33 : vector<4x8x1xf32>
    %cst_21 = arith.constant dense<0.000000e+00> : vector<4x8xf32>
    %35 = vector.multi_reduction <add>, %32, %cst_21 [2] : vector<4x8x16xf32> to vector<4x8xf32>
    %36 = vector.shape_cast %35 : vector<4x8xf32> to vector<4x8x1xf32>
    %37 = arith.addf %34, %36 : vector<4x8x1xf32>
    %c0_22 = arith.constant 0 : index
    %c0_23 = arith.constant 0 : index
    %c0_24 = arith.constant 0 : index
    %38 = vector.load %arg9[%c0_22, %c0_23, %c0_24] : memref<4x8x1xf32, #tpu.memory_space<vmem>>, vector<4x8x1xf32>
    tpu.vector_store %arg9[%c0_22, %c0_23, %c0_24], %37 {strides = array<i32>} : memref<4x8x1xf32, #tpu.memory_space<vmem>>, vector<4x8x1xf32>,
    %c0_25 = arith.constant 0 : index
    %c0_26 = arith.constant 0 : index
    %c0_27 = arith.constant 0 : index
    %39 = vector.load %arg10[%c0_25, %c0_26, %c0_27] : memref<4x8x8xf32, #tpu.memory_space<vmem>>, vector<4x8x8xf32>
    %40 = vector.broadcast %29 : vector<4x8x1xf32> to vector<4x8x8xf32>
    %41 = arith.mulf %40, %39 : vector<4x8x8xf32>
    %42 = arith.truncf %32 : vector<4x8x16xf32> to vector<4x8x16xbf16>
    %cst_28 = arith.constant dense<0.000000e+00> : vector<4x8x8xf32>
    %43 = tpu.matmul %42, %8, %cst_28 {dimension_numbers = #tpu.dot_dimension_numbers<[2], [1], [1], [2], [0, 0, 0, 1, 1, 2], [0], [0]>} : vector<4x8x16xbf16>, vector<4x16x8xbf16>, vector<4x8x8xf32> -> vector<4x8x8xf32>
    %44 = arith.addf %41, %43 : vector<4x8x8xf32>
    %c0_29 = arith.constant 0 : index
    %c0_30 = arith.constant 0 : index
    %c0_31 = arith.constant 0 : index
    %45 = vector.load %arg10[%c0_29, %c0_30, %c0_31] : memref<4x8x8xf32, #tpu.memory_space<vmem>>, vector<4x8x8xf32>
    tpu.vector_store %arg10[%c0_29, %c0_30, %c0_31], %44 {strides = array<i32>} : memref<4x8x8xf32, #tpu.memory_space<vmem>>, vector<4x8x8xf32>,
    %c0_32 = arith.constant 0 : index
    %c0_33 = arith.constant 0 : index
    %c0_34 = arith.constant 0 : index
    %46 = vector.load %arg8[%c0_32, %c0_33, %c0_34] : memref<4x8x1xf32, #tpu.memory_space<vmem>>, vector<4x8x1xf32>
    tpu.vector_store %arg8[%c0_32, %c0_33, %c0_34], %27 {strides = array<i32>} : memref<4x8x1xf32, #tpu.memory_space<vmem>>, vector<4x8x1xf32>,
    %c0_i32_35 = arith.constant 0 : i32
    %47 = arith.cmpi eq, %arg2, %c0_i32_35 : i32
    %48 = arith.extui %47 : i1 to i32
    %c0_i32_36 = arith.constant 0 : i32
    %49 = arith.cmpi ne, %48, %c0_i32_36 : i32
    scf.if %49 {
      %c0_37 = arith.constant 0 : index
      %c0_38 = arith.constant 0 : index
      %c0_39 = arith.constant 0 : index
      %50 = vector.load %arg10[%c0_37, %c0_38, %c0_39] : memref<4x8x8xf32, #tpu.memory_space<vmem>>, vector<4x8x8xf32>
      %c0_40 = arith.constant 0 : index
      %c0_41 = arith.constant 0 : index
      %c0_42 = arith.constant 0 : index
      %51 = vector.load %arg9[%c0_40, %c0_41, %c0_42] : memref<4x8x1xf32, #tpu.memory_space<vmem>>, vector<4x8x1xf32>
      %52 = tpu.reciprocal %51 : vector<4x8x1xf32> -> vector<4x8x1xf32>
      %53 = vector.broadcast %52 : vector<4x8x1xf32> to vector<4x8x8xf32>
      %54 = arith.mulf %50, %53 : vector<4x8x8xf32>
      %55 = vector.extract_strided_slice %54 {offsets = [0, 0, 0], sizes = [1, 8, 8], strides = [1, 1, 1]} : vector<4x8x8xf32> to vector<1x8x8xf32>
      %56 = vector.shape_cast %55 : vector<1x8x8xf32> to vector<8x8xf32>
      %57 = vector.extract_strided_slice %54 {offsets = [1, 0, 0], sizes = [1, 8, 8], strides = [1, 1, 1]} : vector<4x8x8xf32> to vector<1x8x8xf32>
      %58 = vector.shape_cast %57 : vector<1x8x8xf32> to vector<8x8xf32>
      %59 = vector.extract_strided_slice %54 {offsets = [2, 0, 0], sizes = [1, 8, 8], strides = [1, 1, 1]} : vector<4x8x8xf32> to vector<1x8x8xf32>
      %60 = vector.shape_cast %59 : vector<1x8x8xf32> to vector<8x8xf32>
      %61 = vector.extract_strided_slice %54 {offsets = [3, 0, 0], sizes = [1, 8, 8], strides = [1, 1, 1]} : vector<4x8x8xf32> to vector<1x8x8xf32>
      %62 = vector.shape_cast %61 : vector<1x8x8xf32> to vector<8x8xf32>
      %63 = tpu.concatenate %56, %58, %60, %62 in 1 : vector<8x8xf32>, vector<8x8xf32>, vector<8x8xf32>, vector<8x8xf32> -> vector<8x32xf32>
      %64 = arith.truncf %63 : vector<8x32xf32> to vector<8x32xbf16>
      %c0_43 = arith.constant 0 : index
      %c0_44 = arith.constant 0 : index
      %c0_45 = arith.constant 0 : index
      %65 = vector.load %arg7[%c0_43, %c0_44, %c0_45] : memref<1x8x32xbf16, #tpu.memory_space<vmem>>, vector<1x8x32xbf16>
      %66 = vector.shape_cast %65 : vector<1x8x32xbf16> to vector<8x32xbf16>
      %67 = vector.shape_cast %64 : vector<8x32xbf16> to vector<1x8x32xbf16>
      tpu.vector_store %arg7[%c0_43, %c0_44, %c0_45], %67 {strides = array<i32>} : memref<1x8x32xbf16, #tpu.memory_space<vmem>>, vector<1x8x32xbf16>,
    } else {
    }
    return
  }
  func.func @transform_0(%arg0: i32, %arg1: i32, %arg2: i32, %arg3: memref<2xi32, #tpu.memory_space<smem>>) -> (i32, i32, i32, i32) {
    %c0_i32 = arith.constant 0 : i32
    %c0_i32_0 = arith.constant 0 : i32
    %c0_i32_1 = arith.constant 0 : i32
    return %arg0, %c0_i32, %arg1, %c0_i32_0 : i32, i32, i32, i32
  }
  func.func @transform_1(%arg0: i32, %arg1: i32, %arg2: i32, %arg3: memref<2xi32, #tpu.memory_space<smem>>) -> (i32, i32, i32, i32) {
    %c0_i32 = arith.constant 0 : i32
    %c0_i32_0 = arith.constant 0 : i32
    %c0_i32_1 = arith.constant 0 : i32
    return %arg0, %c0_i32, %arg2, %c0_i32_0 : i32, i32, i32, i32
  }
  func.func @transform_2(%arg0: i32, %arg1: i32, %arg2: i32, %arg3: memref<2xi32, #tpu.memory_space<smem>>) -> (i32, i32, i32, i32) {
    %c0_i32 = arith.constant 0 : i32
    %c0_i32_0 = arith.constant 0 : i32
    %c0_i32_1 = arith.constant 0 : i32
    return %arg0, %c0_i32, %arg2, %c0_i32_0 : i32, i32, i32, i32
  }
  func.func @transform_3(%arg0: i32, %arg1: i32, %arg2: i32, %arg3: memref<2xi32, #tpu.memory_space<smem>>) -> (i32, i32, i32) {
    %c0_i32 = arith.constant 0 : i32
    %c0_i32_0 = arith.constant 0 : i32
    return %arg0, %arg1, %c0_i32 : i32, i32, i32
  }
}

module attributes {stable_mosaic.version = 11 : i64} {
  func.func @_mm_bias_act_kernel(%arg0: i32, %arg1: i32, %arg2: i32, %arg3: memref<16x32xbf16, #tpu.memory_space<vmem>>, %arg4: memref<32x64xbf16, #tpu.memory_space<vmem>>, %arg5: memref<1x64xf32, #tpu.memory_space<vmem>>, %arg6: memref<16x64xbf16, #tpu.memory_space<vmem>>, %arg7: memref<16x64xf32, #tpu.memory_space<vmem>>) attributes {dimension_semantics = [#tpu.dimension_semantics<parallel>, #tpu.dimension_semantics<parallel>, #tpu.dimension_semantics<arbitrary>], iteration_bounds = array<i64: 1, 1, 1>, scalar_prefetch = 0 : i64, scratch_operands = 1 : i64, tpu.core_type = #tpu.core_type<tc>, window_params = [{transform_indices = @transform_0, window_bounds = array<i64: 16, 32>}, {transform_indices = @transform_1, window_bounds = array<i64: 32, 64>}, {transform_indices = @transform_2, window_bounds = array<i64: 1, 64>}, {transform_indices = @transform_3, window_bounds = array<i64: 16, 64>}]} {
    %c0_i32 = arith.constant 0 : i32
    %0 = arith.cmpi eq, %arg2, %c0_i32 : i32
    %1 = arith.extui %0 : i1 to i32
    %c0_i32_0 = arith.constant 0 : i32
    %2 = arith.cmpi ne, %1, %c0_i32_0 : i32
    scf.if %2 {
      %cst_10 = arith.constant 0.000000e+00 : f32
      %12 = vector.broadcast %cst_10 : f32 to vector<16x64xf32>
      %c0_11 = arith.constant 0 : index
      %c0_12 = arith.constant 0 : index
      %13 = vector.load %arg7[%c0_11, %c0_12] : memref<16x64xf32, #tpu.memory_space<vmem>>, vector<16x64xf32>
      tpu.vector_store %arg7[%c0_11, %c0_12], %12 {strides = array<i32>} : memref<16x64xf32, #tpu.memory_space<vmem>>, vector<16x64xf32>,
    } else {
    }
    %c0 = arith.constant 0 : index
    %c0_1 = arith.constant 0 : index
    %3 = vector.load %arg7[%c0, %c0_1] : memref<16x64xf32, #tpu.memory_space<vmem>>, vector<16x64xf32>
    %c0_2 = arith.constant 0 : index
    %c0_3 = arith.constant 0 : index
    %4 = vector.load %arg3[%c0_2, %c0_3] : memref<16x32xbf16, #tpu.memory_space<vmem>>, vector<16x32xbf16>
    %c0_4 = arith.constant 0 : index
    %c0_5 = arith.constant 0 : index
    %5 = vector.load %arg4[%c0_4, %c0_5] : memref<32x64xbf16, #tpu.memory_space<vmem>>, vector<32x64xbf16>
    %cst = arith.constant dense<0.000000e+00> : vector<16x64xf32>
    %6 = tpu.matmul %4, %5, %cst {dimension_numbers = #tpu.dot_dimension_numbers<[1], [0], [0], [1], [0, 0, 1, 1], [], []>} : vector<16x32xbf16>, vector<32x64xbf16>, vector<16x64xf32> -> vector<16x64xf32>
    %7 = arith.addf %3, %6 : vector<16x64xf32>
    %c0_6 = arith.constant 0 : index
    %c0_7 = arith.constant 0 : index
    %8 = vector.load %arg7[%c0_6, %c0_7] : memref<16x64xf32, #tpu.memory_space<vmem>>, vector<16x64xf32>
    tpu.vector_store %arg7[%c0_6, %c0_7], %7 {strides = array<i32>} : memref<16x64xf32, #tpu.memory_space<vmem>>, vector<16x64xf32>,
    %c0_i32_8 = arith.constant 0 : i32
    %9 = arith.cmpi eq, %arg2, %c0_i32_8 : i32
    %10 = arith.extui %9 : i1 to i32
    %c0_i32_9 = arith.constant 0 : i32
    %11 = arith.cmpi ne, %10, %c0_i32_9 : i32
    scf.if %11 {
      %c0_10 = arith.constant 0 : index
      %c0_11 = arith.constant 0 : index
      %12 = vector.load %arg7[%c0_10, %c0_11] : memref<16x64xf32, #tpu.memory_space<vmem>>, vector<16x64xf32>
      %c0_12 = arith.constant 0 : index
      %c0_13 = arith.constant 0 : index
      %13 = vector.load %arg5[%c0_12, %c0_13] : memref<1x64xf32, #tpu.memory_space<vmem>>, vector<1x64xf32>
      %14 = vector.broadcast %13 : vector<1x64xf32> to vector<16x64xf32>
      %15 = arith.addf %12, %14 : vector<16x64xf32>
      %cst_14 = arith.constant 5.000000e-01 : f32
      %16 = vector.broadcast %cst_14 : f32 to vector<16x64xf32>
      %17 = arith.mulf %16, %15 : vector<16x64xf32>
      %cst_15 = arith.constant 4.471500e-02 : f32
      %18 = vector.broadcast %cst_15 : f32 to vector<16x64xf32>
      %19 = arith.mulf %18, %15 : vector<16x64xf32>
      %20 = arith.mulf %19, %15 : vector<16x64xf32>
      %21 = arith.mulf %20, %15 : vector<16x64xf32>
      %22 = arith.addf %15, %21 : vector<16x64xf32>
      %cst_16 = arith.constant 0.797884583 : f32
      %23 = vector.broadcast %cst_16 : f32 to vector<16x64xf32>
      %24 = arith.mulf %23, %22 : vector<16x64xf32>
      %25 = math.tanh %24 : vector<16x64xf32>
      %cst_17 = arith.constant 1.000000e+00 : f32
      %26 = vector.broadcast %cst_17 : f32 to vector<16x64xf32>
      %27 = arith.addf %26, %25 : vector<16x64xf32>
      %28 = arith.mulf %17, %27 : vector<16x64xf32>
      %29 = arith.truncf %28 : vector<16x64xf32> to vector<16x64xbf16>
      %c0_18 = arith.constant 0 : index
      %c0_19 = arith.constant 0 : index
      %30 = vector.load %arg6[%c0_18, %c0_19] : memref<16x64xbf16, #tpu.memory_space<vmem>>, vector<16x64xbf16>
      tpu.vector_store %arg6[%c0_18, %c0_19], %29 {strides = array<i32>} : memref<16x64xbf16, #tpu.memory_space<vmem>>, vector<16x64xbf16>,
    } else {
    }
    return
  }
  func.func @transform_0(%arg0: i32, %arg1: i32, %arg2: i32) -> (i32, i32) {
    %c0_i32 = arith.constant 0 : i32
    return %arg0, %arg2 : i32, i32
  }
  func.func @transform_1(%arg0: i32, %arg1: i32, %arg2: i32) -> (i32, i32) {
    %c0_i32 = arith.constant 0 : i32
    return %arg2, %arg1 : i32, i32
  }
  func.func @transform_2(%arg0: i32, %arg1: i32, %arg2: i32) -> (i32, i32) {
    %c0_i32 = arith.constant 0 : i32
    %c0_i32_0 = arith.constant 0 : i32
    return %c0_i32, %arg1 : i32, i32
  }
  func.func @transform_3(%arg0: i32, %arg1: i32, %arg2: i32) -> (i32, i32) {
    %c0_i32 = arith.constant 0 : i32
    return %arg0, %arg1 : i32, i32
  }
}

module attributes {stable_mosaic.version = 11 : i64} {
  func.func @_mm_res_ln_kernel(%arg0: i32, %arg1: i32, %arg2: memref<16x64xbf16, #tpu.memory_space<vmem>>, %arg3: memref<64x32xbf16, #tpu.memory_space<vmem>>, %arg4: memref<1x32xf32, #tpu.memory_space<vmem>>, %arg5: memref<16x32xbf16, #tpu.memory_space<vmem>>, %arg6: memref<1x32xf32, #tpu.memory_space<vmem>>, %arg7: memref<1x32xf32, #tpu.memory_space<vmem>>, %arg8: memref<16x32xbf16, #tpu.memory_space<vmem>>, %arg9: memref<16x32xf32, #tpu.memory_space<vmem>>) attributes {dimension_semantics = [#tpu.dimension_semantics<parallel>, #tpu.dimension_semantics<arbitrary>], iteration_bounds = array<i64: 1, 1>, scalar_prefetch = 0 : i64, scratch_operands = 1 : i64, tpu.core_type = #tpu.core_type<tc>, window_params = [{transform_indices = @transform_0, window_bounds = array<i64: 16, 64>}, {transform_indices = @transform_1, window_bounds = array<i64: 64, 32>}, {pipeline_mode = #tpu.pipeline_mode<synchronous>, transform_indices = @transform_2, window_bounds = array<i64: 1, 32>}, {transform_indices = @transform_3, window_bounds = array<i64: 16, 32>}, {pipeline_mode = #tpu.pipeline_mode<synchronous>, transform_indices = @transform_4, window_bounds = array<i64: 1, 32>}, {pipeline_mode = #tpu.pipeline_mode<synchronous>, transform_indices = @transform_5, window_bounds = array<i64: 1, 32>}, {transform_indices = @transform_6, window_bounds = array<i64: 16, 32>}]} {
    %c0_i32 = arith.constant 0 : i32
    %0 = arith.cmpi eq, %arg1, %c0_i32 : i32
    %1 = arith.extui %0 : i1 to i32
    %c0_i32_0 = arith.constant 0 : i32
    %2 = arith.cmpi ne, %1, %c0_i32_0 : i32
    scf.if %2 {
      %cst_10 = arith.constant 0.000000e+00 : f32
      %12 = vector.broadcast %cst_10 : f32 to vector<16x32xf32>
      %c0_11 = arith.constant 0 : index
      %c0_12 = arith.constant 0 : index
      %13 = vector.load %arg9[%c0_11, %c0_12] : memref<16x32xf32, #tpu.memory_space<vmem>>, vector<16x32xf32>
      tpu.vector_store %arg9[%c0_11, %c0_12], %12 {strides = array<i32>} : memref<16x32xf32, #tpu.memory_space<vmem>>, vector<16x32xf32>,
    } else {
    }
    %c0 = arith.constant 0 : index
    %c0_1 = arith.constant 0 : index
    %3 = vector.load %arg9[%c0, %c0_1] : memref<16x32xf32, #tpu.memory_space<vmem>>, vector<16x32xf32>
    %c0_2 = arith.constant 0 : index
    %c0_3 = arith.constant 0 : index
    %4 = vector.load %arg2[%c0_2, %c0_3] : memref<16x64xbf16, #tpu.memory_space<vmem>>, vector<16x64xbf16>
    %c0_4 = arith.constant 0 : index
    %c0_5 = arith.constant 0 : index
    %5 = vector.load %arg3[%c0_4, %c0_5] : memref<64x32xbf16, #tpu.memory_space<vmem>>, vector<64x32xbf16>
    %cst = arith.constant dense<0.000000e+00> : vector<16x32xf32>
    %6 = tpu.matmul %4, %5, %cst {dimension_numbers = #tpu.dot_dimension_numbers<[1], [0], [0], [1], [0, 0, 1, 1], [], []>} : vector<16x64xbf16>, vector<64x32xbf16>, vector<16x32xf32> -> vector<16x32xf32>
    %7 = arith.addf %3, %6 : vector<16x32xf32>
    %c0_6 = arith.constant 0 : index
    %c0_7 = arith.constant 0 : index
    %8 = vector.load %arg9[%c0_6, %c0_7] : memref<16x32xf32, #tpu.memory_space<vmem>>, vector<16x32xf32>
    tpu.vector_store %arg9[%c0_6, %c0_7], %7 {strides = array<i32>} : memref<16x32xf32, #tpu.memory_space<vmem>>, vector<16x32xf32>,
    %c0_i32_8 = arith.constant 0 : i32
    %9 = arith.cmpi eq, %arg1, %c0_i32_8 : i32
    %10 = arith.extui %9 : i1 to i32
    %c0_i32_9 = arith.constant 0 : i32
    %11 = arith.cmpi ne, %10, %c0_i32_9 : i32
    scf.if %11 {
      %c0_10 = arith.constant 0 : index
      %c0_11 = arith.constant 0 : index
      %12 = vector.load %arg9[%c0_10, %c0_11] : memref<16x32xf32, #tpu.memory_space<vmem>>, vector<16x32xf32>
      %c0_12 = arith.constant 0 : index
      %c0_13 = arith.constant 0 : index
      %13 = vector.load %arg4[%c0_12, %c0_13] : memref<1x32xf32, #tpu.memory_space<vmem>>, vector<1x32xf32>
      %14 = vector.broadcast %13 : vector<1x32xf32> to vector<16x32xf32>
      %15 = arith.addf %12, %14 : vector<16x32xf32>
      %c0_14 = arith.constant 0 : index
      %c0_15 = arith.constant 0 : index
      %16 = vector.load %arg5[%c0_14, %c0_15] : memref<16x32xbf16, #tpu.memory_space<vmem>>, vector<16x32xbf16>
      %17 = arith.extf %16 : vector<16x32xbf16> to vector<16x32xf32>
      %18 = arith.addf %15, %17 : vector<16x32xf32>
      %cst_16 = arith.constant dense<0.000000e+00> : vector<16xf32>
      %19 = vector.multi_reduction <add>, %18, %cst_16 [1] : vector<16x32xf32> to vector<16xf32>
      %20 = vector.shape_cast %19 : vector<16xf32> to vector<16x1xf32>
      %cst_17 = arith.constant 3.200000e+01 : f32
      %21 = vector.broadcast %cst_17 : f32 to vector<16x1xf32>
      %22 = arith.divf %20, %21 : vector<16x1xf32>
      %23 = vector.broadcast %22 : vector<16x1xf32> to vector<16x32xf32>
      %24 = arith.subf %18, %23 : vector<16x32xf32>
      %25 = arith.mulf %24, %24 : vector<16x32xf32>
      %cst_18 = arith.constant dense<0.000000e+00> : vector<16xf32>
      %26 = vector.multi_reduction <add>, %25, %cst_18 [1] : vector<16x32xf32> to vector<16xf32>
      %27 = vector.shape_cast %26 : vector<16xf32> to vector<16x1xf32>
      %cst_19 = arith.constant 3.200000e+01 : f32
      %28 = vector.broadcast %cst_19 : f32 to vector<16x1xf32>
      %29 = arith.divf %27, %28 : vector<16x1xf32>
      %cst_20 = arith.constant 9.99999996E-13 : f32
      %30 = vector.broadcast %cst_20 : f32 to vector<16x1xf32>
      %31 = arith.addf %29, %30 : vector<16x1xf32>
      %32 = math.rsqrt %31 : vector<16x1xf32>
      %33 = vector.broadcast %32 : vector<16x1xf32> to vector<16x32xf32>
      %34 = arith.mulf %24, %33 : vector<16x32xf32>
      %c0_21 = arith.constant 0 : index
      %c0_22 = arith.constant 0 : index
      %35 = vector.load %arg6[%c0_21, %c0_22] : memref<1x32xf32, #tpu.memory_space<vmem>>, vector<1x32xf32>
      %36 = vector.broadcast %35 : vector<1x32xf32> to vector<16x32xf32>
      %37 = arith.mulf %34, %36 : vector<16x32xf32>
      %c0_23 = arith.constant 0 : index
      %c0_24 = arith.constant 0 : index
      %38 = vector.load %arg7[%c0_23, %c0_24] : memref<1x32xf32, #tpu.memory_space<vmem>>, vector<1x32xf32>
      %39 = vector.broadcast %38 : vector<1x32xf32> to vector<16x32xf32>
      %40 = arith.addf %37, %39 : vector<16x32xf32>
      %41 = arith.truncf %40 : vector<16x32xf32> to vector<16x32xbf16>
      %c0_25 = arith.constant 0 : index
      %c0_26 = arith.constant 0 : index
      %42 = vector.load %arg8[%c0_25, %c0_26] : memref<16x32xbf16, #tpu.memory_space<vmem>>, vector<16x32xbf16>
      tpu.vector_store %arg8[%c0_25, %c0_26], %41 {strides = array<i32>} : memref<16x32xbf16, #tpu.memory_space<vmem>>, vector<16x32xbf16>,
    } else {
    }
    return
  }
  func.func @transform_0(%arg0: i32, %arg1: i32) -> (i32, i32) {
    %c0_i32 = arith.constant 0 : i32
    return %arg0, %arg1 : i32, i32
  }
  func.func @transform_1(%arg0: i32, %arg1: i32) -> (i32, i32) {
    %c0_i32 = arith.constant 0 : i32
    %c0_i32_0 = arith.constant 0 : i32
    return %arg1, %c0_i32 : i32, i32
  }
  func.func @transform_2(%arg0: i32, %arg1: i32) -> (i32, i32) {
    %c0_i32 = arith.constant 0 : i32
    %c0_i32_0 = arith.constant 0 : i32
    %c0_i32_1 = arith.constant 0 : i32
    return %c0_i32, %c0_i32_0 : i32, i32
  }
  func.func @transform_3(%arg0: i32, %arg1: i32) -> (i32, i32) {
    %c0_i32 = arith.constant 0 : i32
    %c0_i32_0 = arith.constant 0 : i32
    return %arg0, %c0_i32 : i32, i32
  }
  func.func @transform_4(%arg0: i32, %arg1: i32) -> (i32, i32) {
    %c0_i32 = arith.constant 0 : i32
    %c0_i32_0 = arith.constant 0 : i32
    %c0_i32_1 = arith.constant 0 : i32
    return %c0_i32, %c0_i32_0 : i32, i32
  }
  func.func @transform_5(%arg0: i32, %arg1: i32) -> (i32, i32) {
    %c0_i32 = arith.constant 0 : i32
    %c0_i32_0 = arith.constant 0 : i32
    %c0_i32_1 = arith.constant 0 : i32
    return %c0_i32, %c0_i32_0 : i32, i32
  }
  func.func @transform_6(%arg0: i32, %arg1: i32) -> (i32, i32) {
    %c0_i32 = arith.constant 0 : i32
    %c0_i32_0 = arith.constant 0 : i32
    return %arg0, %c0_i32 : i32, i32
  }
}

module attributes {stable_mosaic.version = 11 : i64} {
  func.func @_mm_bias_act_kernel(%arg0: i32, %arg1: i32, %arg2: i32, %arg3: memref<16x32xbf16, #tpu.memory_space<vmem>>, %arg4: memref<32x32xbf16, #tpu.memory_space<vmem>>, %arg5: memref<1x32xf32, #tpu.memory_space<vmem>>, %arg6: memref<16x32xbf16, #tpu.memory_space<vmem>>, %arg7: memref<16x32xf32, #tpu.memory_space<vmem>>) attributes {dimension_semantics = [#tpu.dimension_semantics<parallel>, #tpu.dimension_semantics<parallel>, #tpu.dimension_semantics<arbitrary>], iteration_bounds = array<i64: 1, 1, 1>, scalar_prefetch = 0 : i64, scratch_operands = 1 : i64, tpu.core_type = #tpu.core_type<tc>, window_params = [{transform_indices = @transform_0, window_bounds = array<i64: 16, 32>}, {transform_indices = @transform_1, window_bounds = array<i64: 32, 32>}, {transform_indices = @transform_2, window_bounds = array<i64: 1, 32>}, {transform_indices = @transform_3, window_bounds = array<i64: 16, 32>}]} {
    %c0_i32 = arith.constant 0 : i32
    %0 = arith.cmpi eq, %arg2, %c0_i32 : i32
    %1 = arith.extui %0 : i1 to i32
    %c0_i32_0 = arith.constant 0 : i32
    %2 = arith.cmpi ne, %1, %c0_i32_0 : i32
    scf.if %2 {
      %cst_10 = arith.constant 0.000000e+00 : f32
      %12 = vector.broadcast %cst_10 : f32 to vector<16x32xf32>
      %c0_11 = arith.constant 0 : index
      %c0_12 = arith.constant 0 : index
      %13 = vector.load %arg7[%c0_11, %c0_12] : memref<16x32xf32, #tpu.memory_space<vmem>>, vector<16x32xf32>
      tpu.vector_store %arg7[%c0_11, %c0_12], %12 {strides = array<i32>} : memref<16x32xf32, #tpu.memory_space<vmem>>, vector<16x32xf32>,
    } else {
    }
    %c0 = arith.constant 0 : index
    %c0_1 = arith.constant 0 : index
    %3 = vector.load %arg7[%c0, %c0_1] : memref<16x32xf32, #tpu.memory_space<vmem>>, vector<16x32xf32>
    %c0_2 = arith.constant 0 : index
    %c0_3 = arith.constant 0 : index
    %4 = vector.load %arg3[%c0_2, %c0_3] : memref<16x32xbf16, #tpu.memory_space<vmem>>, vector<16x32xbf16>
    %c0_4 = arith.constant 0 : index
    %c0_5 = arith.constant 0 : index
    %5 = vector.load %arg4[%c0_4, %c0_5] : memref<32x32xbf16, #tpu.memory_space<vmem>>, vector<32x32xbf16>
    %cst = arith.constant dense<0.000000e+00> : vector<16x32xf32>
    %6 = tpu.matmul %4, %5, %cst {dimension_numbers = #tpu.dot_dimension_numbers<[1], [0], [0], [1], [0, 0, 1, 1], [], []>} : vector<16x32xbf16>, vector<32x32xbf16>, vector<16x32xf32> -> vector<16x32xf32>
    %7 = arith.addf %3, %6 : vector<16x32xf32>
    %c0_6 = arith.constant 0 : index
    %c0_7 = arith.constant 0 : index
    %8 = vector.load %arg7[%c0_6, %c0_7] : memref<16x32xf32, #tpu.memory_space<vmem>>, vector<16x32xf32>
    tpu.vector_store %arg7[%c0_6, %c0_7], %7 {strides = array<i32>} : memref<16x32xf32, #tpu.memory_space<vmem>>, vector<16x32xf32>,
    %c0_i32_8 = arith.constant 0 : i32
    %9 = arith.cmpi eq, %arg2, %c0_i32_8 : i32
    %10 = arith.extui %9 : i1 to i32
    %c0_i32_9 = arith.constant 0 : i32
    %11 = arith.cmpi ne, %10, %c0_i32_9 : i32
    scf.if %11 {
      %c0_10 = arith.constant 0 : index
      %c0_11 = arith.constant 0 : index
      %12 = vector.load %arg7[%c0_10, %c0_11] : memref<16x32xf32, #tpu.memory_space<vmem>>, vector<16x32xf32>
      %c0_12 = arith.constant 0 : index
      %c0_13 = arith.constant 0 : index
      %13 = vector.load %arg5[%c0_12, %c0_13] : memref<1x32xf32, #tpu.memory_space<vmem>>, vector<1x32xf32>
      %14 = vector.broadcast %13 : vector<1x32xf32> to vector<16x32xf32>
      %15 = arith.addf %12, %14 : vector<16x32xf32>
      %16 = math.tanh %15 : vector<16x32xf32>
      %17 = arith.truncf %16 : vector<16x32xf32> to vector<16x32xbf16>
      %c0_14 = arith.constant 0 : index
      %c0_15 = arith.constant 0 : index
      %18 = vector.load %arg6[%c0_14, %c0_15] : memref<16x32xbf16, #tpu.memory_space<vmem>>, vector<16x32xbf16>
      tpu.vector_store %arg6[%c0_14, %c0_15], %17 {strides = array<i32>} : memref<16x32xbf16, #tpu.memory_space<vmem>>, vector<16x32xbf16>,
    } else {
    }
    return
  }
  func.func @transform_0(%arg0: i32, %arg1: i32, %arg2: i32) -> (i32, i32) {
    %c0_i32 = arith.constant 0 : i32
    return %arg0, %arg2 : i32, i32
  }
  func.func @transform_1(%arg0: i32, %arg1: i32, %arg2: i32) -> (i32, i32) {
    %c0_i32 = arith.constant 0 : i32
    return %arg2, %arg1 : i32, i32
  }
  func.func @transform_2(%arg0: i32, %arg1: i32, %arg2: i32) -> (i32, i32) {
    %c0_i32 = arith.constant 0 : i32
    %c0_i32_0 = arith.constant 0 : i32
    return %c0_i32, %arg1 : i32, i32
  }
  func.func @transform_3(%arg0: i32, %arg1: i32, %arg2: i32) -> (i32, i32) {
    %c0_i32 = arith.constant 0 : i32
    return %arg0, %arg1 : i32, i32
  }
}

module attributes {stable_mosaic.version = 11 : i64} {
  func.func @_gen_ce_kernel(%arg0: i32, %arg1: i32, %arg2: memref<16x32xbf16, #tpu.memory_space<vmem>>, %arg3: memref<64x32xbf16, #tpu.memory_space<vmem>>, %arg4: memref<1x64xf32, #tpu.memory_space<vmem>>, %arg5: memref<16x1xi32, #tpu.memory_space<vmem>>, %arg6: memref<16x1xf32, #tpu.memory_space<vmem>>, %arg7: memref<16x1xf32, #tpu.memory_space<vmem>>, %arg8: memref<16x1xf32, #tpu.memory_space<vmem>>, %arg9: memref<16x1xf32, #tpu.memory_space<vmem>>) attributes {dimension_semantics = [#tpu.dimension_semantics<parallel>, #tpu.dimension_semantics<arbitrary>], iteration_bounds = array<i64: 1, 1>, scalar_prefetch = 0 : i64, scratch_operands = 3 : i64, tpu.core_type = #tpu.core_type<tc>, window_params = [{transform_indices = @transform_0, window_bounds = array<i64: 16, 32>}, {transform_indices = @transform_1, window_bounds = array<i64: 64, 32>}, {transform_indices = @transform_2, window_bounds = array<i64: 1, 64>}, {transform_indices = @transform_3, window_bounds = array<i64: 16, 1>}, {transform_indices = @transform_4, window_bounds = array<i64: 16, 1>}]} {
    %c0_i32 = arith.constant 0 : i32
    %0 = arith.cmpi eq, %arg1, %c0_i32 : i32
    %1 = arith.extui %0 : i1 to i32
    %c0_i32_0 = arith.constant 0 : i32
    %2 = arith.cmpi ne, %1, %c0_i32_0 : i32
    scf.if %2 {
      %cst_26 = arith.constant 0xFF800000 : f32
      %42 = vector.broadcast %cst_26 : f32 to vector<16x1xf32>
      %c0_27 = arith.constant 0 : index
      %c0_28 = arith.constant 0 : index
      %43 = vector.load %arg7[%c0_27, %c0_28] : memref<16x1xf32, #tpu.memory_space<vmem>>, vector<16x1xf32>
      tpu.vector_store %arg7[%c0_27, %c0_28], %42 {strides = array<i32>} : memref<16x1xf32, #tpu.memory_space<vmem>>, vector<16x1xf32>,
      %cst_29 = arith.constant 0.000000e+00 : f32
      %44 = vector.broadcast %cst_29 : f32 to vector<16x1xf32>
      %c0_30 = arith.constant 0 : index
      %c0_31 = arith.constant 0 : index
      %45 = vector.load %arg8[%c0_30, %c0_31] : memref<16x1xf32, #tpu.memory_space<vmem>>, vector<16x1xf32>
      tpu.vector_store %arg8[%c0_30, %c0_31], %44 {strides = array<i32>} : memref<16x1xf32, #tpu.memory_space<vmem>>, vector<16x1xf32>,
      %cst_32 = arith.constant 0.000000e+00 : f32
      %46 = vector.broadcast %cst_32 : f32 to vector<16x1xf32>
      %c0_33 = arith.constant 0 : index
      %c0_34 = arith.constant 0 : index
      %47 = vector.load %arg9[%c0_33, %c0_34] : memref<16x1xf32, #tpu.memory_space<vmem>>, vector<16x1xf32>
      tpu.vector_store %arg9[%c0_33, %c0_34], %46 {strides = array<i32>} : memref<16x1xf32, #tpu.memory_space<vmem>>, vector<16x1xf32>,
    } else {
    }
    %c0 = arith.constant 0 : index
    %c0_1 = arith.constant 0 : index
    %3 = vector.load %arg2[%c0, %c0_1] : memref<16x32xbf16, #tpu.memory_space<vmem>>, vector<16x32xbf16>
    %c0_2 = arith.constant 0 : index
    %c0_3 = arith.constant 0 : index
    %4 = vector.load %arg3[%c0_2, %c0_3] : memref<64x32xbf16, #tpu.memory_space<vmem>>, vector<64x32xbf16>
    %cst = arith.constant dense<0.000000e+00> : vector<16x64xf32>
    %5 = tpu.matmul %3, %4, %cst {dimension_numbers = #tpu.dot_dimension_numbers<[1], [1], [0], [0], [0, 0, 1, 0], [], []>} : vector<16x32xbf16>, vector<64x32xbf16>, vector<16x64xf32> -> vector<16x64xf32>
    %c0_4 = arith.constant 0 : index
    %c0_5 = arith.constant 0 : index
    %6 = vector.load %arg4[%c0_4, %c0_5] : memref<1x64xf32, #tpu.memory_space<vmem>>, vector<1x64xf32>
    %7 = vector.broadcast %6 : vector<1x64xf32> to vector<16x64xf32>
    %8 = arith.addf %5, %7 : vector<16x64xf32>
    %c0_6 = arith.constant 0 : index
    %c0_7 = arith.constant 0 : index
    %9 = vector.load %arg7[%c0_6, %c0_7] : memref<16x1xf32, #tpu.memory_space<vmem>>, vector<16x1xf32>
    %cst_8 = arith.constant dense<0xFF800000> : vector<16xf32>
    %10 = vector.multi_reduction <maximumf>, %8, %cst_8 [1] : vector<16x64xf32> to vector<16xf32>
    %11 = vector.shape_cast %10 : vector<16xf32> to vector<16x1xf32>
    %12 = arith.maximumf %9, %11 : vector<16x1xf32>
    %c0_9 = arith.constant 0 : index
    %c0_10 = arith.constant 0 : index
    %13 = vector.load %arg8[%c0_9, %c0_10] : memref<16x1xf32, #tpu.memory_space<vmem>>, vector<16x1xf32>
    %14 = arith.subf %9, %12 : vector<16x1xf32>
    %15 = math.exp %14 : vector<16x1xf32>
    %16 = arith.mulf %13, %15 : vector<16x1xf32>
    %17 = vector.broadcast %12 : vector<16x1xf32> to vector<16x64xf32>
    %18 = arith.subf %8, %17 : vector<16x64xf32>
    %19 = math.exp %18 : vector<16x64xf32>
    %cst_11 = arith.constant dense<0.000000e+00> : vector<16xf32>
    %20 = vector.multi_reduction <add>, %19, %cst_11 [1] : vector<16x64xf32> to vector<16xf32>
    %21 = vector.shape_cast %20 : vector<16xf32> to vector<16x1xf32>
    %22 = arith.addf %16, %21 : vector<16x1xf32>
    %c0_12 = arith.constant 0 : index
    %c0_13 = arith.constant 0 : index
    %23 = vector.load %arg8[%c0_12, %c0_13] : memref<16x1xf32, #tpu.memory_space<vmem>>, vector<16x1xf32>
    tpu.vector_store %arg8[%c0_12, %c0_13], %22 {strides = array<i32>} : memref<16x1xf32, #tpu.memory_space<vmem>>, vector<16x1xf32>,
    %c0_14 = arith.constant 0 : index
    %c0_15 = arith.constant 0 : index
    %24 = vector.load %arg7[%c0_14, %c0_15] : memref<16x1xf32, #tpu.memory_space<vmem>>, vector<16x1xf32>
    tpu.vector_store %arg7[%c0_14, %c0_15], %12 {strides = array<i32>} : memref<16x1xf32, #tpu.memory_space<vmem>>, vector<16x1xf32>,
    %25 = tpu.iota {dimensions = array<i32: 1>} : vector<16x64xi32>
    %c64_i32 = arith.constant 64 : i32
    %26 = arith.muli %arg1, %c64_i32 : i32
    %27 = vector.broadcast %26 : i32 to vector<16x64xi32>
    %28 = arith.addi %25, %27 : vector<16x64xi32>
    %c0_16 = arith.constant 0 : index
    %c0_17 = arith.constant 0 : index
    %29 = vector.load %arg9[%c0_16, %c0_17] : memref<16x1xf32, #tpu.memory_space<vmem>>, vector<16x1xf32>
    %c0_18 = arith.constant 0 : index
    %c0_19 = arith.constant 0 : index
    %30 = vector.load %arg5[%c0_18, %c0_19] : memref<16x1xi32, #tpu.memory_space<vmem>>, vector<16x1xi32>
    %31 = vector.broadcast %30 : vector<16x1xi32> to vector<16x64xi32>
    %32 = arith.cmpi eq, %28, %31 : vector<16x64xi32>
    %cst_20 = arith.constant 0.000000e+00 : f32
    %33 = vector.broadcast %cst_20 : f32 to vector<16x64xf32>
    %34 = arith.select %32, %8, %33 : vector<16x64xi1>, vector<16x64xf32>
    %cst_21 = arith.constant dense<0.000000e+00> : vector<16xf32>
    %35 = vector.multi_reduction <add>, %34, %cst_21 [1] : vector<16x64xf32> to vector<16xf32>
    %36 = vector.shape_cast %35 : vector<16xf32> to vector<16x1xf32>
    %37 = arith.addf %29, %36 : vector<16x1xf32>
    %c0_22 = arith.constant 0 : index
    %c0_23 = arith.constant 0 : index
    %38 = vector.load %arg9[%c0_22, %c0_23] : memref<16x1xf32, #tpu.memory_space<vmem>>, vector<16x1xf32>
    tpu.vector_store %arg9[%c0_22, %c0_23], %37 {strides = array<i32>} : memref<16x1xf32, #tpu.memory_space<vmem>>, vector<16x1xf32>,
    %c0_i32_24 = arith.constant 0 : i32
    %39 = arith.cmpi eq, %arg1, %c0_i32_24 : i32
    %40 = arith.extui %39 : i1 to i32
    %c0_i32_25 = arith.constant 0 : i32
    %41 = arith.cmpi ne, %40, %c0_i32_25 : i32
    scf.if %41 {
      %c0_26 = arith.constant 0 : index
      %c0_27 = arith.constant 0 : index
      %42 = vector.load %arg7[%c0_26, %c0_27] : memref<16x1xf32, #tpu.memory_space<vmem>>, vector<16x1xf32>
      %c0_28 = arith.constant 0 : index
      %c0_29 = arith.constant 0 : index
      %43 = vector.load %arg8[%c0_28, %c0_29] : memref<16x1xf32, #tpu.memory_space<vmem>>, vector<16x1xf32>
      %44 = math.log %43 : vector<16x1xf32>
      %45 = arith.addf %42, %44 : vector<16x1xf32>
      %c0_30 = arith.constant 0 : index
      %c0_31 = arith.constant 0 : index
      %46 = vector.load %arg9[%c0_30, %c0_31] : memref<16x1xf32, #tpu.memory_space<vmem>>, vector<16x1xf32>
      %47 = arith.subf %45, %46 : vector<16x1xf32>
      %c0_32 = arith.constant 0 : index
      %c0_33 = arith.constant 0 : index
      %48 = vector.load %arg6[%c0_32, %c0_33] : memref<16x1xf32, #tpu.memory_space<vmem>>, vector<16x1xf32>
      tpu.vector_store %arg6[%c0_32, %c0_33], %47 {strides = array<i32>} : memref<16x1xf32, #tpu.memory_space<vmem>>, vector<16x1xf32>,
    } else {
    }
    return
  }
  func.func @transform_0(%arg0: i32, %arg1: i32) -> (i32, i32) {
    %c0_i32 = arith.constant 0 : i32
    %c0_i32_0 = arith.constant 0 : i32
    return %arg0, %c0_i32 : i32, i32
  }
  func.func @transform_1(%arg0: i32, %arg1: i32) -> (i32, i32) {
    %c0_i32 = arith.constant 0 : i32
    %c0_i32_0 = arith.constant 0 : i32
    return %arg1, %c0_i32 : i32, i32
  }
  func.func @transform_2(%arg0: i32, %arg1: i32) -> (i32, i32) {
    %c0_i32 = arith.constant 0 : i32
    %c0_i32_0 = arith.constant 0 : i32
    return %c0_i32, %arg1 : i32, i32
  }
  func.func @transform_3(%arg0: i32, %arg1: i32) -> (i32, i32) {
    %c0_i32 = arith.constant 0 : i32
    %c0_i32_0 = arith.constant 0 : i32
    return %arg0, %c0_i32 : i32, i32
  }
  func.func @transform_4(%arg0: i32, %arg1: i32) -> (i32, i32) {
    %c0_i32 = arith.constant 0 : i32
    %c0_i32_0 = arith.constant 0 : i32
    return %arg0, %c0_i32 : i32, i32
  }
}

</mosaic_0001>

<llo_original>
// kernel: transformer_bert_forward.19
$region0: #{transformer_bert_forward.19}
  #allocation0 [shape = 'u32[]', space=smem, size = 0x4, offset = 0x4, fixed_abs, tag = 'smem constant byte address 0x4 - core index']
  #allocation1 [shape = 'u32[144,128]{1,0:T(1,128)}', space=vmem, size = 0x12000, scoped, tag = 'internal scratch']
  #allocation2 [shape = 'f32[32,64]{1,0:T(8,128)}', space=vmem, size = 0x4000, scoped, tag = 'scratch operand']
  %s0 = inlined_call_operand.vmem [shape: bf16[32,32], index: 0, kind: input, shape index: {}]
  %s1 = inlined_call_operand.vmem [shape: bf16[32,64], index: 1, kind: input, shape index: {}]
  %s2 = inlined_call_operand.vmem [shape: f32[1,64], index: 2, kind: input, shape index: {}]
  %s3 = inlined_call_operand.vmem [shape: bf16[32,64], index: 3, kind: output, shape index: {}]
  %s4 = sld [smem:[#allocation0]]
  $region30: #{transformer_bert_forward.19} parent=0
    _
  %s6 = ssub.s32 1, %s4
  %s7 = scalar_select 0, %s6, %s4
  // Predicated region
  $region2: #{transformer_bert_forward.19} parent=0 // pred_check
    _
  $region3: #{transformer_bert_forward.19} parent=0 // pred_check_branch
    %9 = sbr.rel (0) target = $region5
  $region4: #{transformer_bert_forward.19} parent=0 // pred_region
    _
  $region5: #{transformer_bert_forward.19} parent=0 // pred_fallthru
    _
  // Predicated region
  $region6: #{transformer_bert_forward.19} parent=0 // pred_check
    _
  $region7: #{transformer_bert_forward.19} parent=0 // pred_check_branch
    %11 = sbr.rel (0) target = $region9
  $region8: #{transformer_bert_forward.19} parent=0 // pred_region
    _
  $region9: #{transformer_bert_forward.19} parent=0 // pred_fallthru
    _
  // Predicated region
  $region10: #{transformer_bert_forward.19} parent=0 // pred_check
    _
  $region11: #{transformer_bert_forward.19} parent=0 // pred_check_branch
    %13 = sbr.rel (0) target = $region13
  $region12: #{transformer_bert_forward.19} parent=0 // pred_region
    _
  $region13: #{transformer_bert_forward.19} parent=0 // pred_fallthru
    _
  %p15 = scmp.eq.s32.totalorder 0, 0
  // Predicated region
  $region14: #{transformer_bert_forward.19} parent=0 // pred_check
    %p16 = pneg %p15
  $region15: #{transformer_bert_forward.19} parent=0 // pred_check_branch
    %18 = sbr.rel (%p16) target = $region17
  $region16: #{transformer_bert_forward.19} parent=0 // pred_region
    %vm19 = vcmask 523264
    %20 = vst.msk [vmem:[#allocation2] sm:$0xff] %vm19, 0.0
    %21 = vst.msk [vmem:[#allocation2 + $0x8] sm:$0xff] %vm19, 0.0
    %22 = vst.msk [vmem:[#allocation2 + $0x10] sm:$0xff] %vm19, 0.0
    %23 = vst.msk [vmem:[#allocation2 + $0x18] sm:$0xff] %vm19, 0.0
  $region17: #{transformer_bert_forward.19} parent=0 // pred_fallthru
    _
  %v24 = vld [vmem:[#allocation2] sm:$0xff]
  %v25 = vld [vmem:[#allocation2 + $0x8] sm:$0xff]
  %v26 = vld [vmem:[#allocation2 + $0x10] sm:$0xff]
  %v27 = vld [vmem:[#allocation2 + $0x18] sm:$0xff]
  %v28 = vld [vmem:[%s0] sm:$0xf]
  %v29 = vld [vmem:[%s0 + $0x4] sm:$0xf]
  %v30 = vld [vmem:[%s0 + $0x8] sm:$0xf]
  %v31 = vld [vmem:[%s0 + $0xc] sm:$0xf]
  %v32 = vld [vmem:[%s1] sm:$0xf]
  %v33 = vld [vmem:[%s1 + $0x4] sm:$0xf]
  %v34 = vld [vmem:[%s1 + $0x8] sm:$0xf]
  %v35 = vld [vmem:[%s1 + $0xc] sm:$0xf]
  %v40 = vunpack.c.l.b16 %v28
  %v41 = vunpack.c.l.b16 %v29
  %v42 = vunpack.c.l.b16 %v30
  %v43 = vunpack.c.l.b16 %v31
  %v44 = vpack.c.b16 %v41, %v40
  %v45 = vpack.c.b16 %v43, %v42
  %v50 = vunpack.c.l.b16 %v32
  %v51 = vunpack.c.l.b16 %v33
  %v52 = vunpack.c.l.b16 %v34
  %v53 = vunpack.c.l.b16 %v35
  %v54 = vpack.c.b16 %v51, %v50
  %v55 = vpack.c.b16 %v53, %v52
  %vm58 = vcmask 261120
  %v60 = vsel %vm58, %v44, 0
  %v63 = vsel %vm58, %v45, 0
  %65 = vmatprep.subr.bf16.mxu0 0
  %66 = vmatpush1.bf16.msra.mxu0 0
  %67 = vmatprep.subr.bf16.mxu0 0
  %68 = vmatpush1.bf16.msra.mxu0 0
  %69 = vmatprep.subr.bf16.mxu0 0
  %70 = vmatpush1.bf16.msra.mxu0 0
  %71 = vmatprep.subr.bf16.mxu0 0
  %72 = vmatpush1.bf16.msra.mxu0 0
  %73 = vmatprep.subr.bf16.mxu0 0
  %74 = vmatpush1.bf16.msra.mxu0 0
  %75 = vmatprep.subr.bf16.mxu0 0
  %76 = vmatpush1.bf16.msra.mxu0 0
  %77 = vmatprep.subr.bf16.mxu0 0
  %78 = vmatpush1.bf16.msra.mxu0 %v55
  %79 = vmatprep.subr.bf16.mxu0 0
  %80 = vmatpush1.bf16.msra.mxu0 %v54
  %81 = vmatprep.subr.bf16.mxu0 0
  %82 = vmatpush2.bf16.msra.mxu0 0
  %83 = vmatprep.subr.bf16.mxu0 0
  %84 = vmatpush2.bf16.msra.mxu0 0
  %85 = vmatprep.subr.bf16.mxu0 0
  %86 = vmatpush2.bf16.msra.mxu0 0
  %87 = vmatprep.subr.bf16.mxu0 0
  %88 = vmatpush2.bf16.msra.mxu0 0
  %89 = vmatprep.subr.bf16.mxu0 0
  %90 = vmatpush2.bf16.msra.mxu0 0
  %91 = vmatprep.subr.bf16.mxu0 0
  %92 = vmatpush2.bf16.msra.mxu0 0
  %93 = vmatprep.subr.bf16.mxu0 0
  %94 = vmatpush2.bf16.msra.mxu0 0
  %95 = vmatprep.subr.bf16.mxu0 0
  %96 = vmatpush2.bf16.msra.mxu0 0
  %97 = vmatprep.mubr.bf16.mxu0 0
  %98 = vmatmul.mubr.bf16.gmra.mxu0 %v60
  %v99 = vpop.f32.mrf.mxu0
  %v100 = vadd.f32 0.0, %v99
  %v101 = vpop.f32.mrf.mxu0
  %v102 = vpop.f32.mrf.mxu0
  %v103 = vadd.f32 0.0, %v102
  %v104 = vpop.f32.mrf.mxu0
  %105 = vmatprep.mubr.bf16.mxu0 0
  %106 = vmatmul.mubr.bf16.gmra.mxu0 %v63
  %v107 = vpop.f32.mrf.mxu0
  %v108 = vadd.f32 0.0, %v107
  %v109 = vpop.f32.mrf.mxu0
  %v110 = vpop.f32.mrf.mxu0
  %v111 = vadd.f32 0.0, %v110
  %v112 = vpop.f32.mrf.mxu0
  %113 = vdwg.mxu0
  %v114 = vadd.f32 %v24, %v100
  %v115 = vadd.f32 %v25, %v103
  %v116 = vadd.f32 %v26, %v108
  %v117 = vadd.f32 %v27, %v111
  %vm118 = vcmask 523264
  %119 = vst.msk [vmem:[#allocation2] sm:$0xff] %vm118, %v114
  %120 = vst.msk [vmem:[#allocation2 + $0x8] sm:$0xff] %vm118, %v115
  %121 = vst.msk [vmem:[#allocation2 + $0x10] sm:$0xff] %vm118, %v116
  %122 = vst.msk [vmem:[#allocation2 + $0x18] sm:$0xff] %vm118, %v117
  // Predicated region
  $region18: #{transformer_bert_forward.19} parent=0 // pred_check
    %p123 = pneg %p15
  $region19: #{transformer_bert_forward.19} parent=0 // pred_check_branch
    %125 = sbr.rel (%p123) target = $region21
  $region20: #{transformer_bert_forward.19} parent=0 // pred_region
    %v126 = vld [vmem:[#allocation2] sm:$0xff]
    %v127 = vld [vmem:[#allocation2 + $0x8] sm:$0xff]
    %v128 = vld [vmem:[#allocation2 + $0x10] sm:$0xff]
    %v129 = vld [vmem:[#allocation2 + $0x18] sm:$0xff]
    %v130 = vld [vmem:[%s2] sm:$0x1]
    %v132 = vlaneseq
    %v133 = vshrl.u32 %v132, 7
    %v134 = vsub.s32 0, %v133
    %v135 = vrot.slane %v130, %v134
    %v137 = vadd.f32 %v126, %v135
    %v138 = vadd.f32 %v127, %v135
    %v139 = vadd.f32 %v128, %v135
    %v140 = vadd.f32 %v129, %v135
    %v141 = vmul.f32 %v137, 0.5
    %v142 = vmul.f32 %v138, 0.5
    %v143 = vmul.f32 %v139, 0.5
    %v144 = vmul.f32 %v140, 0.5
    %v145 = vmul.f32 %v137, 0.044715
    %v146 = vmul.f32 %v138, 0.044715
    %v147 = vmul.f32 %v139, 0.044715
    %v148 = vmul.f32 %v140, 0.044715
    %v149 = vmul.f32 %v145, %v137
    %v150 = vmul.f32 %v146, %v138
    %v151 = vmul.f32 %v147, %v139
    %v152 = vmul.f32 %v148, %v140
    %v153 = vmul.f32 %v149, %v137
    %v154 = vmul.f32 %v150, %v138
    %v155 = vmul.f32 %v151, %v139
    %v156 = vmul.f32 %v152, %v140
    %v157 = vadd.f32 %v137, %v153
    %v158 = vadd.f32 %v138, %v154
    %v159 = vadd.f32 %v139, %v155
    %v160 = vadd.f32 %v140, %v156
    %v161 = vmul.f32 %v157, 0.7978846
    %v162 = vmul.f32 %v158, 0.7978846
    %v163 = vmul.f32 %v159, 0.7978846
    %v164 = vmul.f32 %v160, 0.7978846
    %v165 = vtanh.pop %v161
    %v166 = vtanh.pop %v162
    %v167 = vtanh.pop %v163
    %v168 = vtanh.pop %v164
    %v169 = vadd.f32 %v165, 1.0
    %v170 = vadd.f32 %v166, 1.0
    %v171 = vadd.f32 %v167, 1.0
    %v172 = vadd.f32 %v168, 1.0
    %v173 = vmul.f32 %v141, %v169
    %v174 = vmul.f32 %v142, %v170
    %v175 = vmul.f32 %v143, %v171
    %v176 = vmul.f32 %v144, %v172
    %v177 = vpack.c.bf16 %v174, %v173
    %v178 = vpack.c.bf16 %v176, %v175
    %v181 = vunpack.c.l.b16 %v177
    %v182 = vunpack.c.h.b16 %v177
    %v183 = vunpack.c.l.b16 %v178
    %v184 = vunpack.c.h.b16 %v178
    %v185 = vpack.c.b16 %v181, %v181
    %v186 = vpack.c.b16 %v182, %v182
    %v187 = vpack.c.b16 %v183, %v183
    %v188 = vpack.c.b16 %v184, %v184
    %vm193 = vcmask 519168
    %194 = vst.msk [vmem:[%s3] sm:$0xf] %vm193, %v185
    %195 = vst.msk [vmem:[%s3 + $0x4] sm:$0xf] %vm193, %v186
    %196 = vst.msk [vmem:[%s3 + $0x8] sm:$0xf] %vm193, %v187
    %197 = vst.msk [vmem:[%s3 + $0xc] sm:$0xf] %vm193, %v188
  $region21: #{transformer_bert_forward.19} parent=0 // pred_fallthru
    _
  // Predicated region
  $region22: #{transformer_bert_forward.19} parent=0 // pred_check
    _
  $region23: #{transformer_bert_forward.19} parent=0 // pred_check_branch
    %199 = sbr.rel (0) target = $region25
  $region24: #{transformer_bert_forward.19} parent=0 // pred_region
    _
  $region25: #{transformer_bert_forward.19} parent=0 // pred_fallthru
    _
  // Predicated region
  $region26: #{transformer_bert_forward.19} parent=0 // pred_check
    _
  $region27: #{transformer_bert_forward.19} parent=0 // pred_check_branch
    %201 = sbr.rel (0) target = $region29
  $region28: #{transformer_bert_forward.19} parent=0 // pred_region
    _
  $region29: #{transformer_bert_forward.19} parent=0 // pred_fallthru
    _

// kernel: transformer_bert_forward.16
$region0: #{transformer_bert_forward.16}
  #allocation0 [shape = 'u32[]', space=smem, size = 0x4, offset = 0x4, fixed_abs, tag = 'smem constant byte address 0x4 - core index']
  #allocation1 [shape = 'u32[144,128]{1,0:T(1,128)}', space=vmem, size = 0x12000, scoped, tag = 'internal scratch']
  #allocation2 [shape = 'f32[32,96]{1,0:T(8,128)}', space=vmem, size = 0x4000, scoped, tag = 'scratch operand']
  %s0 = inlined_call_operand.vmem [shape: bf16[32,32], index: 0, kind: input, shape index: {}]
  %s1 = inlined_call_operand.vmem [shape: bf16[32,96], index: 1, kind: input, shape index: {}]
  %s2 = inlined_call_operand.vmem [shape: f32[1,96], index: 2, kind: input, shape index: {}]
  %s3 = inlined_call_operand.vmem [shape: bf16[32,96], index: 3, kind: output, shape index: {}]
  %s4 = sld [smem:[#allocation0]]
  $region30: #{transformer_bert_forward.16} parent=0
    _
  %s6 = ssub.s32 1, %s4
  %s7 = scalar_select 0, %s6, %s4
  // Predicated region
  $region2: #{transformer_bert_forward.16} parent=0 // pred_check
    _
  $region3: #{transformer_bert_forward.16} parent=0 // pred_check_branch
    %9 = sbr.rel (0) target = $region5
  $region4: #{transformer_bert_forward.16} parent=0 // pred_region
    _
  $region5: #{transformer_bert_forward.16} parent=0 // pred_fallthru
    _
  // Predicated region
  $region6: #{transformer_bert_forward.16} parent=0 // pred_check
    _
  $region7: #{transformer_bert_forward.16} parent=0 // pred_check_branch
    %11 = sbr.rel (0) target = $region9
  $region8: #{transformer_bert_forward.16} parent=0 // pred_region
    _
  $region9: #{transformer_bert_forward.16} parent=0 // pred_fallthru
    _
  // Predicated region
  $region10: #{transformer_bert_forward.16} parent=0 // pred_check
    _
  $region11: #{transformer_bert_forward.16} parent=0 // pred_check_branch
    %13 = sbr.rel (0) target = $region13
  $region12: #{transformer_bert_forward.16} parent=0 // pred_region
    _
  $region13: #{transformer_bert_forward.16} parent=0 // pred_fallthru
    _
  %p15 = scmp.eq.s32.totalorder 0, 0
  // Predicated region
  $region14: #{transformer_bert_forward.16} parent=0 // pred_check
    %p16 = pneg %p15
  $region15: #{transformer_bert_forward.16} parent=0 // pred_check_branch
    %18 = sbr.rel (%p16) target = $region17
  $region16: #{transformer_bert_forward.16} parent=0 // pred_region
    %vm19 = vcmask 785408
    %20 = vst.msk [vmem:[#allocation2] sm:$0xff] %vm19, 0.0
    %21 = vst.msk [vmem:[#allocation2 + $0x8] sm:$0xff] %vm19, 0.0
    %22 = vst.msk [vmem:[#allocation2 + $0x10] sm:$0xff] %vm19, 0.0
    %23 = vst.msk [vmem:[#allocation2 + $0x18] sm:$0xff] %vm19, 0.0
  $region17: #{transformer_bert_forward.16} parent=0 // pred_fallthru
    _
  %v24 = vld [vmem:[#allocation2] sm:$0xff]
  %v25 = vld [vmem:[#allocation2 + $0x8] sm:$0xff]
  %v26 = vld [vmem:[#allocation2 + $0x10] sm:$0xff]
  %v27 = vld [vmem:[#allocation2 + $0x18] sm:$0xff]
  %v28 = vld [vmem:[%s0] sm:$0xf]
  %v29 = vld [vmem:[%s0 + $0x4] sm:$0xf]
  %v30 = vld [vmem:[%s0 + $0x8] sm:$0xf]
  %v31 = vld [vmem:[%s0 + $0xc] sm:$0xf]
  %v32 = vld [vmem:[%s1] sm:$0xf]
  %v33 = vld [vmem:[%s1 + $0x4] sm:$0xf]
  %v34 = vld [vmem:[%s1 + $0x8] sm:$0xf]
  %v35 = vld [vmem:[%s1 + $0xc] sm:$0xf]
  %v40 = vunpack.c.l.b16 %v28
  %v41 = vunpack.c.l.b16 %v29
  %v42 = vunpack.c.l.b16 %v30
  %v43 = vunpack.c.l.b16 %v31
  %v44 = vpack.c.b16 %v41, %v40
  %v45 = vpack.c.b16 %v43, %v42
  %v50 = vunpack.c.l.b16 %v32
  %v51 = vunpack.c.l.b16 %v33
  %v52 = vunpack.c.l.b16 %v34
  %v53 = vunpack.c.l.b16 %v35
  %v54 = vpack.c.b16 %v51, %v50
  %v55 = vpack.c.b16 %v53, %v52
  %vm58 = vcmask 261120
  %v60 = vsel %vm58, %v44, 0
  %v63 = vsel %vm58, %v45, 0
  %65 = vmatprep.subr.bf16.mxu0 0
  %66 = vmatpush1.bf16.msra.mxu0 0
  %67 = vmatprep.subr.bf16.mxu0 0
  %68 = vmatpush1.bf16.msra.mxu0 0
  %69 = vmatprep.subr.bf16.mxu0 0
  %70 = vmatpush1.bf16.msra.mxu0 0
  %71 = vmatprep.subr.bf16.mxu0 0
  %72 = vmatpush1.bf16.msra.mxu0 0
  %73 = vmatprep.subr.bf16.mxu0 0
  %74 = vmatpush1.bf16.msra.mxu0 0
  %75 = vmatprep.subr.bf16.mxu0 0
  %76 = vmatpush1.bf16.msra.mxu0 0
  %77 = vmatprep.subr.bf16.mxu0 0
  %78 = vmatpush1.bf16.msra.mxu0 %v55
  %79 = vmatprep.subr.bf16.mxu0 0
  %80 = vmatpush1.bf16.msra.mxu0 %v54
  %81 = vmatprep.subr.bf16.mxu0 0
  %82 = vmatpush2.bf16.msra.mxu0 0
  %83 = vmatprep.subr.bf16.mxu0 0
  %84 = vmatpush2.bf16.msra.mxu0 0
  %85 = vmatprep.subr.bf16.mxu0 0
  %86 = vmatpush2.bf16.msra.mxu0 0
  %87 = vmatprep.subr.bf16.mxu0 0
  %88 = vmatpush2.bf16.msra.mxu0 0
  %89 = vmatprep.subr.bf16.mxu0 0
  %90 = vmatpush2.bf16.msra.mxu0 0
  %91 = vmatprep.subr.bf16.mxu0 0
  %92 = vmatpush2.bf16.msra.mxu0 0
  %93 = vmatprep.subr.bf16.mxu0 0
  %94 = vmatpush2.bf16.msra.mxu0 0
  %95 = vmatprep.subr.bf16.mxu0 0
  %96 = vmatpush2.bf16.msra.mxu0 0
  %97 = vmatprep.mubr.bf16.mxu0 0
  %98 = vmatmul.mubr.bf16.gmra.mxu0 %v60
  %v99 = vpop.f32.mrf.mxu0
  %v100 = vadd.f32 0.0, %v99
  %v101 = vpop.f32.mrf.mxu0
  %v102 = vpop.f32.mrf.mxu0
  %v103 = vadd.f32 0.0, %v102
  %v104 = vpop.f32.mrf.mxu0
  %105 = vmatprep.mubr.bf16.mxu0 0
  %106 = vmatmul.mubr.bf16.gmra.mxu0 %v63
  %v107 = vpop.f32.mrf.mxu0
  %v108 = vadd.f32 0.0, %v107
  %v109 = vpop.f32.mrf.mxu0
  %v110 = vpop.f32.mrf.mxu0
  %v111 = vadd.f32 0.0, %v110
  %v112 = vpop.f32.mrf.mxu0
  %113 = vdwg.mxu0
  %v114 = vadd.f32 %v24, %v100
  %v115 = vadd.f32 %v25, %v103
  %v116 = vadd.f32 %v26, %v108
  %v117 = vadd.f32 %v27, %v111
  %vm118 = vcmask 785408
  %119 = vst.msk [vmem:[#allocation2] sm:$0xff] %vm118, %v114
  %120 = vst.msk [vmem:[#allocation2 + $0x8] sm:$0xff] %vm118, %v115
  %121 = vst.msk [vmem:[#allocation2 + $0x10] sm:$0xff] %vm118, %v116
  %122 = vst.msk [vmem:[#allocation2 + $0x18] sm:$0xff] %vm118, %v117
  // Predicated region
  $region18: #{transformer_bert_forward.16} parent=0 // pred_check
    %p123 = pneg %p15
  $region19: #{transformer_bert_forward.16} parent=0 // pred_check_branch
    %125 = sbr.rel (%p123) target = $region21
  $region20: #{transformer_bert_forward.16} parent=0 // pred_region
    %v126 = vld [vmem:[#allocation2] sm:$0xff]
    %v127 = vld [vmem:[#allocation2 + $0x8] sm:$0xff]
    %v128 = vld [vmem:[#allocation2 + $0x10] sm:$0xff]
    %v129 = vld [vmem:[#allocation2 + $0x18] sm:$0xff]
    %v130 = vld [vmem:[%s2] sm:$0x1]
    %v132 = vlaneseq
    %v133 = vshrl.u32 %v132, 7
    %v134 = vsub.s32 0, %v133
    %v135 = vrot.slane %v130, %v134
    %v137 = vadd.f32 %v126, %v135
    %v138 = vadd.f32 %v127, %v135
    %v139 = vadd.f32 %v128, %v135
    %v140 = vadd.f32 %v129, %v135
    %v141 = vpack.c.bf16 %v138, %v137
    %v142 = vpack.c.bf16 %v140, %v139
    %v145 = vunpack.c.l.b16 %v141
    %v146 = vunpack.c.h.b16 %v141
    %v147 = vunpack.c.l.b16 %v142
    %v148 = vunpack.c.h.b16 %v142
    %v149 = vpack.c.b16 %v145, %v145
    %v150 = vpack.c.b16 %v146, %v146
    %v151 = vpack.c.b16 %v147, %v147
    %v152 = vpack.c.b16 %v148, %v148
    %vm157 = vcmask 781312
    %158 = vst.msk [vmem:[%s3] sm:$0xf] %vm157, %v149
    %159 = vst.msk [vmem:[%s3 + $0x4] sm:$0xf] %vm157, %v150
    %160 = vst.msk [vmem:[%s3 + $0x8] sm:$0xf] %vm157, %v151
    %161 = vst.msk [vmem:[%s3 + $0xc] sm:$0xf] %vm157, %v152
  $region21: #{transformer_bert_forward.16} parent=0 // pred_fallthru
    _
  // Predicated region
  $region22: #{transformer_bert_forward.16} parent=0 // pred_check
    _
  $region23: #{transformer_bert_forward.16} parent=0 // pred_check_branch
    %163 = sbr.rel (0) target = $region25
  $region24: #{transformer_bert_forward.16} parent=0 // pred_region
    _
  $region25: #{transformer_bert_forward.16} parent=0 // pred_fallthru
    _
  // Predicated region
  $region26: #{transformer_bert_forward.16} parent=0 // pred_check
    _
  $region27: #{transformer_bert_forward.16} parent=0 // pred_check_branch
    %165 = sbr.rel (0) target = $region29
  $region28: #{transformer_bert_forward.16} parent=0 // pred_region
    _
  $region29: #{transformer_bert_forward.16} parent=0 // pred_fallthru
    _

// kernel: transformer_bert_forward.18
$region0: #{transformer_bert_forward.18}
  #allocation0 [shape = 'u32[]', space=smem, size = 0x4, offset = 0x4, fixed_abs, tag = 'smem constant byte address 0x4 - core index']
  #allocation1 [shape = 'u32[144,128]{1,0:T(1,128)}', space=vmem, size = 0x12000, scoped, tag = 'internal scratch']
  #allocation2 [shape = 'f32[32,32]{1,0:T(8,128)}', space=vmem, size = 0x4000, scoped, tag = 'scratch operand']
  %s0 = inlined_call_operand.vmem [shape: bf16[32,32], index: 0, kind: input, shape index: {}]
  %s1 = inlined_call_operand.vmem [shape: bf16[32,32], index: 1, kind: input, shape index: {}]
  %s2 = inlined_call_operand.vmem [shape: f32[1,32], index: 2, kind: input, shape index: {}]
  %s3 = inlined_call_operand.vmem [shape: bf16[32,32], index: 3, kind: input, shape index: {}]
  %s4 = inlined_call_operand.vmem [shape: f32[1,32], index: 4, kind: input, shape index: {}]
  %s5 = inlined_call_operand.vmem [shape: f32[1,32], index: 5, kind: input, shape index: {}]
  %s6 = inlined_call_operand.vmem [shape: bf16[32,32], index: 6, kind: output, shape index: {}]
  %s7 = sld [smem:[#allocation0]]
  $region42: #{transformer_bert_forward.18} parent=0
    _
  %s9 = ssub.s32 1, %s7
  %s10 = scalar_select 0, %s9, %s7
  // Predicated region
  $region2: #{transformer_bert_forward.18} parent=0 // pred_check
    _
  $region3: #{transformer_bert_forward.18} parent=0 // pred_check_branch
    %12 = sbr.rel (0) target = $region5
  $region4: #{transformer_bert_forward.18} parent=0 // pred_region
    _
  $region5: #{transformer_bert_forward.18} parent=0 // pred_fallthru
    _
  // Predicated region
  $region6: #{transformer_bert_forward.18} parent=0 // pred_check
    _
  $region7: #{transformer_bert_forward.18} parent=0 // pred_check_branch
    %14 = sbr.rel (0) target = $region9
  $region8: #{transformer_bert_forward.18} parent=0 // pred_region
    _
  $region9: #{transformer_bert_forward.18} parent=0 // pred_fallthru
    _
  // Predicated region
  $region10: #{transformer_bert_forward.18} parent=0 // pred_check
    _
  $region11: #{transformer_bert_forward.18} parent=0 // pred_check_branch
    %16 = sbr.rel (0) target = $region13
  $region12: #{transformer_bert_forward.18} parent=0 // pred_region
    _
  $region13: #{transformer_bert_forward.18} parent=0 // pred_fallthru
    _
  // Predicated region
  $region14: #{transformer_bert_forward.18} parent=0 // pred_check
    _
  $region15: #{transformer_bert_forward.18} parent=0 // pred_check_branch
    %18 = sbr.rel (0) target = $region17
  $region16: #{transformer_bert_forward.18} parent=0 // pred_region
    _
  $region17: #{transformer_bert_forward.18} parent=0 // pred_fallthru
    _
  // Predicated region
  $region18: #{transformer_bert_forward.18} parent=0 // pred_check
    _
  $region19: #{transformer_bert_forward.18} parent=0 // pred_check_branch
    %20 = sbr.rel (0) target = $region21
  $region20: #{transformer_bert_forward.18} parent=0 // pred_region
    _
  $region21: #{transformer_bert_forward.18} parent=0 // pred_fallthru
    _
  // Predicated region
  $region22: #{transformer_bert_forward.18} parent=0 // pred_check
    _
  $region23: #{transformer_bert_forward.18} parent=0 // pred_check_branch
    %22 = sbr.rel (0) target = $region25
  $region24: #{transformer_bert_forward.18} parent=0 // pred_region
    _
  $region25: #{transformer_bert_forward.18} parent=0 // pred_fallthru
    _
  %p24 = scmp.eq.s32.totalorder 0, 0
  // Predicated region
  $region26: #{transformer_bert_forward.18} parent=0 // pred_check
    %p25 = pneg %p24
  $region27: #{transformer_bert_forward.18} parent=0 // pred_check_branch
    %27 = sbr.rel (%p25) target = $region29
  $region28: #{transformer_bert_forward.18} parent=0 // pred_region
    %vm28 = vcmask 261120
    %29 = vst.msk [vmem:[#allocation2] sm:$0xff] %vm28, 0.0
    %30 = vst.msk [vmem:[#allocation2 + $0x8] sm:$0xff] %vm28, 0.0
    %31 = vst.msk [vmem:[#allocation2 + $0x10] sm:$0xff] %vm28, 0.0
    %32 = vst.msk [vmem:[#allocation2 + $0x18] sm:$0xff] %vm28, 0.0
  $region29: #{transformer_bert_forward.18} parent=0 // pred_fallthru
    _
  %v33 = vld [vmem:[#allocation2] sm:$0xff]
  %v34 = vld [vmem:[#allocation2 + $0x8] sm:$0xff]
  %v35 = vld [vmem:[#allocation2 + $0x10] sm:$0xff]
  %v36 = vld [vmem:[#allocation2 + $0x18] sm:$0xff]
  %v37 = vld [vmem:[%s0] sm:$0xf]
  %v38 = vld [vmem:[%s0 + $0x4] sm:$0xf]
  %v39 = vld [vmem:[%s0 + $0x8] sm:$0xf]
  %v40 = vld [vmem:[%s0 + $0xc] sm:$0xf]
  %v41 = vld [vmem:[%s1] sm:$0xf]
  %v42 = vld [vmem:[%s1 + $0x4] sm:$0xf]
  %v43 = vld [vmem:[%s1 + $0x8] sm:$0xf]
  %v44 = vld [vmem:[%s1 + $0xc] sm:$0xf]
  %v49 = vunpack.c.l.b16 %v37
  %v50 = vunpack.c.l.b16 %v38
  %v51 = vunpack.c.l.b16 %v39
  %v52 = vunpack.c.l.b16 %v40
  %v53 = vpack.c.b16 %v50, %v49
  %v54 = vpack.c.b16 %v52, %v51
  %v59 = vunpack.c.l.b16 %v41
  %v60 = vunpack.c.l.b16 %v42
  %v61 = vunpack.c.l.b16 %v43
  %v62 = vunpack.c.l.b16 %v44
  %v63 = vpack.c.b16 %v60, %v59
  %v64 = vpack.c.b16 %v62, %v61
  %vm67 = vcmask 261120
  %v69 = vsel %vm67, %v53, 0
  %v72 = vsel %vm67, %v54, 0
  %74 = vmatprep.subr.bf16.mxu0 0
  %75 = vmatpush1.bf16.msra.mxu0 0
  %76 = vmatprep.subr.bf16.mxu0 0
  %77 = vmatpush1.bf16.msra.mxu0 0
  %78 = vmatprep.subr.bf16.mxu0 0
  %79 = vmatpush1.bf16.msra.mxu0 0
  %80 = vmatprep.subr.bf16.mxu0 0
  %81 = vmatpush1.bf16.msra.mxu0 0
  %82 = vmatprep.subr.bf16.mxu0 0
  %83 = vmatpush1.bf16.msra.mxu0 0
  %84 = vmatprep.subr.bf16.mxu0 0
  %85 = vmatpush1.bf16.msra.mxu0 0
  %86 = vmatprep.subr.bf16.mxu0 0
  %87 = vmatpush1.bf16.msra.mxu0 %v64
  %88 = vmatprep.subr.bf16.mxu0 0
  %89 = vmatpush1.bf16.msra.mxu0 %v63
  %90 = vmatprep.subr.bf16.mxu0 0
  %91 = vmatpush2.bf16.msra.mxu0 0
  %92 = vmatprep.subr.bf16.mxu0 0
  %93 = vmatpush2.bf16.msra.mxu0 0
  %94 = vmatprep.subr.bf16.mxu0 0
  %95 = vmatpush2.bf16.msra.mxu0 0
  %96 = vmatprep.subr.bf16.mxu0 0
  %97 = vmatpush2.bf16.msra.mxu0 0
  %98 = vmatprep.subr.bf16.mxu0 0
  %99 = vmatpush2.bf16.msra.mxu0 0
  %100 = vmatprep.subr.bf16.mxu0 0
  %101 = vmatpush2.bf16.msra.mxu0 0
  %102 = vmatprep.subr.bf16.mxu0 0
  %103 = vmatpush2.bf16.msra.mxu0 0
  %104 = vmatprep.subr.bf16.mxu0 0
  %105 = vmatpush2.bf16.msra.mxu0 0
  %106 = vmatprep.mubr.bf16.mxu0 0
  %107 = vmatmul.mubr.bf16.gmra.mxu0 %v69
  %v108 = vpop.f32.mrf.mxu0
  %v109 = vadd.f32 0.0, %v108
  %v110 = vpop.f32.mrf.mxu0
  %v111 = vpop.f32.mrf.mxu0
  %v112 = vadd.f32 0.0, %v111
  %v113 = vpop.f32.mrf.mxu0
  %114 = vmatprep.mubr.bf16.mxu0 0
  %115 = vmatmul.mubr.bf16.gmra.mxu0 %v72
  %v116 = vpop.f32.mrf.mxu0
  %v117 = vadd.f32 0.0, %v116
  %v118 = vpop.f32.mrf.mxu0
  %v119 = vpop.f32.mrf.mxu0
  %v120 = vadd.f32 0.0, %v119
  %v121 = vpop.f32.mrf.mxu0
  %122 = vdwg.mxu0
  %v123 = vadd.f32 %v33, %v109
  %v124 = vadd.f32 %v34, %v112
  %v125 = vadd.f32 %v35, %v117
  %v126 = vadd.f32 %v36, %v120
  %127 = vst.msk [vmem:[#allocation2] sm:$0xff] %vm67, %v123
  %128 = vst.msk [vmem:[#allocation2 + $0x8] sm:$0xff] %vm67, %v124
  %129 = vst.msk [vmem:[#allocation2 + $0x10] sm:$0xff] %vm67, %v125
  %130 = vst.msk [vmem:[#allocation2 + $0x18] sm:$0xff] %vm67, %v126
  // Predicated region
  $region30: #{transformer_bert_forward.18} parent=0 // pred_check
    %p131 = pneg %p24
  $region31: #{transformer_bert_forward.18} parent=0 // pred_check_branch
    %133 = sbr.rel (%p131) target = $region33
  $region32: #{transformer_bert_forward.18} parent=0 // pred_region
    %v134 = vld [vmem:[#allocation2] sm:$0xff]
    %v135 = vld [vmem:[#allocation2 + $0x8] sm:$0xff]
    %v136 = vld [vmem:[#allocation2 + $0x10] sm:$0xff]
    %v137 = vld [vmem:[#allocation2 + $0x18] sm:$0xff]
    %v138 = vld [vmem:[%s2] sm:$0x1]
    %v140 = vlaneseq
    %v141 = vshrl.u32 %v140, 7
    %v142 = vsub.s32 0, %v141
    %v143 = vrot.slane %v138, %v142
    %v145 = vadd.f32 %v134, %v143
    %v146 = vadd.f32 %v135, %v143
    %v147 = vadd.f32 %v136, %v143
    %v148 = vadd.f32 %v137, %v143
    %v149 = vld [vmem:[%s3] sm:$0xf]
    %v150 = vld [vmem:[%s3 + $0x4] sm:$0xf]
    %v151 = vld [vmem:[%s3 + $0x8] sm:$0xf]
    %v152 = vld [vmem:[%s3 + $0xc] sm:$0xf]
    %v153 = vunpack.c.l.bf16 %v149
    %v154 = vunpack.c.l.bf16 %v150
    %v155 = vunpack.c.l.bf16 %v151
    %v156 = vunpack.c.l.bf16 %v152
    %v157 = vadd.f32 %v145, %v153
    %v158 = vadd.f32 %v146, %v154
    %v159 = vadd.f32 %v147, %v155
    %v160 = vadd.f32 %v148, %v156
    %v161 = vsel %vm67, %v157, 0.0
    %162 = vadd.xlane.f32.xlu0 %v161
    %v163 = vpop.xlane.xlu0 %162
    %v164 = vsel %vm67, %v158, 0.0
    %165 = vadd.xlane.f32.xlu0 %v164
    %v166 = vpop.xlane.xlu0 %165
    %v167 = vsel %vm67, %v159, 0.0
    %168 = vadd.xlane.f32.xlu0 %v167
    %v169 = vpop.xlane.xlu0 %168
    %v170 = vsel %vm67, %v160, 0.0
    %171 = vadd.xlane.f32.xlu0 %v170
    %v172 = vpop.xlane.xlu0 %171
    %v173 = vrcp.pop 32.0
    %v174 = vmul.f32 %v163, %v173
    %v175 = vmul.f32 %v166, %v173
    %v176 = vmul.f32 %v169, %v173
    %v177 = vmul.f32 %v172, %v173
    %v178 = vsub.f32 %v157, %v174
    %v179 = vsub.f32 %v158, %v175
    %v180 = vsub.f32 %v159, %v176
    %v181 = vsub.f32 %v160, %v177
    %v182 = vmul.f32 %v178, %v178
    %v183 = vmul.f32 %v179, %v179
    %v184 = vmul.f32 %v180, %v180
    %v185 = vmul.f32 %v181, %v181
    %v186 = vsel %vm67, %v182, 0.0
    %187 = vadd.xlane.f32.xlu0 %v186
    %v188 = vpop.xlane.xlu0 %187
    %v189 = vsel %vm67, %v183, 0.0
    %190 = vadd.xlane.f32.xlu0 %v189
    %v191 = vpop.xlane.xlu0 %190
    %v192 = vsel %vm67, %v184, 0.0
    %193 = vadd.xlane.f32.xlu0 %v192
    %v194 = vpop.xlane.xlu0 %193
    %v195 = vsel %vm67, %v185, 0.0
    %196 = vadd.xlane.f32.xlu0 %v195
    %v197 = vpop.xlane.xlu0 %196
    %v198 = vmul.f32 %v188, %v173
    %v199 = vmul.f32 %v191, %v173
    %v200 = vmul.f32 %v194, %v173
    %v201 = vmul.f32 %v197, %v173
    %v202 = vadd.f32 %v198, 1e-12
    %v203 = vadd.f32 %v199, 1e-12
    %v204 = vadd.f32 %v200, 1e-12
    %v205 = vadd.f32 %v201, 1e-12
    %v206 = vrsqrt.pop %v202
    %v207 = vrsqrt.pop %v203
    %v208 = vrsqrt.pop %v204
    %v209 = vrsqrt.pop %v205
    %v210 = vmul.f32 %v178, %v206
    %v211 = vmul.f32 %v179, %v207
    %v212 = vmul.f32 %v180, %v208
    %v213 = vmul.f32 %v181, %v209
    %v214 = vld [vmem:[%s4] sm:$0x1]
    %v216 = vlaneseq
    %v217 = vshrl.u32 %v216, 7
    %v218 = vsub.s32 0, %v217
    %v219 = vrot.slane %v214, %v218
    %v221 = vmul.f32 %v210, %v219
    %v222 = vmul.f32 %v211, %v219
    %v223 = vmul.f32 %v212, %v219
    %v224 = vmul.f32 %v213, %v219
    %v225 = vld [vmem:[%s5] sm:$0x1]
    %v227 = vlaneseq
    %v228 = vshrl.u32 %v227, 7
    %v229 = vsub.s32 0, %v228
    %v230 = vrot.slane %v225, %v229
    %v232 = vadd.f32 %v221, %v230
    %v233 = vadd.f32 %v222, %v230
    %v234 = vadd.f32 %v223, %v230
    %v235 = vadd.f32 %v224, %v230
    %v236 = vpack.c.bf16 %v233, %v232
    %v237 = vpack.c.bf16 %v235, %v234
    %v240 = vunpack.c.l.b16 %v236
    %v241 = vunpack.c.h.b16 %v236
    %v242 = vunpack.c.l.b16 %v237
    %v243 = vunpack.c.h.b16 %v237
    %v244 = vpack.c.b16 %v240, %v240
    %v245 = vpack.c.b16 %v241, %v241
    %v246 = vpack.c.b16 %v242, %v242
    %v247 = vpack.c.b16 %v243, %v243
    %vm252 = vcmask 257024
    %253 = vst.msk [vmem:[%s6] sm:$0xf] %vm252, %v244
    %254 = vst.msk [vmem:[%s6 + $0x4] sm:$0xf] %vm252, %v245
    %255 = vst.msk [vmem:[%s6 + $0x8] sm:$0xf] %vm252, %v246
    %256 = vst.msk [vmem:[%s6 + $0xc] sm:$0xf] %vm252, %v247
  $region33: #{transformer_bert_forward.18} parent=0 // pred_fallthru
    _
  // Predicated region
  $region34: #{transformer_bert_forward.18} parent=0 // pred_check
    _
  $region35: #{transformer_bert_forward.18} parent=0 // pred_check_branch
    %258 = sbr.rel (0) target = $region37
  $region36: #{transformer_bert_forward.18} parent=0 // pred_region
    _
  $region37: #{transformer_bert_forward.18} parent=0 // pred_fallthru
    _
  // Predicated region
  $region38: #{transformer_bert_forward.18} parent=0 // pred_check
    _
  $region39: #{transformer_bert_forward.18} parent=0 // pred_check_branch
    %260 = sbr.rel (0) target = $region41
  $region40: #{transformer_bert_forward.18} parent=0 // pred_region
    _
  $region41: #{transformer_bert_forward.18} parent=0 // pred_fallthru
    _

// kernel: transformer_bert_forward.17
$region0: #{transformer_bert_forward.17}
  #allocation0 [shape = 'u32[]', space=smem, size = 0x4, offset = 0x4, fixed_abs, tag = 'smem constant byte address 0x4 - core index']
  #allocation1 [shape = 'u32[144,128]{1,0:T(1,128)}', space=vmem, size = 0x12000, scoped, tag = 'internal scratch']
  #allocation2 [shape = 'f32[4,16,1]{2,1,0:T(8,128)}', space=vmem, size = 0x8000, scoped, tag = 'scratch operand']
  #allocation3 [shape = 'f32[4,16,1]{2,1,0:T(8,128)}', space=vmem, size = 0x8000, scoped, tag = 'scratch operand']
  #allocation4 [shape = 'f32[4,16,8]{2,1,0:T(8,128)}', space=vmem, size = 0x8000, scoped, tag = 'scratch operand']
  #allocation5 [shape = 's32[1]{0}', space=sflag, size = 0x4, scoped, tag = 'scoped memory for transformer_bert_forward.17']
  #allocation6 [shape = 'u8[512]{0}', space=smem, size = 0x200, scoped, tag = 'prefetched SMEM operand 0']
  %s0 = inlined_call_operand.vmem [shape: s32[2], index: 0, kind: input, shape index: {}]
  %s1 = inlined_call_operand.vmem [shape: bf16[2,4,16,8], index: 1, kind: input, shape index: {}]
  %s2 = inlined_call_operand.vmem [shape: bf16[2,4,16,8], index: 2, kind: input, shape index: {}]
  %s3 = inlined_call_operand.vmem [shape: bf16[2,4,16,8], index: 3, kind: input, shape index: {}]
  %s4 = inlined_call_operand.vmem [shape: bf16[2,16,32], index: 4, kind: output, shape index: {}]
  %s5 = sld [smem:[#allocation0]]
  $region53: #{transformer_bert_forward.17} parent=0
    _
  %s7 = ssub.s32 1, %s5
  %s8 = scalar_select 0, %s7, %s5
  %s9 = sshll.u32 %s0, 4
  %s10 = int_to_ptr.vmem [resolvable:$true] %s9
  %12 = dma.vmem_to_smem %s10, 16, [#allocation6], [#allocation5]
  %13 = dma.done [#allocation5], 16
  %14 = sfence
  loop: start=0, step=1, limit=4
  $region2: #{transformer_bert_forward.17} parent=0 // loop_pre_header
    _
  $region3: #{transformer_bert_forward.17} parent=0 // loop_header
    %s16 = sphi 0, %s20
    %p17 = scmp.ge.s32.totalorder %s16, 4
    %s23 = sphi 0, %s42
    %s24 = sphi 0, %s38
    %s25 = sphi 0, %s34
    %s26 = sphi 0, %s23
    %s27 = sphi 0, %s24
    %s28 = sphi 0, %s25
    %s29 = sphi 0, %s26
    %s30 = sphi 0, %s27
    %s31 = sphi 0, %s28
    %s47 = sphi 0, %s49
    %s50 = sphi 0, %s47
    %s51 = sphi 0, %s50
    %s67 = sphi 0, %s51
    %s75 = sphi 0, %s77
    %s78 = sphi 0, %s75
    %s79 = sphi 0, %s78
    %s95 = sphi 0, %s79
    %s103 = sphi 0, %s105
    %s106 = sphi 0, %s103
    %s107 = sphi 0, %s106
    %s123 = sphi 0, %s107
    %s131 = sphi 0, %s133
    %s134 = sphi 0, %s131
    %s135 = sphi 0, %s134
    %s151 = sphi 0, %s135
  $region4: #{transformer_bert_forward.17} parent=0 // loop_header_branch
    %19 = sbr.rel (%p17) target = $region8
  $region5: #{transformer_bert_forward.17} parent=0 // loop_body
    %s21 = ssub.s32 %s16, 1
    %s22 = ssub.s32 %s16, 2
    %s32 = sadd.s32 1, %s25
    %p33 = scmp.ge.s32.totalorder %s32, 1
    %s34 = scalar_select %p33, 0, %s32
    %s35 = sadd.s32 1, %s24
    %s36 = scalar_select %p33, %s35, %s24
    %p37 = scmp.ge.s32.totalorder %s36, 1
    %s38 = scalar_select %p37, 0, %s36
    %s39 = sadd.s32 1, %s23
    %s40 = scalar_select %p37, %s39, %s23
    %p41 = scmp.ge.s32.totalorder %s40, 2
    %s42 = scalar_select %p41, 0, %s40
    %s43 = ssub.s32 %s23, %s42
    %s44 = ssub.s32 %s24, %s38
    %s45 = sor.u32 %s43, %s44
    %p46 = scmp.eq.s32.totalorder %s45, 0
    %s48 = sadd.s32 %s47, 1
    %s49 = scalar_select %p46, %s47, %s48
    %p52 = pneg %p46
    %p53 = scmp.eq.s32.totalorder %s16, 1
    %p54 = por %p52, %p53
    %p55 = scmp.ne.s32.totalorder %s47, %s50
    %p56 = scmp.eq.s32.totalorder %s16, 0
    %p57 = por %p55, %p56
    %p58 = scmp.ne.s32.totalorder %s47, %s50
    %p59 = scmp.eq.s32.totalorder %s21, 1
    %p60 = por %p58, %p59
    %p61 = scmp.ne.s32.totalorder %s50, %s51
    %p62 = scmp.eq.s32.totalorder %s21, 0
    %p63 = por %p61, %p62
    %p64 = scmp.ne.s32.totalorder %s50, %s51
    %p65 = scmp.eq.s32.totalorder %s22, 1
    %p66 = por %p64, %p65
    %p68 = scmp.ne.s32.totalorder %s51, %s67
    %p69 = scmp.eq.s32.totalorder %s22, 0
    %p70 = por %p68, %p69
    %s71 = ssub.s32 %s23, %s42
    %s72 = ssub.s32 %s25, %s34
    %s73 = sor.u32 %s71, %s72
    %p74 = scmp.eq.s32.totalorder %s73, 0
    %s76 = sadd.s32 %s75, 1
    %s77 = scalar_select %p74, %s75, %s76
    %p80 = pneg %p74
    %p81 = scmp.eq.s32.totalorder %s16, 1
    %p82 = por %p80, %p81
    %p83 = scmp.ne.s32.totalorder %s75, %s78
    %p84 = scmp.eq.s32.totalorder %s16, 0
    %p85 = por %p83, %p84
    %p86 = scmp.ne.s32.totalorder %s75, %s78
    %p87 = scmp.eq.s32.totalorder %s21, 1
    %p88 = por %p86, %p87
    %p89 = scmp.ne.s32.totalorder %s78, %s79
    %p90 = scmp.eq.s32.totalorder %s21, 0
    %p91 = por %p89, %p90
    %p92 = scmp.ne.s32.totalorder %s78, %s79
    %p93 = scmp.eq.s32.totalorder %s22, 1
    %p94 = por %p92, %p93
    %p96 = scmp.ne.s32.totalorder %s79, %s95
    %p97 = scmp.eq.s32.totalorder %s22, 0
    %p98 = por %p96, %p97
    %s99 = ssub.s32 %s23, %s42
    %s100 = ssub.s32 %s25, %s34
    %s101 = sor.u32 %s99, %s100
    %p102 = scmp.eq.s32.totalorder %s101, 0
    %s104 = sadd.s32 %s103, 1
    %s105 = scalar_select %p102, %s103, %s104
    %p108 = pneg %p102
    %p109 = scmp.eq.s32.totalorder %s16, 1
    %p110 = por %p108, %p109
    %p111 = scmp.ne.s32.totalorder %s103, %s106
    %p112 = scmp.eq.s32.totalorder %s16, 0
    %p113 = por %p111, %p112
    %p114 = scmp.ne.s32.totalorder %s103, %s106
    %p115 = scmp.eq.s32.totalorder %s21, 1
    %p116 = por %p114, %p115
    %p117 = scmp.ne.s32.totalorder %s106, %s107
    %p118 = scmp.eq.s32.totalorder %s21, 0
    %p119 = por %p117, %p118
    %p120 = scmp.ne.s32.totalorder %s106, %s107
    %p121 = scmp.eq.s32.totalorder %s22, 1
    %p122 = por %p120, %p121
    %p124 = scmp.ne.s32.totalorder %s107, %s123
    %p125 = scmp.eq.s32.totalorder %s22, 0
    %p126 = por %p124, %p125
    %s127 = ssub.s32 %s23, %s42
    %s128 = ssub.s32 %s24, %s38
    %s129 = sor.u32 %s127, %s128
    %p130 = scmp.eq.s32.totalorder %s129, 0
    %s132 = sadd.s32 %s131, 1
    %s133 = scalar_select %p130, %s131, %s132
    %p136 = pneg %p130
    %p137 = scmp.eq.s32.totalorder %s16, 1
    %p138 = por %p136, %p137
    %p139 = scmp.ne.s32.totalorder %s131, %s134
    %p140 = scmp.eq.s32.totalorder %s16, 0
    %p141 = por %p139, %p140
    %p142 = scmp.ne.s32.totalorder %s131, %s134
    %p143 = scmp.eq.s32.totalorder %s21, 1
    %p144 = por %p142, %p143
    %p145 = scmp.ne.s32.totalorder %s134, %s135
    %p146 = scmp.eq.s32.totalorder %s21, 0
    %p147 = por %p145, %p146
    %p148 = scmp.ne.s32.totalorder %s134, %s135
    %p149 = scmp.eq.s32.totalorder %s22, 1
    %p150 = por %p148, %p149
    %p152 = scmp.ne.s32.totalorder %s135, %s151
    %p153 = scmp.eq.s32.totalorder %s22, 0
    %p154 = por %p152, %p153
    %p155 = scmp.le.s32.totalorder 1, %s16
    %p156 = scmp.lt.s32.totalorder %s16, 3
    %p157 = pnand %p155, %p156
    %p158 = pneg %p157
    // Predicated region
    $region9: #{transformer_bert_forward.17} parent=5 // pred_check
      _
    $region10: #{transformer_bert_forward.17} parent=5 // pred_check_branch
      %160 = sbr.rel (%p157) target = $region12
    $region11: #{transformer_bert_forward.17} parent=5 // pred_region
      %s161 = ssub.s32 %s16, 1
    $region12: #{transformer_bert_forward.17} parent=5 // pred_fallthru
      _
    %p162 = scmp.lt.s32.totalorder %s16, 2
    // Predicated region
    $region13: #{transformer_bert_forward.17} parent=5 // pred_check
      %p163 = pneg %p162
    $region14: #{transformer_bert_forward.17} parent=5 // pred_check_branch
      %165 = sbr.rel (%p163) target = $region16
    $region15: #{transformer_bert_forward.17} parent=5 // pred_region
      // Predicated region
      $region17: #{transformer_bert_forward.17} parent=15 // pred_check
        %p166 = pneg %p57
      $region18: #{transformer_bert_forward.17} parent=15 // pred_check_branch
        %168 = sbr.rel (%p166) target = $region20
      $region19: #{transformer_bert_forward.17} parent=15 // pred_region
        %s169 = smul.u32 2, %s24
        %p170 = scmp.lt.s32.totalorder %s23, 1
        %s171 = scalar_select %p170, %s23, 1
        %p172 = scmp.lt.s32.totalorder %s169, 1
        %s173 = scalar_select %p172, %s169, 1
        %s174 = smul.addr %s171, 8
        %s175 = sadd.s32 %s173, %s174
        %s176 = smul.addr %s175, 4
        %s177 = scalar_lea.vmem %s1, %s176
        %s178 = smul.u32 2, %s24
      $region20: #{transformer_bert_forward.17} parent=15 // pred_fallthru
        _
      // Predicated region
      $region21: #{transformer_bert_forward.17} parent=15 // pred_check
        %p179 = pneg %p85
      $region22: #{transformer_bert_forward.17} parent=15 // pred_check_branch
        %181 = sbr.rel (%p179) target = $region24
      $region23: #{transformer_bert_forward.17} parent=15 // pred_region
        %s182 = smul.u32 2, %s25
        %p183 = scmp.lt.s32.totalorder %s23, 1
        %s184 = scalar_select %p183, %s23, 1
        %p185 = scmp.lt.s32.totalorder %s182, 1
        %s186 = scalar_select %p185, %s182, 1
        %s187 = smul.addr %s184, 8
        %s188 = sadd.s32 %s186, %s187
        %s189 = smul.addr %s188, 4
        %s190 = scalar_lea.vmem %s2, %s189
        %s191 = smul.u32 2, %s25
      $region24: #{transformer_bert_forward.17} parent=15 // pred_fallthru
        _
      // Predicated region
      $region25: #{transformer_bert_forward.17} parent=15 // pred_check
        %p192 = pneg %p113
      $region26: #{transformer_bert_forward.17} parent=15 // pred_check_branch
        %194 = sbr.rel (%p192) target = $region28
      $region27: #{transformer_bert_forward.17} parent=15 // pred_region
        %s195 = smul.u32 2, %s25
        %p196 = scmp.lt.s32.totalorder %s23, 1
        %s197 = scalar_select %p196, %s23, 1
        %p198 = scmp.lt.s32.totalorder %s195, 1
        %s199 = scalar_select %p198, %s195, 1
        %s200 = smul.addr %s197, 8
        %s201 = sadd.s32 %s199, %s200
        %s202 = smul.addr %s201, 4
        %s203 = scalar_lea.vmem %s3, %s202
        %s204 = smul.u32 2, %s25
      $region28: #{transformer_bert_forward.17} parent=15 // pred_fallthru
        _
    $region16: #{transformer_bert_forward.17} parent=5 // pred_fallthru
      _
    %p205 = scmp.le.s32.totalorder 1, %s16
    %p206 = scmp.lt.s32.totalorder %s16, 3
    %p207 = pnand %p205, %p206
    %p208 = pneg %p207
    // Predicated region
    $region29: #{transformer_bert_forward.17} parent=5 // pred_check
      _
    $region30: #{transformer_bert_forward.17} parent=5 // pred_check_branch
      %210 = sbr.rel (%p207) target = $region32
    $region31: #{transformer_bert_forward.17} parent=5 // pred_region
      %s211 = ssub.s32 %s16, 1
      %s212 = smul.u32 2, %s27
      %p213 = scmp.lt.s32.totalorder %s26, 1
      %s214 = scalar_select %p213, %s26, 1
      %p215 = scmp.lt.s32.totalorder %s212, 1
      %s216 = scalar_select %p215, %s212, 1
      %s217 = smul.addr %s214, 8
      %s218 = sadd.s32 %s216, %s217
      %s219 = smul.addr %s218, 4
      %s220 = scalar_lea.vmem %s1, %s219
      %p221 = pneg %p63
      %p222 = pneg %p60
      %s223 = smul.u32 2, %s28
      %p224 = scmp.lt.s32.totalorder %s26, 1
      %s225 = scalar_select %p224, %s26, 1
      %p226 = scmp.lt.s32.totalorder %s223, 1
      %s227 = scalar_select %p226, %s223, 1
      %s228 = smul.addr %s225, 8
      %s229 = sadd.s32 %s227, %s228
      %s230 = smul.addr %s229, 4
      %s231 = scalar_lea.vmem %s2, %s230
      %p232 = pneg %p91
      %p233 = pneg %p88
      %s234 = smul.u32 2, %s28
      %p235 = scmp.lt.s32.totalorder %s26, 1
      %s236 = scalar_select %p235, %s26, 1
      %p237 = scmp.lt.s32.totalorder %s234, 1
      %s238 = scalar_select %p237, %s234, 1
      %s239 = smul.addr %s236, 8
      %s240 = sadd.s32 %s238, %s239
      %s241 = smul.addr %s240, 4
      %s242 = scalar_lea.vmem %s3, %s241
      %p243 = pneg %p119
      %p244 = pneg %p116
      %p245 = pneg %p147
      %p246 = pneg %p144
      %s247 = smul.u32 2, %s27
      %p248 = scmp.lt.s32.totalorder %s26, 1
      %s249 = scalar_select %p248, %s26, 1
      %p250 = scmp.lt.s32.totalorder %s247, 1
      %s251 = scalar_select %p250, %s247, 1
      %s252 = smul.addr %s249, 2
      %s253 = sadd.s32 %s251, %s252
      %s254 = smul.addr %s253, 4
      %s255 = scalar_lea.vmem %s4, %s254
      %s256 = smul.u32 2, %s27
      %p257 = scmp.lt.s32.totalorder %s26, 1
      %s258 = scalar_select %p257, %s26, 1
      %p259 = scmp.lt.s32.totalorder %s256, 1
      %s260 = scalar_select %p259, %s256, 1
      %s261 = smul.addr %s258, 8
      %s262 = sadd.s32 %s260, %s261
      %s263 = smul.addr %s262, 4
      %s264 = scalar_lea.vmem %s1, %s263
      %s265 = smul.u32 2, %s27
      %s266 = smul.u32 2, %s28
      %p267 = scmp.lt.s32.totalorder %s26, 1
      %s268 = scalar_select %p267, %s26, 1
      %p269 = scmp.lt.s32.totalorder %s266, 1
      %s270 = scalar_select %p269, %s266, 1
      %s271 = smul.addr %s268, 8
      %s272 = sadd.s32 %s270, %s271
      %s273 = smul.addr %s272, 4
      %s274 = scalar_lea.vmem %s2, %s273
      %s275 = smul.u32 2, %s28
      %s276 = smul.u32 2, %s28
      %p277 = scmp.lt.s32.totalorder %s26, 1
      %s278 = scalar_select %p277, %s26, 1
      %p279 = scmp.lt.s32.totalorder %s276, 1
      %s280 = scalar_select %p279, %s276, 1
      %s281 = smul.addr %s278, 8
      %s282 = sadd.s32 %s280, %s281
      %s283 = smul.addr %s282, 4
      %s284 = scalar_lea.vmem %s3, %s283
      %s285 = smul.u32 2, %s28
      %s286 = smul.u32 2, %s27
      %p287 = scmp.lt.s32.totalorder %s26, 1
      %s288 = scalar_select %p287, %s26, 1
      %p289 = scmp.lt.s32.totalorder %s286, 1
      %s290 = scalar_select %p289, %s286, 1
      %s291 = smul.addr %s288, 2
      %s292 = sadd.s32 %s290, %s291
      %s293 = smul.addr %s292, 4
      %s294 = scalar_lea.vmem %s4, %s293
      %s295 = smul.u32 2, %s27
      %p297 = scmp.eq.s32.totalorder %s28, 0
      // Predicated region
      $region33: #{transformer_bert_forward.17} parent=31 // pred_check
        %p298 = pneg %p297
      $region34: #{transformer_bert_forward.17} parent=31 // pred_check_branch
        %300 = sbr.rel (%p298) target = $region36
      $region35: #{transformer_bert_forward.17} parent=31 // pred_region
        %vm301 = vcmask 7168
        %302 = vst.msk [vmem:[#allocation2] sm:$0xff] %vm301, -inf
        %303 = vst.msk [vmem:[#allocation2 + $0x8] sm:$0xff] %vm301, -inf
        %304 = vst.msk [vmem:[#allocation2 + $0x10] sm:$0xff] %vm301, -inf
        %305 = vst.msk [vmem:[#allocation2 + $0x18] sm:$0xff] %vm301, -inf
        %306 = vst.msk [vmem:[#allocation2 + $0x20] sm:$0xff] %vm301, -inf
        %307 = vst.msk [vmem:[#allocation2 + $0x28] sm:$0xff] %vm301, -inf
        %308 = vst.msk [vmem:[#allocation2 + $0x30] sm:$0xff] %vm301, -inf
        %309 = vst.msk [vmem:[#allocation2 + $0x38] sm:$0xff] %vm301, -inf
        %310 = vst.msk [vmem:[#allocation3] sm:$0xff] %vm301, 0.0
        %311 = vst.msk [vmem:[#allocation3 + $0x8] sm:$0xff] %vm301, 0.0
        %312 = vst.msk [vmem:[#allocation3 + $0x10] sm:$0xff] %vm301, 0.0
        %313 = vst.msk [vmem:[#allocation3 + $0x18] sm:$0xff] %vm301, 0.0
        %314 = vst.msk [vmem:[#allocation3 + $0x20] sm:$0xff] %vm301, 0.0
        %315 = vst.msk [vmem:[#allocation3 + $0x28] sm:$0xff] %vm301, 0.0
        %316 = vst.msk [vmem:[#allocation3 + $0x30] sm:$0xff] %vm301, 0.0
        %317 = vst.msk [vmem:[#allocation3 + $0x38] sm:$0xff] %vm301, 0.0
        %vm318 = vcmask 64512
        %319 = vst.msk [vmem:[#allocation4] sm:$0xff] %vm318, 0.0
        %320 = vst.msk [vmem:[#allocation4 + $0x8] sm:$0xff] %vm318, 0.0
        %321 = vst.msk [vmem:[#allocation4 + $0x10] sm:$0xff] %vm318, 0.0
        %322 = vst.msk [vmem:[#allocation4 + $0x18] sm:$0xff] %vm318, 0.0
        %323 = vst.msk [vmem:[#allocation4 + $0x20] sm:$0xff] %vm318, 0.0
        %324 = vst.msk [vmem:[#allocation4 + $0x28] sm:$0xff] %vm318, 0.0
        %325 = vst.msk [vmem:[#allocation4 + $0x30] sm:$0xff] %vm318, 0.0
        %326 = vst.msk [vmem:[#allocation4 + $0x38] sm:$0xff] %vm318, 0.0
      $region36: #{transformer_bert_forward.17} parent=31 // pred_fallthru
        _
      %v327 = vld [vmem:[%s264] sm:$0xf]
      %v328 = vld [vmem:[%s264 + $0x4] sm:$0xf]
      %v329 = vld [vmem:[%s264 + $0x8] sm:$0xf]
      %v330 = vld [vmem:[%s264 + $0xc] sm:$0xf]
      %v331 = vld [vmem:[%s264 + $0x10] sm:$0xf]
      %v332 = vld [vmem:[%s264 + $0x14] sm:$0xf]
      %v333 = vld [vmem:[%s264 + $0x18] sm:$0xf]
      %v334 = vld [vmem:[%s264 + $0x1c] sm:$0xf]
      %v335 = vld [vmem:[%s274] sm:$0xf]
      %v336 = vld [vmem:[%s274 + $0x4] sm:$0xf]
      %v337 = vld [vmem:[%s274 + $0x8] sm:$0xf]
      %v338 = vld [vmem:[%s274 + $0xc] sm:$0xf]
      %v339 = vld [vmem:[%s274 + $0x10] sm:$0xf]
      %v340 = vld [vmem:[%s274 + $0x14] sm:$0xf]
      %v341 = vld [vmem:[%s274 + $0x18] sm:$0xf]
      %v342 = vld [vmem:[%s274 + $0x1c] sm:$0xf]
      %v343 = vld [vmem:[%s284] sm:$0xf]
      %v344 = vld [vmem:[%s284 + $0x4] sm:$0xf]
      %v345 = vld [vmem:[%s284 + $0x8] sm:$0xf]
      %v346 = vld [vmem:[%s284 + $0xc] sm:$0xf]
      %v347 = vld [vmem:[%s284 + $0x10] sm:$0xf]
      %v348 = vld [vmem:[%s284 + $0x14] sm:$0xf]
      %v349 = vld [vmem:[%s284 + $0x18] sm:$0xf]
      %v350 = vld [vmem:[%s284 + $0x1c] sm:$0xf]
      %v353 = vunpack.c.l.b16 %v327
      %v354 = vunpack.c.l.b16 %v328
      %v355 = vpack.c.b16 %v354, %v353
      %v358 = vunpack.c.l.b16 %v335
      %v359 = vunpack.c.l.b16 %v336
      %v360 = vpack.c.b16 %v359, %v358
      %vm361 = vcmask 64512
      %v363 = vsel %vm361, %v355, 0
      %v366 = vsel %vm361, %v360, 0
      %368 = vmatprep.subr.bf16.mxu0 0
      %369 = vmatpush1.bf16.xpose.msra.mxu0 0
      %370 = vmatprep.subr.bf16.mxu0 0
      %371 = vmatpush1.bf16.xpose.msra.mxu0 0
      %372 = vmatprep.subr.bf16.mxu0 0
      %373 = vmatpush1.bf16.xpose.msra.mxu0 0
      %374 = vmatprep.subr.bf16.mxu0 0
      %375 = vmatpush1.bf16.xpose.msra.mxu0 0
      %376 = vmatprep.subr.bf16.mxu0 0
      %377 = vmatpush1.bf16.xpose.msra.mxu0 0
      %378 = vmatprep.subr.bf16.mxu0 0
      %379 = vmatpush1.bf16.xpose.msra.mxu0 0
      %380 = vmatprep.subr.bf16.mxu0 0
      %381 = vmatpush1.bf16.xpose.msra.mxu0 0
      %382 = vmatprep.subr.bf16.mxu0 0
      %383 = vmatpush1.bf16.xpose.msra.mxu0 %v366
      %384 = vmatprep.subr.bf16.mxu0 0
      %385 = vmatpush2.bf16.xpose.msra.mxu0 0
      %386 = vmatprep.subr.bf16.mxu0 0
      %387 = vmatpush2.bf16.xpose.msra.mxu0 0
      %388 = vmatprep.subr.bf16.mxu0 0
      %389 = vmatpush2.bf16.xpose.msra.mxu0 0
      %390 = vmatprep.subr.bf16.mxu0 0
      %391 = vmatpush2.bf16.xpose.msra.mxu0 0
      %392 = vmatprep.subr.bf16.mxu0 0
      %393 = vmatpush2.bf16.xpose.msra.mxu0 0
      %394 = vmatprep.subr.bf16.mxu0 0
      %395 = vmatpush2.bf16.xpose.msra.mxu0 0
      %396 = vmatprep.subr.bf16.mxu0 0
      %397 = vmatpush2.bf16.xpose.msra.mxu0 0
      %398 = vmatprep.subr.bf16.mxu0 0
      %399 = vmatpush2.bf16.xpose.msra.mxu0 0
      %400 = vmatprep.mubr.bf16.mxu0 0
      %401 = vmatmul.mubr.bf16.gmra.mxu0 %v363
      %v402 = vpop.f32.mrf.mxu0
      %v403 = vadd.f32 0.0, %v402
      %v404 = vpop.f32.mrf.mxu0
      %v405 = vpop.f32.mrf.mxu0
      %v406 = vadd.f32 0.0, %v405
      %v407 = vpop.f32.mrf.mxu0
      %408 = vdwg.mxu0
      %v411 = vunpack.c.l.b16 %v329
      %v412 = vunpack.c.l.b16 %v330
      %v413 = vpack.c.b16 %v412, %v411
      %v416 = vunpack.c.l.b16 %v337
      %v417 = vunpack.c.l.b16 %v338
      %v418 = vpack.c.b16 %v417, %v416
      %v420 = vsel %vm361, %v413, 0
      %v423 = vsel %vm361, %v418, 0
      %425 = vmatprep.subr.bf16.mxu0 0
      %426 = vmatpush1.bf16.xpose.msra.mxu0 0
      %427 = vmatprep.subr.bf16.mxu0 0
      %428 = vmatpush1.bf16.xpose.msra.mxu0 0
      %429 = vmatprep.subr.bf16.mxu0 0
      %430 = vmatpush1.bf16.xpose.msra.mxu0 0
      %431 = vmatprep.subr.bf16.mxu0 0
      %432 = vmatpush1.bf16.xpose.msra.mxu0 0
      %433 = vmatprep.subr.bf16.mxu0 0
      %434 = vmatpush1.bf16.xpose.msra.mxu0 0
      %435 = vmatprep.subr.bf16.mxu0 0
      %436 = vmatpush1.bf16.xpose.msra.mxu0 0
      %437 = vmatprep.subr.bf16.mxu0 0
      %438 = vmatpush1.bf16.xpose.msra.mxu0 0
      %439 = vmatprep.subr.bf16.mxu0 0
      %440 = vmatpush1.bf16.xpose.msra.mxu0 %v423
      %441 = vmatprep.subr.bf16.mxu0 0
      %442 = vmatpush2.bf16.xpose.msra.mxu0 0
      %443 = vmatprep.subr.bf16.mxu0 0
      %444 = vmatpush2.bf16.xpose.msra.mxu0 0
      %445 = vmatprep.subr.bf16.mxu0 0
      %446 = vmatpush2.bf16.xpose.msra.mxu0 0
      %447 = vmatprep.subr.bf16.mxu0 0
      %448 = vmatpush2.bf16.xpose.msra.mxu0 0
      %449 = vmatprep.subr.bf16.mxu0 0
      %450 = vmatpush2.bf16.xpose.msra.mxu0 0
      %451 = vmatprep.subr.bf16.mxu0 0
      %452 = vmatpush2.bf16.xpose.msra.mxu0 0
      %453 = vmatprep.subr.bf16.mxu0 0
      %454 = vmatpush2.bf16.xpose.msra.mxu0 0
      %455 = vmatprep.subr.bf16.mxu0 0
      %456 = vmatpush2.bf16.xpose.msra.mxu0 0
      %457 = vmatprep.mubr.bf16.mxu0 0
      %458 = vmatmul.mubr.bf16.gmra.mxu0 %v420
      %v459 = vpop.f32.mrf.mxu0
      %v460 = vadd.f32 0.0, %v459
      %v461 = vpop.f32.mrf.mxu0
      %v462 = vpop.f32.mrf.mxu0
      %v463 = vadd.f32 0.0, %v462
      %v464 = vpop.f32.mrf.mxu0
      %465 = vdwg.mxu0
      %v468 = vunpack.c.l.b16 %v331
      %v469 = vunpack.c.l.b16 %v332
      %v470 = vpack.c.b16 %v469, %v468
      %v473 = vunpack.c.l.b16 %v339
      %v474 = vunpack.c.l.b16 %v340
      %v475 = vpack.c.b16 %v474, %v473
      %v477 = vsel %vm361, %v470, 0
      %v480 = vsel %vm361, %v475, 0
      %482 = vmatprep.subr.bf16.mxu0 0
      %483 = vmatpush1.bf16.xpose.msra.mxu0 0
      %484 = vmatprep.subr.bf16.mxu0 0
      %485 = vmatpush1.bf16.xpose.msra.mxu0 0
      %486 = vmatprep.subr.bf16.mxu0 0
      %487 = vmatpush1.bf16.xpose.msra.mxu0 0
      %488 = vmatprep.subr.bf16.mxu0 0
      %489 = vmatpush1.bf16.xpose.msra.mxu0 0
      %490 = vmatprep.subr.bf16.mxu0 0
      %491 = vmatpush1.bf16.xpose.msra.mxu0 0
      %492 = vmatprep.subr.bf16.mxu0 0
      %493 = vmatpush1.bf16.xpose.msra.mxu0 0
      %494 = vmatprep.subr.bf16.mxu0 0
      %495 = vmatpush1.bf16.xpose.msra.mxu0 0
      %496 = vmatprep.subr.bf16.mxu0 0
      %497 = vmatpush1.bf16.xpose.msra.mxu0 %v480
      %498 = vmatprep.subr.bf16.mxu0 0
      %499 = vmatpush2.bf16.xpose.msra.mxu0 0
      %500 = vmatprep.subr.bf16.mxu0 0
      %501 = vmatpush2.bf16.xpose.msra.mxu0 0
      %502 = vmatprep.subr.bf16.mxu0 0
      %503 = vmatpush2.bf16.xpose.msra.mxu0 0
      %504 = vmatprep.subr.bf16.mxu0 0
      %505 = vmatpush2.bf16.xpose.msra.mxu0 0
      %506 = vmatprep.subr.bf16.mxu0 0
      %507 = vmatpush2.bf16.xpose.msra.mxu0 0
      %508 = vmatprep.subr.bf16.mxu0 0
      %509 = vmatpush2.bf16.xpose.msra.mxu0 0
      %510 = vmatprep.subr.bf16.mxu0 0
      %511 = vmatpush2.bf16.xpose.msra.mxu0 0
      %512 = vmatprep.subr.bf16.mxu0 0
      %513 = vmatpush2.bf16.xpose.msra.mxu0 0
      %514 = vmatprep.mubr.bf16.mxu0 0
      %515 = vmatmul.mubr.bf16.gmra.mxu0 %v477
      %v516 = vpop.f32.mrf.mxu0
      %v517 = vadd.f32 0.0, %v516
      %v518 = vpop.f32.mrf.mxu0
      %v519 = vpop.f32.mrf.mxu0
      %v520 = vadd.f32 0.0, %v519
      %v521 = vpop.f32.mrf.mxu0
      %522 = vdwg.mxu0
      %v525 = vunpack.c.l.b16 %v333
      %v526 = vunpack.c.l.b16 %v334
      %v527 = vpack.c.b16 %v526, %v525
      %v530 = vunpack.c.l.b16 %v341
      %v531 = vunpack.c.l.b16 %v342
      %v532 = vpack.c.b16 %v531, %v530
      %v534 = vsel %vm361, %v527, 0
      %v537 = vsel %vm361, %v532, 0
      %539 = vmatprep.subr.bf16.mxu0 0
      %540 = vmatpush1.bf16.xpose.msra.mxu0 0
      %541 = vmatprep.subr.bf16.mxu0 0
      %542 = vmatpush1.bf16.xpose.msra.mxu0 0
      %543 = vmatprep.subr.bf16.mxu0 0
      %544 = vmatpush1.bf16.xpose.msra.mxu0 0
      %545 = vmatprep.subr.bf16.mxu0 0
      %546 = vmatpush1.bf16.xpose.msra.mxu0 0
      %547 = vmatprep.subr.bf16.mxu0 0
      %548 = vmatpush1.bf16.xpose.msra.mxu0 0
      %549 = vmatprep.subr.bf16.mxu0 0
      %550 = vmatpush1.bf16.xpose.msra.mxu0 0
      %551 = vmatprep.subr.bf16.mxu0 0
      %552 = vmatpush1.bf16.xpose.msra.mxu0 0
      %553 = vmatprep.subr.bf16.mxu0 0
      %554 = vmatpush1.bf16.xpose.msra.mxu0 %v537
      %555 = vmatprep.subr.bf16.mxu0 0
      %556 = vmatpush2.bf16.xpose.msra.mxu0 0
      %557 = vmatprep.subr.bf16.mxu0 0
      %558 = vmatpush2.bf16.xpose.msra.mxu0 0
      %559 = vmatprep.subr.bf16.mxu0 0
      %560 = vmatpush2.bf16.xpose.msra.mxu0 0
      %561 = vmatprep.subr.bf16.mxu0 0
      %562 = vmatpush2.bf16.xpose.msra.mxu0 0
      %563 = vmatprep.subr.bf16.mxu0 0
      %564 = vmatpush2.bf16.xpose.msra.mxu0 0
      %565 = vmatprep.subr.bf16.mxu0 0
      %566 = vmatpush2.bf16.xpose.msra.mxu0 0
      %567 = vmatprep.subr.bf16.mxu0 0
      %568 = vmatpush2.bf16.xpose.msra.mxu0 0
      %569 = vmatprep.subr.bf16.mxu0 0
      %570 = vmatpush2.bf16.xpose.msra.mxu0 0
      %571 = vmatprep.mubr.bf16.mxu0 0
      %572 = vmatmul.mubr.bf16.gmra.mxu0 %v534
      %v573 = vpop.f32.mrf.mxu0
      %v574 = vadd.f32 0.0, %v573
      %v575 = vpop.f32.mrf.mxu0
      %v576 = vpop.f32.mrf.mxu0
      %v577 = vadd.f32 0.0, %v576
      %v578 = vpop.f32.mrf.mxu0
      %579 = vdwg.mxu0
      %v580 = vmul.f32 %v403, 0.35355338
      %v581 = vmul.f32 %v406, 0.35355338
      %v582 = vmul.f32 %v460, 0.35355338
      %v583 = vmul.f32 %v463, 0.35355338
      %v584 = vmul.f32 %v517, 0.35355338
      %v585 = vmul.f32 %v520, 0.35355338
      %v586 = vmul.f32 %v574, 0.35355338
      %v587 = vmul.f32 %v577, 0.35355338
      %s588 = sld [smem:[#allocation6 + %s26]]
      %v589 = vlaneseq
      %v590 = vand.u32 %v589, 127
      %s591 = smul.u32 %s28, 16
      %v592 = vstv %s591
      %v593 = vadd.s32 %v590, %v592
      %v594 = vstv %s588
      %vm595 = vcmp.lt.s32.totalorder %v593, %v594
      %v596 = vsel %vm595, 1, 0
      %vm597 = vcmp.eq.s32.totalorder %v596, 1
      %v598 = vsel %vm597, %v580, -1e+09
      %v599 = vsel %vm597, %v581, -1e+09
      %v600 = vsel %vm597, %v582, -1e+09
      %v601 = vsel %vm597, %v583, -1e+09
      %v602 = vsel %vm597, %v584, -1e+09
      %v603 = vsel %vm597, %v585, -1e+09
      %v604 = vsel %vm597, %v586, -1e+09
      %v605 = vsel %vm597, %v587, -1e+09
      %v606 = vld [vmem:[#allocation2] sm:$0xff]
      %v607 = vld [vmem:[#allocation2 + $0x8] sm:$0xff]
      %v608 = vld [vmem:[#allocation2 + $0x10] sm:$0xff]
      %v609 = vld [vmem:[#allocation2 + $0x18] sm:$0xff]
      %v610 = vld [vmem:[#allocation2 + $0x20] sm:$0xff]
      %v611 = vld [vmem:[#allocation2 + $0x28] sm:$0xff]
      %v612 = vld [vmem:[#allocation2 + $0x30] sm:$0xff]
      %v613 = vld [vmem:[#allocation2 + $0x38] sm:$0xff]
      %vm614 = vcmask 130048
      %v615 = vsel %vm614, %v598, -inf
      %616 = vmax.xlane.f32.xlu0 %v615
      %v617 = vpop.xlane.xlu0 %616
      %v618 = vsel %vm614, %v599, -inf
      %619 = vmax.xlane.f32.xlu0 %v618
      %v620 = vpop.xlane.xlu0 %619
      %v621 = vsel %vm614, %v600, -inf
      %622 = vmax.xlane.f32.xlu0 %v621
      %v623 = vpop.xlane.xlu0 %622
      %v624 = vsel %vm614, %v601, -inf
      %625 = vmax.xlane.f32.xlu0 %v624
      %v626 = vpop.xlane.xlu0 %625
      %v627 = vsel %vm614, %v602, -inf
      %628 = vmax.xlane.f32.xlu0 %v627
      %v629 = vpop.xlane.xlu0 %628
      %v630 = vsel %vm614, %v603, -inf
      %631 = vmax.xlane.f32.xlu0 %v630
      %v632 = vpop.xlane.xlu0 %631
      %v633 = vsel %vm614, %v604, -inf
      %634 = vmax.xlane.f32.xlu0 %v633
      %v635 = vpop.xlane.xlu0 %634
      %v636 = vsel %vm614, %v605, -inf
      %637 = vmax.xlane.f32.xlu0 %v636
      %v638 = vpop.xlane.xlu0 %637
      %v639 = vmax.f32 %v606, %v617
      %v640 = vmax.f32 %v607, %v620
      %v641 = vmax.f32 %v608, %v623
      %v642 = vmax.f32 %v609, %v626
      %v643 = vmax.f32 %v610, %v629
      %v644 = vmax.f32 %v611, %v632
      %v645 = vmax.f32 %v612, %v635
      %v646 = vmax.f32 %v613, %v638
      %v647 = vsub.f32 %v606, %v639
      %v648 = vsub.f32 %v607, %v640
      %v649 = vsub.f32 %v608, %v641
      %v650 = vsub.f32 %v609, %v642
      %v651 = vsub.f32 %v610, %v643
      %v652 = vsub.f32 %v611, %v644
      %v653 = vsub.f32 %v612, %v645
      %v654 = vsub.f32 %v613, %v646
      %v655 = vmul.f32 %v647, 1.442695
      %v656 = vpow.pop %v655
      %v657 = vmul.f32 %v648, 1.442695
      %v658 = vpow.pop %v657
      %v659 = vmul.f32 %v649, 1.442695
      %v660 = vpow.pop %v659
      %v661 = vmul.f32 %v650, 1.442695
      %v662 = vpow.pop %v661
      %v663 = vmul.f32 %v651, 1.442695
      %v664 = vpow.pop %v663
      %v665 = vmul.f32 %v652, 1.442695
      %v666 = vpow.pop %v665
      %v667 = vmul.f32 %v653, 1.442695
      %v668 = vpow.pop %v667
      %v669 = vmul.f32 %v654, 1.442695
      %v670 = vpow.pop %v669
      %672 = vset.pattern.permute.xlu0 0
      %673 = vperm.xlu0 %672, %v639
      %v674 = vpop.permute.xlu0 %673
      %677 = vset.pattern.permute.xlu0 0
      %678 = vperm.xlu0 %677, %v640
      %v679 = vpop.permute.xlu0 %678
      %682 = vset.pattern.permute.xlu0 0
      %683 = vperm.xlu0 %682, %v641
      %v684 = vpop.permute.xlu0 %683
      %687 = vset.pattern.permute.xlu0 0
      %688 = vperm.xlu0 %687, %v642
      %v689 = vpop.permute.xlu0 %688
      %692 = vset.pattern.permute.xlu0 0
      %693 = vperm.xlu0 %692, %v643
      %v694 = vpop.permute.xlu0 %693
      %697 = vset.pattern.permute.xlu0 0
      %698 = vperm.xlu0 %697, %v644
      %v699 = vpop.permute.xlu0 %698
      %702 = vset.pattern.permute.xlu0 0
      %703 = vperm.xlu0 %702, %v645
      %v704 = vpop.permute.xlu0 %703
      %707 = vset.pattern.permute.xlu0 0
      %708 = vperm.xlu0 %707, %v646
      %v709 = vpop.permute.xlu0 %708
      %v711 = vsub.f32 %v598, %v674
      %v712 = vsub.f32 %v599, %v679
      %v713 = vsub.f32 %v600, %v684
      %v714 = vsub.f32 %v601, %v689
      %v715 = vsub.f32 %v602, %v694
      %v716 = vsub.f32 %v603, %v699
      %v717 = vsub.f32 %v604, %v704
      %v718 = vsub.f32 %v605, %v709
      %v719 = vmul.f32 %v711, 1.442695
      %v720 = vpow.pop %v719
      %v721 = vmul.f32 %v712, 1.442695
      %v722 = vpow.pop %v721
      %v723 = vmul.f32 %v713, 1.442695
      %v724 = vpow.pop %v723
      %v725 = vmul.f32 %v714, 1.442695
      %v726 = vpow.pop %v725
      %v727 = vmul.f32 %v715, 1.442695
      %v728 = vpow.pop %v727
      %v729 = vmul.f32 %v716, 1.442695
      %v730 = vpow.pop %v729
      %v731 = vmul.f32 %v717, 1.442695
      %v732 = vpow.pop %v731
      %v733 = vmul.f32 %v718, 1.442695
      %v734 = vpow.pop %v733
      %v735 = vld [vmem:[#allocation3] sm:$0xff]
      %v736 = vld [vmem:[#allocation3 + $0x8] sm:$0xff]
      %v737 = vld [vmem:[#allocation3 + $0x10] sm:$0xff]
      %v738 = vld [vmem:[#allocation3 + $0x18] sm:$0xff]
      %v739 = vld [vmem:[#allocation3 + $0x20] sm:$0xff]
      %v740 = vld [vmem:[#allocation3 + $0x28] sm:$0xff]
      %v741 = vld [vmem:[#allocation3 + $0x30] sm:$0xff]
      %v742 = vld [vmem:[#allocation3 + $0x38] sm:$0xff]
      %v743 = vmul.f32 %v656, %v735
      %v744 = vmul.f32 %v658, %v736
      %v745 = vmul.f32 %v660, %v737
      %v746 = vmul.f32 %v662, %v738
      %v747 = vmul.f32 %v664, %v739
      %v748 = vmul.f32 %v666, %v740
      %v749 = vmul.f32 %v668, %v741
      %v750 = vmul.f32 %v670, %v742
      %v751 = vsel %vm614, %v720, 0.0
      %752 = vadd.xlane.f32.xlu0 %v751
      %v753 = vpop.xlane.xlu0 %752
      %v754 = vsel %vm614, %v722, 0.0
      %755 = vadd.xlane.f32.xlu0 %v754
      %v756 = vpop.xlane.xlu0 %755
      %v757 = vsel %vm614, %v724, 0.0
      %758 = vadd.xlane.f32.xlu0 %v757
      %v759 = vpop.xlane.xlu0 %758
      %v760 = vsel %vm614, %v726, 0.0
      %761 = vadd.xlane.f32.xlu0 %v760
      %v762 = vpop.xlane.xlu0 %761
      %v763 = vsel %vm614, %v728, 0.0
      %764 = vadd.xlane.f32.xlu0 %v763
      %v765 = vpop.xlane.xlu0 %764
      %v766 = vsel %vm614, %v730, 0.0
      %767 = vadd.xlane.f32.xlu0 %v766
      %v768 = vpop.xlane.xlu0 %767
      %v769 = vsel %vm614, %v732, 0.0
      %770 = vadd.xlane.f32.xlu0 %v769
      %v771 = vpop.xlane.xlu0 %770
      %v772 = vsel %vm614, %v734, 0.0
      %773 = vadd.xlane.f32.xlu0 %v772
      %v774 = vpop.xlane.xlu0 %773
      %v775 = vadd.f32 %v743, %v753
      %v776 = vadd.f32 %v744, %v756
      %v777 = vadd.f32 %v745, %v759
      %v778 = vadd.f32 %v746, %v762
      %v779 = vadd.f32 %v747, %v765
      %v780 = vadd.f32 %v748, %v768
      %v781 = vadd.f32 %v749, %v771
      %v782 = vadd.f32 %v750, %v774
      %vm783 = vcmask 7168
      %784 = vst.msk [vmem:[#allocation3] sm:$0xff] %vm783, %v775
      %785 = vst.msk [vmem:[#allocation3 + $0x8] sm:$0xff] %vm783, %v776
      %786 = vst.msk [vmem:[#allocation3 + $0x10] sm:$0xff] %vm783, %v777
      %787 = vst.msk [vmem:[#allocation3 + $0x18] sm:$0xff] %vm783, %v778
      %788 = vst.msk [vmem:[#allocation3 + $0x20] sm:$0xff] %vm783, %v779
      %789 = vst.msk [vmem:[#allocation3 + $0x28] sm:$0xff] %vm783, %v780
      %790 = vst.msk [vmem:[#allocation3 + $0x30] sm:$0xff] %vm783, %v781
      %791 = vst.msk [vmem:[#allocation3 + $0x38] sm:$0xff] %vm783, %v782
      %v792 = vld [vmem:[#allocation4] sm:$0xff]
      %v793 = vld [vmem:[#allocation4 + $0x8] sm:$0xff]
      %v794 = vld [vmem:[#allocation4 + $0x10] sm:$0xff]
      %v795 = vld [vmem:[#allocation4 + $0x18] sm:$0xff]
      %v796 = vld [vmem:[#allocation4 + $0x20] sm:$0xff]
      %v797 = vld [vmem:[#allocation4 + $0x28] sm:$0xff]
      %v798 = vld [vmem:[#allocation4 + $0x30] sm:$0xff]
      %v799 = vld [vmem:[#allocation4 + $0x38] sm:$0xff]
      %801 = vset.pattern.permute.xlu0 0
      %802 = vperm.xlu0 %801, %v656
      %v803 = vpop.permute.xlu0 %802
      %806 = vset.pattern.permute.xlu0 0
      %807 = vperm.xlu0 %806, %v658
      %v808 = vpop.permute.xlu0 %807
      %811 = vset.pattern.permute.xlu0 0
      %812 = vperm.xlu0 %811, %v660
      %v813 = vpop.permute.xlu0 %812
      %816 = vset.pattern.permute.xlu0 0
      %817 = vperm.xlu0 %816, %v662
      %v818 = vpop.permute.xlu0 %817
      %821 = vset.pattern.permute.xlu0 0
      %822 = vperm.xlu0 %821, %v664
      %v823 = vpop.permute.xlu0 %822
      %826 = vset.pattern.permute.xlu0 0
      %827 = vperm.xlu0 %826, %v666
      %v828 = vpop.permute.xlu0 %827
      %831 = vset.pattern.permute.xlu0 0
      %832 = vperm.xlu0 %831, %v668
      %v833 = vpop.permute.xlu0 %832
      %836 = vset.pattern.permute.xlu0 0
      %837 = vperm.xlu0 %836, %v670
      %v838 = vpop.permute.xlu0 %837
      %v840 = vmul.f32 %v803, %v792
      %v841 = vmul.f32 %v808, %v793
      %v842 = vmul.f32 %v813, %v794
      %v843 = vmul.f32 %v818, %v795
      %v844 = vmul.f32 %v823, %v796
      %v845 = vmul.f32 %v828, %v797
      %v846 = vmul.f32 %v833, %v798
      %v847 = vmul.f32 %v838, %v799
      %v848 = vpack.c.bf16 %v722, %v720
      %v849 = vpack.c.bf16 %v726, %v724
      %v850 = vpack.c.bf16 %v730, %v728
      %v851 = vpack.c.bf16 %v734, %v732
      %v854 = vunpack.c.l.b16 %v343
      %v855 = vunpack.c.l.b16 %v344
      %v856 = vpack.c.b16 %v855, %v854
      %v859 = vsel %vm614, %v848, 0
      %861 = vmatprep.subr.bf16.mxu0 0
      %862 = vmatpush1.bf16.msra.mxu0 0
      %863 = vmatprep.subr.bf16.mxu0 0
      %864 = vmatpush1.bf16.msra.mxu0 0
      %865 = vmatprep.subr.bf16.mxu0 0
      %866 = vmatpush1.bf16.msra.mxu0 0
      %867 = vmatprep.subr.bf16.mxu0 0
      %868 = vmatpush1.bf16.msra.mxu0 0
      %869 = vmatprep.subr.bf16.mxu0 0
      %870 = vmatpush1.bf16.msra.mxu0 0
      %871 = vmatprep.subr.bf16.mxu0 0
      %872 = vmatpush1.bf16.msra.mxu0 0
      %873 = vmatprep.subr.bf16.mxu0 0
      %874 = vmatpush1.bf16.msra.mxu0 0
      %875 = vmatprep.subr.bf16.mxu0 0
      %876 = vmatpush1.bf16.msra.mxu0 %v856
      %877 = vmatprep.subr.bf16.mxu0 0
      %878 = vmatpush2.bf16.msra.mxu0 0
      %879 = vmatprep.subr.bf16.mxu0 0
      %880 = vmatpush2.bf16.msra.mxu0 0
      %881 = vmatprep.subr.bf16.mxu0 0
      %882 = vmatpush2.bf16.msra.mxu0 0
      %883 = vmatprep.subr.bf16.mxu0 0
      %884 = vmatpush2.bf16.msra.mxu0 0
      %885 = vmatprep.subr.bf16.mxu0 0
      %886 = vmatpush2.bf16.msra.mxu0 0
      %887 = vmatprep.subr.bf16.mxu0 0
      %888 = vmatpush2.bf16.msra.mxu0 0
      %889 = vmatprep.subr.bf16.mxu0 0
      %890 = vmatpush2.bf16.msra.mxu0 0
      %891 = vmatprep.subr.bf16.mxu0 0
      %892 = vmatpush2.bf16.msra.mxu0 0
      %893 = vmatprep.mubr.bf16.mxu0 0
      %894 = vmatmul.mubr.bf16.gmra.mxu0 %v859
      %v895 = vpop.f32.mrf.mxu0
      %v896 = vadd.f32 0.0, %v895
      %v897 = vpop.f32.mrf.mxu0
      %v898 = vpop.f32.mrf.mxu0
      %v899 = vadd.f32 0.0, %v898
      %v900 = vpop.f32.mrf.mxu0
      %901 = vdwg.mxu0
      %v904 = vunpack.c.l.b16 %v345
      %v905 = vunpack.c.l.b16 %v346
      %v906 = vpack.c.b16 %v905, %v904
      %v909 = vsel %vm614, %v849, 0
      %911 = vmatprep.subr.bf16.mxu0 0
      %912 = vmatpush1.bf16.msra.mxu0 0
      %913 = vmatprep.subr.bf16.mxu0 0
      %914 = vmatpush1.bf16.msra.mxu0 0
      %915 = vmatprep.subr.bf16.mxu0 0
      %916 = vmatpush1.bf16.msra.mxu0 0
      %917 = vmatprep.subr.bf16.mxu0 0
      %918 = vmatpush1.bf16.msra.mxu0 0
      %919 = vmatprep.subr.bf16.mxu0 0
      %920 = vmatpush1.bf16.msra.mxu0 0
      %921 = vmatprep.subr.bf16.mxu0 0
      %922 = vmatpush1.bf16.msra.mxu0 0
      %923 = vmatprep.subr.bf16.mxu0 0
      %924 = vmatpush1.bf16.msra.mxu0 0
      %925 = vmatprep.subr.bf16.mxu0 0
      %926 = vmatpush1.bf16.msra.mxu0 %v906
      %927 = vmatprep.subr.bf16.mxu0 0
      %928 = vmatpush2.bf16.msra.mxu0 0
      %929 = vmatprep.subr.bf16.mxu0 0
      %930 = vmatpush2.bf16.msra.mxu0 0
      %931 = vmatprep.subr.bf16.mxu0 0
      %932 = vmatpush2.bf16.msra.mxu0 0
      %933 = vmatprep.subr.bf16.mxu0 0
      %934 = vmatpush2.bf16.msra.mxu0 0
      %935 = vmatprep.subr.bf16.mxu0 0
      %936 = vmatpush2.bf16.msra.mxu0 0
      %937 = vmatprep.subr.bf16.mxu0 0
      %938 = vmatpush2.bf16.msra.mxu0 0
      %939 = vmatprep.subr.bf16.mxu0 0
      %940 = vmatpush2.bf16.msra.mxu0 0
      %941 = vmatprep.subr.bf16.mxu0 0
      %942 = vmatpush2.bf16.msra.mxu0 0
      %943 = vmatprep.mubr.bf16.mxu0 0
      %944 = vmatmul.mubr.bf16.gmra.mxu0 %v909
      %v945 = vpop.f32.mrf.mxu0
      %v946 = vadd.f32 0.0, %v945
      %v947 = vpop.f32.mrf.mxu0
      %v948 = vpop.f32.mrf.mxu0
      %v949 = vadd.f32 0.0, %v948
      %v950 = vpop.f32.mrf.mxu0
      %951 = vdwg.mxu0
      %v954 = vunpack.c.l.b16 %v347
      %v955 = vunpack.c.l.b16 %v348
      %v956 = vpack.c.b16 %v955, %v954
      %v959 = vsel %vm614, %v850, 0
      %961 = vmatprep.subr.bf16.mxu0 0
      %962 = vmatpush1.bf16.msra.mxu0 0
      %963 = vmatprep.subr.bf16.mxu0 0
      %964 = vmatpush1.bf16.msra.mxu0 0
      %965 = vmatprep.subr.bf16.mxu0 0
      %966 = vmatpush1.bf16.msra.mxu0 0
      %967 = vmatprep.subr.bf16.mxu0 0
      %968 = vmatpush1.bf16.msra.mxu0 0
      %969 = vmatprep.subr.bf16.mxu0 0
      %970 = vmatpush1.bf16.msra.mxu0 0
      %971 = vmatprep.subr.bf16.mxu0 0
      %972 = vmatpush1.bf16.msra.mxu0 0
      %973 = vmatprep.subr.bf16.mxu0 0
      %974 = vmatpush1.bf16.msra.mxu0 0
      %975 = vmatprep.subr.bf16.mxu0 0
      %976 = vmatpush1.bf16.msra.mxu0 %v956
      %977 = vmatprep.subr.bf16.mxu0 0
      %978 = vmatpush2.bf16.msra.mxu0 0
      %979 = vmatprep.subr.bf16.mxu0 0
      %980 = vmatpush2.bf16.msra.mxu0 0
      %981 = vmatprep.subr.bf16.mxu0 0
      %982 = vmatpush2.bf16.msra.mxu0 0
      %983 = vmatprep.subr.bf16.mxu0 0
      %984 = vmatpush2.bf16.msra.mxu0 0
      %985 = vmatprep.subr.bf16.mxu0 0
      %986 = vmatpush2.bf16.msra.mxu0 0
      %987 = vmatprep.subr.bf16.mxu0 0
      %988 = vmatpush2.bf16.msra.mxu0 0
      %989 = vmatprep.subr.bf16.mxu0 0
      %990 = vmatpush2.bf16.msra.mxu0 0
      %991 = vmatprep.subr.bf16.mxu0 0
      %992 = vmatpush2.bf16.msra.mxu0 0
      %993 = vmatprep.mubr.bf16.mxu0 0
      %994 = vmatmul.mubr.bf16.gmra.mxu0 %v959
      %v995 = vpop.f32.mrf.mxu0
      %v996 = vadd.f32 0.0, %v995
      %v997 = vpop.f32.mrf.mxu0
      %v998 = vpop.f32.mrf.mxu0
      %v999 = vadd.f32 0.0, %v998
      %v1000 = vpop.f32.mrf.mxu0
      %1001 = vdwg.mxu0
      %v1004 = vunpack.c.l.b16 %v349
      %v1005 = vunpack.c.l.b16 %v350
      %v1006 = vpack.c.b16 %v1005, %v1004
      %v1009 = vsel %vm614, %v851, 0
      %1011 = vmatprep.subr.bf16.mxu0 0
      %1012 = vmatpush1.bf16.msra.mxu0 0
      %1013 = vmatprep.subr.bf16.mxu0 0
      %1014 = vmatpush1.bf16.msra.mxu0 0
      %1015 = vmatprep.subr.bf16.mxu0 0
      %1016 = vmatpush1.bf16.msra.mxu0 0
      %1017 = vmatprep.subr.bf16.mxu0 0
      %1018 = vmatpush1.bf16.msra.mxu0 0
      %1019 = vmatprep.subr.bf16.mxu0 0
      %1020 = vmatpush1.bf16.msra.mxu0 0
      %1021 = vmatprep.subr.bf16.mxu0 0
      %1022 = vmatpush1.bf16.msra.mxu0 0
      %1023 = vmatprep.subr.bf16.mxu0 0
      %1024 = vmatpush1.bf16.msra.mxu0 0
      %1025 = vmatprep.subr.bf16.mxu0 0
      %1026 = vmatpush1.bf16.msra.mxu0 %v1006
      %1027 = vmatprep.subr.bf16.mxu0 0
      %1028 = vmatpush2.bf16.msra.mxu0 0
      %1029 = vmatprep.subr.bf16.mxu0 0
      %1030 = vmatpush2.bf16.msra.mxu0 0
      %1031 = vmatprep.subr.bf16.mxu0 0
      %1032 = vmatpush2.bf16.msra.mxu0 0
      %1033 = vmatprep.subr.bf16.mxu0 0
      %1034 = vmatpush2.bf16.msra.mxu0 0
      %1035 = vmatprep.subr.bf16.mxu0 0
      %1036 = vmatpush2.bf16.msra.mxu0 0
      %1037 = vmatprep.subr.bf16.mxu0 0
      %1038 = vmatpush2.bf16.msra.mxu0 0
      %1039 = vmatprep.subr.bf16.mxu0 0
      %1040 = vmatpush2.bf16.msra.mxu0 0
      %1041 = vmatprep.subr.bf16.mxu0 0
      %1042 = vmatpush2.bf16.msra.mxu0 0
      %1043 = vmatprep.mubr.bf16.mxu0 0
      %1044 = vmatmul.mubr.bf16.gmra.mxu0 %v1009
      %v1045 = vpop.f32.mrf.mxu0
      %v1046 = vadd.f32 0.0, %v1045
      %v1047 = vpop.f32.mrf.mxu0
      %v1048 = vpop.f32.mrf.mxu0
      %v1049 = vadd.f32 0.0, %v1048
      %v1050 = vpop.f32.mrf.mxu0
      %1051 = vdwg.mxu0
      %v1052 = vadd.f32 %v840, %v896
      %v1053 = vadd.f32 %v841, %v899
      %v1054 = vadd.f32 %v842, %v946
      %v1055 = vadd.f32 %v843, %v949
      %v1056 = vadd.f32 %v844, %v996
      %v1057 = vadd.f32 %v845, %v999
      %v1058 = vadd.f32 %v846, %v1046
      %v1059 = vadd.f32 %v847, %v1049
      %1060 = vst.msk [vmem:[#allocation4] sm:$0xff] %vm361, %v1052
      %1061 = vst.msk [vmem:[#allocation4 + $0x8] sm:$0xff] %vm361, %v1053
      %1062 = vst.msk [vmem:[#allocation4 + $0x10] sm:$0xff] %vm361, %v1054
      %1063 = vst.msk [vmem:[#allocation4 + $0x18] sm:$0xff] %vm361, %v1055
      %1064 = vst.msk [vmem:[#allocation4 + $0x20] sm:$0xff] %vm361, %v1056
      %1065 = vst.msk [vmem:[#allocation4 + $0x28] sm:$0xff] %vm361, %v1057
      %1066 = vst.msk [vmem:[#allocation4 + $0x30] sm:$0xff] %vm361, %v1058
      %1067 = vst.msk [vmem:[#allocation4 + $0x38] sm:$0xff] %vm361, %v1059
      %1068 = vst.msk [vmem:[#allocation2] sm:$0xff] %vm783, %v639
      %1069 = vst.msk [vmem:[#allocation2 + $0x8] sm:$0xff] %vm783, %v640
      %1070 = vst.msk [vmem:[#allocation2 + $0x10] sm:$0xff] %vm783, %v641
      %1071 = vst.msk [vmem:[#allocation2 + $0x18] sm:$0xff] %vm783, %v642
      %1072 = vst.msk [vmem:[#allocation2 + $0x20] sm:$0xff] %vm783, %v643
      %1073 = vst.msk [vmem:[#allocation2 + $0x28] sm:$0xff] %vm783, %v644
      %1074 = vst.msk [vmem:[#allocation2 + $0x30] sm:$0xff] %vm783, %v645
      %1075 = vst.msk [vmem:[#allocation2 + $0x38] sm:$0xff] %vm783, %v646
      // Predicated region
      $region37: #{transformer_bert_forward.17} parent=31 // pred_check
        %p1076 = pneg %p297
      $region38: #{transformer_bert_forward.17} parent=31 // pred_check_branch
        %1078 = sbr.rel (%p1076) target = $region40
      $region39: #{transformer_bert_forward.17} parent=31 // pred_region
        %v1079 = vld [vmem:[#allocation4] sm:$0xff]
        %v1080 = vld [vmem:[#allocation4 + $0x8] sm:$0xff]
        %v1081 = vld [vmem:[#allocation4 + $0x10] sm:$0xff]
        %v1082 = vld [vmem:[#allocation4 + $0x18] sm:$0xff]
        %v1083 = vld [vmem:[#allocation4 + $0x20] sm:$0xff]
        %v1084 = vld [vmem:[#allocation4 + $0x28] sm:$0xff]
        %v1085 = vld [vmem:[#allocation4 + $0x30] sm:$0xff]
        %v1086 = vld [vmem:[#allocation4 + $0x38] sm:$0xff]
        %v1087 = vld [vmem:[#allocation3] sm:$0xff]
        %v1088 = vld [vmem:[#allocation3 + $0x8] sm:$0xff]
        %v1089 = vld [vmem:[#allocation3 + $0x10] sm:$0xff]
        %v1090 = vld [vmem:[#allocation3 + $0x18] sm:$0xff]
        %v1091 = vld [vmem:[#allocation3 + $0x20] sm:$0xff]
        %v1092 = vld [vmem:[#allocation3 + $0x28] sm:$0xff]
        %v1093 = vld [vmem:[#allocation3 + $0x30] sm:$0xff]
        %v1094 = vld [vmem:[#allocation3 + $0x38] sm:$0xff]
        %v1095 = vrcp.pop %v1087
        %v1096 = vrcp.pop %v1088
        %v1097 = vrcp.pop %v1089
        %v1098 = vrcp.pop %v1090
        %v1099 = vrcp.pop %v1091
        %v1100 = vrcp.pop %v1092
        %v1101 = vrcp.pop %v1093
        %v1102 = vrcp.pop %v1094
        %1104 = vset.pattern.permute.xlu0 0
        %1105 = vperm.xlu0 %1104, %v1095
        %v1106 = vpop.permute.xlu0 %1105
        %1109 = vset.pattern.permute.xlu0 0
        %1110 = vperm.xlu0 %1109, %v1096
        %v1111 = vpop.permute.xlu0 %1110
        %1114 = vset.pattern.permute.xlu0 0
        %1115 = vperm.xlu0 %1114, %v1097
        %v1116 = vpop.permute.xlu0 %1115
        %1119 = vset.pattern.permute.xlu0 0
        %1120 = vperm.xlu0 %1119, %v1098
        %v1121 = vpop.permute.xlu0 %1120
        %1124 = vset.pattern.permute.xlu0 0
        %1125 = vperm.xlu0 %1124, %v1099
        %v1126 = vpop.permute.xlu0 %1125
        %1129 = vset.pattern.permute.xlu0 0
        %1130 = vperm.xlu0 %1129, %v1100
        %v1131 = vpop.permute.xlu0 %1130
        %1134 = vset.pattern.permute.xlu0 0
        %1135 = vperm.xlu0 %1134, %v1101
        %v1136 = vpop.permute.xlu0 %1135
        %1139 = vset.pattern.permute.xlu0 0
        %1140 = vperm.xlu0 %1139, %v1102
        %v1141 = vpop.permute.xlu0 %1140
        %v1143 = vmul.f32 %v1079, %v1106
        %v1144 = vmul.f32 %v1080, %v1111
        %v1145 = vmul.f32 %v1081, %v1116
        %v1146 = vmul.f32 %v1082, %v1121
        %v1147 = vmul.f32 %v1083, %v1126
        %v1148 = vmul.f32 %v1084, %v1131
        %v1149 = vmul.f32 %v1085, %v1136
        %v1150 = vmul.f32 %v1086, %v1141
        %1153 = vrot.lane.b32.xlu0 %v1145, 8
        %v1154 = vpop.permute.xlu0 %1153
        %1155 = vrot.lane.b32.xlu0 %v1146, 8
        %v1156 = vpop.permute.xlu0 %1155
        %1161 = vrot.lane.b32.xlu0 %v1147, 16
        %v1162 = vpop.permute.xlu0 %1161
        %1163 = vrot.lane.b32.xlu0 %v1148, 16
        %v1164 = vpop.permute.xlu0 %1163
        %1169 = vrot.lane.b32.xlu0 %v1149, 24
        %v1170 = vpop.permute.xlu0 %1169
        %1171 = vrot.lane.b32.xlu0 %v1150, 24
        %v1172 = vpop.permute.xlu0 %1171
        %v1175 = vsel %vm361, %v1143, %v1154
        %v1176 = vsel %vm361, %v1144, %v1156
        %v1177 = vsel %vm614, %v1175, %v1162
        %v1178 = vsel %vm614, %v1176, %v1164
        %vm1179 = vcmask 195584
        %v1180 = vsel %vm1179, %v1177, %v1170
        %v1181 = vsel %vm1179, %v1178, %v1172
        %v1182 = vpack.c.bf16 %v1181, %v1180
        %v1184 = vunpack.c.l.b16 %v1182
        %v1185 = vunpack.c.h.b16 %v1182
        %v1186 = vpack.c.b16 %v1184, %v1184
        %v1187 = vpack.c.b16 %v1185, %v1185
        %vm1190 = vcmask 257024
        %1191 = vst.msk [vmem:[%s294] sm:$0xf] %vm1190, %v1186
        %1192 = vst.msk [vmem:[%s294 + $0x4] sm:$0xf] %vm1190, %v1187
      $region40: #{transformer_bert_forward.17} parent=31 // pred_fallthru
        _
      %s1193 = smul.u32 2, %s27
      %p1194 = scmp.lt.s32.totalorder %s26, 1
      %s1195 = scalar_select %p1194, %s26, 1
      %p1196 = scmp.lt.s32.totalorder %s1193, 1
      %s1197 = scalar_select %p1196, %s1193, 1
      %s1198 = smul.addr %s1195, 2
      %s1199 = sadd.s32 %s1197, %s1198
      %s1200 = smul.addr %s1199, 4
      %s1201 = scalar_lea.vmem %s4, %s1200
      // Predicated region
      $region41: #{transformer_bert_forward.17} parent=31 // pred_check
        %p1202 = pneg %p144
      $region42: #{transformer_bert_forward.17} parent=31 // pred_check_branch
        %1204 = sbr.rel (%p1202) target = $region44
      $region43: #{transformer_bert_forward.17} parent=31 // pred_region
        %s1205 = smul.u32 2, %s27
      $region44: #{transformer_bert_forward.17} parent=31 // pred_fallthru
        _
    $region32: #{transformer_bert_forward.17} parent=5 // pred_fallthru
      _
    %p1206 = scmp.le.s32.totalorder 2, %s16
    // Predicated region
    $region45: #{transformer_bert_forward.17} parent=5 // pred_check
      %p1207 = pneg %p1206
    $region46: #{transformer_bert_forward.17} parent=5 // pred_check_branch
      %1209 = sbr.rel (%p1207) target = $region48
    $region47: #{transformer_bert_forward.17} parent=5 // pred_region
      %s1210 = ssub.s32 %s16, 2
      // Predicated region
      $region49: #{transformer_bert_forward.17} parent=47 // pred_check
        %p1211 = pneg %p150
      $region50: #{transformer_bert_forward.17} parent=47 // pred_check_branch
        %1213 = sbr.rel (%p1211) target = $region52
      $region51: #{transformer_bert_forward.17} parent=47 // pred_region
        %s1214 = smul.u32 2, %s30
        %p1215 = scmp.lt.s32.totalorder %s29, 1
        %s1216 = scalar_select %p1215, %s29, 1
        %p1217 = scmp.lt.s32.totalorder %s1214, 1
        %s1218 = scalar_select %p1217, %s1214, 1
        %s1219 = smul.addr %s1216, 2
        %s1220 = sadd.s32 %s1218, %s1219
        %s1221 = smul.addr %s1220, 4
        %s1222 = scalar_lea.vmem %s4, %s1221
      $region52: #{transformer_bert_forward.17} parent=47 // pred_fallthru
        _
    $region48: #{transformer_bert_forward.17} parent=5 // pred_fallthru
      _
  $region6: #{transformer_bert_forward.17} parent=0 // loop_footer
    %s20 = sadd.s32 1, %s16
  $region7: #{transformer_bert_forward.17} parent=0 // loop_footer_branch
    %15 = sbr.rel target = $region3
  $region8: #{transformer_bert_forward.17} parent=0 // loop_exit
    _

// kernel: transformer_bert_forward.25
$region0: #{transformer_bert_forward.25}
  #allocation0 [shape = 'u32[]', space=smem, size = 0x4, offset = 0x4, fixed_abs, tag = 'smem constant byte address 0x4 - core index']
  #allocation1 [shape = 'u32[144,128]{1,0:T(1,128)}', space=vmem, size = 0x12000, scoped, tag = 'internal scratch']
  #allocation2 [shape = 'f32[32,64]{1,0:T(8,128)}', space=vmem, size = 0x4000, scoped, tag = 'scratch operand']
  %s0 = inlined_call_operand.vmem [shape: bf16[32,32], index: 0, kind: input, shape index: {}]
  %s1 = inlined_call_operand.vmem [shape: bf16[32,64], index: 1, kind: input, shape index: {}]
  %s2 = inlined_call_operand.vmem [shape: f32[1,64], index: 2, kind: input, shape index: {}]
  %s3 = inlined_call_operand.vmem [shape: bf16[32,64], index: 3, kind: output, shape index: {}]
  %s4 = sld [smem:[#allocation0]]
  $region30: #{transformer_bert_forward.25} parent=0
    _
  %s6 = ssub.s32 1, %s4
  %s7 = scalar_select 0, %s6, %s4
  // Predicated region
  $region2: #{transformer_bert_forward.25} parent=0 // pred_check
    _
  $region3: #{transformer_bert_forward.25} parent=0 // pred_check_branch
    %9 = sbr.rel (0) target = $region5
  $region4: #{transformer_bert_forward.25} parent=0 // pred_region
    _
  $region5: #{transformer_bert_forward.25} parent=0 // pred_fallthru
    _
  // Predicated region
  $region6: #{transformer_bert_forward.25} parent=0 // pred_check
    _
  $region7: #{transformer_bert_forward.25} parent=0 // pred_check_branch
    %11 = sbr.rel (0) target = $region9
  $region8: #{transformer_bert_forward.25} parent=0 // pred_region
    _
  $region9: #{transformer_bert_forward.25} parent=0 // pred_fallthru
    _
  // Predicated region
  $region10: #{transformer_bert_forward.25} parent=0 // pred_check
    _
  $region11: #{transformer_bert_forward.25} parent=0 // pred_check_branch
    %13 = sbr.rel (0) target = $region13
  $region12: #{transformer_bert_forward.25} parent=0 // pred_region
    _
  $region13: #{transformer_bert_forward.25} parent=0 // pred_fallthru
    _
  %p15 = scmp.eq.s32.totalorder 0, 0
  // Predicated region
  $region14: #{transformer_bert_forward.25} parent=0 // pred_check
    %p16 = pneg %p15
  $region15: #{transformer_bert_forward.25} parent=0 // pred_check_branch
    %18 = sbr.rel (%p16) target = $region17
  $region16: #{transformer_bert_forward.25} parent=0 // pred_region
    %vm19 = vcmask 523264
    %20 = vst.msk [vmem:[#allocation2] sm:$0xff] %vm19, 0.0
    %21 = vst.msk [vmem:[#allocation2 + $0x8] sm:$0xff] %vm19, 0.0
    %22 = vst.msk [vmem:[#allocation2 + $0x10] sm:$0xff] %vm19, 0.0
    %23 = vst.msk [vmem:[#allocation2 + $0x18] sm:$0xff] %vm19, 0.0
  $region17: #{transformer_bert_forward.25} parent=0 // pred_fallthru
    _
  %v24 = vld [vmem:[#allocation2] sm:$0xff]
  %v25 = vld [vmem:[#allocation2 + $0x8] sm:$0xff]
  %v26 = vld [vmem:[#allocation2 + $0x10] sm:$0xff]
  %v27 = vld [vmem:[#allocation2 + $0x18] sm:$0xff]
  %v28 = vld [vmem:[%s0] sm:$0xf]
  %v29 = vld [vmem:[%s0 + $0x4] sm:$0xf]
  %v30 = vld [vmem:[%s0 + $0x8] sm:$0xf]
  %v31 = vld [vmem:[%s0 + $0xc] sm:$0xf]
  %v32 = vld [vmem:[%s1] sm:$0xf]
  %v33 = vld [vmem:[%s1 + $0x4] sm:$0xf]
  %v34 = vld [vmem:[%s1 + $0x8] sm:$0xf]
  %v35 = vld [vmem:[%s1 + $0xc] sm:$0xf]
  %v40 = vunpack.c.l.b16 %v28
  %v41 = vunpack.c.l.b16 %v29
  %v42 = vunpack.c.l.b16 %v30
  %v43 = vunpack.c.l.b16 %v31
  %v44 = vpack.c.b16 %v41, %v40
  %v45 = vpack.c.b16 %v43, %v42
  %v50 = vunpack.c.l.b16 %v32
  %v51 = vunpack.c.l.b16 %v33
  %v52 = vunpack.c.l.b16 %v34
  %v53 = vunpack.c.l.b16 %v35
  %v54 = vpack.c.b16 %v51, %v50
  %v55 = vpack.c.b16 %v53, %v52
  %vm58 = vcmask 261120
  %v60 = vsel %vm58, %v44, 0
  %v63 = vsel %vm58, %v45, 0
  %65 = vmatprep.subr.bf16.mxu0 0
  %66 = vmatpush1.bf16.msra.mxu0 0
  %67 = vmatprep.subr.bf16.mxu0 0
  %68 = vmatpush1.bf16.msra.mxu0 0
  %69 = vmatprep.subr.bf16.mxu0 0
  %70 = vmatpush1.bf16.msra.mxu0 0
  %71 = vmatprep.subr.bf16.mxu0 0
  %72 = vmatpush1.bf16.msra.mxu0 0
  %73 = vmatprep.subr.bf16.mxu0 0
  %74 = vmatpush1.bf16.msra.mxu0 0
  %75 = vmatprep.subr.bf16.mxu0 0
  %76 = vmatpush1.bf16.msra.mxu0 0
  %77 = vmatprep.subr.bf16.mxu0 0
  %78 = vmatpush1.bf16.msra.mxu0 %v55
  %79 = vmatprep.subr.bf16.mxu0 0
  %80 = vmatpush1.bf16.msra.mxu0 %v54
  %81 = vmatprep.subr.bf16.mxu0 0
  %82 = vmatpush2.bf16.msra.mxu0 0
  %83 = vmatprep.subr.bf16.mxu0 0
  %84 = vmatpush2.bf16.msra.mxu0 0
  %85 = vmatprep.subr.bf16.mxu0 0
  %86 = vmatpush2.bf16.msra.mxu0 0
  %87 = vmatprep.subr.bf16.mxu0 0
  %88 = vmatpush2.bf16.msra.mxu0 0
  %89 = vmatprep.subr.bf16.mxu0 0
  %90 = vmatpush2.bf16.msra.mxu0 0
  %91 = vmatprep.subr.bf16.mxu0 0
  %92 = vmatpush2.bf16.msra.mxu0 0
  %93 = vmatprep.subr.bf16.mxu0 0
  %94 = vmatpush2.bf16.msra.mxu0 0
  %95 = vmatprep.subr.bf16.mxu0 0
  %96 = vmatpush2.bf16.msra.mxu0 0
  %97 = vmatprep.mubr.bf16.mxu0 0
  %98 = vmatmul.mubr.bf16.gmra.mxu0 %v60
  %v99 = vpop.f32.mrf.mxu0
  %v100 = vadd.f32 0.0, %v99
  %v101 = vpop.f32.mrf.mxu0
  %v102 = vpop.f32.mrf.mxu0
  %v103 = vadd.f32 0.0, %v102
  %v104 = vpop.f32.mrf.mxu0
  %105 = vmatprep.mubr.bf16.mxu0 0
  %106 = vmatmul.mubr.bf16.gmra.mxu0 %v63
  %v107 = vpop.f32.mrf.mxu0
  %v108 = vadd.f32 0.0, %v107
  %v109 = vpop.f32.mrf.mxu0
  %v110 = vpop.f32.mrf.mxu0
  %v111 = vadd.f32 0.0, %v110
  %v112 = vpop.f32.mrf.mxu0
  %113 = vdwg.mxu0
  %v114 = vadd.f32 %v24, %v100
  %v115 = vadd.f32 %v25, %v103
  %v116 = vadd.f32 %v26, %v108
  %v117 = vadd.f32 %v27, %v111
  %vm118 = vcmask 523264
  %119 = vst.msk [vmem:[#allocation2] sm:$0xff] %vm118, %v114
  %120 = vst.msk [vmem:[#allocation2 + $0x8] sm:$0xff] %vm118, %v115
  %121 = vst.msk [vmem:[#allocation2 + $0x10] sm:$0xff] %vm118, %v116
  %122 = vst.msk [vmem:[#allocation2 + $0x18] sm:$0xff] %vm118, %v117
  // Predicated region
  $region18: #{transformer_bert_forward.25} parent=0 // pred_check
    %p123 = pneg %p15
  $region19: #{transformer_bert_forward.25} parent=0 // pred_check_branch
    %125 = sbr.rel (%p123) target = $region21
  $region20: #{transformer_bert_forward.25} parent=0 // pred_region
    %v126 = vld [vmem:[#allocation2] sm:$0xff]
    %v127 = vld [vmem:[#allocation2 + $0x8] sm:$0xff]
    %v128 = vld [vmem:[#allocation2 + $0x10] sm:$0xff]
    %v129 = vld [vmem:[#allocation2 + $0x18] sm:$0xff]
    %v130 = vld [vmem:[%s2] sm:$0x1]
    %v132 = vlaneseq
    %v133 = vshrl.u32 %v132, 7
    %v134 = vsub.s32 0, %v133
    %v135 = vrot.slane %v130, %v134
    %v137 = vadd.f32 %v126, %v135
    %v138 = vadd.f32 %v127, %v135
    %v139 = vadd.f32 %v128, %v135
    %v140 = vadd.f32 %v129, %v135
    %v141 = vpack.c.bf16 %v138, %v137
    %v142 = vpack.c.bf16 %v140, %v139
    %v145 = vunpack.c.l.b16 %v141
    %v146 = vunpack.c.h.b16 %v141
    %v147 = vunpack.c.l.b16 %v142
    %v148 = vunpack.c.h.b16 %v142
    %v149 = vpack.c.b16 %v145, %v145
    %v150 = vpack.c.b16 %v146, %v146
    %v151 = vpack.c.b16 %v147, %v147
    %v152 = vpack.c.b16 %v148, %v148
    %vm157 = vcmask 519168
    %158 = vst.msk [vmem:[%s3] sm:$0xf] %vm157, %v149
    %159 = vst.msk [vmem:[%s3 + $0x4] sm:$0xf] %vm157, %v150
    %160 = vst.msk [vmem:[%s3 + $0x8] sm:$0xf] %vm157, %v151
    %161 = vst.msk [vmem:[%s3 + $0xc] sm:$0xf] %vm157, %v152
  $region21: #{transformer_bert_forward.25} parent=0 // pred_fallthru
    _
  // Predicated region
  $region22: #{transformer_bert_forward.25} parent=0 // pred_check
    _
  $region23: #{transformer_bert_forward.25} parent=0 // pred_check_branch
    %163 = sbr.rel (0) target = $region25
  $region24: #{transformer_bert_forward.25} parent=0 // pred_region
    _
  $region25: #{transformer_bert_forward.25} parent=0 // pred_fallthru
    _
  // Predicated region
  $region26: #{transformer_bert_forward.25} parent=0 // pred_check
    _
  $region27: #{transformer_bert_forward.25} parent=0 // pred_check_branch
    %165 = sbr.rel (0) target = $region29
  $region28: #{transformer_bert_forward.25} parent=0 // pred_region
    _
  $region29: #{transformer_bert_forward.25} parent=0 // pred_fallthru
    _

// kernel: transformer_bert_forward.20
$region0: #{transformer_bert_forward.20}
  #allocation0 [shape = 'u32[]', space=smem, size = 0x4, offset = 0x4, fixed_abs, tag = 'smem constant byte address 0x4 - core index']
  #allocation1 [shape = 'u32[144,128]{1,0:T(1,128)}', space=vmem, size = 0x12000, scoped, tag = 'internal scratch']
  #allocation2 [shape = 'f32[32,32]{1,0:T(8,128)}', space=vmem, size = 0x4000, scoped, tag = 'scratch operand']
  %s0 = inlined_call_operand.vmem [shape: bf16[32,64], index: 0, kind: input, shape index: {}]
  %s1 = inlined_call_operand.vmem [shape: bf16[64,32], index: 1, kind: input, shape index: {}]
  %s2 = inlined_call_operand.vmem [shape: f32[1,32], index: 2, kind: input, shape index: {}]
  %s3 = inlined_call_operand.vmem [shape: bf16[32,32], index: 3, kind: input, shape index: {}]
  %s4 = inlined_call_operand.vmem [shape: f32[1,32], index: 4, kind: input, shape index: {}]
  %s5 = inlined_call_operand.vmem [shape: f32[1,32], index: 5, kind: input, shape index: {}]
  %s6 = inlined_call_operand.vmem [shape: bf16[32,32], index: 6, kind: output, shape index: {}]
  %s7 = sld [smem:[#allocation0]]
  $region42: #{transformer_bert_forward.20} parent=0
    _
  %s9 = ssub.s32 1, %s7
  %s10 = scalar_select 0, %s9, %s7
  // Predicated region
  $region2: #{transformer_bert_forward.20} parent=0 // pred_check
    _
  $region3: #{transformer_bert_forward.20} parent=0 // pred_check_branch
    %12 = sbr.rel (0) target = $region5
  $region4: #{transformer_bert_forward.20} parent=0 // pred_region
    _
  $region5: #{transformer_bert_forward.20} parent=0 // pred_fallthru
    _
  // Predicated region
  $region6: #{transformer_bert_forward.20} parent=0 // pred_check
    _
  $region7: #{transformer_bert_forward.20} parent=0 // pred_check_branch
    %14 = sbr.rel (0) target = $region9
  $region8: #{transformer_bert_forward.20} parent=0 // pred_region
    _
  $region9: #{transformer_bert_forward.20} parent=0 // pred_fallthru
    _
  // Predicated region
  $region10: #{transformer_bert_forward.20} parent=0 // pred_check
    _
  $region11: #{transformer_bert_forward.20} parent=0 // pred_check_branch
    %16 = sbr.rel (0) target = $region13
  $region12: #{transformer_bert_forward.20} parent=0 // pred_region
    _
  $region13: #{transformer_bert_forward.20} parent=0 // pred_fallthru
    _
  // Predicated region
  $region14: #{transformer_bert_forward.20} parent=0 // pred_check
    _
  $region15: #{transformer_bert_forward.20} parent=0 // pred_check_branch
    %18 = sbr.rel (0) target = $region17
  $region16: #{transformer_bert_forward.20} parent=0 // pred_region
    _
  $region17: #{transformer_bert_forward.20} parent=0 // pred_fallthru
    _
  // Predicated region
  $region18: #{transformer_bert_forward.20} parent=0 // pred_check
    _
  $region19: #{transformer_bert_forward.20} parent=0 // pred_check_branch
    %20 = sbr.rel (0) target = $region21
  $region20: #{transformer_bert_forward.20} parent=0 // pred_region
    _
  $region21: #{transformer_bert_forward.20} parent=0 // pred_fallthru
    _
  // Predicated region
  $region22: #{transformer_bert_forward.20} parent=0 // pred_check
    _
  $region23: #{transformer_bert_forward.20} parent=0 // pred_check_branch
    %22 = sbr.rel (0) target = $region25
  $region24: #{transformer_bert_forward.20} parent=0 // pred_region
    _
  $region25: #{transformer_bert_forward.20} parent=0 // pred_fallthru
    _
  %p24 = scmp.eq.s32.totalorder 0, 0
  // Predicated region
  $region26: #{transformer_bert_forward.20} parent=0 // pred_check
    %p25 = pneg %p24
  $region27: #{transformer_bert_forward.20} parent=0 // pred_check_branch
    %27 = sbr.rel (%p25) target = $region29
  $region28: #{transformer_bert_forward.20} parent=0 // pred_region
    %vm28 = vcmask 261120
    %29 = vst.msk [vmem:[#allocation2] sm:$0xff] %vm28, 0.0
    %30 = vst.msk [vmem:[#allocation2 + $0x8] sm:$0xff] %vm28, 0.0
    %31 = vst.msk [vmem:[#allocation2 + $0x10] sm:$0xff] %vm28, 0.0
    %32 = vst.msk [vmem:[#allocation2 + $0x18] sm:$0xff] %vm28, 0.0
  $region29: #{transformer_bert_forward.20} parent=0 // pred_fallthru
    _
  %v33 = vld [vmem:[#allocation2] sm:$0xff]
  %v34 = vld [vmem:[#allocation2 + $0x8] sm:$0xff]
  %v35 = vld [vmem:[#allocation2 + $0x10] sm:$0xff]
  %v36 = vld [vmem:[#allocation2 + $0x18] sm:$0xff]
  %v37 = vld [vmem:[%s0] sm:$0xf]
  %v38 = vld [vmem:[%s0 + $0x4] sm:$0xf]
  %v39 = vld [vmem:[%s0 + $0x8] sm:$0xf]
  %v40 = vld [vmem:[%s0 + $0xc] sm:$0xf]
  %v41 = vld [vmem:[%s1] sm:$0xf]
  %v42 = vld [vmem:[%s1 + $0x4] sm:$0xf]
  %v43 = vld [vmem:[%s1 + $0x8] sm:$0xf]
  %v44 = vld [vmem:[%s1 + $0xc] sm:$0xf]
  %v45 = vld [vmem:[%s1 + $0x10] sm:$0xf]
  %v46 = vld [vmem:[%s1 + $0x14] sm:$0xf]
  %v47 = vld [vmem:[%s1 + $0x18] sm:$0xf]
  %v48 = vld [vmem:[%s1 + $0x1c] sm:$0xf]
  %v53 = vunpack.c.l.b16 %v37
  %v54 = vunpack.c.l.b16 %v38
  %v55 = vunpack.c.l.b16 %v39
  %v56 = vunpack.c.l.b16 %v40
  %v57 = vpack.c.b16 %v54, %v53
  %v58 = vpack.c.b16 %v56, %v55
  %v67 = vunpack.c.l.b16 %v41
  %v68 = vunpack.c.l.b16 %v42
  %v69 = vunpack.c.l.b16 %v43
  %v70 = vunpack.c.l.b16 %v44
  %v71 = vunpack.c.l.b16 %v45
  %v72 = vunpack.c.l.b16 %v46
  %v73 = vunpack.c.l.b16 %v47
  %v74 = vunpack.c.l.b16 %v48
  %v75 = vpack.c.b16 %v68, %v67
  %v76 = vpack.c.b16 %v70, %v69
  %v77 = vpack.c.b16 %v72, %v71
  %v78 = vpack.c.b16 %v74, %v73
  %vm83 = vcmask 523264
  %v85 = vsel %vm83, %v57, 0
  %v88 = vsel %vm83, %v58, 0
  %90 = vmatprep.subr.bf16.mxu0 0
  %91 = vmatpush1.bf16.msra.mxu0 0
  %92 = vmatprep.subr.bf16.mxu0 0
  %93 = vmatpush1.bf16.msra.mxu0 0
  %94 = vmatprep.subr.bf16.mxu0 0
  %95 = vmatpush1.bf16.msra.mxu0 0
  %96 = vmatprep.subr.bf16.mxu0 0
  %97 = vmatpush1.bf16.msra.mxu0 0
  %98 = vmatprep.subr.bf16.mxu0 0
  %99 = vmatpush1.bf16.msra.mxu0 %v78
  %100 = vmatprep.subr.bf16.mxu0 0
  %101 = vmatpush1.bf16.msra.mxu0 %v77
  %102 = vmatprep.subr.bf16.mxu0 0
  %103 = vmatpush1.bf16.msra.mxu0 %v76
  %104 = vmatprep.subr.bf16.mxu0 0
  %105 = vmatpush1.bf16.msra.mxu0 %v75
  %106 = vmatprep.subr.bf16.mxu0 0
  %107 = vmatpush2.bf16.msra.mxu0 0
  %108 = vmatprep.subr.bf16.mxu0 0
  %109 = vmatpush2.bf16.msra.mxu0 0
  %110 = vmatprep.subr.bf16.mxu0 0
  %111 = vmatpush2.bf16.msra.mxu0 0
  %112 = vmatprep.subr.bf16.mxu0 0
  %113 = vmatpush2.bf16.msra.mxu0 0
  %114 = vmatprep.subr.bf16.mxu0 0
  %115 = vmatpush2.bf16.msra.mxu0 0
  %116 = vmatprep.subr.bf16.mxu0 0
  %117 = vmatpush2.bf16.msra.mxu0 0
  %118 = vmatprep.subr.bf16.mxu0 0
  %119 = vmatpush2.bf16.msra.mxu0 0
  %120 = vmatprep.subr.bf16.mxu0 0
  %121 = vmatpush2.bf16.msra.mxu0 0
  %122 = vmatprep.mubr.bf16.mxu0 0
  %123 = vmatmul.mubr.bf16.gmra.mxu0 %v85
  %v124 = vpop.f32.mrf.mxu0
  %v125 = vadd.f32 0.0, %v124
  %v126 = vpop.f32.mrf.mxu0
  %v127 = vpop.f32.mrf.mxu0
  %v128 = vadd.f32 0.0, %v127
  %v129 = vpop.f32.mrf.mxu0
  %130 = vmatprep.mubr.bf16.mxu0 0
  %131 = vmatmul.mubr.bf16.gmra.mxu0 %v88
  %v132 = vpop.f32.mrf.mxu0
  %v133 = vadd.f32 0.0, %v132
  %v134 = vpop.f32.mrf.mxu0
  %v135 = vpop.f32.mrf.mxu0
  %v136 = vadd.f32 0.0, %v135
  %v137 = vpop.f32.mrf.mxu0
  %138 = vdwg.mxu0
  %v139 = vadd.f32 %v33, %v125
  %v140 = vadd.f32 %v34, %v128
  %v141 = vadd.f32 %v35, %v133
  %v142 = vadd.f32 %v36, %v136
  %vm143 = vcmask 261120
  %144 = vst.msk [vmem:[#allocation2] sm:$0xff] %vm143, %v139
  %145 = vst.msk [vmem:[#allocation2 + $0x8] sm:$0xff] %vm143, %v140
  %146 = vst.msk [vmem:[#allocation2 + $0x10] sm:$0xff] %vm143, %v141
  %147 = vst.msk [vmem:[#allocation2 + $0x18] sm:$0xff] %vm143, %v142
  // Predicated region
  $region30: #{transformer_bert_forward.20} parent=0 // pred_check
    %p148 = pneg %p24
  $region31: #{transformer_bert_forward.20} parent=0 // pred_check_branch
    %150 = sbr.rel (%p148) target = $region33
  $region32: #{transformer_bert_forward.20} parent=0 // pred_region
    %v151 = vld [vmem:[#allocation2] sm:$0xff]
    %v152 = vld [vmem:[#allocation2 + $0x8] sm:$0xff]
    %v153 = vld [vmem:[#allocation2 + $0x10] sm:$0xff]
    %v154 = vld [vmem:[#allocation2 + $0x18] sm:$0xff]
    %v155 = vld [vmem:[%s2] sm:$0x1]
    %v157 = vlaneseq
    %v158 = vshrl.u32 %v157, 7
    %v159 = vsub.s32 0, %v158
    %v160 = vrot.slane %v155, %v159
    %v162 = vadd.f32 %v151, %v160
    %v163 = vadd.f32 %v152, %v160
    %v164 = vadd.f32 %v153, %v160
    %v165 = vadd.f32 %v154, %v160
    %v166 = vld [vmem:[%s3] sm:$0xf]
    %v167 = vld [vmem:[%s3 + $0x4] sm:$0xf]
    %v168 = vld [vmem:[%s3 + $0x8] sm:$0xf]
    %v169 = vld [vmem:[%s3 + $0xc] sm:$0xf]
    %v170 = vunpack.c.l.bf16 %v166
    %v171 = vunpack.c.l.bf16 %v167
    %v172 = vunpack.c.l.bf16 %v168
    %v173 = vunpack.c.l.bf16 %v169
    %v174 = vadd.f32 %v162, %v170
    %v175 = vadd.f32 %v163, %v171
    %v176 = vadd.f32 %v164, %v172
    %v177 = vadd.f32 %v165, %v173
    %v178 = vsel %vm143, %v174, 0.0
    %179 = vadd.xlane.f32.xlu0 %v178
    %v180 = vpop.xlane.xlu0 %179
    %v181 = vsel %vm143, %v175, 0.0
    %182 = vadd.xlane.f32.xlu0 %v181
    %v183 = vpop.xlane.xlu0 %182
    %v184 = vsel %vm143, %v176, 0.0
    %185 = vadd.xlane.f32.xlu0 %v184
    %v186 = vpop.xlane.xlu0 %185
    %v187 = vsel %vm143, %v177, 0.0
    %188 = vadd.xlane.f32.xlu0 %v187
    %v189 = vpop.xlane.xlu0 %188
    %v190 = vrcp.pop 32.0
    %v191 = vmul.f32 %v180, %v190
    %v192 = vmul.f32 %v183, %v190
    %v193 = vmul.f32 %v186, %v190
    %v194 = vmul.f32 %v189, %v190
    %v195 = vsub.f32 %v174, %v191
    %v196 = vsub.f32 %v175, %v192
    %v197 = vsub.f32 %v176, %v193
    %v198 = vsub.f32 %v177, %v194
    %v199 = vmul.f32 %v195, %v195
    %v200 = vmul.f32 %v196, %v196
    %v201 = vmul.f32 %v197, %v197
    %v202 = vmul.f32 %v198, %v198
    %v203 = vsel %vm143, %v199, 0.0
    %204 = vadd.xlane.f32.xlu0 %v203
    %v205 = vpop.xlane.xlu0 %204
    %v206 = vsel %vm143, %v200, 0.0
    %207 = vadd.xlane.f32.xlu0 %v206
    %v208 = vpop.xlane.xlu0 %207
    %v209 = vsel %vm143, %v201, 0.0
    %210 = vadd.xlane.f32.xlu0 %v209
    %v211 = vpop.xlane.xlu0 %210
    %v212 = vsel %vm143, %v202, 0.0
    %213 = vadd.xlane.f32.xlu0 %v212
    %v214 = vpop.xlane.xlu0 %213
    %v215 = vmul.f32 %v205, %v190
    %v216 = vmul.f32 %v208, %v190
    %v217 = vmul.f32 %v211, %v190
    %v218 = vmul.f32 %v214, %v190
    %v219 = vadd.f32 %v215, 1e-12
    %v220 = vadd.f32 %v216, 1e-12
    %v221 = vadd.f32 %v217, 1e-12
    %v222 = vadd.f32 %v218, 1e-12
    %v223 = vrsqrt.pop %v219
    %v224 = vrsqrt.pop %v220
    %v225 = vrsqrt.pop %v221
    %v226 = vrsqrt.pop %v222
    %v227 = vmul.f32 %v195, %v223
    %v228 = vmul.f32 %v196, %v224
    %v229 = vmul.f32 %v197, %v225
    %v230 = vmul.f32 %v198, %v226
    %v231 = vld [vmem:[%s4] sm:$0x1]
    %v233 = vlaneseq
    %v234 = vshrl.u32 %v233, 7
    %v235 = vsub.s32 0, %v234
    %v236 = vrot.slane %v231, %v235
    %v238 = vmul.f32 %v227, %v236
    %v239 = vmul.f32 %v228, %v236
    %v240 = vmul.f32 %v229, %v236
    %v241 = vmul.f32 %v230, %v236
    %v242 = vld [vmem:[%s5] sm:$0x1]
    %v244 = vlaneseq
    %v245 = vshrl.u32 %v244, 7
    %v246 = vsub.s32 0, %v245
    %v247 = vrot.slane %v242, %v246
    %v249 = vadd.f32 %v238, %v247
    %v250 = vadd.f32 %v239, %v247
    %v251 = vadd.f32 %v240, %v247
    %v252 = vadd.f32 %v241, %v247
    %v253 = vpack.c.bf16 %v250, %v249
    %v254 = vpack.c.bf16 %v252, %v251
    %v257 = vunpack.c.l.b16 %v253
    %v258 = vunpack.c.h.b16 %v253
    %v259 = vunpack.c.l.b16 %v254
    %v260 = vunpack.c.h.b16 %v254
    %v261 = vpack.c.b16 %v257, %v257
    %v262 = vpack.c.b16 %v258, %v258
    %v263 = vpack.c.b16 %v259, %v259
    %v264 = vpack.c.b16 %v260, %v260
    %vm269 = vcmask 257024
    %270 = vst.msk [vmem:[%s6] sm:$0xf] %vm269, %v261
    %271 = vst.msk [vmem:[%s6 + $0x4] sm:$0xf] %vm269, %v262
    %272 = vst.msk [vmem:[%s6 + $0x8] sm:$0xf] %vm269, %v263
    %273 = vst.msk [vmem:[%s6 + $0xc] sm:$0xf] %vm269, %v264
  $region33: #{transformer_bert_forward.20} parent=0 // pred_fallthru
    _
  // Predicated region
  $region34: #{transformer_bert_forward.20} parent=0 // pred_check
    _
  $region35: #{transformer_bert_forward.20} parent=0 // pred_check_branch
    %275 = sbr.rel (0) target = $region37
  $region36: #{transformer_bert_forward.20} parent=0 // pred_region
    _
  $region37: #{transformer_bert_forward.20} parent=0 // pred_fallthru
    _
  // Predicated region
  $region38: #{transformer_bert_forward.20} parent=0 // pred_check
    _
  $region39: #{transformer_bert_forward.20} parent=0 // pred_check_branch
    %277 = sbr.rel (0) target = $region41
  $region40: #{transformer_bert_forward.20} parent=0 // pred_region
    _
  $region41: #{transformer_bert_forward.20} parent=0 // pred_fallthru
    _

// kernel: transformer_bert_forward.21
$region0: #{transformer_bert_forward.21}
  #allocation0 [shape = 'u32[]', space=smem, size = 0x4, offset = 0x4, fixed_abs, tag = 'smem constant byte address 0x4 - core index']
  #allocation1 [shape = 'u32[144,128]{1,0:T(1,128)}', space=vmem, size = 0x12000, scoped, tag = 'internal scratch']
  #allocation2 [shape = 'f32[16,96]{1,0:T(8,128)}', space=vmem, size = 0x2000, scoped, tag = 'scratch operand']
  %s0 = inlined_call_operand.vmem [shape: bf16[16,32], index: 0, kind: input, shape index: {}]
  %s1 = inlined_call_operand.vmem [shape: bf16[32,96], index: 1, kind: input, shape index: {}]
  %s2 = inlined_call_operand.vmem [shape: f32[1,96], index: 2, kind: input, shape index: {}]
  %s3 = inlined_call_operand.vmem [shape: bf16[16,96], index: 3, kind: output, shape index: {}]
  %s4 = sld [smem:[#allocation0]]
  $region30: #{transformer_bert_forward.21} parent=0
    _
  %s6 = ssub.s32 1, %s4
  %s7 = scalar_select 0, %s6, %s4
  // Predicated region
  $region2: #{transformer_bert_forward.21} parent=0 // pred_check
    _
  $region3: #{transformer_bert_forward.21} parent=0 // pred_check_branch
    %9 = sbr.rel (0) target = $region5
  $region4: #{transformer_bert_forward.21} parent=0 // pred_region
    _
  $region5: #{transformer_bert_forward.21} parent=0 // pred_fallthru
    _
  // Predicated region
  $region6: #{transformer_bert_forward.21} parent=0 // pred_check
    _
  $region7: #{transformer_bert_forward.21} parent=0 // pred_check_branch
    %11 = sbr.rel (0) target = $region9
  $region8: #{transformer_bert_forward.21} parent=0 // pred_region
    _
  $region9: #{transformer_bert_forward.21} parent=0 // pred_fallthru
    _
  // Predicated region
  $region10: #{transformer_bert_forward.21} parent=0 // pred_check
    _
  $region11: #{transformer_bert_forward.21} parent=0 // pred_check_branch
    %13 = sbr.rel (0) target = $region13
  $region12: #{transformer_bert_forward.21} parent=0 // pred_region
    _
  $region13: #{transformer_bert_forward.21} parent=0 // pred_fallthru
    _
  %p15 = scmp.eq.s32.totalorder 0, 0
  // Predicated region
  $region14: #{transformer_bert_forward.21} parent=0 // pred_check
    %p16 = pneg %p15
  $region15: #{transformer_bert_forward.21} parent=0 // pred_check_branch
    %18 = sbr.rel (%p16) target = $region17
  $region16: #{transformer_bert_forward.21} parent=0 // pred_region
    %vm19 = vcmask 785408
    %20 = vst.msk [vmem:[#allocation2] sm:$0xff] %vm19, 0.0
    %21 = vst.msk [vmem:[#allocation2 + $0x8] sm:$0xff] %vm19, 0.0
  $region17: #{transformer_bert_forward.21} parent=0 // pred_fallthru
    _
  %v22 = vld [vmem:[#allocation2] sm:$0xff]
  %v23 = vld [vmem:[#allocation2 + $0x8] sm:$0xff]
  %v24 = vld [vmem:[%s0] sm:$0xf]
  %v25 = vld [vmem:[%s0 + $0x4] sm:$0xf]
  %v26 = vld [vmem:[%s1] sm:$0xf]
  %v27 = vld [vmem:[%s1 + $0x4] sm:$0xf]
  %v28 = vld [vmem:[%s1 + $0x8] sm:$0xf]
  %v29 = vld [vmem:[%s1 + $0xc] sm:$0xf]
  %v32 = vunpack.c.l.b16 %v24
  %v33 = vunpack.c.l.b16 %v25
  %v34 = vpack.c.b16 %v33, %v32
  %v39 = vunpack.c.l.b16 %v26
  %v40 = vunpack.c.l.b16 %v27
  %v41 = vunpack.c.l.b16 %v28
  %v42 = vunpack.c.l.b16 %v29
  %v43 = vpack.c.b16 %v40, %v39
  %v44 = vpack.c.b16 %v42, %v41
  %vm47 = vcmask 261120
  %v49 = vsel %vm47, %v34, 0
  %51 = vmatprep.subr.bf16.mxu0 0
  %52 = vmatpush1.bf16.msra.mxu0 0
  %53 = vmatprep.subr.bf16.mxu0 0
  %54 = vmatpush1.bf16.msra.mxu0 0
  %55 = vmatprep.subr.bf16.mxu0 0
  %56 = vmatpush1.bf16.msra.mxu0 0
  %57 = vmatprep.subr.bf16.mxu0 0
  %58 = vmatpush1.bf16.msra.mxu0 0
  %59 = vmatprep.subr.bf16.mxu0 0
  %60 = vmatpush1.bf16.msra.mxu0 0
  %61 = vmatprep.subr.bf16.mxu0 0
  %62 = vmatpush1.bf16.msra.mxu0 0
  %63 = vmatprep.subr.bf16.mxu0 0
  %64 = vmatpush1.bf16.msra.mxu0 %v44
  %65 = vmatprep.subr.bf16.mxu0 0
  %66 = vmatpush1.bf16.msra.mxu0 %v43
  %67 = vmatprep.subr.bf16.mxu0 0
  %68 = vmatpush2.bf16.msra.mxu0 0
  %69 = vmatprep.subr.bf16.mxu0 0
  %70 = vmatpush2.bf16.msra.mxu0 0
  %71 = vmatprep.subr.bf16.mxu0 0
  %72 = vmatpush2.bf16.msra.mxu0 0
  %73 = vmatprep.subr.bf16.mxu0 0
  %74 = vmatpush2.bf16.msra.mxu0 0
  %75 = vmatprep.subr.bf16.mxu0 0
  %76 = vmatpush2.bf16.msra.mxu0 0
  %77 = vmatprep.subr.bf16.mxu0 0
  %78 = vmatpush2.bf16.msra.mxu0 0
  %79 = vmatprep.subr.bf16.mxu0 0
  %80 = vmatpush2.bf16.msra.mxu0 0
  %81 = vmatprep.subr.bf16.mxu0 0
  %82 = vmatpush2.bf16.msra.mxu0 0
  %83 = vmatprep.mubr.bf16.mxu0 0
  %84 = vmatmul.mubr.bf16.gmra.mxu0 %v49
  %v85 = vpop.f32.mrf.mxu0
  %v86 = vadd.f32 0.0, %v85
  %v87 = vpop.f32.mrf.mxu0
  %v88 = vpop.f32.mrf.mxu0
  %v89 = vadd.f32 0.0, %v88
  %v90 = vpop.f32.mrf.mxu0
  %91 = vdwg.mxu0
  %v92 = vadd.f32 %v22, %v86
  %v93 = vadd.f32 %v23, %v89
  %vm94 = vcmask 785408
  %95 = vst.msk [vmem:[#allocation2] sm:$0xff] %vm94, %v92
  %96 = vst.msk [vmem:[#allocation2 + $0x8] sm:$0xff] %vm94, %v93
  // Predicated region
  $region18: #{transformer_bert_forward.21} parent=0 // pred_check
    %p97 = pneg %p15
  $region19: #{transformer_bert_forward.21} parent=0 // pred_check_branch
    %99 = sbr.rel (%p97) target = $region21
  $region20: #{transformer_bert_forward.21} parent=0 // pred_region
    %v100 = vld [vmem:[#allocation2] sm:$0xff]
    %v101 = vld [vmem:[#allocation2 + $0x8] sm:$0xff]
    %v102 = vld [vmem:[%s2] sm:$0x1]
    %v104 = vlaneseq
    %v105 = vshrl.u32 %v104, 7
    %v106 = vsub.s32 0, %v105
    %v107 = vrot.slane %v102, %v106
    %v109 = vadd.f32 %v100, %v107
    %v110 = vadd.f32 %v101, %v107
    %v111 = vpack.c.bf16 %v110, %v109
    %v113 = vunpack.c.l.b16 %v111
    %v114 = vunpack.c.h.b16 %v111
    %v115 = vpack.c.b16 %v113, %v113
    %v116 = vpack.c.b16 %v114, %v114
    %vm119 = vcmask 781312
    %120 = vst.msk [vmem:[%s3] sm:$0xf] %vm119, %v115
    %121 = vst.msk [vmem:[%s3 + $0x4] sm:$0xf] %vm119, %v116
  $region21: #{transformer_bert_forward.21} parent=0 // pred_fallthru
    _
  // Predicated region
  $region22: #{transformer_bert_forward.21} parent=0 // pred_check
    _
  $region23: #{transformer_bert_forward.21} parent=0 // pred_check_branch
    %123 = sbr.rel (0) target = $region25
  $region24: #{transformer_bert_forward.21} parent=0 // pred_region
    _
  $region25: #{transformer_bert_forward.21} parent=0 // pred_fallthru
    _
  // Predicated region
  $region26: #{transformer_bert_forward.21} parent=0 // pred_check
    _
  $region27: #{transformer_bert_forward.21} parent=0 // pred_check_branch
    %125 = sbr.rel (0) target = $region29
  $region28: #{transformer_bert_forward.21} parent=0 // pred_region
    _
  $region29: #{transformer_bert_forward.21} parent=0 // pred_fallthru
    _

// kernel: transformer_bert_forward.23
$region0: #{transformer_bert_forward.23}
  #allocation0 [shape = 'u32[]', space=smem, size = 0x4, offset = 0x4, fixed_abs, tag = 'smem constant byte address 0x4 - core index']
  #allocation1 [shape = 'u32[144,128]{1,0:T(1,128)}', space=vmem, size = 0x12000, scoped, tag = 'internal scratch']
  #allocation2 [shape = 'f32[16,32]{1,0:T(8,128)}', space=vmem, size = 0x2000, scoped, tag = 'scratch operand']
  %s0 = inlined_call_operand.vmem [shape: bf16[16,32], index: 0, kind: input, shape index: {}]
  %s1 = inlined_call_operand.vmem [shape: bf16[32,32], index: 1, kind: input, shape index: {}]
  %s2 = inlined_call_operand.vmem [shape: f32[1,32], index: 2, kind: input, shape index: {}]
  %s3 = inlined_call_operand.vmem [shape: bf16[16,32], index: 3, kind: input, shape index: {}]
  %s4 = inlined_call_operand.vmem [shape: f32[1,32], index: 4, kind: input, shape index: {}]
  %s5 = inlined_call_operand.vmem [shape: f32[1,32], index: 5, kind: input, shape index: {}]
  %s6 = inlined_call_operand.vmem [shape: bf16[16,32], index: 6, kind: output, shape index: {}]
  %s7 = sld [smem:[#allocation0]]
  $region42: #{transformer_bert_forward.23} parent=0
    _
  %s9 = ssub.s32 1, %s7
  %s10 = scalar_select 0, %s9, %s7
  // Predicated region
  $region2: #{transformer_bert_forward.23} parent=0 // pred_check
    _
  $region3: #{transformer_bert_forward.23} parent=0 // pred_check_branch
    %12 = sbr.rel (0) target = $region5
  $region4: #{transformer_bert_forward.23} parent=0 // pred_region
    _
  $region5: #{transformer_bert_forward.23} parent=0 // pred_fallthru
    _
  // Predicated region
  $region6: #{transformer_bert_forward.23} parent=0 // pred_check
    _
  $region7: #{transformer_bert_forward.23} parent=0 // pred_check_branch
    %14 = sbr.rel (0) target = $region9
  $region8: #{transformer_bert_forward.23} parent=0 // pred_region
    _
  $region9: #{transformer_bert_forward.23} parent=0 // pred_fallthru
    _
  // Predicated region
  $region10: #{transformer_bert_forward.23} parent=0 // pred_check
    _
  $region11: #{transformer_bert_forward.23} parent=0 // pred_check_branch
    %16 = sbr.rel (0) target = $region13
  $region12: #{transformer_bert_forward.23} parent=0 // pred_region
    _
  $region13: #{transformer_bert_forward.23} parent=0 // pred_fallthru
    _
  // Predicated region
  $region14: #{transformer_bert_forward.23} parent=0 // pred_check
    _
  $region15: #{transformer_bert_forward.23} parent=0 // pred_check_branch
    %18 = sbr.rel (0) target = $region17
  $region16: #{transformer_bert_forward.23} parent=0 // pred_region
    _
  $region17: #{transformer_bert_forward.23} parent=0 // pred_fallthru
    _
  // Predicated region
  $region18: #{transformer_bert_forward.23} parent=0 // pred_check
    _
  $region19: #{transformer_bert_forward.23} parent=0 // pred_check_branch
    %20 = sbr.rel (0) target = $region21
  $region20: #{transformer_bert_forward.23} parent=0 // pred_region
    _
  $region21: #{transformer_bert_forward.23} parent=0 // pred_fallthru
    _
  // Predicated region
  $region22: #{transformer_bert_forward.23} parent=0 // pred_check
    _
  $region23: #{transformer_bert_forward.23} parent=0 // pred_check_branch
    %22 = sbr.rel (0) target = $region25
  $region24: #{transformer_bert_forward.23} parent=0 // pred_region
    _
  $region25: #{transformer_bert_forward.23} parent=0 // pred_fallthru
    _
  %p24 = scmp.eq.s32.totalorder 0, 0
  // Predicated region
  $region26: #{transformer_bert_forward.23} parent=0 // pred_check
    %p25 = pneg %p24
  $region27: #{transformer_bert_forward.23} parent=0 // pred_check_branch
    %27 = sbr.rel (%p25) target = $region29
  $region28: #{transformer_bert_forward.23} parent=0 // pred_region
    %vm28 = vcmask 261120
    %29 = vst.msk [vmem:[#allocation2] sm:$0xff] %vm28, 0.0
    %30 = vst.msk [vmem:[#allocation2 + $0x8] sm:$0xff] %vm28, 0.0
  $region29: #{transformer_bert_forward.23} parent=0 // pred_fallthru
    _
  %v31 = vld [vmem:[#allocation2] sm:$0xff]
  %v32 = vld [vmem:[#allocation2 + $0x8] sm:$0xff]
  %v33 = vld [vmem:[%s0] sm:$0xf]
  %v34 = vld [vmem:[%s0 + $0x4] sm:$0xf]
  %v35 = vld [vmem:[%s1] sm:$0xf]
  %v36 = vld [vmem:[%s1 + $0x4] sm:$0xf]
  %v37 = vld [vmem:[%s1 + $0x8] sm:$0xf]
  %v38 = vld [vmem:[%s1 + $0xc] sm:$0xf]
  %v41 = vunpack.c.l.b16 %v33
  %v42 = vunpack.c.l.b16 %v34
  %v43 = vpack.c.b16 %v42, %v41
  %v48 = vunpack.c.l.b16 %v35
  %v49 = vunpack.c.l.b16 %v36
  %v50 = vunpack.c.l.b16 %v37
  %v51 = vunpack.c.l.b16 %v38
  %v52 = vpack.c.b16 %v49, %v48
  %v53 = vpack.c.b16 %v51, %v50
  %vm56 = vcmask 261120
  %v58 = vsel %vm56, %v43, 0
  %60 = vmatprep.subr.bf16.mxu0 0
  %61 = vmatpush1.bf16.msra.mxu0 0
  %62 = vmatprep.subr.bf16.mxu0 0
  %63 = vmatpush1.bf16.msra.mxu0 0
  %64 = vmatprep.subr.bf16.mxu0 0
  %65 = vmatpush1.bf16.msra.mxu0 0
  %66 = vmatprep.subr.bf16.mxu0 0
  %67 = vmatpush1.bf16.msra.mxu0 0
  %68 = vmatprep.subr.bf16.mxu0 0
  %69 = vmatpush1.bf16.msra.mxu0 0
  %70 = vmatprep.subr.bf16.mxu0 0
  %71 = vmatpush1.bf16.msra.mxu0 0
  %72 = vmatprep.subr.bf16.mxu0 0
  %73 = vmatpush1.bf16.msra.mxu0 %v53
  %74 = vmatprep.subr.bf16.mxu0 0
  %75 = vmatpush1.bf16.msra.mxu0 %v52
  %76 = vmatprep.subr.bf16.mxu0 0
  %77 = vmatpush2.bf16.msra.mxu0 0
  %78 = vmatprep.subr.bf16.mxu0 0
  %79 = vmatpush2.bf16.msra.mxu0 0
  %80 = vmatprep.subr.bf16.mxu0 0
  %81 = vmatpush2.bf16.msra.mxu0 0
  %82 = vmatprep.subr.bf16.mxu0 0
  %83 = vmatpush2.bf16.msra.mxu0 0
  %84 = vmatprep.subr.bf16.mxu0 0
  %85 = vmatpush2.bf16.msra.mxu0 0
  %86 = vmatprep.subr.bf16.mxu0 0
  %87 = vmatpush2.bf16.msra.mxu0 0
  %88 = vmatprep.subr.bf16.mxu0 0
  %89 = vmatpush2.bf16.msra.mxu0 0
  %90 = vmatprep.subr.bf16.mxu0 0
  %91 = vmatpush2.bf16.msra.mxu0 0
  %92 = vmatprep.mubr.bf16.mxu0 0
  %93 = vmatmul.mubr.bf16.gmra.mxu0 %v58
  %v94 = vpop.f32.mrf.mxu0
  %v95 = vadd.f32 0.0, %v94
  %v96 = vpop.f32.mrf.mxu0
  %v97 = vpop.f32.mrf.mxu0
  %v98 = vadd.f32 0.0, %v97
  %v99 = vpop.f32.mrf.mxu0
  %100 = vdwg.mxu0
  %v101 = vadd.f32 %v31, %v95
  %v102 = vadd.f32 %v32, %v98
  %103 = vst.msk [vmem:[#allocation2] sm:$0xff] %vm56, %v101
  %104 = vst.msk [vmem:[#allocation2 + $0x8] sm:$0xff] %vm56, %v102
  // Predicated region
  $region30: #{transformer_bert_forward.23} parent=0 // pred_check
    %p105 = pneg %p24
  $region31: #{transformer_bert_forward.23} parent=0 // pred_check_branch
    %107 = sbr.rel (%p105) target = $region33
  $region32: #{transformer_bert_forward.23} parent=0 // pred_region
    %v108 = vld [vmem:[#allocation2] sm:$0xff]
    %v109 = vld [vmem:[#allocation2 + $0x8] sm:$0xff]
    %v110 = vld [vmem:[%s2] sm:$0x1]
    %v112 = vlaneseq
    %v113 = vshrl.u32 %v112, 7
    %v114 = vsub.s32 0, %v113
    %v115 = vrot.slane %v110, %v114
    %v117 = vadd.f32 %v108, %v115
    %v118 = vadd.f32 %v109, %v115
    %v119 = vld [vmem:[%s3] sm:$0xf]
    %v120 = vld [vmem:[%s3 + $0x4] sm:$0xf]
    %v121 = vunpack.c.l.bf16 %v119
    %v122 = vunpack.c.l.bf16 %v120
    %v123 = vadd.f32 %v117, %v121
    %v124 = vadd.f32 %v118, %v122
    %v125 = vsel %vm56, %v123, 0.0
    %126 = vadd.xlane.f32.xlu0 %v125
    %v127 = vpop.xlane.xlu0 %126
    %v128 = vsel %vm56, %v124, 0.0
    %129 = vadd.xlane.f32.xlu0 %v128
    %v130 = vpop.xlane.xlu0 %129
    %v131 = vrcp.pop 32.0
    %v132 = vmul.f32 %v127, %v131
    %v133 = vmul.f32 %v130, %v131
    %v134 = vsub.f32 %v123, %v132
    %v135 = vsub.f32 %v124, %v133
    %v136 = vmul.f32 %v134, %v134
    %v137 = vmul.f32 %v135, %v135
    %v138 = vsel %vm56, %v136, 0.0
    %139 = vadd.xlane.f32.xlu0 %v138
    %v140 = vpop.xlane.xlu0 %139
    %v141 = vsel %vm56, %v137, 0.0
    %142 = vadd.xlane.f32.xlu0 %v141
    %v143 = vpop.xlane.xlu0 %142
    %v144 = vmul.f32 %v140, %v131
    %v145 = vmul.f32 %v143, %v131
    %v146 = vadd.f32 %v144, 1e-12
    %v147 = vadd.f32 %v145, 1e-12
    %v148 = vrsqrt.pop %v146
    %v149 = vrsqrt.pop %v147
    %v150 = vmul.f32 %v134, %v148
    %v151 = vmul.f32 %v135, %v149
    %v152 = vld [vmem:[%s4] sm:$0x1]
    %v154 = vlaneseq
    %v155 = vshrl.u32 %v154, 7
    %v156 = vsub.s32 0, %v155
    %v157 = vrot.slane %v152, %v156
    %v159 = vmul.f32 %v150, %v157
    %v160 = vmul.f32 %v151, %v157
    %v161 = vld [vmem:[%s5] sm:$0x1]
    %v163 = vlaneseq
    %v164 = vshrl.u32 %v163, 7
    %v165 = vsub.s32 0, %v164
    %v166 = vrot.slane %v161, %v165
    %v168 = vadd.f32 %v159, %v166
    %v169 = vadd.f32 %v160, %v166
    %v170 = vpack.c.bf16 %v169, %v168
    %v172 = vunpack.c.l.b16 %v170
    %v173 = vunpack.c.h.b16 %v170
    %v174 = vpack.c.b16 %v172, %v172
    %v175 = vpack.c.b16 %v173, %v173
    %vm178 = vcmask 257024
    %179 = vst.msk [vmem:[%s6] sm:$0xf] %vm178, %v174
    %180 = vst.msk [vmem:[%s6 + $0x4] sm:$0xf] %vm178, %v175
  $region33: #{transformer_bert_forward.23} parent=0 // pred_fallthru
    _
  // Predicated region
  $region34: #{transformer_bert_forward.23} parent=0 // pred_check
    _
  $region35: #{transformer_bert_forward.23} parent=0 // pred_check_branch
    %182 = sbr.rel (0) target = $region37
  $region36: #{transformer_bert_forward.23} parent=0 // pred_region
    _
  $region37: #{transformer_bert_forward.23} parent=0 // pred_fallthru
    _
  // Predicated region
  $region38: #{transformer_bert_forward.23} parent=0 // pred_check
    _
  $region39: #{transformer_bert_forward.23} parent=0 // pred_check_branch
    %184 = sbr.rel (0) target = $region41
  $region40: #{transformer_bert_forward.23} parent=0 // pred_region
    _
  $region41: #{transformer_bert_forward.23} parent=0 // pred_fallthru
    _

// kernel: transformer_bert_forward.24
$region0: #{transformer_bert_forward.24}
  #allocation0 [shape = 'u32[]', space=smem, size = 0x4, offset = 0x4, fixed_abs, tag = 'smem constant byte address 0x4 - core index']
  #allocation1 [shape = 'u32[144,128]{1,0:T(1,128)}', space=vmem, size = 0x12000, scoped, tag = 'internal scratch']
  #allocation2 [shape = 'f32[16,32]{1,0:T(8,128)}', space=vmem, size = 0x2000, scoped, tag = 'scratch operand']
  %s0 = inlined_call_operand.vmem [shape: bf16[16,32], index: 0, kind: input, shape index: {}]
  %s1 = inlined_call_operand.vmem [shape: bf16[32,32], index: 1, kind: input, shape index: {}]
  %s2 = inlined_call_operand.vmem [shape: f32[1,32], index: 2, kind: input, shape index: {}]
  %s3 = inlined_call_operand.vmem [shape: bf16[16,32], index: 3, kind: output, shape index: {}]
  %s4 = sld [smem:[#allocation0]]
  $region30: #{transformer_bert_forward.24} parent=0
    _
  %s6 = ssub.s32 1, %s4
  %s7 = scalar_select 0, %s6, %s4
  // Predicated region
  $region2: #{transformer_bert_forward.24} parent=0 // pred_check
    _
  $region3: #{transformer_bert_forward.24} parent=0 // pred_check_branch
    %9 = sbr.rel (0) target = $region5
  $region4: #{transformer_bert_forward.24} parent=0 // pred_region
    _
  $region5: #{transformer_bert_forward.24} parent=0 // pred_fallthru
    _
  // Predicated region
  $region6: #{transformer_bert_forward.24} parent=0 // pred_check
    _
  $region7: #{transformer_bert_forward.24} parent=0 // pred_check_branch
    %11 = sbr.rel (0) target = $region9
  $region8: #{transformer_bert_forward.24} parent=0 // pred_region
    _
  $region9: #{transformer_bert_forward.24} parent=0 // pred_fallthru
    _
  // Predicated region
  $region10: #{transformer_bert_forward.24} parent=0 // pred_check
    _
  $region11: #{transformer_bert_forward.24} parent=0 // pred_check_branch
    %13 = sbr.rel (0) target = $region13
  $region12: #{transformer_bert_forward.24} parent=0 // pred_region
    _
  $region13: #{transformer_bert_forward.24} parent=0 // pred_fallthru
    _
  %p15 = scmp.eq.s32.totalorder 0, 0
  // Predicated region
  $region14: #{transformer_bert_forward.24} parent=0 // pred_check
    %p16 = pneg %p15
  $region15: #{transformer_bert_forward.24} parent=0 // pred_check_branch
    %18 = sbr.rel (%p16) target = $region17
  $region16: #{transformer_bert_forward.24} parent=0 // pred_region
    %vm19 = vcmask 261120
    %20 = vst.msk [vmem:[#allocation2] sm:$0xff] %vm19, 0.0
    %21 = vst.msk [vmem:[#allocation2 + $0x8] sm:$0xff] %vm19, 0.0
  $region17: #{transformer_bert_forward.24} parent=0 // pred_fallthru
    _
  %v22 = vld [vmem:[#allocation2] sm:$0xff]
  %v23 = vld [vmem:[#allocation2 + $0x8] sm:$0xff]
  %v24 = vld [vmem:[%s0] sm:$0xf]
  %v25 = vld [vmem:[%s0 + $0x4] sm:$0xf]
  %v26 = vld [vmem:[%s1] sm:$0xf]
  %v27 = vld [vmem:[%s1 + $0x4] sm:$0xf]
  %v28 = vld [vmem:[%s1 + $0x8] sm:$0xf]
  %v29 = vld [vmem:[%s1 + $0xc] sm:$0xf]
  %v32 = vunpack.c.l.b16 %v24
  %v33 = vunpack.c.l.b16 %v25
  %v34 = vpack.c.b16 %v33, %v32
  %v39 = vunpack.c.l.b16 %v26
  %v40 = vunpack.c.l.b16 %v27
  %v41 = vunpack.c.l.b16 %v28
  %v42 = vunpack.c.l.b16 %v29
  %v43 = vpack.c.b16 %v40, %v39
  %v44 = vpack.c.b16 %v42, %v41
  %vm47 = vcmask 261120
  %v49 = vsel %vm47, %v34, 0
  %51 = vmatprep.subr.bf16.mxu0 0
  %52 = vmatpush1.bf16.msra.mxu0 0
  %53 = vmatprep.subr.bf16.mxu0 0
  %54 = vmatpush1.bf16.msra.mxu0 0
  %55 = vmatprep.subr.bf16.mxu0 0
  %56 = vmatpush1.bf16.msra.mxu0 0
  %57 = vmatprep.subr.bf16.mxu0 0
  %58 = vmatpush1.bf16.msra.mxu0 0
  %59 = vmatprep.subr.bf16.mxu0 0
  %60 = vmatpush1.bf16.msra.mxu0 0
  %61 = vmatprep.subr.bf16.mxu0 0
  %62 = vmatpush1.bf16.msra.mxu0 0
  %63 = vmatprep.subr.bf16.mxu0 0
  %64 = vmatpush1.bf16.msra.mxu0 %v44
  %65 = vmatprep.subr.bf16.mxu0 0
  %66 = vmatpush1.bf16.msra.mxu0 %v43
  %67 = vmatprep.subr.bf16.mxu0 0
  %68 = vmatpush2.bf16.msra.mxu0 0
  %69 = vmatprep.subr.bf16.mxu0 0
  %70 = vmatpush2.bf16.msra.mxu0 0
  %71 = vmatprep.subr.bf16.mxu0 0
  %72 = vmatpush2.bf16.msra.mxu0 0
  %73 = vmatprep.subr.bf16.mxu0 0
  %74 = vmatpush2.bf16.msra.mxu0 0
  %75 = vmatprep.subr.bf16.mxu0 0
  %76 = vmatpush2.bf16.msra.mxu0 0
  %77 = vmatprep.subr.bf16.mxu0 0
  %78 = vmatpush2.bf16.msra.mxu0 0
  %79 = vmatprep.subr.bf16.mxu0 0
  %80 = vmatpush2.bf16.msra.mxu0 0
  %81 = vmatprep.subr.bf16.mxu0 0
  %82 = vmatpush2.bf16.msra.mxu0 0
  %83 = vmatprep.mubr.bf16.mxu0 0
  %84 = vmatmul.mubr.bf16.gmra.mxu0 %v49
  %v85 = vpop.f32.mrf.mxu0
  %v86 = vadd.f32 0.0, %v85
  %v87 = vpop.f32.mrf.mxu0
  %v88 = vpop.f32.mrf.mxu0
  %v89 = vadd.f32 0.0, %v88
  %v90 = vpop.f32.mrf.mxu0
  %91 = vdwg.mxu0
  %v92 = vadd.f32 %v22, %v86
  %v93 = vadd.f32 %v23, %v89
  %94 = vst.msk [vmem:[#allocation2] sm:$0xff] %vm47, %v92
  %95 = vst.msk [vmem:[#allocation2 + $0x8] sm:$0xff] %vm47, %v93
  // Predicated region
  $region18: #{transformer_bert_forward.24} parent=0 // pred_check
    %p96 = pneg %p15
  $region19: #{transformer_bert_forward.24} parent=0 // pred_check_branch
    %98 = sbr.rel (%p96) target = $region21
  $region20: #{transformer_bert_forward.24} parent=0 // pred_region
    %v99 = vld [vmem:[#allocation2] sm:$0xff]
    %v100 = vld [vmem:[#allocation2 + $0x8] sm:$0xff]
    %v101 = vld [vmem:[%s2] sm:$0x1]
    %v103 = vlaneseq
    %v104 = vshrl.u32 %v103, 7
    %v105 = vsub.s32 0, %v104
    %v106 = vrot.slane %v101, %v105
    %v108 = vadd.f32 %v99, %v106
    %v109 = vadd.f32 %v100, %v106
    %v110 = vpack.c.bf16 %v109, %v108
    %v112 = vunpack.c.l.b16 %v110
    %v113 = vunpack.c.h.b16 %v110
    %v114 = vpack.c.b16 %v112, %v112
    %v115 = vpack.c.b16 %v113, %v113
    %vm118 = vcmask 257024
    %119 = vst.msk [vmem:[%s3] sm:$0xf] %vm118, %v114
    %120 = vst.msk [vmem:[%s3 + $0x4] sm:$0xf] %vm118, %v115
  $region21: #{transformer_bert_forward.24} parent=0 // pred_fallthru
    _
  // Predicated region
  $region22: #{transformer_bert_forward.24} parent=0 // pred_check
    _
  $region23: #{transformer_bert_forward.24} parent=0 // pred_check_branch
    %122 = sbr.rel (0) target = $region25
  $region24: #{transformer_bert_forward.24} parent=0 // pred_region
    _
  $region25: #{transformer_bert_forward.24} parent=0 // pred_fallthru
    _
  // Predicated region
  $region26: #{transformer_bert_forward.24} parent=0 // pred_check
    _
  $region27: #{transformer_bert_forward.24} parent=0 // pred_check_branch
    %124 = sbr.rel (0) target = $region29
  $region28: #{transformer_bert_forward.24} parent=0 // pred_region
    _
  $region29: #{transformer_bert_forward.24} parent=0 // pred_fallthru
    _

// kernel: transformer_bert_forward.22
$region0: #{transformer_bert_forward.22}
  #allocation0 [shape = 'u32[]', space=smem, size = 0x4, offset = 0x4, fixed_abs, tag = 'smem constant byte address 0x4 - core index']
  #allocation1 [shape = 'u32[144,128]{1,0:T(1,128)}', space=vmem, size = 0x12000, scoped, tag = 'internal scratch']
  #allocation2 [shape = 'f32[4,8,1]{2,1,0:T(8,128)}', space=vmem, size = 0x4000, scoped, tag = 'scratch operand']
  #allocation3 [shape = 'f32[4,8,1]{2,1,0:T(8,128)}', space=vmem, size = 0x4000, scoped, tag = 'scratch operand']
  #allocation4 [shape = 'f32[4,8,8]{2,1,0:T(8,128)}', space=vmem, size = 0x4000, scoped, tag = 'scratch operand']
  #allocation5 [shape = 's32[1]{0}', space=sflag, size = 0x4, scoped, tag = 'scoped memory for transformer_bert_forward.22']
  #allocation6 [shape = 'u8[512]{0}', space=smem, size = 0x200, scoped, tag = 'prefetched SMEM operand 0']
  %s0 = inlined_call_operand.vmem [shape: s32[2], index: 0, kind: input, shape index: {}]
  %s1 = inlined_call_operand.vmem [shape: bf16[2,4,8,8], index: 1, kind: input, shape index: {}]
  %s2 = inlined_call_operand.vmem [shape: bf16[2,4,8,8], index: 2, kind: input, shape index: {}]
  %s3 = inlined_call_operand.vmem [shape: bf16[2,4,8,8], index: 3, kind: input, shape index: {}]
  %s4 = inlined_call_operand.vmem [shape: bf16[2,8,32], index: 4, kind: output, shape index: {}]
  %s5 = sld [smem:[#allocation0]]
  $region53: #{transformer_bert_forward.22} parent=0
    _
  %s7 = ssub.s32 1, %s5
  %s8 = scalar_select 0, %s7, %s5
  %s9 = sshll.u32 %s0, 4
  %s10 = int_to_ptr.vmem [resolvable:$true] %s9
  %12 = dma.vmem_to_smem %s10, 16, [#allocation6], [#allocation5]
  %13 = dma.done [#allocation5], 16
  %14 = sfence
  loop: start=0, step=1, limit=4
  $region2: #{transformer_bert_forward.22} parent=0 // loop_pre_header
    _
  $region3: #{transformer_bert_forward.22} parent=0 // loop_header
    %s16 = sphi 0, %s20
    %p17 = scmp.ge.s32.totalorder %s16, 4
    %s23 = sphi 0, %s42
    %s24 = sphi 0, %s38
    %s25 = sphi 0, %s34
    %s26 = sphi 0, %s23
    %s27 = sphi 0, %s24
    %s28 = sphi 0, %s25
    %s29 = sphi 0, %s26
    %s30 = sphi 0, %s27
    %s31 = sphi 0, %s28
    %s47 = sphi 0, %s49
    %s50 = sphi 0, %s47
    %s51 = sphi 0, %s50
    %s67 = sphi 0, %s51
    %s75 = sphi 0, %s77
    %s78 = sphi 0, %s75
    %s79 = sphi 0, %s78
    %s95 = sphi 0, %s79
    %s103 = sphi 0, %s105
    %s106 = sphi 0, %s103
    %s107 = sphi 0, %s106
    %s123 = sphi 0, %s107
    %s131 = sphi 0, %s133
    %s134 = sphi 0, %s131
    %s135 = sphi 0, %s134
    %s151 = sphi 0, %s135
  $region4: #{transformer_bert_forward.22} parent=0 // loop_header_branch
    %19 = sbr.rel (%p17) target = $region8
  $region5: #{transformer_bert_forward.22} parent=0 // loop_body
    %s21 = ssub.s32 %s16, 1
    %s22 = ssub.s32 %s16, 2
    %s32 = sadd.s32 1, %s25
    %p33 = scmp.ge.s32.totalorder %s32, 1
    %s34 = scalar_select %p33, 0, %s32
    %s35 = sadd.s32 1, %s24
    %s36 = scalar_select %p33, %s35, %s24
    %p37 = scmp.ge.s32.totalorder %s36, 1
    %s38 = scalar_select %p37, 0, %s36
    %s39 = sadd.s32 1, %s23
    %s40 = scalar_select %p37, %s39, %s23
    %p41 = scmp.ge.s32.totalorder %s40, 2
    %s42 = scalar_select %p41, 0, %s40
    %s43 = ssub.s32 %s23, %s42
    %s44 = ssub.s32 %s24, %s38
    %s45 = sor.u32 %s43, %s44
    %p46 = scmp.eq.s32.totalorder %s45, 0
    %s48 = sadd.s32 %s47, 1
    %s49 = scalar_select %p46, %s47, %s48
    %p52 = pneg %p46
    %p53 = scmp.eq.s32.totalorder %s16, 1
    %p54 = por %p52, %p53
    %p55 = scmp.ne.s32.totalorder %s47, %s50
    %p56 = scmp.eq.s32.totalorder %s16, 0
    %p57 = por %p55, %p56
    %p58 = scmp.ne.s32.totalorder %s47, %s50
    %p59 = scmp.eq.s32.totalorder %s21, 1
    %p60 = por %p58, %p59
    %p61 = scmp.ne.s32.totalorder %s50, %s51
    %p62 = scmp.eq.s32.totalorder %s21, 0
    %p63 = por %p61, %p62
    %p64 = scmp.ne.s32.totalorder %s50, %s51
    %p65 = scmp.eq.s32.totalorder %s22, 1
    %p66 = por %p64, %p65
    %p68 = scmp.ne.s32.totalorder %s51, %s67
    %p69 = scmp.eq.s32.totalorder %s22, 0
    %p70 = por %p68, %p69
    %s71 = ssub.s32 %s23, %s42
    %s72 = ssub.s32 %s25, %s34
    %s73 = sor.u32 %s71, %s72
    %p74 = scmp.eq.s32.totalorder %s73, 0
    %s76 = sadd.s32 %s75, 1
    %s77 = scalar_select %p74, %s75, %s76
    %p80 = pneg %p74
    %p81 = scmp.eq.s32.totalorder %s16, 1
    %p82 = por %p80, %p81
    %p83 = scmp.ne.s32.totalorder %s75, %s78
    %p84 = scmp.eq.s32.totalorder %s16, 0
    %p85 = por %p83, %p84
    %p86 = scmp.ne.s32.totalorder %s75, %s78
    %p87 = scmp.eq.s32.totalorder %s21, 1
    %p88 = por %p86, %p87
    %p89 = scmp.ne.s32.totalorder %s78, %s79
    %p90 = scmp.eq.s32.totalorder %s21, 0
    %p91 = por %p89, %p90
    %p92 = scmp.ne.s32.totalorder %s78, %s79
    %p93 = scmp.eq.s32.totalorder %s22, 1
    %p94 = por %p92, %p93
    %p96 = scmp.ne.s32.totalorder %s79, %s95
    %p97 = scmp.eq.s32.totalorder %s22, 0
    %p98 = por %p96, %p97
    %s99 = ssub.s32 %s23, %s42
    %s100 = ssub.s32 %s25, %s34
    %s101 = sor.u32 %s99, %s100
    %p102 = scmp.eq.s32.totalorder %s101, 0
    %s104 = sadd.s32 %s103, 1
    %s105 = scalar_select %p102, %s103, %s104
    %p108 = pneg %p102
    %p109 = scmp.eq.s32.totalorder %s16, 1
    %p110 = por %p108, %p109
    %p111 = scmp.ne.s32.totalorder %s103, %s106
    %p112 = scmp.eq.s32.totalorder %s16, 0
    %p113 = por %p111, %p112
    %p114 = scmp.ne.s32.totalorder %s103, %s106
    %p115 = scmp.eq.s32.totalorder %s21, 1
    %p116 = por %p114, %p115
    %p117 = scmp.ne.s32.totalorder %s106, %s107
    %p118 = scmp.eq.s32.totalorder %s21, 0
    %p119 = por %p117, %p118
    %p120 = scmp.ne.s32.totalorder %s106, %s107
    %p121 = scmp.eq.s32.totalorder %s22, 1
    %p122 = por %p120, %p121
    %p124 = scmp.ne.s32.totalorder %s107, %s123
    %p125 = scmp.eq.s32.totalorder %s22, 0
    %p126 = por %p124, %p125
    %s127 = ssub.s32 %s23, %s42
    %s128 = ssub.s32 %s24, %s38
    %s129 = sor.u32 %s127, %s128
    %p130 = scmp.eq.s32.totalorder %s129, 0
    %s132 = sadd.s32 %s131, 1
    %s133 = scalar_select %p130, %s131, %s132
    %p136 = pneg %p130
    %p137 = scmp.eq.s32.totalorder %s16, 1
    %p138 = por %p136, %p137
    %p139 = scmp.ne.s32.totalorder %s131, %s134
    %p140 = scmp.eq.s32.totalorder %s16, 0
    %p141 = por %p139, %p140
    %p142 = scmp.ne.s32.totalorder %s131, %s134
    %p143 = scmp.eq.s32.totalorder %s21, 1
    %p144 = por %p142, %p143
    %p145 = scmp.ne.s32.totalorder %s134, %s135
    %p146 = scmp.eq.s32.totalorder %s21, 0
    %p147 = por %p145, %p146
    %p148 = scmp.ne.s32.totalorder %s134, %s135
    %p149 = scmp.eq.s32.totalorder %s22, 1
    %p150 = por %p148, %p149
    %p152 = scmp.ne.s32.totalorder %s135, %s151
    %p153 = scmp.eq.s32.totalorder %s22, 0
    %p154 = por %p152, %p153
    %p155 = scmp.le.s32.totalorder 1, %s16
    %p156 = scmp.lt.s32.totalorder %s16, 3
    %p157 = pnand %p155, %p156
    %p158 = pneg %p157
    // Predicated region
    $region9: #{transformer_bert_forward.22} parent=5 // pred_check
      _
    $region10: #{transformer_bert_forward.22} parent=5 // pred_check_branch
      %160 = sbr.rel (%p157) target = $region12
    $region11: #{transformer_bert_forward.22} parent=5 // pred_region
      %s161 = ssub.s32 %s16, 1
    $region12: #{transformer_bert_forward.22} parent=5 // pred_fallthru
      _
    %p162 = scmp.lt.s32.totalorder %s16, 2
    // Predicated region
    $region13: #{transformer_bert_forward.22} parent=5 // pred_check
      %p163 = pneg %p162
    $region14: #{transformer_bert_forward.22} parent=5 // pred_check_branch
      %165 = sbr.rel (%p163) target = $region16
    $region15: #{transformer_bert_forward.22} parent=5 // pred_region
      // Predicated region
      $region17: #{transformer_bert_forward.22} parent=15 // pred_check
        %p166 = pneg %p57
      $region18: #{transformer_bert_forward.22} parent=15 // pred_check_branch
        %168 = sbr.rel (%p166) target = $region20
      $region19: #{transformer_bert_forward.22} parent=15 // pred_region
        %p169 = scmp.lt.s32.totalorder %s23, 1
        %s170 = scalar_select %p169, %s23, 1
        %p171 = scmp.lt.s32.totalorder %s24, 0
        %s172 = scalar_select %p171, %s24, 0
        %s173 = smul.addr %s170, 4
        %s174 = sadd.s32 %s172, %s173
        %s175 = smul.addr %s174, 4
        %s176 = scalar_lea.vmem %s1, %s175
      $region20: #{transformer_bert_forward.22} parent=15 // pred_fallthru
        _
      // Predicated region
      $region21: #{transformer_bert_forward.22} parent=15 // pred_check
        %p177 = pneg %p85
      $region22: #{transformer_bert_forward.22} parent=15 // pred_check_branch
        %179 = sbr.rel (%p177) target = $region24
      $region23: #{transformer_bert_forward.22} parent=15 // pred_region
        %p180 = scmp.lt.s32.totalorder %s23, 1
        %s181 = scalar_select %p180, %s23, 1
        %p182 = scmp.lt.s32.totalorder %s25, 0
        %s183 = scalar_select %p182, %s25, 0
        %s184 = smul.addr %s181, 4
        %s185 = sadd.s32 %s183, %s184
        %s186 = smul.addr %s185, 4
        %s187 = scalar_lea.vmem %s2, %s186
      $region24: #{transformer_bert_forward.22} parent=15 // pred_fallthru
        _
      // Predicated region
      $region25: #{transformer_bert_forward.22} parent=15 // pred_check
        %p188 = pneg %p113
      $region26: #{transformer_bert_forward.22} parent=15 // pred_check_branch
        %190 = sbr.rel (%p188) target = $region28
      $region27: #{transformer_bert_forward.22} parent=15 // pred_region
        %p191 = scmp.lt.s32.totalorder %s23, 1
        %s192 = scalar_select %p191, %s23, 1
        %p193 = scmp.lt.s32.totalorder %s25, 0
        %s194 = scalar_select %p193, %s25, 0
        %s195 = smul.addr %s192, 4
        %s196 = sadd.s32 %s194, %s195
        %s197 = smul.addr %s196, 4
        %s198 = scalar_lea.vmem %s3, %s197
      $region28: #{transformer_bert_forward.22} parent=15 // pred_fallthru
        _
    $region16: #{transformer_bert_forward.22} parent=5 // pred_fallthru
      _
    %p199 = scmp.le.s32.totalorder 1, %s16
    %p200 = scmp.lt.s32.totalorder %s16, 3
    %p201 = pnand %p199, %p200
    %p202 = pneg %p201
    // Predicated region
    $region29: #{transformer_bert_forward.22} parent=5 // pred_check
      _
    $region30: #{transformer_bert_forward.22} parent=5 // pred_check_branch
      %204 = sbr.rel (%p201) target = $region32
    $region31: #{transformer_bert_forward.22} parent=5 // pred_region
      %s205 = ssub.s32 %s16, 1
      %p206 = scmp.lt.s32.totalorder %s26, 1
      %s207 = scalar_select %p206, %s26, 1
      %p208 = scmp.lt.s32.totalorder %s27, 0
      %s209 = scalar_select %p208, %s27, 0
      %s210 = smul.addr %s207, 4
      %s211 = sadd.s32 %s209, %s210
      %s212 = smul.addr %s211, 4
      %s213 = scalar_lea.vmem %s1, %s212
      %p214 = pneg %p63
      %p215 = pneg %p60
      %p216 = scmp.lt.s32.totalorder %s26, 1
      %s217 = scalar_select %p216, %s26, 1
      %p218 = scmp.lt.s32.totalorder %s28, 0
      %s219 = scalar_select %p218, %s28, 0
      %s220 = smul.addr %s217, 4
      %s221 = sadd.s32 %s219, %s220
      %s222 = smul.addr %s221, 4
      %s223 = scalar_lea.vmem %s2, %s222
      %p224 = pneg %p91
      %p225 = pneg %p88
      %p226 = scmp.lt.s32.totalorder %s26, 1
      %s227 = scalar_select %p226, %s26, 1
      %p228 = scmp.lt.s32.totalorder %s28, 0
      %s229 = scalar_select %p228, %s28, 0
      %s230 = smul.addr %s227, 4
      %s231 = sadd.s32 %s229, %s230
      %s232 = smul.addr %s231, 4
      %s233 = scalar_lea.vmem %s3, %s232
      %p234 = pneg %p119
      %p235 = pneg %p116
      %p236 = pneg %p147
      %p237 = pneg %p144
      %p238 = scmp.lt.s32.totalorder %s26, 1
      %s239 = scalar_select %p238, %s26, 1
      %p240 = scmp.lt.s32.totalorder %s27, 0
      %s241 = scalar_select %p240, %s27, 0
      %s242 = sadd.s32 %s241, %s239
      %s243 = smul.addr %s242, 4
      %s244 = scalar_lea.vmem %s4, %s243
      %p245 = scmp.lt.s32.totalorder %s26, 1
      %s246 = scalar_select %p245, %s26, 1
      %p247 = scmp.lt.s32.totalorder %s27, 0
      %s248 = scalar_select %p247, %s27, 0
      %s249 = smul.addr %s246, 4
      %s250 = sadd.s32 %s248, %s249
      %s251 = smul.addr %s250, 4
      %s252 = scalar_lea.vmem %s1, %s251
      %p253 = scmp.lt.s32.totalorder %s26, 1
      %s254 = scalar_select %p253, %s26, 1
      %p255 = scmp.lt.s32.totalorder %s28, 0
      %s256 = scalar_select %p255, %s28, 0
      %s257 = smul.addr %s254, 4
      %s258 = sadd.s32 %s256, %s257
      %s259 = smul.addr %s258, 4
      %s260 = scalar_lea.vmem %s2, %s259
      %p261 = scmp.lt.s32.totalorder %s26, 1
      %s262 = scalar_select %p261, %s26, 1
      %p263 = scmp.lt.s32.totalorder %s28, 0
      %s264 = scalar_select %p263, %s28, 0
      %s265 = smul.addr %s262, 4
      %s266 = sadd.s32 %s264, %s265
      %s267 = smul.addr %s266, 4
      %s268 = scalar_lea.vmem %s3, %s267
      %p269 = scmp.lt.s32.totalorder %s26, 1
      %s270 = scalar_select %p269, %s26, 1
      %p271 = scmp.lt.s32.totalorder %s27, 0
      %s272 = scalar_select %p271, %s27, 0
      %s273 = sadd.s32 %s272, %s270
      %s274 = smul.addr %s273, 4
      %s275 = scalar_lea.vmem %s4, %s274
      %p277 = scmp.eq.s32.totalorder %s28, 0
      // Predicated region
      $region33: #{transformer_bert_forward.22} parent=31 // pred_check
        %p278 = pneg %p277
      $region34: #{transformer_bert_forward.22} parent=31 // pred_check_branch
        %280 = sbr.rel (%p278) target = $region36
      $region35: #{transformer_bert_forward.22} parent=31 // pred_region
        %vm281 = vcmask 7168
        %282 = vst.msk [vmem:[#allocation2] sm:$0xff] %vm281, -inf
        %283 = vst.msk [vmem:[#allocation2 + $0x8] sm:$0xff] %vm281, -inf
        %284 = vst.msk [vmem:[#allocation2 + $0x10] sm:$0xff] %vm281, -inf
        %285 = vst.msk [vmem:[#allocation2 + $0x18] sm:$0xff] %vm281, -inf
        %286 = vst.msk [vmem:[#allocation3] sm:$0xff] %vm281, 0.0
        %287 = vst.msk [vmem:[#allocation3 + $0x8] sm:$0xff] %vm281, 0.0
        %288 = vst.msk [vmem:[#allocation3 + $0x10] sm:$0xff] %vm281, 0.0
        %289 = vst.msk [vmem:[#allocation3 + $0x18] sm:$0xff] %vm281, 0.0
        %vm290 = vcmask 64512
        %291 = vst.msk [vmem:[#allocation4] sm:$0xff] %vm290, 0.0
        %292 = vst.msk [vmem:[#allocation4 + $0x8] sm:$0xff] %vm290, 0.0
        %293 = vst.msk [vmem:[#allocation4 + $0x10] sm:$0xff] %vm290, 0.0
        %294 = vst.msk [vmem:[#allocation4 + $0x18] sm:$0xff] %vm290, 0.0
      $region36: #{transformer_bert_forward.22} parent=31 // pred_fallthru
        _
      %v295 = vld [vmem:[%s252] sm:$0xf]
      %v296 = vld [vmem:[%s252 + $0x4] sm:$0xf]
      %v297 = vld [vmem:[%s252 + $0x8] sm:$0xf]
      %v298 = vld [vmem:[%s252 + $0xc] sm:$0xf]
      %v299 = vld [vmem:[%s260] sm:$0xf]
      %v300 = vld [vmem:[%s260 + $0x4] sm:$0xf]
      %v301 = vld [vmem:[%s260 + $0x8] sm:$0xf]
      %v302 = vld [vmem:[%s260 + $0xc] sm:$0xf]
      %v303 = vld [vmem:[%s268] sm:$0xf]
      %v304 = vld [vmem:[%s268 + $0x4] sm:$0xf]
      %v305 = vld [vmem:[%s268 + $0x8] sm:$0xf]
      %v306 = vld [vmem:[%s268 + $0xc] sm:$0xf]
      %vm307 = vcmask 64512
      %v309 = vsel %vm307, %v295, 0
      %v312 = vsel %vm307, %v299, 0
      %314 = vmatprep.subr.bf16.mxu0 0
      %315 = vmatpush1.bf16.xpose.msra.mxu0 0
      %316 = vmatprep.subr.bf16.mxu0 0
      %317 = vmatpush1.bf16.xpose.msra.mxu0 0
      %318 = vmatprep.subr.bf16.mxu0 0
      %319 = vmatpush1.bf16.xpose.msra.mxu0 0
      %320 = vmatprep.subr.bf16.mxu0 0
      %321 = vmatpush1.bf16.xpose.msra.mxu0 0
      %322 = vmatprep.subr.bf16.mxu0 0
      %323 = vmatpush1.bf16.xpose.msra.mxu0 0
      %324 = vmatprep.subr.bf16.mxu0 0
      %325 = vmatpush1.bf16.xpose.msra.mxu0 0
      %326 = vmatprep.subr.bf16.mxu0 0
      %327 = vmatpush1.bf16.xpose.msra.mxu0 0
      %328 = vmatprep.subr.bf16.mxu0 0
      %329 = vmatpush1.bf16.xpose.msra.mxu0 %v312
      %330 = vmatprep.subr.bf16.mxu0 0
      %331 = vmatpush2.bf16.xpose.msra.mxu0 0
      %332 = vmatprep.subr.bf16.mxu0 0
      %333 = vmatpush2.bf16.xpose.msra.mxu0 0
      %334 = vmatprep.subr.bf16.mxu0 0
      %335 = vmatpush2.bf16.xpose.msra.mxu0 0
      %336 = vmatprep.subr.bf16.mxu0 0
      %337 = vmatpush2.bf16.xpose.msra.mxu0 0
      %338 = vmatprep.subr.bf16.mxu0 0
      %339 = vmatpush2.bf16.xpose.msra.mxu0 0
      %340 = vmatprep.subr.bf16.mxu0 0
      %341 = vmatpush2.bf16.xpose.msra.mxu0 0
      %342 = vmatprep.subr.bf16.mxu0 0
      %343 = vmatpush2.bf16.xpose.msra.mxu0 0
      %344 = vmatprep.subr.bf16.mxu0 0
      %345 = vmatpush2.bf16.xpose.msra.mxu0 0
      %346 = vmatprep.mubr.bf16.mxu0 0
      %347 = vmatmul.mubr.bf16.gmra.mxu0 %v309
      %v348 = vpop.f32.mrf.mxu0
      %v349 = vadd.f32 0.0, %v348
      %v350 = vpop.f32.mrf.mxu0
      %v351 = vpop.f32.mrf.mxu0
      %v352 = vpop.f32.mrf.mxu0
      %353 = vdwg.mxu0
      %v355 = vsel %vm307, %v296, 0
      %v358 = vsel %vm307, %v300, 0
      %360 = vmatprep.subr.bf16.mxu0 0
      %361 = vmatpush1.bf16.xpose.msra.mxu0 0
      %362 = vmatprep.subr.bf16.mxu0 0
      %363 = vmatpush1.bf16.xpose.msra.mxu0 0
      %364 = vmatprep.subr.bf16.mxu0 0
      %365 = vmatpush1.bf16.xpose.msra.mxu0 0
      %366 = vmatprep.subr.bf16.mxu0 0
      %367 = vmatpush1.bf16.xpose.msra.mxu0 0
      %368 = vmatprep.subr.bf16.mxu0 0
      %369 = vmatpush1.bf16.xpose.msra.mxu0 0
      %370 = vmatprep.subr.bf16.mxu0 0
      %371 = vmatpush1.bf16.xpose.msra.mxu0 0
      %372 = vmatprep.subr.bf16.mxu0 0
      %373 = vmatpush1.bf16.xpose.msra.mxu0 0
      %374 = vmatprep.subr.bf16.mxu0 0
      %375 = vmatpush1.bf16.xpose.msra.mxu0 %v358
      %376 = vmatprep.subr.bf16.mxu0 0
      %377 = vmatpush2.bf16.xpose.msra.mxu0 0
      %378 = vmatprep.subr.bf16.mxu0 0
      %379 = vmatpush2.bf16.xpose.msra.mxu0 0
      %380 = vmatprep.subr.bf16.mxu0 0
      %381 = vmatpush2.bf16.xpose.msra.mxu0 0
      %382 = vmatprep.subr.bf16.mxu0 0
      %383 = vmatpush2.bf16.xpose.msra.mxu0 0
      %384 = vmatprep.subr.bf16.mxu0 0
      %385 = vmatpush2.bf16.xpose.msra.mxu0 0
      %386 = vmatprep.subr.bf16.mxu0 0
      %387 = vmatpush2.bf16.xpose.msra.mxu0 0
      %388 = vmatprep.subr.bf16.mxu0 0
      %389 = vmatpush2.bf16.xpose.msra.mxu0 0
      %390 = vmatprep.subr.bf16.mxu0 0
      %391 = vmatpush2.bf16.xpose.msra.mxu0 0
      %392 = vmatprep.mubr.bf16.mxu0 0
      %393 = vmatmul.mubr.bf16.gmra.mxu0 %v355
      %v394 = vpop.f32.mrf.mxu0
      %v395 = vadd.f32 0.0, %v394
      %v396 = vpop.f32.mrf.mxu0
      %v397 = vpop.f32.mrf.mxu0
      %v398 = vpop.f32.mrf.mxu0
      %399 = vdwg.mxu0
      %v401 = vsel %vm307, %v297, 0
      %v404 = vsel %vm307, %v301, 0
      %406 = vmatprep.subr.bf16.mxu0 0
      %407 = vmatpush1.bf16.xpose.msra.mxu0 0
      %408 = vmatprep.subr.bf16.mxu0 0
      %409 = vmatpush1.bf16.xpose.msra.mxu0 0
      %410 = vmatprep.subr.bf16.mxu0 0
      %411 = vmatpush1.bf16.xpose.msra.mxu0 0
      %412 = vmatprep.subr.bf16.mxu0 0
      %413 = vmatpush1.bf16.xpose.msra.mxu0 0
      %414 = vmatprep.subr.bf16.mxu0 0
      %415 = vmatpush1.bf16.xpose.msra.mxu0 0
      %416 = vmatprep.subr.bf16.mxu0 0
      %417 = vmatpush1.bf16.xpose.msra.mxu0 0
      %418 = vmatprep.subr.bf16.mxu0 0
      %419 = vmatpush1.bf16.xpose.msra.mxu0 0
      %420 = vmatprep.subr.bf16.mxu0 0
      %421 = vmatpush1.bf16.xpose.msra.mxu0 %v404
      %422 = vmatprep.subr.bf16.mxu0 0
      %423 = vmatpush2.bf16.xpose.msra.mxu0 0
      %424 = vmatprep.subr.bf16.mxu0 0
      %425 = vmatpush2.bf16.xpose.msra.mxu0 0
      %426 = vmatprep.subr.bf16.mxu0 0
      %427 = vmatpush2.bf16.xpose.msra.mxu0 0
      %428 = vmatprep.subr.bf16.mxu0 0
      %429 = vmatpush2.bf16.xpose.msra.mxu0 0
      %430 = vmatprep.subr.bf16.mxu0 0
      %431 = vmatpush2.bf16.xpose.msra.mxu0 0
      %432 = vmatprep.subr.bf16.mxu0 0
      %433 = vmatpush2.bf16.xpose.msra.mxu0 0
      %434 = vmatprep.subr.bf16.mxu0 0
      %435 = vmatpush2.bf16.xpose.msra.mxu0 0
      %436 = vmatprep.subr.bf16.mxu0 0
      %437 = vmatpush2.bf16.xpose.msra.mxu0 0
      %438 = vmatprep.mubr.bf16.mxu0 0
      %439 = vmatmul.mubr.bf16.gmra.mxu0 %v401
      %v440 = vpop.f32.mrf.mxu0
      %v441 = vadd.f32 0.0, %v440
      %v442 = vpop.f32.mrf.mxu0
      %v443 = vpop.f32.mrf.mxu0
      %v444 = vpop.f32.mrf.mxu0
      %445 = vdwg.mxu0
      %v447 = vsel %vm307, %v298, 0
      %v450 = vsel %vm307, %v302, 0
      %452 = vmatprep.subr.bf16.mxu0 0
      %453 = vmatpush1.bf16.xpose.msra.mxu0 0
      %454 = vmatprep.subr.bf16.mxu0 0
      %455 = vmatpush1.bf16.xpose.msra.mxu0 0
      %456 = vmatprep.subr.bf16.mxu0 0
      %457 = vmatpush1.bf16.xpose.msra.mxu0 0
      %458 = vmatprep.subr.bf16.mxu0 0
      %459 = vmatpush1.bf16.xpose.msra.mxu0 0
      %460 = vmatprep.subr.bf16.mxu0 0
      %461 = vmatpush1.bf16.xpose.msra.mxu0 0
      %462 = vmatprep.subr.bf16.mxu0 0
      %463 = vmatpush1.bf16.xpose.msra.mxu0 0
      %464 = vmatprep.subr.bf16.mxu0 0
      %465 = vmatpush1.bf16.xpose.msra.mxu0 0
      %466 = vmatprep.subr.bf16.mxu0 0
      %467 = vmatpush1.bf16.xpose.msra.mxu0 %v450
      %468 = vmatprep.subr.bf16.mxu0 0
      %469 = vmatpush2.bf16.xpose.msra.mxu0 0
      %470 = vmatprep.subr.bf16.mxu0 0
      %471 = vmatpush2.bf16.xpose.msra.mxu0 0
      %472 = vmatprep.subr.bf16.mxu0 0
      %473 = vmatpush2.bf16.xpose.msra.mxu0 0
      %474 = vmatprep.subr.bf16.mxu0 0
      %475 = vmatpush2.bf16.xpose.msra.mxu0 0
      %476 = vmatprep.subr.bf16.mxu0 0
      %477 = vmatpush2.bf16.xpose.msra.mxu0 0
      %478 = vmatprep.subr.bf16.mxu0 0
      %479 = vmatpush2.bf16.xpose.msra.mxu0 0
      %480 = vmatprep.subr.bf16.mxu0 0
      %481 = vmatpush2.bf16.xpose.msra.mxu0 0
      %482 = vmatprep.subr.bf16.mxu0 0
      %483 = vmatpush2.bf16.xpose.msra.mxu0 0
      %484 = vmatprep.mubr.bf16.mxu0 0
      %485 = vmatmul.mubr.bf16.gmra.mxu0 %v447
      %v486 = vpop.f32.mrf.mxu0
      %v487 = vadd.f32 0.0, %v486
      %v488 = vpop.f32.mrf.mxu0
      %v489 = vpop.f32.mrf.mxu0
      %v490 = vpop.f32.mrf.mxu0
      %491 = vdwg.mxu0
      %v492 = vmul.f32 %v349, 0.35355338
      %v493 = vmul.f32 %v395, 0.35355338
      %v494 = vmul.f32 %v441, 0.35355338
      %v495 = vmul.f32 %v487, 0.35355338
      %s496 = sld [smem:[#allocation6 + %s26]]
      %v497 = vlaneseq
      %v498 = vand.u32 %v497, 127
      %s499 = smul.u32 %s28, 8
      %v500 = vstv %s499
      %v501 = vadd.s32 %v498, %v500
      %v502 = vstv %s496
      %vm503 = vcmp.lt.s32.totalorder %v501, %v502
      %v504 = vlaneseq
      %v505 = vshrl.u32 %v504, 7
      %s506 = smul.u32 %s27, 8
      %v507 = vstv %s506
      %v508 = vadd.s32 %v505, %v507
      %vm509 = vcmp.le.s32.totalorder %v501, %v508
      %vm510 = vmand %vm503, %vm509
      %v511 = vsel %vm510, 1, 0
      %vm512 = vcmp.eq.s32.totalorder %v511, 1
      %v513 = vsel %vm512, %v492, -1e+09
      %v514 = vsel %vm512, %v493, -1e+09
      %v515 = vsel %vm512, %v494, -1e+09
      %v516 = vsel %vm512, %v495, -1e+09
      %v517 = vld [vmem:[#allocation2] sm:$0xff]
      %v518 = vld [vmem:[#allocation2 + $0x8] sm:$0xff]
      %v519 = vld [vmem:[#allocation2 + $0x10] sm:$0xff]
      %v520 = vld [vmem:[#allocation2 + $0x18] sm:$0xff]
      %v521 = vsel %vm307, %v513, -inf
      %522 = vmax.xlane.f32.xlu0 %v521
      %v523 = vpop.xlane.xlu0 %522
      %v524 = vsel %vm307, %v514, -inf
      %525 = vmax.xlane.f32.xlu0 %v524
      %v526 = vpop.xlane.xlu0 %525
      %v527 = vsel %vm307, %v515, -inf
      %528 = vmax.xlane.f32.xlu0 %v527
      %v529 = vpop.xlane.xlu0 %528
      %v530 = vsel %vm307, %v516, -inf
      %531 = vmax.xlane.f32.xlu0 %v530
      %v532 = vpop.xlane.xlu0 %531
      %v533 = vmax.f32 %v517, %v523
      %v534 = vmax.f32 %v518, %v526
      %v535 = vmax.f32 %v519, %v529
      %v536 = vmax.f32 %v520, %v532
      %v537 = vsub.f32 %v517, %v533
      %v538 = vsub.f32 %v518, %v534
      %v539 = vsub.f32 %v519, %v535
      %v540 = vsub.f32 %v520, %v536
      %v541 = vmul.f32 %v537, 1.442695
      %v542 = vpow.pop %v541
      %v543 = vmul.f32 %v538, 1.442695
      %v544 = vpow.pop %v543
      %v545 = vmul.f32 %v539, 1.442695
      %v546 = vpow.pop %v545
      %v547 = vmul.f32 %v540, 1.442695
      %v548 = vpow.pop %v547
      %550 = vset.pattern.permute.xlu0 0
      %551 = vperm.xlu0 %550, %v533
      %v552 = vpop.permute.xlu0 %551
      %555 = vset.pattern.permute.xlu0 0
      %556 = vperm.xlu0 %555, %v534
      %v557 = vpop.permute.xlu0 %556
      %560 = vset.pattern.permute.xlu0 0
      %561 = vperm.xlu0 %560, %v535
      %v562 = vpop.permute.xlu0 %561
      %565 = vset.pattern.permute.xlu0 0
      %566 = vperm.xlu0 %565, %v536
      %v567 = vpop.permute.xlu0 %566
      %v569 = vsub.f32 %v513, %v552
      %v570 = vsub.f32 %v514, %v557
      %v571 = vsub.f32 %v515, %v562
      %v572 = vsub.f32 %v516, %v567
      %v573 = vmul.f32 %v569, 1.442695
      %v574 = vpow.pop %v573
      %v575 = vmul.f32 %v570, 1.442695
      %v576 = vpow.pop %v575
      %v577 = vmul.f32 %v571, 1.442695
      %v578 = vpow.pop %v577
      %v579 = vmul.f32 %v572, 1.442695
      %v580 = vpow.pop %v579
      %v581 = vld [vmem:[#allocation3] sm:$0xff]
      %v582 = vld [vmem:[#allocation3 + $0x8] sm:$0xff]
      %v583 = vld [vmem:[#allocation3 + $0x10] sm:$0xff]
      %v584 = vld [vmem:[#allocation3 + $0x18] sm:$0xff]
      %v585 = vmul.f32 %v542, %v581
      %v586 = vmul.f32 %v544, %v582
      %v587 = vmul.f32 %v546, %v583
      %v588 = vmul.f32 %v548, %v584
      %v589 = vsel %vm307, %v574, 0.0
      %590 = vadd.xlane.f32.xlu0 %v589
      %v591 = vpop.xlane.xlu0 %590
      %v592 = vsel %vm307, %v576, 0.0
      %593 = vadd.xlane.f32.xlu0 %v592
      %v594 = vpop.xlane.xlu0 %593
      %v595 = vsel %vm307, %v578, 0.0
      %596 = vadd.xlane.f32.xlu0 %v595
      %v597 = vpop.xlane.xlu0 %596
      %v598 = vsel %vm307, %v580, 0.0
      %599 = vadd.xlane.f32.xlu0 %v598
      %v600 = vpop.xlane.xlu0 %599
      %v601 = vadd.f32 %v585, %v591
      %v602 = vadd.f32 %v586, %v594
      %v603 = vadd.f32 %v587, %v597
      %v604 = vadd.f32 %v588, %v600
      %vm605 = vcmask 7168
      %606 = vst.msk [vmem:[#allocation3] sm:$0xff] %vm605, %v601
      %607 = vst.msk [vmem:[#allocation3 + $0x8] sm:$0xff] %vm605, %v602
      %608 = vst.msk [vmem:[#allocation3 + $0x10] sm:$0xff] %vm605, %v603
      %609 = vst.msk [vmem:[#allocation3 + $0x18] sm:$0xff] %vm605, %v604
      %v610 = vld [vmem:[#allocation4] sm:$0xff]
      %v611 = vld [vmem:[#allocation4 + $0x8] sm:$0xff]
      %v612 = vld [vmem:[#allocation4 + $0x10] sm:$0xff]
      %v613 = vld [vmem:[#allocation4 + $0x18] sm:$0xff]
      %615 = vset.pattern.permute.xlu0 0
      %616 = vperm.xlu0 %615, %v542
      %v617 = vpop.permute.xlu0 %616
      %620 = vset.pattern.permute.xlu0 0
      %621 = vperm.xlu0 %620, %v544
      %v622 = vpop.permute.xlu0 %621
      %625 = vset.pattern.permute.xlu0 0
      %626 = vperm.xlu0 %625, %v546
      %v627 = vpop.permute.xlu0 %626
      %630 = vset.pattern.permute.xlu0 0
      %631 = vperm.xlu0 %630, %v548
      %v632 = vpop.permute.xlu0 %631
      %v634 = vmul.f32 %v617, %v610
      %v635 = vmul.f32 %v622, %v611
      %v636 = vmul.f32 %v627, %v612
      %v637 = vmul.f32 %v632, %v613
      %v638 = vpack.c.bf16 %v574, %v574
      %v639 = vpack.c.bf16 %v576, %v576
      %v640 = vpack.c.bf16 %v578, %v578
      %v641 = vpack.c.bf16 %v580, %v580
      %v643 = vsel %vm307, %v638, 0
      %vm645 = vcmask 1043456
      %v647 = vsel %vm645, %v303, 0
      %649 = vmatprep.subr.bf16.mxu0 0
      %650 = vmatpush1.bf16.msra.mxu0 0
      %651 = vmatprep.subr.bf16.mxu0 0
      %652 = vmatpush1.bf16.msra.mxu0 0
      %653 = vmatprep.subr.bf16.mxu0 0
      %654 = vmatpush1.bf16.msra.mxu0 0
      %655 = vmatprep.subr.bf16.mxu0 0
      %656 = vmatpush1.bf16.msra.mxu0 0
      %657 = vmatprep.subr.bf16.mxu0 0
      %658 = vmatpush1.bf16.msra.mxu0 0
      %659 = vmatprep.subr.bf16.mxu0 0
      %660 = vmatpush1.bf16.msra.mxu0 0
      %661 = vmatprep.subr.bf16.mxu0 0
      %662 = vmatpush1.bf16.msra.mxu0 0
      %663 = vmatprep.subr.bf16.mxu0 0
      %664 = vmatpush1.bf16.msra.mxu0 %v647
      %665 = vmatprep.subr.bf16.mxu0 0
      %666 = vmatpush2.bf16.msra.mxu0 0
      %667 = vmatprep.subr.bf16.mxu0 0
      %668 = vmatpush2.bf16.msra.mxu0 0
      %669 = vmatprep.subr.bf16.mxu0 0
      %670 = vmatpush2.bf16.msra.mxu0 0
      %671 = vmatprep.subr.bf16.mxu0 0
      %672 = vmatpush2.bf16.msra.mxu0 0
      %673 = vmatprep.subr.bf16.mxu0 0
      %674 = vmatpush2.bf16.msra.mxu0 0
      %675 = vmatprep.subr.bf16.mxu0 0
      %676 = vmatpush2.bf16.msra.mxu0 0
      %677 = vmatprep.subr.bf16.mxu0 0
      %678 = vmatpush2.bf16.msra.mxu0 0
      %679 = vmatprep.subr.bf16.mxu0 0
      %680 = vmatpush2.bf16.msra.mxu0 0
      %681 = vmatprep.mubr.bf16.mxu0 0
      %682 = vmatmul.mubr.bf16.gmra.mxu0 %v643
      %v683 = vpop.f32.mrf.mxu0
      %v684 = vadd.f32 0.0, %v683
      %v685 = vpop.f32.mrf.mxu0
      %v686 = vpop.f32.mrf.mxu0
      %v687 = vpop.f32.mrf.mxu0
      %688 = vdwg.mxu0
      %v690 = vsel %vm307, %v639, 0
      %v693 = vsel %vm645, %v304, 0
      %695 = vmatprep.subr.bf16.mxu0 0
      %696 = vmatpush1.bf16.msra.mxu0 0
      %697 = vmatprep.subr.bf16.mxu0 0
      %698 = vmatpush1.bf16.msra.mxu0 0
      %699 = vmatprep.subr.bf16.mxu0 0
      %700 = vmatpush1.bf16.msra.mxu0 0
      %701 = vmatprep.subr.bf16.mxu0 0
      %702 = vmatpush1.bf16.msra.mxu0 0
      %703 = vmatprep.subr.bf16.mxu0 0
      %704 = vmatpush1.bf16.msra.mxu0 0
      %705 = vmatprep.subr.bf16.mxu0 0
      %706 = vmatpush1.bf16.msra.mxu0 0
      %707 = vmatprep.subr.bf16.mxu0 0
      %708 = vmatpush1.bf16.msra.mxu0 0
      %709 = vmatprep.subr.bf16.mxu0 0
      %710 = vmatpush1.bf16.msra.mxu0 %v693
      %711 = vmatprep.subr.bf16.mxu0 0
      %712 = vmatpush2.bf16.msra.mxu0 0
      %713 = vmatprep.subr.bf16.mxu0 0
      %714 = vmatpush2.bf16.msra.mxu0 0
      %715 = vmatprep.subr.bf16.mxu0 0
      %716 = vmatpush2.bf16.msra.mxu0 0
      %717 = vmatprep.subr.bf16.mxu0 0
      %718 = vmatpush2.bf16.msra.mxu0 0
      %719 = vmatprep.subr.bf16.mxu0 0
      %720 = vmatpush2.bf16.msra.mxu0 0
      %721 = vmatprep.subr.bf16.mxu0 0
      %722 = vmatpush2.bf16.msra.mxu0 0
      %723 = vmatprep.subr.bf16.mxu0 0
      %724 = vmatpush2.bf16.msra.mxu0 0
      %725 = vmatprep.subr.bf16.mxu0 0
      %726 = vmatpush2.bf16.msra.mxu0 0
      %727 = vmatprep.mubr.bf16.mxu0 0
      %728 = vmatmul.mubr.bf16.gmra.mxu0 %v690
      %v729 = vpop.f32.mrf.mxu0
      %v730 = vadd.f32 0.0, %v729
      %v731 = vpop.f32.mrf.mxu0
      %v732 = vpop.f32.mrf.mxu0
      %v733 = vpop.f32.mrf.mxu0
      %734 = vdwg.mxu0
      %v736 = vsel %vm307, %v640, 0
      %v739 = vsel %vm645, %v305, 0
      %741 = vmatprep.subr.bf16.mxu0 0
      %742 = vmatpush1.bf16.msra.mxu0 0
      %743 = vmatprep.subr.bf16.mxu0 0
      %744 = vmatpush1.bf16.msra.mxu0 0
      %745 = vmatprep.subr.bf16.mxu0 0
      %746 = vmatpush1.bf16.msra.mxu0 0
      %747 = vmatprep.subr.bf16.mxu0 0
      %748 = vmatpush1.bf16.msra.mxu0 0
      %749 = vmatprep.subr.bf16.mxu0 0
      %750 = vmatpush1.bf16.msra.mxu0 0
      %751 = vmatprep.subr.bf16.mxu0 0
      %752 = vmatpush1.bf16.msra.mxu0 0
      %753 = vmatprep.subr.bf16.mxu0 0
      %754 = vmatpush1.bf16.msra.mxu0 0
      %755 = vmatprep.subr.bf16.mxu0 0
      %756 = vmatpush1.bf16.msra.mxu0 %v739
      %757 = vmatprep.subr.bf16.mxu0 0
      %758 = vmatpush2.bf16.msra.mxu0 0
      %759 = vmatprep.subr.bf16.mxu0 0
      %760 = vmatpush2.bf16.msra.mxu0 0
      %761 = vmatprep.subr.bf16.mxu0 0
      %762 = vmatpush2.bf16.msra.mxu0 0
      %763 = vmatprep.subr.bf16.mxu0 0
      %764 = vmatpush2.bf16.msra.mxu0 0
      %765 = vmatprep.subr.bf16.mxu0 0
      %766 = vmatpush2.bf16.msra.mxu0 0
      %767 = vmatprep.subr.bf16.mxu0 0
      %768 = vmatpush2.bf16.msra.mxu0 0
      %769 = vmatprep.subr.bf16.mxu0 0
      %770 = vmatpush2.bf16.msra.mxu0 0
      %771 = vmatprep.subr.bf16.mxu0 0
      %772 = vmatpush2.bf16.msra.mxu0 0
      %773 = vmatprep.mubr.bf16.mxu0 0
      %774 = vmatmul.mubr.bf16.gmra.mxu0 %v736
      %v775 = vpop.f32.mrf.mxu0
      %v776 = vadd.f32 0.0, %v775
      %v777 = vpop.f32.mrf.mxu0
      %v778 = vpop.f32.mrf.mxu0
      %v779 = vpop.f32.mrf.mxu0
      %780 = vdwg.mxu0
      %v782 = vsel %vm307, %v641, 0
      %v785 = vsel %vm645, %v306, 0
      %787 = vmatprep.subr.bf16.mxu0 0
      %788 = vmatpush1.bf16.msra.mxu0 0
      %789 = vmatprep.subr.bf16.mxu0 0
      %790 = vmatpush1.bf16.msra.mxu0 0
      %791 = vmatprep.subr.bf16.mxu0 0
      %792 = vmatpush1.bf16.msra.mxu0 0
      %793 = vmatprep.subr.bf16.mxu0 0
      %794 = vmatpush1.bf16.msra.mxu0 0
      %795 = vmatprep.subr.bf16.mxu0 0
      %796 = vmatpush1.bf16.msra.mxu0 0
      %797 = vmatprep.subr.bf16.mxu0 0
      %798 = vmatpush1.bf16.msra.mxu0 0
      %799 = vmatprep.subr.bf16.mxu0 0
      %800 = vmatpush1.bf16.msra.mxu0 0
      %801 = vmatprep.subr.bf16.mxu0 0
      %802 = vmatpush1.bf16.msra.mxu0 %v785
      %803 = vmatprep.subr.bf16.mxu0 0
      %804 = vmatpush2.bf16.msra.mxu0 0
      %805 = vmatprep.subr.bf16.mxu0 0
      %806 = vmatpush2.bf16.msra.mxu0 0
      %807 = vmatprep.subr.bf16.mxu0 0
      %808 = vmatpush2.bf16.msra.mxu0 0
      %809 = vmatprep.subr.bf16.mxu0 0
      %810 = vmatpush2.bf16.msra.mxu0 0
      %811 = vmatprep.subr.bf16.mxu0 0
      %812 = vmatpush2.bf16.msra.mxu0 0
      %813 = vmatprep.subr.bf16.mxu0 0
      %814 = vmatpush2.bf16.msra.mxu0 0
      %815 = vmatprep.subr.bf16.mxu0 0
      %816 = vmatpush2.bf16.msra.mxu0 0
      %817 = vmatprep.subr.bf16.mxu0 0
      %818 = vmatpush2.bf16.msra.mxu0 0
      %819 = vmatprep.mubr.bf16.mxu0 0
      %820 = vmatmul.mubr.bf16.gmra.mxu0 %v782
      %v821 = vpop.f32.mrf.mxu0
      %v822 = vadd.f32 0.0, %v821
      %v823 = vpop.f32.mrf.mxu0
      %v824 = vpop.f32.mrf.mxu0
      %v825 = vpop.f32.mrf.mxu0
      %826 = vdwg.mxu0
      %v827 = vadd.f32 %v634, %v684
      %v828 = vadd.f32 %v635, %v730
      %v829 = vadd.f32 %v636, %v776
      %v830 = vadd.f32 %v637, %v822
      %831 = vst.msk [vmem:[#allocation4] sm:$0xff] %vm307, %v827
      %832 = vst.msk [vmem:[#allocation4 + $0x8] sm:$0xff] %vm307, %v828
      %833 = vst.msk [vmem:[#allocation4 + $0x10] sm:$0xff] %vm307, %v829
      %834 = vst.msk [vmem:[#allocation4 + $0x18] sm:$0xff] %vm307, %v830
      %835 = vst.msk [vmem:[#allocation2] sm:$0xff] %vm605, %v533
      %836 = vst.msk [vmem:[#allocation2 + $0x8] sm:$0xff] %vm605, %v534
      %837 = vst.msk [vmem:[#allocation2 + $0x10] sm:$0xff] %vm605, %v535
      %838 = vst.msk [vmem:[#allocation2 + $0x18] sm:$0xff] %vm605, %v536
      // Predicated region
      $region37: #{transformer_bert_forward.22} parent=31 // pred_check
        %p839 = pneg %p277
      $region38: #{transformer_bert_forward.22} parent=31 // pred_check_branch
        %841 = sbr.rel (%p839) target = $region40
      $region39: #{transformer_bert_forward.22} parent=31 // pred_region
        %v842 = vld [vmem:[#allocation4] sm:$0xff]
        %v843 = vld [vmem:[#allocation4 + $0x8] sm:$0xff]
        %v844 = vld [vmem:[#allocation4 + $0x10] sm:$0xff]
        %v845 = vld [vmem:[#allocation4 + $0x18] sm:$0xff]
        %v846 = vld [vmem:[#allocation3] sm:$0xff]
        %v847 = vld [vmem:[#allocation3 + $0x8] sm:$0xff]
        %v848 = vld [vmem:[#allocation3 + $0x10] sm:$0xff]
        %v849 = vld [vmem:[#allocation3 + $0x18] sm:$0xff]
        %v850 = vrcp.pop %v846
        %v851 = vrcp.pop %v847
        %v852 = vrcp.pop %v848
        %v853 = vrcp.pop %v849
        %855 = vset.pattern.permute.xlu0 0
        %856 = vperm.xlu0 %855, %v850
        %v857 = vpop.permute.xlu0 %856
        %860 = vset.pattern.permute.xlu0 0
        %861 = vperm.xlu0 %860, %v851
        %v862 = vpop.permute.xlu0 %861
        %865 = vset.pattern.permute.xlu0 0
        %866 = vperm.xlu0 %865, %v852
        %v867 = vpop.permute.xlu0 %866
        %870 = vset.pattern.permute.xlu0 0
        %871 = vperm.xlu0 %870, %v853
        %v872 = vpop.permute.xlu0 %871
        %v874 = vmul.f32 %v842, %v857
        %v875 = vmul.f32 %v843, %v862
        %v876 = vmul.f32 %v844, %v867
        %v877 = vmul.f32 %v845, %v872
        %879 = vrot.lane.b32.xlu0 %v875, 8
        %v880 = vpop.permute.xlu0 %879
        %883 = vrot.lane.b32.xlu0 %v876, 16
        %v884 = vpop.permute.xlu0 %883
        %887 = vrot.lane.b32.xlu0 %v877, 24
        %v888 = vpop.permute.xlu0 %887
        %v890 = vsel %vm307, %v874, %v880
        %vm891 = vcmask 130048
        %v892 = vsel %vm891, %v890, %v884
        %vm893 = vcmask 195584
        %v894 = vsel %vm893, %v892, %v888
        %v895 = vpack.c.bf16 %v894, %v894
        %vm896 = vcmask 257024
        %897 = vst.msk [vmem:[%s275] sm:$0xf] %vm896, %v895
      $region40: #{transformer_bert_forward.22} parent=31 // pred_fallthru
        _
      %p898 = scmp.lt.s32.totalorder %s26, 1
      %s899 = scalar_select %p898, %s26, 1
      %p900 = scmp.lt.s32.totalorder %s27, 0
      %s901 = scalar_select %p900, %s27, 0
      %s902 = sadd.s32 %s901, %s899
      %s903 = smul.addr %s902, 4
      %s904 = scalar_lea.vmem %s4, %s903
      // Predicated region
      $region41: #{transformer_bert_forward.22} parent=31 // pred_check
        %p905 = pneg %p144
      $region42: #{transformer_bert_forward.22} parent=31 // pred_check_branch
        %907 = sbr.rel (%p905) target = $region44
      $region43: #{transformer_bert_forward.22} parent=31 // pred_region
        _
      $region44: #{transformer_bert_forward.22} parent=31 // pred_fallthru
        _
    $region32: #{transformer_bert_forward.22} parent=5 // pred_fallthru
      _
    %p908 = scmp.le.s32.totalorder 2, %s16
    // Predicated region
    $region45: #{transformer_bert_forward.22} parent=5 // pred_check
      %p909 = pneg %p908
    $region46: #{transformer_bert_forward.22} parent=5 // pred_check_branch
      %911 = sbr.rel (%p909) target = $region48
    $region47: #{transformer_bert_forward.22} parent=5 // pred_region
      %s912 = ssub.s32 %s16, 2
      // Predicated region
      $region49: #{transformer_bert_forward.22} parent=47 // pred_check
        %p913 = pneg %p150
      $region50: #{transformer_bert_forward.22} parent=47 // pred_check_branch
        %915 = sbr.rel (%p913) target = $region52
      $region51: #{transformer_bert_forward.22} parent=47 // pred_region
        %p916 = scmp.lt.s32.totalorder %s29, 1
        %s917 = scalar_select %p916, %s29, 1
        %p918 = scmp.lt.s32.totalorder %s30, 0
        %s919 = scalar_select %p918, %s30, 0
        %s920 = sadd.s32 %s919, %s917
        %s921 = smul.addr %s920, 4
        %s922 = scalar_lea.vmem %s4, %s921
      $region52: #{transformer_bert_forward.22} parent=47 // pred_fallthru
        _
    $region48: #{transformer_bert_forward.22} parent=5 // pred_fallthru
      _
  $region6: #{transformer_bert_forward.22} parent=0 // loop_footer
    %s20 = sadd.s32 1, %s16
  $region7: #{transformer_bert_forward.22} parent=0 // loop_footer_branch
    %15 = sbr.rel target = $region3
  $region8: #{transformer_bert_forward.22} parent=0 // loop_exit
    _

// kernel: transformer_bert_forward.28
$region0: #{transformer_bert_forward.28}
  #allocation0 [shape = 'u32[]', space=smem, size = 0x4, offset = 0x4, fixed_abs, tag = 'smem constant byte address 0x4 - core index']
  #allocation1 [shape = 'u32[144,128]{1,0:T(1,128)}', space=vmem, size = 0x12000, scoped, tag = 'internal scratch']
  #allocation2 [shape = 'f32[16,64]{1,0:T(8,128)}', space=vmem, size = 0x2000, scoped, tag = 'scratch operand']
  %s0 = inlined_call_operand.vmem [shape: bf16[16,32], index: 0, kind: input, shape index: {}]
  %s1 = inlined_call_operand.vmem [shape: bf16[32,64], index: 1, kind: input, shape index: {}]
  %s2 = inlined_call_operand.vmem [shape: f32[1,64], index: 2, kind: input, shape index: {}]
  %s3 = inlined_call_operand.vmem [shape: bf16[16,64], index: 3, kind: output, shape index: {}]
  %s4 = sld [smem:[#allocation0]]
  $region30: #{transformer_bert_forward.28} parent=0
    _
  %s6 = ssub.s32 1, %s4
  %s7 = scalar_select 0, %s6, %s4
  // Predicated region
  $region2: #{transformer_bert_forward.28} parent=0 // pred_check
    _
  $region3: #{transformer_bert_forward.28} parent=0 // pred_check_branch
    %9 = sbr.rel (0) target = $region5
  $region4: #{transformer_bert_forward.28} parent=0 // pred_region
    _
  $region5: #{transformer_bert_forward.28} parent=0 // pred_fallthru
    _
  // Predicated region
  $region6: #{transformer_bert_forward.28} parent=0 // pred_check
    _
  $region7: #{transformer_bert_forward.28} parent=0 // pred_check_branch
    %11 = sbr.rel (0) target = $region9
  $region8: #{transformer_bert_forward.28} parent=0 // pred_region
    _
  $region9: #{transformer_bert_forward.28} parent=0 // pred_fallthru
    _
  // Predicated region
  $region10: #{transformer_bert_forward.28} parent=0 // pred_check
    _
  $region11: #{transformer_bert_forward.28} parent=0 // pred_check_branch
    %13 = sbr.rel (0) target = $region13
  $region12: #{transformer_bert_forward.28} parent=0 // pred_region
    _
  $region13: #{transformer_bert_forward.28} parent=0 // pred_fallthru
    _
  %p15 = scmp.eq.s32.totalorder 0, 0
  // Predicated region
  $region14: #{transformer_bert_forward.28} parent=0 // pred_check
    %p16 = pneg %p15
  $region15: #{transformer_bert_forward.28} parent=0 // pred_check_branch
    %18 = sbr.rel (%p16) target = $region17
  $region16: #{transformer_bert_forward.28} parent=0 // pred_region
    %vm19 = vcmask 523264
    %20 = vst.msk [vmem:[#allocation2] sm:$0xff] %vm19, 0.0
    %21 = vst.msk [vmem:[#allocation2 + $0x8] sm:$0xff] %vm19, 0.0
  $region17: #{transformer_bert_forward.28} parent=0 // pred_fallthru
    _
  %v22 = vld [vmem:[#allocation2] sm:$0xff]
  %v23 = vld [vmem:[#allocation2 + $0x8] sm:$0xff]
  %v24 = vld [vmem:[%s0] sm:$0xf]
  %v25 = vld [vmem:[%s0 + $0x4] sm:$0xf]
  %v26 = vld [vmem:[%s1] sm:$0xf]
  %v27 = vld [vmem:[%s1 + $0x4] sm:$0xf]
  %v28 = vld [vmem:[%s1 + $0x8] sm:$0xf]
  %v29 = vld [vmem:[%s1 + $0xc] sm:$0xf]
  %v32 = vunpack.c.l.b16 %v24
  %v33 = vunpack.c.l.b16 %v25
  %v34 = vpack.c.b16 %v33, %v32
  %v39 = vunpack.c.l.b16 %v26
  %v40 = vunpack.c.l.b16 %v27
  %v41 = vunpack.c.l.b16 %v28
  %v42 = vunpack.c.l.b16 %v29
  %v43 = vpack.c.b16 %v40, %v39
  %v44 = vpack.c.b16 %v42, %v41
  %vm47 = vcmask 261120
  %v49 = vsel %vm47, %v34, 0
  %51 = vmatprep.subr.bf16.mxu0 0
  %52 = vmatpush1.bf16.msra.mxu0 0
  %53 = vmatprep.subr.bf16.mxu0 0
  %54 = vmatpush1.bf16.msra.mxu0 0
  %55 = vmatprep.subr.bf16.mxu0 0
  %56 = vmatpush1.bf16.msra.mxu0 0
  %57 = vmatprep.subr.bf16.mxu0 0
  %58 = vmatpush1.bf16.msra.mxu0 0
  %59 = vmatprep.subr.bf16.mxu0 0
  %60 = vmatpush1.bf16.msra.mxu0 0
  %61 = vmatprep.subr.bf16.mxu0 0
  %62 = vmatpush1.bf16.msra.mxu0 0
  %63 = vmatprep.subr.bf16.mxu0 0
  %64 = vmatpush1.bf16.msra.mxu0 %v44
  %65 = vmatprep.subr.bf16.mxu0 0
  %66 = vmatpush1.bf16.msra.mxu0 %v43
  %67 = vmatprep.subr.bf16.mxu0 0
  %68 = vmatpush2.bf16.msra.mxu0 0
  %69 = vmatprep.subr.bf16.mxu0 0
  %70 = vmatpush2.bf16.msra.mxu0 0
  %71 = vmatprep.subr.bf16.mxu0 0
  %72 = vmatpush2.bf16.msra.mxu0 0
  %73 = vmatprep.subr.bf16.mxu0 0
  %74 = vmatpush2.bf16.msra.mxu0 0
  %75 = vmatprep.subr.bf16.mxu0 0
  %76 = vmatpush2.bf16.msra.mxu0 0
  %77 = vmatprep.subr.bf16.mxu0 0
  %78 = vmatpush2.bf16.msra.mxu0 0
  %79 = vmatprep.subr.bf16.mxu0 0
  %80 = vmatpush2.bf16.msra.mxu0 0
  %81 = vmatprep.subr.bf16.mxu0 0
  %82 = vmatpush2.bf16.msra.mxu0 0
  %83 = vmatprep.mubr.bf16.mxu0 0
  %84 = vmatmul.mubr.bf16.gmra.mxu0 %v49
  %v85 = vpop.f32.mrf.mxu0
  %v86 = vadd.f32 0.0, %v85
  %v87 = vpop.f32.mrf.mxu0
  %v88 = vpop.f32.mrf.mxu0
  %v89 = vadd.f32 0.0, %v88
  %v90 = vpop.f32.mrf.mxu0
  %91 = vdwg.mxu0
  %v92 = vadd.f32 %v22, %v86
  %v93 = vadd.f32 %v23, %v89
  %vm94 = vcmask 523264
  %95 = vst.msk [vmem:[#allocation2] sm:$0xff] %vm94, %v92
  %96 = vst.msk [vmem:[#allocation2 + $0x8] sm:$0xff] %vm94, %v93
  // Predicated region
  $region18: #{transformer_bert_forward.28} parent=0 // pred_check
    %p97 = pneg %p15
  $region19: #{transformer_bert_forward.28} parent=0 // pred_check_branch
    %99 = sbr.rel (%p97) target = $region21
  $region20: #{transformer_bert_forward.28} parent=0 // pred_region
    %v100 = vld [vmem:[#allocation2] sm:$0xff]
    %v101 = vld [vmem:[#allocation2 + $0x8] sm:$0xff]
    %v102 = vld [vmem:[%s2] sm:$0x1]
    %v104 = vlaneseq
    %v105 = vshrl.u32 %v104, 7
    %v106 = vsub.s32 0, %v105
    %v107 = vrot.slane %v102, %v106
    %v109 = vadd.f32 %v100, %v107
    %v110 = vadd.f32 %v101, %v107
    %v111 = vmul.f32 %v109, 0.5
    %v112 = vmul.f32 %v110, 0.5
    %v113 = vmul.f32 %v109, 0.044715
    %v114 = vmul.f32 %v110, 0.044715
    %v115 = vmul.f32 %v113, %v109
    %v116 = vmul.f32 %v114, %v110
    %v117 = vmul.f32 %v115, %v109
    %v118 = vmul.f32 %v116, %v110
    %v119 = vadd.f32 %v109, %v117
    %v120 = vadd.f32 %v110, %v118
    %v121 = vmul.f32 %v119, 0.7978846
    %v122 = vmul.f32 %v120, 0.7978846
    %v123 = vtanh.pop %v121
    %v124 = vtanh.pop %v122
    %v125 = vadd.f32 %v123, 1.0
    %v126 = vadd.f32 %v124, 1.0
    %v127 = vmul.f32 %v111, %v125
    %v128 = vmul.f32 %v112, %v126
    %v129 = vpack.c.bf16 %v128, %v127
    %v131 = vunpack.c.l.b16 %v129
    %v132 = vunpack.c.h.b16 %v129
    %v133 = vpack.c.b16 %v131, %v131
    %v134 = vpack.c.b16 %v132, %v132
    %vm137 = vcmask 519168
    %138 = vst.msk [vmem:[%s3] sm:$0xf] %vm137, %v133
    %139 = vst.msk [vmem:[%s3 + $0x4] sm:$0xf] %vm137, %v134
  $region21: #{transformer_bert_forward.28} parent=0 // pred_fallthru
    _
  // Predicated region
  $region22: #{transformer_bert_forward.28} parent=0 // pred_check
    _
  $region23: #{transformer_bert_forward.28} parent=0 // pred_check_branch
    %141 = sbr.rel (0) target = $region25
  $region24: #{transformer_bert_forward.28} parent=0 // pred_region
    _
  $region25: #{transformer_bert_forward.28} parent=0 // pred_fallthru
    _
  // Predicated region
  $region26: #{transformer_bert_forward.28} parent=0 // pred_check
    _
  $region27: #{transformer_bert_forward.28} parent=0 // pred_check_branch
    %143 = sbr.rel (0) target = $region29
  $region28: #{transformer_bert_forward.28} parent=0 // pred_region
    _
  $region29: #{transformer_bert_forward.28} parent=0 // pred_fallthru
    _

// kernel: transformer_bert_forward.26
$region0: #{transformer_bert_forward.26}
  #allocation0 [shape = 'u32[]', space=smem, size = 0x4, offset = 0x4, fixed_abs, tag = 'smem constant byte address 0x4 - core index']
  #allocation1 [shape = 'u32[144,128]{1,0:T(1,128)}', space=vmem, size = 0x12000, scoped, tag = 'internal scratch']
  #allocation2 [shape = 'f32[4,8,1]{2,1,0:T(8,128)}', space=vmem, size = 0x4000, scoped, tag = 'scratch operand']
  #allocation3 [shape = 'f32[4,8,1]{2,1,0:T(8,128)}', space=vmem, size = 0x4000, scoped, tag = 'scratch operand']
  #allocation4 [shape = 'f32[4,8,8]{2,1,0:T(8,128)}', space=vmem, size = 0x4000, scoped, tag = 'scratch operand']
  #allocation5 [shape = 's32[1]{0}', space=sflag, size = 0x4, scoped, tag = 'scoped memory for transformer_bert_forward.26']
  #allocation6 [shape = 'u8[512]{0}', space=smem, size = 0x200, scoped, tag = 'prefetched SMEM operand 0']
  %s0 = inlined_call_operand.vmem [shape: s32[2], index: 0, kind: input, shape index: {}]
  %s1 = inlined_call_operand.vmem [shape: bf16[2,4,8,8], index: 1, kind: input, shape index: {}]
  %s2 = inlined_call_operand.vmem [shape: bf16[2,4,16,8], index: 2, kind: input, shape index: {}]
  %s3 = inlined_call_operand.vmem [shape: bf16[2,4,16,8], index: 3, kind: input, shape index: {}]
  %s4 = inlined_call_operand.vmem [shape: bf16[2,8,32], index: 4, kind: output, shape index: {}]
  %s5 = sld [smem:[#allocation0]]
  $region53: #{transformer_bert_forward.26} parent=0
    _
  %s7 = ssub.s32 1, %s5
  %s8 = scalar_select 0, %s7, %s5
  %s9 = sshll.u32 %s0, 4
  %s10 = int_to_ptr.vmem [resolvable:$true] %s9
  %12 = dma.vmem_to_smem %s10, 16, [#allocation6], [#allocation5]
  %13 = dma.done [#allocation5], 16
  %14 = sfence
  loop: start=0, step=1, limit=4
  $region2: #{transformer_bert_forward.26} parent=0 // loop_pre_header
    _
  $region3: #{transformer_bert_forward.26} parent=0 // loop_header
    %s16 = sphi 0, %s20
    %p17 = scmp.ge.s32.totalorder %s16, 4
    %s23 = sphi 0, %s42
    %s24 = sphi 0, %s38
    %s25 = sphi 0, %s34
    %s26 = sphi 0, %s23
    %s27 = sphi 0, %s24
    %s28 = sphi 0, %s25
    %s29 = sphi 0, %s26
    %s30 = sphi 0, %s27
    %s31 = sphi 0, %s28
    %s47 = sphi 0, %s49
    %s50 = sphi 0, %s47
    %s51 = sphi 0, %s50
    %s67 = sphi 0, %s51
    %s75 = sphi 0, %s77
    %s78 = sphi 0, %s75
    %s79 = sphi 0, %s78
    %s95 = sphi 0, %s79
    %s103 = sphi 0, %s105
    %s106 = sphi 0, %s103
    %s107 = sphi 0, %s106
    %s123 = sphi 0, %s107
    %s131 = sphi 0, %s133
    %s134 = sphi 0, %s131
    %s135 = sphi 0, %s134
    %s151 = sphi 0, %s135
  $region4: #{transformer_bert_forward.26} parent=0 // loop_header_branch
    %19 = sbr.rel (%p17) target = $region8
  $region5: #{transformer_bert_forward.26} parent=0 // loop_body
    %s21 = ssub.s32 %s16, 1
    %s22 = ssub.s32 %s16, 2
    %s32 = sadd.s32 1, %s25
    %p33 = scmp.ge.s32.totalorder %s32, 1
    %s34 = scalar_select %p33, 0, %s32
    %s35 = sadd.s32 1, %s24
    %s36 = scalar_select %p33, %s35, %s24
    %p37 = scmp.ge.s32.totalorder %s36, 1
    %s38 = scalar_select %p37, 0, %s36
    %s39 = sadd.s32 1, %s23
    %s40 = scalar_select %p37, %s39, %s23
    %p41 = scmp.ge.s32.totalorder %s40, 2
    %s42 = scalar_select %p41, 0, %s40
    %s43 = ssub.s32 %s23, %s42
    %s44 = ssub.s32 %s24, %s38
    %s45 = sor.u32 %s43, %s44
    %p46 = scmp.eq.s32.totalorder %s45, 0
    %s48 = sadd.s32 %s47, 1
    %s49 = scalar_select %p46, %s47, %s48
    %p52 = pneg %p46
    %p53 = scmp.eq.s32.totalorder %s16, 1
    %p54 = por %p52, %p53
    %p55 = scmp.ne.s32.totalorder %s47, %s50
    %p56 = scmp.eq.s32.totalorder %s16, 0
    %p57 = por %p55, %p56
    %p58 = scmp.ne.s32.totalorder %s47, %s50
    %p59 = scmp.eq.s32.totalorder %s21, 1
    %p60 = por %p58, %p59
    %p61 = scmp.ne.s32.totalorder %s50, %s51
    %p62 = scmp.eq.s32.totalorder %s21, 0
    %p63 = por %p61, %p62
    %p64 = scmp.ne.s32.totalorder %s50, %s51
    %p65 = scmp.eq.s32.totalorder %s22, 1
    %p66 = por %p64, %p65
    %p68 = scmp.ne.s32.totalorder %s51, %s67
    %p69 = scmp.eq.s32.totalorder %s22, 0
    %p70 = por %p68, %p69
    %s71 = ssub.s32 %s23, %s42
    %s72 = ssub.s32 %s25, %s34
    %s73 = sor.u32 %s71, %s72
    %p74 = scmp.eq.s32.totalorder %s73, 0
    %s76 = sadd.s32 %s75, 1
    %s77 = scalar_select %p74, %s75, %s76
    %p80 = pneg %p74
    %p81 = scmp.eq.s32.totalorder %s16, 1
    %p82 = por %p80, %p81
    %p83 = scmp.ne.s32.totalorder %s75, %s78
    %p84 = scmp.eq.s32.totalorder %s16, 0
    %p85 = por %p83, %p84
    %p86 = scmp.ne.s32.totalorder %s75, %s78
    %p87 = scmp.eq.s32.totalorder %s21, 1
    %p88 = por %p86, %p87
    %p89 = scmp.ne.s32.totalorder %s78, %s79
    %p90 = scmp.eq.s32.totalorder %s21, 0
    %p91 = por %p89, %p90
    %p92 = scmp.ne.s32.totalorder %s78, %s79
    %p93 = scmp.eq.s32.totalorder %s22, 1
    %p94 = por %p92, %p93
    %p96 = scmp.ne.s32.totalorder %s79, %s95
    %p97 = scmp.eq.s32.totalorder %s22, 0
    %p98 = por %p96, %p97
    %s99 = ssub.s32 %s23, %s42
    %s100 = ssub.s32 %s25, %s34
    %s101 = sor.u32 %s99, %s100
    %p102 = scmp.eq.s32.totalorder %s101, 0
    %s104 = sadd.s32 %s103, 1
    %s105 = scalar_select %p102, %s103, %s104
    %p108 = pneg %p102
    %p109 = scmp.eq.s32.totalorder %s16, 1
    %p110 = por %p108, %p109
    %p111 = scmp.ne.s32.totalorder %s103, %s106
    %p112 = scmp.eq.s32.totalorder %s16, 0
    %p113 = por %p111, %p112
    %p114 = scmp.ne.s32.totalorder %s103, %s106
    %p115 = scmp.eq.s32.totalorder %s21, 1
    %p116 = por %p114, %p115
    %p117 = scmp.ne.s32.totalorder %s106, %s107
    %p118 = scmp.eq.s32.totalorder %s21, 0
    %p119 = por %p117, %p118
    %p120 = scmp.ne.s32.totalorder %s106, %s107
    %p121 = scmp.eq.s32.totalorder %s22, 1
    %p122 = por %p120, %p121
    %p124 = scmp.ne.s32.totalorder %s107, %s123
    %p125 = scmp.eq.s32.totalorder %s22, 0
    %p126 = por %p124, %p125
    %s127 = ssub.s32 %s23, %s42
    %s128 = ssub.s32 %s24, %s38
    %s129 = sor.u32 %s127, %s128
    %p130 = scmp.eq.s32.totalorder %s129, 0
    %s132 = sadd.s32 %s131, 1
    %s133 = scalar_select %p130, %s131, %s132
    %p136 = pneg %p130
    %p137 = scmp.eq.s32.totalorder %s16, 1
    %p138 = por %p136, %p137
    %p139 = scmp.ne.s32.totalorder %s131, %s134
    %p140 = scmp.eq.s32.totalorder %s16, 0
    %p141 = por %p139, %p140
    %p142 = scmp.ne.s32.totalorder %s131, %s134
    %p143 = scmp.eq.s32.totalorder %s21, 1
    %p144 = por %p142, %p143
    %p145 = scmp.ne.s32.totalorder %s134, %s135
    %p146 = scmp.eq.s32.totalorder %s21, 0
    %p147 = por %p145, %p146
    %p148 = scmp.ne.s32.totalorder %s134, %s135
    %p149 = scmp.eq.s32.totalorder %s22, 1
    %p150 = por %p148, %p149
    %p152 = scmp.ne.s32.totalorder %s135, %s151
    %p153 = scmp.eq.s32.totalorder %s22, 0
    %p154 = por %p152, %p153
    %p155 = scmp.le.s32.totalorder 1, %s16
    %p156 = scmp.lt.s32.totalorder %s16, 3
    %p157 = pnand %p155, %p156
    %p158 = pneg %p157
    // Predicated region
    $region9: #{transformer_bert_forward.26} parent=5 // pred_check
      _
    $region10: #{transformer_bert_forward.26} parent=5 // pred_check_branch
      %160 = sbr.rel (%p157) target = $region12
    $region11: #{transformer_bert_forward.26} parent=5 // pred_region
      %s161 = ssub.s32 %s16, 1
    $region12: #{transformer_bert_forward.26} parent=5 // pred_fallthru
      _
    %p162 = scmp.lt.s32.totalorder %s16, 2
    // Predicated region
    $region13: #{transformer_bert_forward.26} parent=5 // pred_check
      %p163 = pneg %p162
    $region14: #{transformer_bert_forward.26} parent=5 // pred_check_branch
      %165 = sbr.rel (%p163) target = $region16
    $region15: #{transformer_bert_forward.26} parent=5 // pred_region
      // Predicated region
      $region17: #{transformer_bert_forward.26} parent=15 // pred_check
        %p166 = pneg %p57
      $region18: #{transformer_bert_forward.26} parent=15 // pred_check_branch
        %168 = sbr.rel (%p166) target = $region20
      $region19: #{transformer_bert_forward.26} parent=15 // pred_region
        %p169 = scmp.lt.s32.totalorder %s23, 1
        %s170 = scalar_select %p169, %s23, 1
        %p171 = scmp.lt.s32.totalorder %s24, 0
        %s172 = scalar_select %p171, %s24, 0
        %s173 = smul.addr %s170, 4
        %s174 = sadd.s32 %s172, %s173
        %s175 = smul.addr %s174, 4
        %s176 = scalar_lea.vmem %s1, %s175
      $region20: #{transformer_bert_forward.26} parent=15 // pred_fallthru
        _
      // Predicated region
      $region21: #{transformer_bert_forward.26} parent=15 // pred_check
        %p177 = pneg %p85
      $region22: #{transformer_bert_forward.26} parent=15 // pred_check_branch
        %179 = sbr.rel (%p177) target = $region24
      $region23: #{transformer_bert_forward.26} parent=15 // pred_region
        %s180 = smul.u32 2, %s25
        %p181 = scmp.lt.s32.totalorder %s23, 1
        %s182 = scalar_select %p181, %s23, 1
        %p183 = scmp.lt.s32.totalorder %s180, 1
        %s184 = scalar_select %p183, %s180, 1
        %s185 = smul.addr %s182, 8
        %s186 = sadd.s32 %s184, %s185
        %s187 = smul.addr %s186, 4
        %s188 = scalar_lea.vmem %s2, %s187
        %s189 = smul.u32 2, %s25
      $region24: #{transformer_bert_forward.26} parent=15 // pred_fallthru
        _
      // Predicated region
      $region25: #{transformer_bert_forward.26} parent=15 // pred_check
        %p190 = pneg %p113
      $region26: #{transformer_bert_forward.26} parent=15 // pred_check_branch
        %192 = sbr.rel (%p190) target = $region28
      $region27: #{transformer_bert_forward.26} parent=15 // pred_region
        %s193 = smul.u32 2, %s25
        %p194 = scmp.lt.s32.totalorder %s23, 1
        %s195 = scalar_select %p194, %s23, 1
        %p196 = scmp.lt.s32.totalorder %s193, 1
        %s197 = scalar_select %p196, %s193, 1
        %s198 = smul.addr %s195, 8
        %s199 = sadd.s32 %s197, %s198
        %s200 = smul.addr %s199, 4
        %s201 = scalar_lea.vmem %s3, %s200
        %s202 = smul.u32 2, %s25
      $region28: #{transformer_bert_forward.26} parent=15 // pred_fallthru
        _
    $region16: #{transformer_bert_forward.26} parent=5 // pred_fallthru
      _
    %p203 = scmp.le.s32.totalorder 1, %s16
    %p204 = scmp.lt.s32.totalorder %s16, 3
    %p205 = pnand %p203, %p204
    %p206 = pneg %p205
    // Predicated region
    $region29: #{transformer_bert_forward.26} parent=5 // pred_check
      _
    $region30: #{transformer_bert_forward.26} parent=5 // pred_check_branch
      %208 = sbr.rel (%p205) target = $region32
    $region31: #{transformer_bert_forward.26} parent=5 // pred_region
      %s209 = ssub.s32 %s16, 1
      %p210 = scmp.lt.s32.totalorder %s26, 1
      %s211 = scalar_select %p210, %s26, 1
      %p212 = scmp.lt.s32.totalorder %s27, 0
      %s213 = scalar_select %p212, %s27, 0
      %s214 = smul.addr %s211, 4
      %s215 = sadd.s32 %s213, %s214
      %s216 = smul.addr %s215, 4
      %s217 = scalar_lea.vmem %s1, %s216
      %p218 = pneg %p63
      %p219 = pneg %p60
      %s220 = smul.u32 2, %s28
      %p221 = scmp.lt.s32.totalorder %s26, 1
      %s222 = scalar_select %p221, %s26, 1
      %p223 = scmp.lt.s32.totalorder %s220, 1
      %s224 = scalar_select %p223, %s220, 1
      %s225 = smul.addr %s222, 8
      %s226 = sadd.s32 %s224, %s225
      %s227 = smul.addr %s226, 4
      %s228 = scalar_lea.vmem %s2, %s227
      %p229 = pneg %p91
      %p230 = pneg %p88
      %s231 = smul.u32 2, %s28
      %p232 = scmp.lt.s32.totalorder %s26, 1
      %s233 = scalar_select %p232, %s26, 1
      %p234 = scmp.lt.s32.totalorder %s231, 1
      %s235 = scalar_select %p234, %s231, 1
      %s236 = smul.addr %s233, 8
      %s237 = sadd.s32 %s235, %s236
      %s238 = smul.addr %s237, 4
      %s239 = scalar_lea.vmem %s3, %s238
      %p240 = pneg %p119
      %p241 = pneg %p116
      %p242 = pneg %p147
      %p243 = pneg %p144
      %p244 = scmp.lt.s32.totalorder %s26, 1
      %s245 = scalar_select %p244, %s26, 1
      %p246 = scmp.lt.s32.totalorder %s27, 0
      %s247 = scalar_select %p246, %s27, 0
      %s248 = sadd.s32 %s247, %s245
      %s249 = smul.addr %s248, 4
      %s250 = scalar_lea.vmem %s4, %s249
      %p251 = scmp.lt.s32.totalorder %s26, 1
      %s252 = scalar_select %p251, %s26, 1
      %p253 = scmp.lt.s32.totalorder %s27, 0
      %s254 = scalar_select %p253, %s27, 0
      %s255 = smul.addr %s252, 4
      %s256 = sadd.s32 %s254, %s255
      %s257 = smul.addr %s256, 4
      %s258 = scalar_lea.vmem %s1, %s257
      %s259 = smul.u32 2, %s28
      %p260 = scmp.lt.s32.totalorder %s26, 1
      %s261 = scalar_select %p260, %s26, 1
      %p262 = scmp.lt.s32.totalorder %s259, 1
      %s263 = scalar_select %p262, %s259, 1
      %s264 = smul.addr %s261, 8
      %s265 = sadd.s32 %s263, %s264
      %s266 = smul.addr %s265, 4
      %s267 = scalar_lea.vmem %s2, %s266
      %s268 = smul.u32 2, %s28
      %s269 = smul.u32 2, %s28
      %p270 = scmp.lt.s32.totalorder %s26, 1
      %s271 = scalar_select %p270, %s26, 1
      %p272 = scmp.lt.s32.totalorder %s269, 1
      %s273 = scalar_select %p272, %s269, 1
      %s274 = smul.addr %s271, 8
      %s275 = sadd.s32 %s273, %s274
      %s276 = smul.addr %s275, 4
      %s277 = scalar_lea.vmem %s3, %s276
      %s278 = smul.u32 2, %s28
      %p279 = scmp.lt.s32.totalorder %s26, 1
      %s280 = scalar_select %p279, %s26, 1
      %p281 = scmp.lt.s32.totalorder %s27, 0
      %s282 = scalar_select %p281, %s27, 0
      %s283 = sadd.s32 %s282, %s280
      %s284 = smul.addr %s283, 4
      %s285 = scalar_lea.vmem %s4, %s284
      %p287 = scmp.eq.s32.totalorder %s28, 0
      // Predicated region
      $region33: #{transformer_bert_forward.26} parent=31 // pred_check
        %p288 = pneg %p287
      $region34: #{transformer_bert_forward.26} parent=31 // pred_check_branch
        %290 = sbr.rel (%p288) target = $region36
      $region35: #{transformer_bert_forward.26} parent=31 // pred_region
        %vm291 = vcmask 7168
        %292 = vst.msk [vmem:[#allocation2] sm:$0xff] %vm291, -inf
        %293 = vst.msk [vmem:[#allocation2 + $0x8] sm:$0xff] %vm291, -inf
        %294 = vst.msk [vmem:[#allocation2 + $0x10] sm:$0xff] %vm291, -inf
        %295 = vst.msk [vmem:[#allocation2 + $0x18] sm:$0xff] %vm291, -inf
        %296 = vst.msk [vmem:[#allocation3] sm:$0xff] %vm291, 0.0
        %297 = vst.msk [vmem:[#allocation3 + $0x8] sm:$0xff] %vm291, 0.0
        %298 = vst.msk [vmem:[#allocation3 + $0x10] sm:$0xff] %vm291, 0.0
        %299 = vst.msk [vmem:[#allocation3 + $0x18] sm:$0xff] %vm291, 0.0
        %vm300 = vcmask 64512
        %301 = vst.msk [vmem:[#allocation4] sm:$0xff] %vm300, 0.0
        %302 = vst.msk [vmem:[#allocation4 + $0x8] sm:$0xff] %vm300, 0.0
        %303 = vst.msk [vmem:[#allocation4 + $0x10] sm:$0xff] %vm300, 0.0
        %304 = vst.msk [vmem:[#allocation4 + $0x18] sm:$0xff] %vm300, 0.0
      $region36: #{transformer_bert_forward.26} parent=31 // pred_fallthru
        _
      %v305 = vld [vmem:[%s258] sm:$0xf]
      %v306 = vld [vmem:[%s258 + $0x4] sm:$0xf]
      %v307 = vld [vmem:[%s258 + $0x8] sm:$0xf]
      %v308 = vld [vmem:[%s258 + $0xc] sm:$0xf]
      %v309 = vld [vmem:[%s267] sm:$0xf]
      %v310 = vld [vmem:[%s267 + $0x4] sm:$0xf]
      %v311 = vld [vmem:[%s267 + $0x8] sm:$0xf]
      %v312 = vld [vmem:[%s267 + $0xc] sm:$0xf]
      %v313 = vld [vmem:[%s267 + $0x10] sm:$0xf]
      %v314 = vld [vmem:[%s267 + $0x14] sm:$0xf]
      %v315 = vld [vmem:[%s267 + $0x18] sm:$0xf]
      %v316 = vld [vmem:[%s267 + $0x1c] sm:$0xf]
      %v317 = vld [vmem:[%s277] sm:$0xf]
      %v318 = vld [vmem:[%s277 + $0x4] sm:$0xf]
      %v319 = vld [vmem:[%s277 + $0x8] sm:$0xf]
      %v320 = vld [vmem:[%s277 + $0xc] sm:$0xf]
      %v321 = vld [vmem:[%s277 + $0x10] sm:$0xf]
      %v322 = vld [vmem:[%s277 + $0x14] sm:$0xf]
      %v323 = vld [vmem:[%s277 + $0x18] sm:$0xf]
      %v324 = vld [vmem:[%s277 + $0x1c] sm:$0xf]
      %v327 = vunpack.c.l.b16 %v309
      %v328 = vunpack.c.l.b16 %v310
      %v329 = vpack.c.b16 %v328, %v327
      %vm330 = vcmask 64512
      %v332 = vsel %vm330, %v305, 0
      %v335 = vsel %vm330, %v329, 0
      %337 = vmatprep.subr.bf16.mxu0 0
      %338 = vmatpush1.bf16.xpose.msra.mxu0 0
      %339 = vmatprep.subr.bf16.mxu0 0
      %340 = vmatpush1.bf16.xpose.msra.mxu0 0
      %341 = vmatprep.subr.bf16.mxu0 0
      %342 = vmatpush1.bf16.xpose.msra.mxu0 0
      %343 = vmatprep.subr.bf16.mxu0 0
      %344 = vmatpush1.bf16.xpose.msra.mxu0 0
      %345 = vmatprep.subr.bf16.mxu0 0
      %346 = vmatpush1.bf16.xpose.msra.mxu0 0
      %347 = vmatprep.subr.bf16.mxu0 0
      %348 = vmatpush1.bf16.xpose.msra.mxu0 0
      %349 = vmatprep.subr.bf16.mxu0 0
      %350 = vmatpush1.bf16.xpose.msra.mxu0 0
      %351 = vmatprep.subr.bf16.mxu0 0
      %352 = vmatpush1.bf16.xpose.msra.mxu0 %v335
      %353 = vmatprep.subr.bf16.mxu0 0
      %354 = vmatpush2.bf16.xpose.msra.mxu0 0
      %355 = vmatprep.subr.bf16.mxu0 0
      %356 = vmatpush2.bf16.xpose.msra.mxu0 0
      %357 = vmatprep.subr.bf16.mxu0 0
      %358 = vmatpush2.bf16.xpose.msra.mxu0 0
      %359 = vmatprep.subr.bf16.mxu0 0
      %360 = vmatpush2.bf16.xpose.msra.mxu0 0
      %361 = vmatprep.subr.bf16.mxu0 0
      %362 = vmatpush2.bf16.xpose.msra.mxu0 0
      %363 = vmatprep.subr.bf16.mxu0 0
      %364 = vmatpush2.bf16.xpose.msra.mxu0 0
      %365 = vmatprep.subr.bf16.mxu0 0
      %366 = vmatpush2.bf16.xpose.msra.mxu0 0
      %367 = vmatprep.subr.bf16.mxu0 0
      %368 = vmatpush2.bf16.xpose.msra.mxu0 0
      %369 = vmatprep.mubr.bf16.mxu0 0
      %370 = vmatmul.mubr.bf16.gmra.mxu0 %v332
      %v371 = vpop.f32.mrf.mxu0
      %v372 = vadd.f32 0.0, %v371
      %v373 = vpop.f32.mrf.mxu0
      %v374 = vpop.f32.mrf.mxu0
      %v375 = vpop.f32.mrf.mxu0
      %376 = vdwg.mxu0
      %v379 = vunpack.c.l.b16 %v311
      %v380 = vunpack.c.l.b16 %v312
      %v381 = vpack.c.b16 %v380, %v379
      %v383 = vsel %vm330, %v306, 0
      %v386 = vsel %vm330, %v381, 0
      %388 = vmatprep.subr.bf16.mxu0 0
      %389 = vmatpush1.bf16.xpose.msra.mxu0 0
      %390 = vmatprep.subr.bf16.mxu0 0
      %391 = vmatpush1.bf16.xpose.msra.mxu0 0
      %392 = vmatprep.subr.bf16.mxu0 0
      %393 = vmatpush1.bf16.xpose.msra.mxu0 0
      %394 = vmatprep.subr.bf16.mxu0 0
      %395 = vmatpush1.bf16.xpose.msra.mxu0 0
      %396 = vmatprep.subr.bf16.mxu0 0
      %397 = vmatpush1.bf16.xpose.msra.mxu0 0
      %398 = vmatprep.subr.bf16.mxu0 0
      %399 = vmatpush1.bf16.xpose.msra.mxu0 0
      %400 = vmatprep.subr.bf16.mxu0 0
      %401 = vmatpush1.bf16.xpose.msra.mxu0 0
      %402 = vmatprep.subr.bf16.mxu0 0
      %403 = vmatpush1.bf16.xpose.msra.mxu0 %v386
      %404 = vmatprep.subr.bf16.mxu0 0
      %405 = vmatpush2.bf16.xpose.msra.mxu0 0
      %406 = vmatprep.subr.bf16.mxu0 0
      %407 = vmatpush2.bf16.xpose.msra.mxu0 0
      %408 = vmatprep.subr.bf16.mxu0 0
      %409 = vmatpush2.bf16.xpose.msra.mxu0 0
      %410 = vmatprep.subr.bf16.mxu0 0
      %411 = vmatpush2.bf16.xpose.msra.mxu0 0
      %412 = vmatprep.subr.bf16.mxu0 0
      %413 = vmatpush2.bf16.xpose.msra.mxu0 0
      %414 = vmatprep.subr.bf16.mxu0 0
      %415 = vmatpush2.bf16.xpose.msra.mxu0 0
      %416 = vmatprep.subr.bf16.mxu0 0
      %417 = vmatpush2.bf16.xpose.msra.mxu0 0
      %418 = vmatprep.subr.bf16.mxu0 0
      %419 = vmatpush2.bf16.xpose.msra.mxu0 0
      %420 = vmatprep.mubr.bf16.mxu0 0
      %421 = vmatmul.mubr.bf16.gmra.mxu0 %v383
      %v422 = vpop.f32.mrf.mxu0
      %v423 = vadd.f32 0.0, %v422
      %v424 = vpop.f32.mrf.mxu0
      %v425 = vpop.f32.mrf.mxu0
      %v426 = vpop.f32.mrf.mxu0
      %427 = vdwg.mxu0
      %v430 = vunpack.c.l.b16 %v313
      %v431 = vunpack.c.l.b16 %v314
      %v432 = vpack.c.b16 %v431, %v430
      %v434 = vsel %vm330, %v307, 0
      %v437 = vsel %vm330, %v432, 0
      %439 = vmatprep.subr.bf16.mxu0 0
      %440 = vmatpush1.bf16.xpose.msra.mxu0 0
      %441 = vmatprep.subr.bf16.mxu0 0
      %442 = vmatpush1.bf16.xpose.msra.mxu0 0
      %443 = vmatprep.subr.bf16.mxu0 0
      %444 = vmatpush1.bf16.xpose.msra.mxu0 0
      %445 = vmatprep.subr.bf16.mxu0 0
      %446 = vmatpush1.bf16.xpose.msra.mxu0 0
      %447 = vmatprep.subr.bf16.mxu0 0
      %448 = vmatpush1.bf16.xpose.msra.mxu0 0
      %449 = vmatprep.subr.bf16.mxu0 0
      %450 = vmatpush1.bf16.xpose.msra.mxu0 0
      %451 = vmatprep.subr.bf16.mxu0 0
      %452 = vmatpush1.bf16.xpose.msra.mxu0 0
      %453 = vmatprep.subr.bf16.mxu0 0
      %454 = vmatpush1.bf16.xpose.msra.mxu0 %v437
      %455 = vmatprep.subr.bf16.mxu0 0
      %456 = vmatpush2.bf16.xpose.msra.mxu0 0
      %457 = vmatprep.subr.bf16.mxu0 0
      %458 = vmatpush2.bf16.xpose.msra.mxu0 0
      %459 = vmatprep.subr.bf16.mxu0 0
      %460 = vmatpush2.bf16.xpose.msra.mxu0 0
      %461 = vmatprep.subr.bf16.mxu0 0
      %462 = vmatpush2.bf16.xpose.msra.mxu0 0
      %463 = vmatprep.subr.bf16.mxu0 0
      %464 = vmatpush2.bf16.xpose.msra.mxu0 0
      %465 = vmatprep.subr.bf16.mxu0 0
      %466 = vmatpush2.bf16.xpose.msra.mxu0 0
      %467 = vmatprep.subr.bf16.mxu0 0
      %468 = vmatpush2.bf16.xpose.msra.mxu0 0
      %469 = vmatprep.subr.bf16.mxu0 0
      %470 = vmatpush2.bf16.xpose.msra.mxu0 0
      %471 = vmatprep.mubr.bf16.mxu0 0
      %472 = vmatmul.mubr.bf16.gmra.mxu0 %v434
      %v473 = vpop.f32.mrf.mxu0
      %v474 = vadd.f32 0.0, %v473
      %v475 = vpop.f32.mrf.mxu0
      %v476 = vpop.f32.mrf.mxu0
      %v477 = vpop.f32.mrf.mxu0
      %478 = vdwg.mxu0
      %v481 = vunpack.c.l.b16 %v315
      %v482 = vunpack.c.l.b16 %v316
      %v483 = vpack.c.b16 %v482, %v481
      %v485 = vsel %vm330, %v308, 0
      %v488 = vsel %vm330, %v483, 0
      %490 = vmatprep.subr.bf16.mxu0 0
      %491 = vmatpush1.bf16.xpose.msra.mxu0 0
      %492 = vmatprep.subr.bf16.mxu0 0
      %493 = vmatpush1.bf16.xpose.msra.mxu0 0
      %494 = vmatprep.subr.bf16.mxu0 0
      %495 = vmatpush1.bf16.xpose.msra.mxu0 0
      %496 = vmatprep.subr.bf16.mxu0 0
      %497 = vmatpush1.bf16.xpose.msra.mxu0 0
      %498 = vmatprep.subr.bf16.mxu0 0
      %499 = vmatpush1.bf16.xpose.msra.mxu0 0
      %500 = vmatprep.subr.bf16.mxu0 0
      %501 = vmatpush1.bf16.xpose.msra.mxu0 0
      %502 = vmatprep.subr.bf16.mxu0 0
      %503 = vmatpush1.bf16.xpose.msra.mxu0 0
      %504 = vmatprep.subr.bf16.mxu0 0
      %505 = vmatpush1.bf16.xpose.msra.mxu0 %v488
      %506 = vmatprep.subr.bf16.mxu0 0
      %507 = vmatpush2.bf16.xpose.msra.mxu0 0
      %508 = vmatprep.subr.bf16.mxu0 0
      %509 = vmatpush2.bf16.xpose.msra.mxu0 0
      %510 = vmatprep.subr.bf16.mxu0 0
      %511 = vmatpush2.bf16.xpose.msra.mxu0 0
      %512 = vmatprep.subr.bf16.mxu0 0
      %513 = vmatpush2.bf16.xpose.msra.mxu0 0
      %514 = vmatprep.subr.bf16.mxu0 0
      %515 = vmatpush2.bf16.xpose.msra.mxu0 0
      %516 = vmatprep.subr.bf16.mxu0 0
      %517 = vmatpush2.bf16.xpose.msra.mxu0 0
      %518 = vmatprep.subr.bf16.mxu0 0
      %519 = vmatpush2.bf16.xpose.msra.mxu0 0
      %520 = vmatprep.subr.bf16.mxu0 0
      %521 = vmatpush2.bf16.xpose.msra.mxu0 0
      %522 = vmatprep.mubr.bf16.mxu0 0
      %523 = vmatmul.mubr.bf16.gmra.mxu0 %v485
      %v524 = vpop.f32.mrf.mxu0
      %v525 = vadd.f32 0.0, %v524
      %v526 = vpop.f32.mrf.mxu0
      %v527 = vpop.f32.mrf.mxu0
      %v528 = vpop.f32.mrf.mxu0
      %529 = vdwg.mxu0
      %v530 = vmul.f32 %v372, 0.35355338
      %v531 = vmul.f32 %v423, 0.35355338
      %v532 = vmul.f32 %v474, 0.35355338
      %v533 = vmul.f32 %v525, 0.35355338
      %s534 = sld [smem:[#allocation6 + %s26]]
      %v535 = vlaneseq
      %v536 = vand.u32 %v535, 127
      %s537 = smul.u32 %s28, 16
      %v538 = vstv %s537
      %v539 = vadd.s32 %v536, %v538
      %v540 = vstv %s534
      %vm541 = vcmp.lt.s32.totalorder %v539, %v540
      %v542 = vsel %vm541, 1, 0
      %vm543 = vcmp.eq.s32.totalorder %v542, 1
      %v544 = vsel %vm543, %v530, -1e+09
      %v545 = vsel %vm543, %v531, -1e+09
      %v546 = vsel %vm543, %v532, -1e+09
      %v547 = vsel %vm543, %v533, -1e+09
      %v548 = vld [vmem:[#allocation2] sm:$0xff]
      %v549 = vld [vmem:[#allocation2 + $0x8] sm:$0xff]
      %v550 = vld [vmem:[#allocation2 + $0x10] sm:$0xff]
      %v551 = vld [vmem:[#allocation2 + $0x18] sm:$0xff]
      %vm552 = vcmask 130048
      %v553 = vsel %vm552, %v544, -inf
      %554 = vmax.xlane.f32.xlu0 %v553
      %v555 = vpop.xlane.xlu0 %554
      %v556 = vsel %vm552, %v545, -inf
      %557 = vmax.xlane.f32.xlu0 %v556
      %v558 = vpop.xlane.xlu0 %557
      %v559 = vsel %vm552, %v546, -inf
      %560 = vmax.xlane.f32.xlu0 %v559
      %v561 = vpop.xlane.xlu0 %560
      %v562 = vsel %vm552, %v547, -inf
      %563 = vmax.xlane.f32.xlu0 %v562
      %v564 = vpop.xlane.xlu0 %563
      %v565 = vmax.f32 %v548, %v555
      %v566 = vmax.f32 %v549, %v558
      %v567 = vmax.f32 %v550, %v561
      %v568 = vmax.f32 %v551, %v564
      %v569 = vsub.f32 %v548, %v565
      %v570 = vsub.f32 %v549, %v566
      %v571 = vsub.f32 %v550, %v567
      %v572 = vsub.f32 %v551, %v568
      %v573 = vmul.f32 %v569, 1.442695
      %v574 = vpow.pop %v573
      %v575 = vmul.f32 %v570, 1.442695
      %v576 = vpow.pop %v575
      %v577 = vmul.f32 %v571, 1.442695
      %v578 = vpow.pop %v577
      %v579 = vmul.f32 %v572, 1.442695
      %v580 = vpow.pop %v579
      %582 = vset.pattern.permute.xlu0 0
      %583 = vperm.xlu0 %582, %v565
      %v584 = vpop.permute.xlu0 %583
      %587 = vset.pattern.permute.xlu0 0
      %588 = vperm.xlu0 %587, %v566
      %v589 = vpop.permute.xlu0 %588
      %592 = vset.pattern.permute.xlu0 0
      %593 = vperm.xlu0 %592, %v567
      %v594 = vpop.permute.xlu0 %593
      %597 = vset.pattern.permute.xlu0 0
      %598 = vperm.xlu0 %597, %v568
      %v599 = vpop.permute.xlu0 %598
      %v601 = vsub.f32 %v544, %v584
      %v602 = vsub.f32 %v545, %v589
      %v603 = vsub.f32 %v546, %v594
      %v604 = vsub.f32 %v547, %v599
      %v605 = vmul.f32 %v601, 1.442695
      %v606 = vpow.pop %v605
      %v607 = vmul.f32 %v602, 1.442695
      %v608 = vpow.pop %v607
      %v609 = vmul.f32 %v603, 1.442695
      %v610 = vpow.pop %v609
      %v611 = vmul.f32 %v604, 1.442695
      %v612 = vpow.pop %v611
      %v613 = vld [vmem:[#allocation3] sm:$0xff]
      %v614 = vld [vmem:[#allocation3 + $0x8] sm:$0xff]
      %v615 = vld [vmem:[#allocation3 + $0x10] sm:$0xff]
      %v616 = vld [vmem:[#allocation3 + $0x18] sm:$0xff]
      %v617 = vmul.f32 %v574, %v613
      %v618 = vmul.f32 %v576, %v614
      %v619 = vmul.f32 %v578, %v615
      %v620 = vmul.f32 %v580, %v616
      %v621 = vsel %vm552, %v606, 0.0
      %622 = vadd.xlane.f32.xlu0 %v621
      %v623 = vpop.xlane.xlu0 %622
      %v624 = vsel %vm552, %v608, 0.0
      %625 = vadd.xlane.f32.xlu0 %v624
      %v626 = vpop.xlane.xlu0 %625
      %v627 = vsel %vm552, %v610, 0.0
      %628 = vadd.xlane.f32.xlu0 %v627
      %v629 = vpop.xlane.xlu0 %628
      %v630 = vsel %vm552, %v612, 0.0
      %631 = vadd.xlane.f32.xlu0 %v630
      %v632 = vpop.xlane.xlu0 %631
      %v633 = vadd.f32 %v617, %v623
      %v634 = vadd.f32 %v618, %v626
      %v635 = vadd.f32 %v619, %v629
      %v636 = vadd.f32 %v620, %v632
      %vm637 = vcmask 7168
      %638 = vst.msk [vmem:[#allocation3] sm:$0xff] %vm637, %v633
      %639 = vst.msk [vmem:[#allocation3 + $0x8] sm:$0xff] %vm637, %v634
      %640 = vst.msk [vmem:[#allocation3 + $0x10] sm:$0xff] %vm637, %v635
      %641 = vst.msk [vmem:[#allocation3 + $0x18] sm:$0xff] %vm637, %v636
      %v642 = vld [vmem:[#allocation4] sm:$0xff]
      %v643 = vld [vmem:[#allocation4 + $0x8] sm:$0xff]
      %v644 = vld [vmem:[#allocation4 + $0x10] sm:$0xff]
      %v645 = vld [vmem:[#allocation4 + $0x18] sm:$0xff]
      %647 = vset.pattern.permute.xlu0 0
      %648 = vperm.xlu0 %647, %v574
      %v649 = vpop.permute.xlu0 %648
      %652 = vset.pattern.permute.xlu0 0
      %653 = vperm.xlu0 %652, %v576
      %v654 = vpop.permute.xlu0 %653
      %657 = vset.pattern.permute.xlu0 0
      %658 = vperm.xlu0 %657, %v578
      %v659 = vpop.permute.xlu0 %658
      %662 = vset.pattern.permute.xlu0 0
      %663 = vperm.xlu0 %662, %v580
      %v664 = vpop.permute.xlu0 %663
      %v666 = vmul.f32 %v649, %v642
      %v667 = vmul.f32 %v654, %v643
      %v668 = vmul.f32 %v659, %v644
      %v669 = vmul.f32 %v664, %v645
      %v670 = vpack.c.bf16 %v606, %v606
      %v671 = vpack.c.bf16 %v608, %v608
      %v672 = vpack.c.bf16 %v610, %v610
      %v673 = vpack.c.bf16 %v612, %v612
      %v676 = vunpack.c.l.b16 %v317
      %v677 = vunpack.c.l.b16 %v318
      %v678 = vpack.c.b16 %v677, %v676
      %v681 = vsel %vm552, %v670, 0
      %683 = vmatprep.subr.bf16.mxu0 0
      %684 = vmatpush1.bf16.msra.mxu0 0
      %685 = vmatprep.subr.bf16.mxu0 0
      %686 = vmatpush1.bf16.msra.mxu0 0
      %687 = vmatprep.subr.bf16.mxu0 0
      %688 = vmatpush1.bf16.msra.mxu0 0
      %689 = vmatprep.subr.bf16.mxu0 0
      %690 = vmatpush1.bf16.msra.mxu0 0
      %691 = vmatprep.subr.bf16.mxu0 0
      %692 = vmatpush1.bf16.msra.mxu0 0
      %693 = vmatprep.subr.bf16.mxu0 0
      %694 = vmatpush1.bf16.msra.mxu0 0
      %695 = vmatprep.subr.bf16.mxu0 0
      %696 = vmatpush1.bf16.msra.mxu0 0
      %697 = vmatprep.subr.bf16.mxu0 0
      %698 = vmatpush1.bf16.msra.mxu0 %v678
      %699 = vmatprep.subr.bf16.mxu0 0
      %700 = vmatpush2.bf16.msra.mxu0 0
      %701 = vmatprep.subr.bf16.mxu0 0
      %702 = vmatpush2.bf16.msra.mxu0 0
      %703 = vmatprep.subr.bf16.mxu0 0
      %704 = vmatpush2.bf16.msra.mxu0 0
      %705 = vmatprep.subr.bf16.mxu0 0
      %706 = vmatpush2.bf16.msra.mxu0 0
      %707 = vmatprep.subr.bf16.mxu0 0
      %708 = vmatpush2.bf16.msra.mxu0 0
      %709 = vmatprep.subr.bf16.mxu0 0
      %710 = vmatpush2.bf16.msra.mxu0 0
      %711 = vmatprep.subr.bf16.mxu0 0
      %712 = vmatpush2.bf16.msra.mxu0 0
      %713 = vmatprep.subr.bf16.mxu0 0
      %714 = vmatpush2.bf16.msra.mxu0 0
      %715 = vmatprep.mubr.bf16.mxu0 0
      %716 = vmatmul.mubr.bf16.gmra.mxu0 %v681
      %v717 = vpop.f32.mrf.mxu0
      %v718 = vadd.f32 0.0, %v717
      %v719 = vpop.f32.mrf.mxu0
      %v720 = vpop.f32.mrf.mxu0
      %v721 = vpop.f32.mrf.mxu0
      %722 = vdwg.mxu0
      %v725 = vunpack.c.l.b16 %v319
      %v726 = vunpack.c.l.b16 %v320
      %v727 = vpack.c.b16 %v726, %v725
      %v730 = vsel %vm552, %v671, 0
      %732 = vmatprep.subr.bf16.mxu0 0
      %733 = vmatpush1.bf16.msra.mxu0 0
      %734 = vmatprep.subr.bf16.mxu0 0
      %735 = vmatpush1.bf16.msra.mxu0 0
      %736 = vmatprep.subr.bf16.mxu0 0
      %737 = vmatpush1.bf16.msra.mxu0 0
      %738 = vmatprep.subr.bf16.mxu0 0
      %739 = vmatpush1.bf16.msra.mxu0 0
      %740 = vmatprep.subr.bf16.mxu0 0
      %741 = vmatpush1.bf16.msra.mxu0 0
      %742 = vmatprep.subr.bf16.mxu0 0
      %743 = vmatpush1.bf16.msra.mxu0 0
      %744 = vmatprep.subr.bf16.mxu0 0
      %745 = vmatpush1.bf16.msra.mxu0 0
      %746 = vmatprep.subr.bf16.mxu0 0
      %747 = vmatpush1.bf16.msra.mxu0 %v727
      %748 = vmatprep.subr.bf16.mxu0 0
      %749 = vmatpush2.bf16.msra.mxu0 0
      %750 = vmatprep.subr.bf16.mxu0 0
      %751 = vmatpush2.bf16.msra.mxu0 0
      %752 = vmatprep.subr.bf16.mxu0 0
      %753 = vmatpush2.bf16.msra.mxu0 0
      %754 = vmatprep.subr.bf16.mxu0 0
      %755 = vmatpush2.bf16.msra.mxu0 0
      %756 = vmatprep.subr.bf16.mxu0 0
      %757 = vmatpush2.bf16.msra.mxu0 0
      %758 = vmatprep.subr.bf16.mxu0 0
      %759 = vmatpush2.bf16.msra.mxu0 0
      %760 = vmatprep.subr.bf16.mxu0 0
      %761 = vmatpush2.bf16.msra.mxu0 0
      %762 = vmatprep.subr.bf16.mxu0 0
      %763 = vmatpush2.bf16.msra.mxu0 0
      %764 = vmatprep.mubr.bf16.mxu0 0
      %765 = vmatmul.mubr.bf16.gmra.mxu0 %v730
      %v766 = vpop.f32.mrf.mxu0
      %v767 = vadd.f32 0.0, %v766
      %v768 = vpop.f32.mrf.mxu0
      %v769 = vpop.f32.mrf.mxu0
      %v770 = vpop.f32.mrf.mxu0
      %771 = vdwg.mxu0
      %v774 = vunpack.c.l.b16 %v321
      %v775 = vunpack.c.l.b16 %v322
      %v776 = vpack.c.b16 %v775, %v774
      %v779 = vsel %vm552, %v672, 0
      %781 = vmatprep.subr.bf16.mxu0 0
      %782 = vmatpush1.bf16.msra.mxu0 0
      %783 = vmatprep.subr.bf16.mxu0 0
      %784 = vmatpush1.bf16.msra.mxu0 0
      %785 = vmatprep.subr.bf16.mxu0 0
      %786 = vmatpush1.bf16.msra.mxu0 0
      %787 = vmatprep.subr.bf16.mxu0 0
      %788 = vmatpush1.bf16.msra.mxu0 0
      %789 = vmatprep.subr.bf16.mxu0 0
      %790 = vmatpush1.bf16.msra.mxu0 0
      %791 = vmatprep.subr.bf16.mxu0 0
      %792 = vmatpush1.bf16.msra.mxu0 0
      %793 = vmatprep.subr.bf16.mxu0 0
      %794 = vmatpush1.bf16.msra.mxu0 0
      %795 = vmatprep.subr.bf16.mxu0 0
      %796 = vmatpush1.bf16.msra.mxu0 %v776
      %797 = vmatprep.subr.bf16.mxu0 0
      %798 = vmatpush2.bf16.msra.mxu0 0
      %799 = vmatprep.subr.bf16.mxu0 0
      %800 = vmatpush2.bf16.msra.mxu0 0
      %801 = vmatprep.subr.bf16.mxu0 0
      %802 = vmatpush2.bf16.msra.mxu0 0
      %803 = vmatprep.subr.bf16.mxu0 0
      %804 = vmatpush2.bf16.msra.mxu0 0
      %805 = vmatprep.subr.bf16.mxu0 0
      %806 = vmatpush2.bf16.msra.mxu0 0
      %807 = vmatprep.subr.bf16.mxu0 0
      %808 = vmatpush2.bf16.msra.mxu0 0
      %809 = vmatprep.subr.bf16.mxu0 0
      %810 = vmatpush2.bf16.msra.mxu0 0
      %811 = vmatprep.subr.bf16.mxu0 0
      %812 = vmatpush2.bf16.msra.mxu0 0
      %813 = vmatprep.mubr.bf16.mxu0 0
      %814 = vmatmul.mubr.bf16.gmra.mxu0 %v779
      %v815 = vpop.f32.mrf.mxu0
      %v816 = vadd.f32 0.0, %v815
      %v817 = vpop.f32.mrf.mxu0
      %v818 = vpop.f32.mrf.mxu0
      %v819 = vpop.f32.mrf.mxu0
      %820 = vdwg.mxu0
      %v823 = vunpack.c.l.b16 %v323
      %v824 = vunpack.c.l.b16 %v324
      %v825 = vpack.c.b16 %v824, %v823
      %v828 = vsel %vm552, %v673, 0
      %830 = vmatprep.subr.bf16.mxu0 0
      %831 = vmatpush1.bf16.msra.mxu0 0
      %832 = vmatprep.subr.bf16.mxu0 0
      %833 = vmatpush1.bf16.msra.mxu0 0
      %834 = vmatprep.subr.bf16.mxu0 0
      %835 = vmatpush1.bf16.msra.mxu0 0
      %836 = vmatprep.subr.bf16.mxu0 0
      %837 = vmatpush1.bf16.msra.mxu0 0
      %838 = vmatprep.subr.bf16.mxu0 0
      %839 = vmatpush1.bf16.msra.mxu0 0
      %840 = vmatprep.subr.bf16.mxu0 0
      %841 = vmatpush1.bf16.msra.mxu0 0
      %842 = vmatprep.subr.bf16.mxu0 0
      %843 = vmatpush1.bf16.msra.mxu0 0
      %844 = vmatprep.subr.bf16.mxu0 0
      %845 = vmatpush1.bf16.msra.mxu0 %v825
      %846 = vmatprep.subr.bf16.mxu0 0
      %847 = vmatpush2.bf16.msra.mxu0 0
      %848 = vmatprep.subr.bf16.mxu0 0
      %849 = vmatpush2.bf16.msra.mxu0 0
      %850 = vmatprep.subr.bf16.mxu0 0
      %851 = vmatpush2.bf16.msra.mxu0 0
      %852 = vmatprep.subr.bf16.mxu0 0
      %853 = vmatpush2.bf16.msra.mxu0 0
      %854 = vmatprep.subr.bf16.mxu0 0
      %855 = vmatpush2.bf16.msra.mxu0 0
      %856 = vmatprep.subr.bf16.mxu0 0
      %857 = vmatpush2.bf16.msra.mxu0 0
      %858 = vmatprep.subr.bf16.mxu0 0
      %859 = vmatpush2.bf16.msra.mxu0 0
      %860 = vmatprep.subr.bf16.mxu0 0
      %861 = vmatpush2.bf16.msra.mxu0 0
      %862 = vmatprep.mubr.bf16.mxu0 0
      %863 = vmatmul.mubr.bf16.gmra.mxu0 %v828
      %v864 = vpop.f32.mrf.mxu0
      %v865 = vadd.f32 0.0, %v864
      %v866 = vpop.f32.mrf.mxu0
      %v867 = vpop.f32.mrf.mxu0
      %v868 = vpop.f32.mrf.mxu0
      %869 = vdwg.mxu0
      %v870 = vadd.f32 %v666, %v718
      %v871 = vadd.f32 %v667, %v767
      %v872 = vadd.f32 %v668, %v816
      %v873 = vadd.f32 %v669, %v865
      %874 = vst.msk [vmem:[#allocation4] sm:$0xff] %vm330, %v870
      %875 = vst.msk [vmem:[#allocation4 + $0x8] sm:$0xff] %vm330, %v871
      %876 = vst.msk [vmem:[#allocation4 + $0x10] sm:$0xff] %vm330, %v872
      %877 = vst.msk [vmem:[#allocation4 + $0x18] sm:$0xff] %vm330, %v873
      %878 = vst.msk [vmem:[#allocation2] sm:$0xff] %vm637, %v565
      %879 = vst.msk [vmem:[#allocation2 + $0x8] sm:$0xff] %vm637, %v566
      %880 = vst.msk [vmem:[#allocation2 + $0x10] sm:$0xff] %vm637, %v567
      %881 = vst.msk [vmem:[#allocation2 + $0x18] sm:$0xff] %vm637, %v568
      // Predicated region
      $region37: #{transformer_bert_forward.26} parent=31 // pred_check
        %p882 = pneg %p287
      $region38: #{transformer_bert_forward.26} parent=31 // pred_check_branch
        %884 = sbr.rel (%p882) target = $region40
      $region39: #{transformer_bert_forward.26} parent=31 // pred_region
        %v885 = vld [vmem:[#allocation4] sm:$0xff]
        %v886 = vld [vmem:[#allocation4 + $0x8] sm:$0xff]
        %v887 = vld [vmem:[#allocation4 + $0x10] sm:$0xff]
        %v888 = vld [vmem:[#allocation4 + $0x18] sm:$0xff]
        %v889 = vld [vmem:[#allocation3] sm:$0xff]
        %v890 = vld [vmem:[#allocation3 + $0x8] sm:$0xff]
        %v891 = vld [vmem:[#allocation3 + $0x10] sm:$0xff]
        %v892 = vld [vmem:[#allocation3 + $0x18] sm:$0xff]
        %v893 = vrcp.pop %v889
        %v894 = vrcp.pop %v890
        %v895 = vrcp.pop %v891
        %v896 = vrcp.pop %v892
        %898 = vset.pattern.permute.xlu0 0
        %899 = vperm.xlu0 %898, %v893
        %v900 = vpop.permute.xlu0 %899
        %903 = vset.pattern.permute.xlu0 0
        %904 = vperm.xlu0 %903, %v894
        %v905 = vpop.permute.xlu0 %904
        %908 = vset.pattern.permute.xlu0 0
        %909 = vperm.xlu0 %908, %v895
        %v910 = vpop.permute.xlu0 %909
        %913 = vset.pattern.permute.xlu0 0
        %914 = vperm.xlu0 %913, %v896
        %v915 = vpop.permute.xlu0 %914
        %v917 = vmul.f32 %v885, %v900
        %v918 = vmul.f32 %v886, %v905
        %v919 = vmul.f32 %v887, %v910
        %v920 = vmul.f32 %v888, %v915
        %922 = vrot.lane.b32.xlu0 %v918, 8
        %v923 = vpop.permute.xlu0 %922
        %926 = vrot.lane.b32.xlu0 %v919, 16
        %v927 = vpop.permute.xlu0 %926
        %930 = vrot.lane.b32.xlu0 %v920, 24
        %v931 = vpop.permute.xlu0 %930
        %v933 = vsel %vm330, %v917, %v923
        %v934 = vsel %vm552, %v933, %v927
        %vm935 = vcmask 195584
        %v936 = vsel %vm935, %v934, %v931
        %v937 = vpack.c.bf16 %v936, %v936
        %vm938 = vcmask 257024
        %939 = vst.msk [vmem:[%s285] sm:$0xf] %vm938, %v937
      $region40: #{transformer_bert_forward.26} parent=31 // pred_fallthru
        _
      %p940 = scmp.lt.s32.totalorder %s26, 1
      %s941 = scalar_select %p940, %s26, 1
      %p942 = scmp.lt.s32.totalorder %s27, 0
      %s943 = scalar_select %p942, %s27, 0
      %s944 = sadd.s32 %s943, %s941
      %s945 = smul.addr %s944, 4
      %s946 = scalar_lea.vmem %s4, %s945
      // Predicated region
      $region41: #{transformer_bert_forward.26} parent=31 // pred_check
        %p947 = pneg %p144
      $region42: #{transformer_bert_forward.26} parent=31 // pred_check_branch
        %949 = sbr.rel (%p947) target = $region44
      $region43: #{transformer_bert_forward.26} parent=31 // pred_region
        _
      $region44: #{transformer_bert_forward.26} parent=31 // pred_fallthru
        _
    $region32: #{transformer_bert_forward.26} parent=5 // pred_fallthru
      _
    %p950 = scmp.le.s32.totalorder 2, %s16
    // Predicated region
    $region45: #{transformer_bert_forward.26} parent=5 // pred_check
      %p951 = pneg %p950
    $region46: #{transformer_bert_forward.26} parent=5 // pred_check_branch
      %953 = sbr.rel (%p951) target = $region48
    $region47: #{transformer_bert_forward.26} parent=5 // pred_region
      %s954 = ssub.s32 %s16, 2
      // Predicated region
      $region49: #{transformer_bert_forward.26} parent=47 // pred_check
        %p955 = pneg %p150
      $region50: #{transformer_bert_forward.26} parent=47 // pred_check_branch
        %957 = sbr.rel (%p955) target = $region52
      $region51: #{transformer_bert_forward.26} parent=47 // pred_region
        %p958 = scmp.lt.s32.totalorder %s29, 1
        %s959 = scalar_select %p958, %s29, 1
        %p960 = scmp.lt.s32.totalorder %s30, 0
        %s961 = scalar_select %p960, %s30, 0
        %s962 = sadd.s32 %s961, %s959
        %s963 = smul.addr %s962, 4
        %s964 = scalar_lea.vmem %s4, %s963
      $region52: #{transformer_bert_forward.26} parent=47 // pred_fallthru
        _
    $region48: #{transformer_bert_forward.26} parent=5 // pred_fallthru
      _
  $region6: #{transformer_bert_forward.26} parent=0 // loop_footer
    %s20 = sadd.s32 1, %s16
  $region7: #{transformer_bert_forward.26} parent=0 // loop_footer_branch
    %15 = sbr.rel target = $region3
  $region8: #{transformer_bert_forward.26} parent=0 // loop_exit
    _

// kernel: transformer_bert_forward.29
$region0: #{transformer_bert_forward.29}
  #allocation0 [shape = 'u32[]', space=smem, size = 0x4, offset = 0x4, fixed_abs, tag = 'smem constant byte address 0x4 - core index']
  #allocation1 [shape = 'u32[144,128]{1,0:T(1,128)}', space=vmem, size = 0x12000, scoped, tag = 'internal scratch']
  #allocation2 [shape = 'f32[16,32]{1,0:T(8,128)}', space=vmem, size = 0x2000, scoped, tag = 'scratch operand']
  %s0 = inlined_call_operand.vmem [shape: bf16[16,64], index: 0, kind: input, shape index: {}]
  %s1 = inlined_call_operand.vmem [shape: bf16[64,32], index: 1, kind: input, shape index: {}]
  %s2 = inlined_call_operand.vmem [shape: f32[1,32], index: 2, kind: input, shape index: {}]
  %s3 = inlined_call_operand.vmem [shape: bf16[16,32], index: 3, kind: input, shape index: {}]
  %s4 = inlined_call_operand.vmem [shape: f32[1,32], index: 4, kind: input, shape index: {}]
  %s5 = inlined_call_operand.vmem [shape: f32[1,32], index: 5, kind: input, shape index: {}]
  %s6 = inlined_call_operand.vmem [shape: bf16[16,32], index: 6, kind: output, shape index: {}]
  %s7 = sld [smem:[#allocation0]]
  $region42: #{transformer_bert_forward.29} parent=0
    _
  %s9 = ssub.s32 1, %s7
  %s10 = scalar_select 0, %s9, %s7
  // Predicated region
  $region2: #{transformer_bert_forward.29} parent=0 // pred_check
    _
  $region3: #{transformer_bert_forward.29} parent=0 // pred_check_branch
    %12 = sbr.rel (0) target = $region5
  $region4: #{transformer_bert_forward.29} parent=0 // pred_region
    _
  $region5: #{transformer_bert_forward.29} parent=0 // pred_fallthru
    _
  // Predicated region
  $region6: #{transformer_bert_forward.29} parent=0 // pred_check
    _
  $region7: #{transformer_bert_forward.29} parent=0 // pred_check_branch
    %14 = sbr.rel (0) target = $region9
  $region8: #{transformer_bert_forward.29} parent=0 // pred_region
    _
  $region9: #{transformer_bert_forward.29} parent=0 // pred_fallthru
    _
  // Predicated region
  $region10: #{transformer_bert_forward.29} parent=0 // pred_check
    _
  $region11: #{transformer_bert_forward.29} parent=0 // pred_check_branch
    %16 = sbr.rel (0) target = $region13
  $region12: #{transformer_bert_forward.29} parent=0 // pred_region
    _
  $region13: #{transformer_bert_forward.29} parent=0 // pred_fallthru
    _
  // Predicated region
  $region14: #{transformer_bert_forward.29} parent=0 // pred_check
    _
  $region15: #{transformer_bert_forward.29} parent=0 // pred_check_branch
    %18 = sbr.rel (0) target = $region17
  $region16: #{transformer_bert_forward.29} parent=0 // pred_region
    _
  $region17: #{transformer_bert_forward.29} parent=0 // pred_fallthru
    _
  // Predicated region
  $region18: #{transformer_bert_forward.29} parent=0 // pred_check
    _
  $region19: #{transformer_bert_forward.29} parent=0 // pred_check_branch
    %20 = sbr.rel (0) target = $region21
  $region20: #{transformer_bert_forward.29} parent=0 // pred_region
    _
  $region21: #{transformer_bert_forward.29} parent=0 // pred_fallthru
    _
  // Predicated region
  $region22: #{transformer_bert_forward.29} parent=0 // pred_check
    _
  $region23: #{transformer_bert_forward.29} parent=0 // pred_check_branch
    %22 = sbr.rel (0) target = $region25
  $region24: #{transformer_bert_forward.29} parent=0 // pred_region
    _
  $region25: #{transformer_bert_forward.29} parent=0 // pred_fallthru
    _
  %p24 = scmp.eq.s32.totalorder 0, 0
  // Predicated region
  $region26: #{transformer_bert_forward.29} parent=0 // pred_check
    %p25 = pneg %p24
  $region27: #{transformer_bert_forward.29} parent=0 // pred_check_branch
    %27 = sbr.rel (%p25) target = $region29
  $region28: #{transformer_bert_forward.29} parent=0 // pred_region
    %vm28 = vcmask 261120
    %29 = vst.msk [vmem:[#allocation2] sm:$0xff] %vm28, 0.0
    %30 = vst.msk [vmem:[#allocation2 + $0x8] sm:$0xff] %vm28, 0.0
  $region29: #{transformer_bert_forward.29} parent=0 // pred_fallthru
    _
  %v31 = vld [vmem:[#allocation2] sm:$0xff]
  %v32 = vld [vmem:[#allocation2 + $0x8] sm:$0xff]
  %v33 = vld [vmem:[%s0] sm:$0xf]
  %v34 = vld [vmem:[%s0 + $0x4] sm:$0xf]
  %v35 = vld [vmem:[%s1] sm:$0xf]
  %v36 = vld [vmem:[%s1 + $0x4] sm:$0xf]
  %v37 = vld [vmem:[%s1 + $0x8] sm:$0xf]
  %v38 = vld [vmem:[%s1 + $0xc] sm:$0xf]
  %v39 = vld [vmem:[%s1 + $0x10] sm:$0xf]
  %v40 = vld [vmem:[%s1 + $0x14] sm:$0xf]
  %v41 = vld [vmem:[%s1 + $0x18] sm:$0xf]
  %v42 = vld [vmem:[%s1 + $0x1c] sm:$0xf]
  %v45 = vunpack.c.l.b16 %v33
  %v46 = vunpack.c.l.b16 %v34
  %v47 = vpack.c.b16 %v46, %v45
  %v56 = vunpack.c.l.b16 %v35
  %v57 = vunpack.c.l.b16 %v36
  %v58 = vunpack.c.l.b16 %v37
  %v59 = vunpack.c.l.b16 %v38
  %v60 = vunpack.c.l.b16 %v39
  %v61 = vunpack.c.l.b16 %v40
  %v62 = vunpack.c.l.b16 %v41
  %v63 = vunpack.c.l.b16 %v42
  %v64 = vpack.c.b16 %v57, %v56
  %v65 = vpack.c.b16 %v59, %v58
  %v66 = vpack.c.b16 %v61, %v60
  %v67 = vpack.c.b16 %v63, %v62
  %vm72 = vcmask 523264
  %v74 = vsel %vm72, %v47, 0
  %76 = vmatprep.subr.bf16.mxu0 0
  %77 = vmatpush1.bf16.msra.mxu0 0
  %78 = vmatprep.subr.bf16.mxu0 0
  %79 = vmatpush1.bf16.msra.mxu0 0
  %80 = vmatprep.subr.bf16.mxu0 0
  %81 = vmatpush1.bf16.msra.mxu0 0
  %82 = vmatprep.subr.bf16.mxu0 0
  %83 = vmatpush1.bf16.msra.mxu0 0
  %84 = vmatprep.subr.bf16.mxu0 0
  %85 = vmatpush1.bf16.msra.mxu0 %v67
  %86 = vmatprep.subr.bf16.mxu0 0
  %87 = vmatpush1.bf16.msra.mxu0 %v66
  %88 = vmatprep.subr.bf16.mxu0 0
  %89 = vmatpush1.bf16.msra.mxu0 %v65
  %90 = vmatprep.subr.bf16.mxu0 0
  %91 = vmatpush1.bf16.msra.mxu0 %v64
  %92 = vmatprep.subr.bf16.mxu0 0
  %93 = vmatpush2.bf16.msra.mxu0 0
  %94 = vmatprep.subr.bf16.mxu0 0
  %95 = vmatpush2.bf16.msra.mxu0 0
  %96 = vmatprep.subr.bf16.mxu0 0
  %97 = vmatpush2.bf16.msra.mxu0 0
  %98 = vmatprep.subr.bf16.mxu0 0
  %99 = vmatpush2.bf16.msra.mxu0 0
  %100 = vmatprep.subr.bf16.mxu0 0
  %101 = vmatpush2.bf16.msra.mxu0 0
  %102 = vmatprep.subr.bf16.mxu0 0
  %103 = vmatpush2.bf16.msra.mxu0 0
  %104 = vmatprep.subr.bf16.mxu0 0
  %105 = vmatpush2.bf16.msra.mxu0 0
  %106 = vmatprep.subr.bf16.mxu0 0
  %107 = vmatpush2.bf16.msra.mxu0 0
  %108 = vmatprep.mubr.bf16.mxu0 0
  %109 = vmatmul.mubr.bf16.gmra.mxu0 %v74
  %v110 = vpop.f32.mrf.mxu0
  %v111 = vadd.f32 0.0, %v110
  %v112 = vpop.f32.mrf.mxu0
  %v113 = vpop.f32.mrf.mxu0
  %v114 = vadd.f32 0.0, %v113
  %v115 = vpop.f32.mrf.mxu0
  %116 = vdwg.mxu0
  %v117 = vadd.f32 %v31, %v111
  %v118 = vadd.f32 %v32, %v114
  %vm119 = vcmask 261120
  %120 = vst.msk [vmem:[#allocation2] sm:$0xff] %vm119, %v117
  %121 = vst.msk [vmem:[#allocation2 + $0x8] sm:$0xff] %vm119, %v118
  // Predicated region
  $region30: #{transformer_bert_forward.29} parent=0 // pred_check
    %p122 = pneg %p24
  $region31: #{transformer_bert_forward.29} parent=0 // pred_check_branch
    %124 = sbr.rel (%p122) target = $region33
  $region32: #{transformer_bert_forward.29} parent=0 // pred_region
    %v125 = vld [vmem:[#allocation2] sm:$0xff]
    %v126 = vld [vmem:[#allocation2 + $0x8] sm:$0xff]
    %v127 = vld [vmem:[%s2] sm:$0x1]
    %v129 = vlaneseq
    %v130 = vshrl.u32 %v129, 7
    %v131 = vsub.s32 0, %v130
    %v132 = vrot.slane %v127, %v131
    %v134 = vadd.f32 %v125, %v132
    %v135 = vadd.f32 %v126, %v132
    %v136 = vld [vmem:[%s3] sm:$0xf]
    %v137 = vld [vmem:[%s3 + $0x4] sm:$0xf]
    %v138 = vunpack.c.l.bf16 %v136
    %v139 = vunpack.c.l.bf16 %v137
    %v140 = vadd.f32 %v134, %v138
    %v141 = vadd.f32 %v135, %v139
    %v142 = vsel %vm119, %v140, 0.0
    %143 = vadd.xlane.f32.xlu0 %v142
    %v144 = vpop.xlane.xlu0 %143
    %v145 = vsel %vm119, %v141, 0.0
    %146 = vadd.xlane.f32.xlu0 %v145
    %v147 = vpop.xlane.xlu0 %146
    %v148 = vrcp.pop 32.0
    %v149 = vmul.f32 %v144, %v148
    %v150 = vmul.f32 %v147, %v148
    %v151 = vsub.f32 %v140, %v149
    %v152 = vsub.f32 %v141, %v150
    %v153 = vmul.f32 %v151, %v151
    %v154 = vmul.f32 %v152, %v152
    %v155 = vsel %vm119, %v153, 0.0
    %156 = vadd.xlane.f32.xlu0 %v155
    %v157 = vpop.xlane.xlu0 %156
    %v158 = vsel %vm119, %v154, 0.0
    %159 = vadd.xlane.f32.xlu0 %v158
    %v160 = vpop.xlane.xlu0 %159
    %v161 = vmul.f32 %v157, %v148
    %v162 = vmul.f32 %v160, %v148
    %v163 = vadd.f32 %v161, 1e-12
    %v164 = vadd.f32 %v162, 1e-12
    %v165 = vrsqrt.pop %v163
    %v166 = vrsqrt.pop %v164
    %v167 = vmul.f32 %v151, %v165
    %v168 = vmul.f32 %v152, %v166
    %v169 = vld [vmem:[%s4] sm:$0x1]
    %v171 = vlaneseq
    %v172 = vshrl.u32 %v171, 7
    %v173 = vsub.s32 0, %v172
    %v174 = vrot.slane %v169, %v173
    %v176 = vmul.f32 %v167, %v174
    %v177 = vmul.f32 %v168, %v174
    %v178 = vld [vmem:[%s5] sm:$0x1]
    %v180 = vlaneseq
    %v181 = vshrl.u32 %v180, 7
    %v182 = vsub.s32 0, %v181
    %v183 = vrot.slane %v178, %v182
    %v185 = vadd.f32 %v176, %v183
    %v186 = vadd.f32 %v177, %v183
    %v187 = vpack.c.bf16 %v186, %v185
    %v189 = vunpack.c.l.b16 %v187
    %v190 = vunpack.c.h.b16 %v187
    %v191 = vpack.c.b16 %v189, %v189
    %v192 = vpack.c.b16 %v190, %v190
    %vm195 = vcmask 257024
    %196 = vst.msk [vmem:[%s6] sm:$0xf] %vm195, %v191
    %197 = vst.msk [vmem:[%s6 + $0x4] sm:$0xf] %vm195, %v192
  $region33: #{transformer_bert_forward.29} parent=0 // pred_fallthru
    _
  // Predicated region
  $region34: #{transformer_bert_forward.29} parent=0 // pred_check
    _
  $region35: #{transformer_bert_forward.29} parent=0 // pred_check_branch
    %199 = sbr.rel (0) target = $region37
  $region36: #{transformer_bert_forward.29} parent=0 // pred_region
    _
  $region37: #{transformer_bert_forward.29} parent=0 // pred_fallthru
    _
  // Predicated region
  $region38: #{transformer_bert_forward.29} parent=0 // pred_check
    _
  $region39: #{transformer_bert_forward.29} parent=0 // pred_check_branch
    %201 = sbr.rel (0) target = $region41
  $region40: #{transformer_bert_forward.29} parent=0 // pred_region
    _
  $region41: #{transformer_bert_forward.29} parent=0 // pred_fallthru
    _

// kernel: transformer_bert_forward.30
$region0: #{transformer_bert_forward.30}
  #allocation0 [shape = 'u32[]', space=smem, size = 0x4, offset = 0x4, fixed_abs, tag = 'smem constant byte address 0x4 - core index']
  #allocation1 [shape = 'u32[144,128]{1,0:T(1,128)}', space=vmem, size = 0x12000, scoped, tag = 'internal scratch']
  #allocation2 [shape = 'f32[16,32]{1,0:T(8,128)}', space=vmem, size = 0x2000, scoped, tag = 'scratch operand']
  %s0 = inlined_call_operand.vmem [shape: bf16[16,32], index: 0, kind: input, shape index: {}]
  %s1 = inlined_call_operand.vmem [shape: bf16[32,32], index: 1, kind: input, shape index: {}]
  %s2 = inlined_call_operand.vmem [shape: f32[1,32], index: 2, kind: input, shape index: {}]
  %s3 = inlined_call_operand.vmem [shape: bf16[16,32], index: 3, kind: output, shape index: {}]
  %s4 = sld [smem:[#allocation0]]
  $region30: #{transformer_bert_forward.30} parent=0
    _
  %s6 = ssub.s32 1, %s4
  %s7 = scalar_select 0, %s6, %s4
  // Predicated region
  $region2: #{transformer_bert_forward.30} parent=0 // pred_check
    _
  $region3: #{transformer_bert_forward.30} parent=0 // pred_check_branch
    %9 = sbr.rel (0) target = $region5
  $region4: #{transformer_bert_forward.30} parent=0 // pred_region
    _
  $region5: #{transformer_bert_forward.30} parent=0 // pred_fallthru
    _
  // Predicated region
  $region6: #{transformer_bert_forward.30} parent=0 // pred_check
    _
  $region7: #{transformer_bert_forward.30} parent=0 // pred_check_branch
    %11 = sbr.rel (0) target = $region9
  $region8: #{transformer_bert_forward.30} parent=0 // pred_region
    _
  $region9: #{transformer_bert_forward.30} parent=0 // pred_fallthru
    _
  // Predicated region
  $region10: #{transformer_bert_forward.30} parent=0 // pred_check
    _
  $region11: #{transformer_bert_forward.30} parent=0 // pred_check_branch
    %13 = sbr.rel (0) target = $region13
  $region12: #{transformer_bert_forward.30} parent=0 // pred_region
    _
  $region13: #{transformer_bert_forward.30} parent=0 // pred_fallthru
    _
  %p15 = scmp.eq.s32.totalorder 0, 0
  // Predicated region
  $region14: #{transformer_bert_forward.30} parent=0 // pred_check
    %p16 = pneg %p15
  $region15: #{transformer_bert_forward.30} parent=0 // pred_check_branch
    %18 = sbr.rel (%p16) target = $region17
  $region16: #{transformer_bert_forward.30} parent=0 // pred_region
    %vm19 = vcmask 261120
    %20 = vst.msk [vmem:[#allocation2] sm:$0xff] %vm19, 0.0
    %21 = vst.msk [vmem:[#allocation2 + $0x8] sm:$0xff] %vm19, 0.0
  $region17: #{transformer_bert_forward.30} parent=0 // pred_fallthru
    _
  %v22 = vld [vmem:[#allocation2] sm:$0xff]
  %v23 = vld [vmem:[#allocation2 + $0x8] sm:$0xff]
  %v24 = vld [vmem:[%s0] sm:$0xf]
  %v25 = vld [vmem:[%s0 + $0x4] sm:$0xf]
  %v26 = vld [vmem:[%s1] sm:$0xf]
  %v27 = vld [vmem:[%s1 + $0x4] sm:$0xf]
  %v28 = vld [vmem:[%s1 + $0x8] sm:$0xf]
  %v29 = vld [vmem:[%s1 + $0xc] sm:$0xf]
  %v32 = vunpack.c.l.b16 %v24
  %v33 = vunpack.c.l.b16 %v25
  %v34 = vpack.c.b16 %v33, %v32
  %v39 = vunpack.c.l.b16 %v26
  %v40 = vunpack.c.l.b16 %v27
  %v41 = vunpack.c.l.b16 %v28
  %v42 = vunpack.c.l.b16 %v29
  %v43 = vpack.c.b16 %v40, %v39
  %v44 = vpack.c.b16 %v42, %v41
  %vm47 = vcmask 261120
  %v49 = vsel %vm47, %v34, 0
  %51 = vmatprep.subr.bf16.mxu0 0
  %52 = vmatpush1.bf16.msra.mxu0 0
  %53 = vmatprep.subr.bf16.mxu0 0
  %54 = vmatpush1.bf16.msra.mxu0 0
  %55 = vmatprep.subr.bf16.mxu0 0
  %56 = vmatpush1.bf16.msra.mxu0 0
  %57 = vmatprep.subr.bf16.mxu0 0
  %58 = vmatpush1.bf16.msra.mxu0 0
  %59 = vmatprep.subr.bf16.mxu0 0
  %60 = vmatpush1.bf16.msra.mxu0 0
  %61 = vmatprep.subr.bf16.mxu0 0
  %62 = vmatpush1.bf16.msra.mxu0 0
  %63 = vmatprep.subr.bf16.mxu0 0
  %64 = vmatpush1.bf16.msra.mxu0 %v44
  %65 = vmatprep.subr.bf16.mxu0 0
  %66 = vmatpush1.bf16.msra.mxu0 %v43
  %67 = vmatprep.subr.bf16.mxu0 0
  %68 = vmatpush2.bf16.msra.mxu0 0
  %69 = vmatprep.subr.bf16.mxu0 0
  %70 = vmatpush2.bf16.msra.mxu0 0
  %71 = vmatprep.subr.bf16.mxu0 0
  %72 = vmatpush2.bf16.msra.mxu0 0
  %73 = vmatprep.subr.bf16.mxu0 0
  %74 = vmatpush2.bf16.msra.mxu0 0
  %75 = vmatprep.subr.bf16.mxu0 0
  %76 = vmatpush2.bf16.msra.mxu0 0
  %77 = vmatprep.subr.bf16.mxu0 0
  %78 = vmatpush2.bf16.msra.mxu0 0
  %79 = vmatprep.subr.bf16.mxu0 0
  %80 = vmatpush2.bf16.msra.mxu0 0
  %81 = vmatprep.subr.bf16.mxu0 0
  %82 = vmatpush2.bf16.msra.mxu0 0
  %83 = vmatprep.mubr.bf16.mxu0 0
  %84 = vmatmul.mubr.bf16.gmra.mxu0 %v49
  %v85 = vpop.f32.mrf.mxu0
  %v86 = vadd.f32 0.0, %v85
  %v87 = vpop.f32.mrf.mxu0
  %v88 = vpop.f32.mrf.mxu0
  %v89 = vadd.f32 0.0, %v88
  %v90 = vpop.f32.mrf.mxu0
  %91 = vdwg.mxu0
  %v92 = vadd.f32 %v22, %v86
  %v93 = vadd.f32 %v23, %v89
  %94 = vst.msk [vmem:[#allocation2] sm:$0xff] %vm47, %v92
  %95 = vst.msk [vmem:[#allocation2 + $0x8] sm:$0xff] %vm47, %v93
  // Predicated region
  $region18: #{transformer_bert_forward.30} parent=0 // pred_check
    %p96 = pneg %p15
  $region19: #{transformer_bert_forward.30} parent=0 // pred_check_branch
    %98 = sbr.rel (%p96) target = $region21
  $region20: #{transformer_bert_forward.30} parent=0 // pred_region
    %v99 = vld [vmem:[#allocation2] sm:$0xff]
    %v100 = vld [vmem:[#allocation2 + $0x8] sm:$0xff]
    %v101 = vld [vmem:[%s2] sm:$0x1]
    %v103 = vlaneseq
    %v104 = vshrl.u32 %v103, 7
    %v105 = vsub.s32 0, %v104
    %v106 = vrot.slane %v101, %v105
    %v108 = vadd.f32 %v99, %v106
    %v109 = vadd.f32 %v100, %v106
    %v110 = vtanh.pop %v108
    %v111 = vtanh.pop %v109
    %v112 = vpack.c.bf16 %v111, %v110
    %v114 = vunpack.c.l.b16 %v112
    %v115 = vunpack.c.h.b16 %v112
    %v116 = vpack.c.b16 %v114, %v114
    %v117 = vpack.c.b16 %v115, %v115
    %vm120 = vcmask 257024
    %121 = vst.msk [vmem:[%s3] sm:$0xf] %vm120, %v116
    %122 = vst.msk [vmem:[%s3 + $0x4] sm:$0xf] %vm120, %v117
  $region21: #{transformer_bert_forward.30} parent=0 // pred_fallthru
    _
  // Predicated region
  $region22: #{transformer_bert_forward.30} parent=0 // pred_check
    _
  $region23: #{transformer_bert_forward.30} parent=0 // pred_check_branch
    %124 = sbr.rel (0) target = $region25
  $region24: #{transformer_bert_forward.30} parent=0 // pred_region
    _
  $region25: #{transformer_bert_forward.30} parent=0 // pred_fallthru
    _
  // Predicated region
  $region26: #{transformer_bert_forward.30} parent=0 // pred_check
    _
  $region27: #{transformer_bert_forward.30} parent=0 // pred_check_branch
    %126 = sbr.rel (0) target = $region29
  $region28: #{transformer_bert_forward.30} parent=0 // pred_region
    _
  $region29: #{transformer_bert_forward.30} parent=0 // pred_fallthru
    _

// kernel: transformer_bert_forward.31
$region0: #{transformer_bert_forward.31}
  #allocation0 [shape = 'u32[]', space=smem, size = 0x4, offset = 0x4, fixed_abs, tag = 'smem constant byte address 0x4 - core index']
  #allocation1 [shape = 'u32[144,128]{1,0:T(1,128)}', space=vmem, size = 0x12000, scoped, tag = 'internal scratch']
  #allocation2 [shape = 'f32[16,1]{1,0:T(8,128)}', space=vmem, size = 0x2000, scoped, tag = 'scratch operand']
  #allocation3 [shape = 'f32[16,1]{1,0:T(8,128)}', space=vmem, size = 0x2000, scoped, tag = 'scratch operand']
  #allocation4 [shape = 'f32[16,1]{1,0:T(8,128)}', space=vmem, size = 0x2000, scoped, tag = 'scratch operand']
  %s0 = inlined_call_operand.vmem [shape: bf16[16,32], index: 0, kind: input, shape index: {}]
  %s1 = inlined_call_operand.vmem [shape: bf16[64,32], index: 1, kind: input, shape index: {}]
  %s2 = inlined_call_operand.vmem [shape: f32[1,64], index: 2, kind: input, shape index: {}]
  %s3 = inlined_call_operand.vmem [shape: s32[16,1], index: 3, kind: input, shape index: {}]
  %s4 = inlined_call_operand.vmem [shape: f32[16,1], index: 4, kind: output, shape index: {}]
  %s5 = sld [smem:[#allocation0]]
  $region34: #{transformer_bert_forward.31} parent=0
    _
  %s7 = ssub.s32 1, %s5
  %s8 = scalar_select 0, %s7, %s5
  // Predicated region
  $region2: #{transformer_bert_forward.31} parent=0 // pred_check
    _
  $region3: #{transformer_bert_forward.31} parent=0 // pred_check_branch
    %10 = sbr.rel (0) target = $region5
  $region4: #{transformer_bert_forward.31} parent=0 // pred_region
    _
  $region5: #{transformer_bert_forward.31} parent=0 // pred_fallthru
    _
  // Predicated region
  $region6: #{transformer_bert_forward.31} parent=0 // pred_check
    _
  $region7: #{transformer_bert_forward.31} parent=0 // pred_check_branch
    %12 = sbr.rel (0) target = $region9
  $region8: #{transformer_bert_forward.31} parent=0 // pred_region
    _
  $region9: #{transformer_bert_forward.31} parent=0 // pred_fallthru
    _
  // Predicated region
  $region10: #{transformer_bert_forward.31} parent=0 // pred_check
    _
  $region11: #{transformer_bert_forward.31} parent=0 // pred_check_branch
    %14 = sbr.rel (0) target = $region13
  $region12: #{transformer_bert_forward.31} parent=0 // pred_region
    _
  $region13: #{transformer_bert_forward.31} parent=0 // pred_fallthru
    _
  // Predicated region
  $region14: #{transformer_bert_forward.31} parent=0 // pred_check
    _
  $region15: #{transformer_bert_forward.31} parent=0 // pred_check_branch
    %16 = sbr.rel (0) target = $region17
  $region16: #{transformer_bert_forward.31} parent=0 // pred_region
    _
  $region17: #{transformer_bert_forward.31} parent=0 // pred_fallthru
    _
  %p18 = scmp.eq.s32.totalorder 0, 0
  // Predicated region
  $region18: #{transformer_bert_forward.31} parent=0 // pred_check
    %p19 = pneg %p18
  $region19: #{transformer_bert_forward.31} parent=0 // pred_check_branch
    %21 = sbr.rel (%p19) target = $region21
  $region20: #{transformer_bert_forward.31} parent=0 // pred_region
    %vm22 = vcmask 7168
    %23 = vst.msk [vmem:[#allocation2] sm:$0xff] %vm22, -inf
    %24 = vst.msk [vmem:[#allocation2 + $0x8] sm:$0xff] %vm22, -inf
    %25 = vst.msk [vmem:[#allocation3] sm:$0xff] %vm22, 0.0
    %26 = vst.msk [vmem:[#allocation3 + $0x8] sm:$0xff] %vm22, 0.0
    %27 = vst.msk [vmem:[#allocation4] sm:$0xff] %vm22, 0.0
    %28 = vst.msk [vmem:[#allocation4 + $0x8] sm:$0xff] %vm22, 0.0
  $region21: #{transformer_bert_forward.31} parent=0 // pred_fallthru
    _
  %v29 = vld [vmem:[%s0] sm:$0xf]
  %v30 = vld [vmem:[%s0 + $0x4] sm:$0xf]
  %v31 = vld [vmem:[%s1] sm:$0xf]
  %v32 = vld [vmem:[%s1 + $0x4] sm:$0xf]
  %v33 = vld [vmem:[%s1 + $0x8] sm:$0xf]
  %v34 = vld [vmem:[%s1 + $0xc] sm:$0xf]
  %v35 = vld [vmem:[%s1 + $0x10] sm:$0xf]
  %v36 = vld [vmem:[%s1 + $0x14] sm:$0xf]
  %v37 = vld [vmem:[%s1 + $0x18] sm:$0xf]
  %v38 = vld [vmem:[%s1 + $0x1c] sm:$0xf]
  %v39 = vld [vmem:[%s2] sm:$0x1]
  %v41 = vlaneseq
  %v42 = vshrl.u32 %v41, 7
  %v43 = vsub.s32 0, %v42
  %v44 = vrot.slane %v39, %v43
  %v48 = vunpack.c.l.b16 %v29
  %v49 = vunpack.c.l.b16 %v30
  %v50 = vpack.c.b16 %v49, %v48
  %v59 = vunpack.c.l.b16 %v31
  %v60 = vunpack.c.l.b16 %v32
  %v61 = vunpack.c.l.b16 %v33
  %v62 = vunpack.c.l.b16 %v34
  %v63 = vunpack.c.l.b16 %v35
  %v64 = vunpack.c.l.b16 %v36
  %v65 = vunpack.c.l.b16 %v37
  %v66 = vunpack.c.l.b16 %v38
  %v67 = vpack.c.b16 %v60, %v59
  %v68 = vpack.c.b16 %v62, %v61
  %v69 = vpack.c.b16 %v64, %v63
  %v70 = vpack.c.b16 %v66, %v65
  %vm71 = vcmask 261120
  %v73 = vsel %vm71, %v50, 0
  %v76 = vsel %vm71, %v67, 0
  %v79 = vsel %vm71, %v68, 0
  %v82 = vsel %vm71, %v69, 0
  %v85 = vsel %vm71, %v70, 0
  %87 = vmatprep.subr.bf16.mxu0 0
  %88 = vmatpush1.bf16.xpose.msra.mxu0 0
  %89 = vmatprep.subr.bf16.mxu0 0
  %90 = vmatpush1.bf16.xpose.msra.mxu0 0
  %91 = vmatprep.subr.bf16.mxu0 0
  %92 = vmatpush1.bf16.xpose.msra.mxu0 0
  %93 = vmatprep.subr.bf16.mxu0 0
  %94 = vmatpush1.bf16.xpose.msra.mxu0 0
  %95 = vmatprep.subr.bf16.mxu0 0
  %96 = vmatpush1.bf16.xpose.msra.mxu0 %v85
  %97 = vmatprep.subr.bf16.mxu0 0
  %98 = vmatpush1.bf16.xpose.msra.mxu0 %v82
  %99 = vmatprep.subr.bf16.mxu0 0
  %100 = vmatpush1.bf16.xpose.msra.mxu0 %v79
  %101 = vmatprep.subr.bf16.mxu0 0
  %102 = vmatpush1.bf16.xpose.msra.mxu0 %v76
  %103 = vmatprep.subr.bf16.mxu0 0
  %104 = vmatpush2.bf16.xpose.msra.mxu0 0
  %105 = vmatprep.subr.bf16.mxu0 0
  %106 = vmatpush2.bf16.xpose.msra.mxu0 0
  %107 = vmatprep.subr.bf16.mxu0 0
  %108 = vmatpush2.bf16.xpose.msra.mxu0 0
  %109 = vmatprep.subr.bf16.mxu0 0
  %110 = vmatpush2.bf16.xpose.msra.mxu0 0
  %111 = vmatprep.subr.bf16.mxu0 0
  %112 = vmatpush2.bf16.xpose.msra.mxu0 0
  %113 = vmatprep.subr.bf16.mxu0 0
  %114 = vmatpush2.bf16.xpose.msra.mxu0 0
  %115 = vmatprep.subr.bf16.mxu0 0
  %116 = vmatpush2.bf16.xpose.msra.mxu0 0
  %117 = vmatprep.subr.bf16.mxu0 0
  %118 = vmatpush2.bf16.xpose.msra.mxu0 0
  %119 = vmatprep.mubr.bf16.mxu0 0
  %120 = vmatmul.mubr.bf16.gmra.mxu0 %v73
  %v121 = vpop.f32.mrf.mxu0
  %v122 = vadd.f32 %v44, %v121
  %v123 = vpop.f32.mrf.mxu0
  %v124 = vpop.f32.mrf.mxu0
  %v125 = vadd.f32 %v44, %v124
  %v126 = vpop.f32.mrf.mxu0
  %127 = vdwg.mxu0
  %v128 = vld [vmem:[#allocation2] sm:$0xff]
  %v129 = vld [vmem:[#allocation2 + $0x8] sm:$0xff]
  %vm130 = vcmask 523264
  %v131 = vsel %vm130, %v122, -inf
  %132 = vmax.xlane.f32.xlu0 %v131
  %v133 = vpop.xlane.xlu0 %132
  %v134 = vsel %vm130, %v125, -inf
  %135 = vmax.xlane.f32.xlu0 %v134
  %v136 = vpop.xlane.xlu0 %135
  %v137 = vmax.f32 %v128, %v133
  %v138 = vmax.f32 %v129, %v136
  %v139 = vld [vmem:[#allocation3] sm:$0xff]
  %v140 = vld [vmem:[#allocation3 + $0x8] sm:$0xff]
  %v141 = vsub.f32 %v128, %v137
  %v142 = vsub.f32 %v129, %v138
  %v143 = vmul.f32 %v141, 1.442695
  %v144 = vpow.pop %v143
  %v145 = vmul.f32 %v142, 1.442695
  %v146 = vpow.pop %v145
  %v147 = vmul.f32 %v139, %v144
  %v148 = vmul.f32 %v140, %v146
  %150 = vset.pattern.permute.xlu0 0
  %151 = vperm.xlu0 %150, %v137
  %v152 = vpop.permute.xlu0 %151
  %155 = vset.pattern.permute.xlu0 0
  %156 = vperm.xlu0 %155, %v138
  %v157 = vpop.permute.xlu0 %156
  %v159 = vsub.f32 %v122, %v152
  %v160 = vsub.f32 %v125, %v157
  %v161 = vmul.f32 %v159, 1.442695
  %v162 = vpow.pop %v161
  %v163 = vmul.f32 %v160, 1.442695
  %v164 = vpow.pop %v163
  %v165 = vsel %vm130, %v162, 0.0
  %166 = vadd.xlane.f32.xlu0 %v165
  %v167 = vpop.xlane.xlu0 %166
  %v168 = vsel %vm130, %v164, 0.0
  %169 = vadd.xlane.f32.xlu0 %v168
  %v170 = vpop.xlane.xlu0 %169
  %v171 = vadd.f32 %v147, %v167
  %v172 = vadd.f32 %v148, %v170
  %vm173 = vcmask 7168
  %174 = vst.msk [vmem:[#allocation3] sm:$0xff] %vm173, %v171
  %175 = vst.msk [vmem:[#allocation3 + $0x8] sm:$0xff] %vm173, %v172
  %176 = vst.msk [vmem:[#allocation2] sm:$0xff] %vm173, %v137
  %177 = vst.msk [vmem:[#allocation2 + $0x8] sm:$0xff] %vm173, %v138
  %v178 = vlaneseq
  %v179 = vand.u32 %v178, 127
  %s180 = smul.u32 0, 64
  %v181 = vstv %s180
  %v182 = vadd.s32 %v179, %v181
  %v183 = vld [vmem:[#allocation4] sm:$0xff]
  %v184 = vld [vmem:[#allocation4 + $0x8] sm:$0xff]
  %v185 = vld [vmem:[%s3] sm:$0xff]
  %v186 = vld [vmem:[%s3 + $0x8] sm:$0xff]
  %187 = vset.pattern.permute.xlu0 0
  %188 = vperm.xlu0 %187, %v185
  %v189 = vpop.permute.xlu0 %188
  %190 = vset.pattern.permute.xlu0 0
  %191 = vperm.xlu0 %190, %v186
  %v192 = vpop.permute.xlu0 %191
  %vm193 = vcmp.eq.s32.totalorder %v182, %v189
  %vm194 = vcmp.eq.s32.totalorder %v182, %v192
  %v195 = vsel %vm193, %v122, 0.0
  %v196 = vsel %vm194, %v125, 0.0
  %v197 = vsel %vm130, %v195, 0.0
  %198 = vadd.xlane.f32.xlu0 %v197
  %v199 = vpop.xlane.xlu0 %198
  %v200 = vsel %vm130, %v196, 0.0
  %201 = vadd.xlane.f32.xlu0 %v200
  %v202 = vpop.xlane.xlu0 %201
  %v203 = vadd.f32 %v183, %v199
  %v204 = vadd.f32 %v184, %v202
  %205 = vst.msk [vmem:[#allocation4] sm:$0xff] %vm173, %v203
  %206 = vst.msk [vmem:[#allocation4 + $0x8] sm:$0xff] %vm173, %v204
  // Predicated region
  $region22: #{transformer_bert_forward.31} parent=0 // pred_check
    %p207 = pneg %p18
  $region23: #{transformer_bert_forward.31} parent=0 // pred_check_branch
    %209 = sbr.rel (%p207) target = $region25
  $region24: #{transformer_bert_forward.31} parent=0 // pred_region
    %v210 = vld [vmem:[#allocation2] sm:$0xff]
    %v211 = vld [vmem:[#allocation2 + $0x8] sm:$0xff]
    %v212 = vld [vmem:[#allocation3] sm:$0xff]
    %v213 = vld [vmem:[#allocation3 + $0x8] sm:$0xff]
    %v214 = vlog2.pop %v212
    %v215 = vmul.f32 %v214, 0.6931472
    %v216 = vlog2.pop %v213
    %v217 = vmul.f32 %v216, 0.6931472
    %v218 = vadd.f32 %v210, %v215
    %v219 = vadd.f32 %v211, %v217
    %v220 = vld [vmem:[#allocation4] sm:$0xff]
    %v221 = vld [vmem:[#allocation4 + $0x8] sm:$0xff]
    %v222 = vsub.f32 %v218, %v220
    %v223 = vsub.f32 %v219, %v221
    %224 = vst.msk [vmem:[%s4] sm:$0xff] %vm173, %v222
    %225 = vst.msk [vmem:[%s4 + $0x8] sm:$0xff] %vm173, %v223
  $region25: #{transformer_bert_forward.31} parent=0 // pred_fallthru
    _
  // Predicated region
  $region26: #{transformer_bert_forward.31} parent=0 // pred_check
    _
  $region27: #{transformer_bert_forward.31} parent=0 // pred_check_branch
    %227 = sbr.rel (0) target = $region29
  $region28: #{transformer_bert_forward.31} parent=0 // pred_region
    _
  $region29: #{transformer_bert_forward.31} parent=0 // pred_fallthru
    _
  // Predicated region
  $region30: #{transformer_bert_forward.31} parent=0 // pred_check
    _
  $region31: #{transformer_bert_forward.31} parent=0 // pred_check_branch
    %229 = sbr.rel (0) target = $region33
  $region32: #{transformer_bert_forward.31} parent=0 // pred_region
    _
  $region33: #{transformer_bert_forward.31} parent=0 // pred_fallthru
    _

</llo_original>
